<compile_context>
chip_gen: v7x
topology: tpu7x:2x2x1
jax: 0.10.0
libtpu: 0.0.40
codegen_flags: <defaults>
</compile_context>

<pallas_src>
import functools

import jax
import jax.numpy as jnp
from jax.experimental import pallas as pl
from jax.experimental.pallas import tpu as pltpu

# ---- config (mirrors EGNN(config)) -------------------------------------------
F = 32                       # solute_hidden_dim / feats_dim
FF = 4                       # num_radial / fourier_features
M = 32                       # m_dim (fixed in EGNN)
POS = 3
NUM_BLOCKS = 2
CUTOFF = 5.0
NUM_EMB = 95

EDGE_IN = 2 * FF + 1 + 2 * F          # 73  (edge_input_dim)
H1 = 2 * EDGE_IN                      # 146 (edge-MLP hidden width)
H1P = ((H1 + 127) // 128) * 128       # 256 (lane-padded)
NC = 2 * FF + 1                       # 9 fourier channels (sin, cos, d^2)
NCP = 16                              # fourier channels padded to a bf16 sublane tile
OUT_W = 128                           # packed output lanes: [coors(3) | feats(F) | 0]

# weight-slab row offsets (lane width H1P everywhere; all offsets 16-aligned for bf16)
R_W1A = 0                 # (F,   H1P)  x_i part of edge-MLP layer 1
R_W1C = F                 # (NCP, H1P)  fourier part of edge-MLP layer 1 (rows 9..15 zero)
R_W2 = 48                 # (H1P, M)    edge-MLP layer 2
R_W3 = R_W2 + H1P         # (M,   4M)   coors-MLP layer 1
R_W5A = R_W3 + M          # (F,   2F)   node-MLP layer 1 (normed-feats part)
R_W5B = R_W5A + F         # (M,   2F)   node-MLP layer 1 (m_i part)
R_W6 = R_W5B + M          # (2F,  F)    node-MLP layer 2
W_ROWS = R_W6 + 2 * F     # 464 rows total (multiple of 16)

B_B2, B_B3, B_W4, B_B4, B_B5, B_B6 = 0, 1, 2, 3, 4, 5


def _round_up(x, m):
    return ((x + m - 1) // m) * m


def _silu_small(x):
    # tanh-form sigmoid; fine for the small per-node tensors.
    return x * (0.5 * jnp.tanh(0.5 * x) + 0.5)


def _make_silu_edge(use_recip):
    def silu(x):
        if use_recip and x.dtype == jnp.float32:
            # exp and approx reciprocal both run on the EUP slot -> minimal VALU work
            return x * pl.reciprocal(1.0 + jnp.exp(-x), approx=True)
        # bf16 path (v6e/v7x): packed bf16 VALU ops already run at 2x f32 width.
        return x * (0.5 * jnp.tanh(0.5 * x) + 0.5)
    return silu


# ---- TPU generation detection & per-generation tuning -------------------------
@functools.lru_cache()
def _tpu_generation():
    try:
        kind = jax.devices()[0].device_kind.lower()
    except Exception:
        return 0
    for g in (7, 6, 5, 4, 3, 2):
        if (f"v{g}" in kind) or (f"tpu{g}" in kind):
            return g
    return 0


@functools.lru_cache()
def _gen_config():
    gen = _tpu_generation()
    if gen >= 7:   # 64 MiB VMEM, 2 TensorCores, bf16 VPU/EUP
        return dict(ew_dtype=jnp.bfloat16, budget=14 << 20, vmem_limit=48 << 20,
                    use_recip=True, two_tc=True)
    if gen == 6:   # 128 MiB VMEM, bf16 VPU/EUP
        return dict(ew_dtype=jnp.bfloat16, budget=28 << 20, vmem_limit=96 << 20,
                    use_recip=True, two_tc=False)
    if gen == 5:   # 128 MiB VMEM, f32-only VPU/EUP
        return dict(ew_dtype=jnp.float32, budget=28 << 20, vmem_limit=96 << 20,
                    use_recip=True, two_tc=False)
    # unknown / older generation: conservative (matches the previous working config)
    return dict(ew_dtype=jnp.float32, budget=8 << 20, vmem_limit=32 << 20,
                use_recip=False, two_tc=False)


def _choose_tile(np_nodes, cfg):
    """Target-tile size from FULL per-pair intermediate accounting (not just h1)."""
    ew_bytes = 2 if cfg['ew_dtype'] == jnp.bfloat16 else 4
    # per (target, source) pair: h1 (ew dtype) + fourier-matmul output (f32) +
    # bf16 copy of h1 for the W2 matmul (f32 path only) + m_f/cw_h/rel/mask/... (~0.8 KB)
    per_pair = H1P * ew_bytes + H1P * 4 + (H1P * 2 if ew_bytes == 4 else 0) + 800
    ti = (cfg['budget'] // (max(np_nodes, 8) * per_pair)) // 8 * 8
    ti = int(max(8, min(256, ti, _round_up(np_nodes, 8))))
    if cfg['two_tc'] and np_nodes >= 16:
        # keep >= 2 grid steps so both v7x TensorCores get work
        ti = min(ti, max(8, (np_nodes // 2) // 8 * 8))
    return int(ti)


# ---- feature probe: single-buffering of grid-invariant inputs ------------------
_BUFFERED_OK = None


def _buffered_supported():
    """Probe whether BlockSpec(pipeline_mode=pl.Buffered(1)) lowers on this jax/TPU."""
    global _BUFFERED_OK
    if _BUFFERED_OK is None:
        try:
            def k(x_ref, o_ref):
                o_ref[...] = x_ref[...]
            probe = pl.pallas_call(
                k, out_shape=jax.ShapeDtypeStruct((8, 128), jnp.float32),
                grid=(2,),
                in_specs=[pl.BlockSpec((8, 128), lambda i: (0, 0),
                                       pipeline_mode=pl.Buffered(1))],
                out_specs=pl.BlockSpec((8, 128), lambda i: (0, 0)))
            jax.block_until_ready(probe(jnp.zeros((8, 128), jnp.float32)))
            _BUFFERED_OK = True
        except Exception:
            _BUFFERED_OK = False
    return _BUFFERED_OK


def _invariant_spec(shape):
    """Grid-invariant resident input: single-buffer it (default double-buffering
    only doubles its VMEM footprint since the block never changes)."""
    if _buffered_supported():
        return pl.BlockSpec(shape, lambda i: (0, 0), pipeline_mode=pl.Buffered(1))
    return pl.BlockSpec(shape, lambda i: (0, 0))


# ---- the per-layer kernel ------------------------------------------------------
def _make_layer_kernel(n_valid, ti, np_, cutoff, num_radial, ew_dtype, use_recip):
    r2 = float(cutoff) * float(cutoff)
    silu_edge = _make_silu_edge(use_recip)

    def kernel(coors_ref, feats_ref, normed_ref, xjw1_ref, w_ref, b_ref, out_ref):
        t0 = pl.multiple_of(pl.program_id(0) * ti, ti)

        coors_all = coors_ref[...]                              # (Np, 3)
        coors_t = coors_ref[pl.ds(t0, ti), :]                   # (TI, 3)
        feats_t = feats_ref[pl.ds(t0, ti), :]                   # (TI, F)  raw feats (x_i)
        normed_t = normed_ref[pl.ds(t0, ti), :]                 # (TI, F)  LayerNorm'ed

        # ---- pairwise geometry: rel[t, j, :] = coors[j] - coors[i = t0+t] ----
        rel = coors_all[None, :, :] - coors_t[:, None, :]       # (TI, Np, 3)
        d2 = jnp.sum(rel * rel, axis=-1, keepdims=True)         # (TI, Np, 1)

        # radius_graph mask: within cutoff, no self loop, source is a real node.
        src = jax.lax.broadcasted_iota(jnp.int32, (np_, 1), 0)[None, :, :]
        tgt = jax.lax.broadcasted_iota(jnp.int32, (ti, 1), 0)[:, :, None] + t0
        mask = ((d2 < r2) & (src != tgt) & (src < n_valid)).astype(jnp.float32)

        # ---- fourier features -> ONE small MXU matmul (K=16, 7 zero channels)
        #      instead of 9 rank-1 VPU broadcast-FMAs over the (TI,Np,H1P) tensor ----
        scaled = jnp.concatenate(
            [d2 * (1.0 / (2.0 ** k)) for k in range(num_radial)], axis=-1)  # (TI,Np,FF)
        zpad = jnp.zeros((ti, np_, NCP - NC), jnp.float32)
        four = jnp.concatenate([jnp.sin(scaled), jnp.cos(scaled), d2, zpad],
                               axis=-1)                                     # (TI,Np,NCP)
        fo = jnp.dot(four.reshape(ti * np_, NCP).astype(jnp.bfloat16),
                     w_ref[R_W1C:R_W1C + NCP, :],
                     preferred_element_type=jnp.float32).reshape(ti, np_, H1P)

        # ---- edge MLP, layer 1 (decomposed; x_j half precomputed in the wrapper) ----
        xi_w1 = jnp.dot(feats_t.astype(jnp.bfloat16), w_ref[R_W1A:R_W1A + F, :],
                        preferred_element_type=jnp.float32)                 # (TI, H1P)
        h1 = (fo + xi_w1[:, None, :]).astype(ew_dtype) + xjw1_ref[...][None, :, :]
        h1 = silu_edge(h1)                                                  # (TI,Np,H1P)

        # ---- edge MLP, layer 2 -> messages m_ij (bf16 operands, f32 accumulate) ----
        m_f = jnp.dot(h1.reshape(ti * np_, H1P).astype(jnp.bfloat16),
                      w_ref[R_W2:R_W2 + H1P, :M],
                      preferred_element_type=jnp.float32) + b_ref[B_B2:B_B2 + 1, :M]
        m_f = silu_edge(m_f)                                                # (TI*Np, M)

        # ---- coors MLP -> per-edge scalar; output layer as a lane reduction ----
        cw_h = silu_edge(
            jnp.dot(m_f.astype(jnp.bfloat16), w_ref[R_W3:R_W3 + M, :4 * M],
                    preferred_element_type=jnp.float32) + b_ref[B_B3:B_B3 + 1, :4 * M])
        w4 = b_ref[B_W4:B_W4 + 1, :4 * M]        # (1, 4M)  CoorsNorm scale folded in
        b4 = b_ref[B_B4:B_B4 + 1, :1]            # (1, 1)
        cw3 = (jnp.sum(cw_h.reshape(ti, np_, 4 * M) * w4[None], axis=-1, keepdims=True)
               + b4[None])                                                  # (TI, Np, 1)

        m3 = m_f.reshape(ti, np_, M)

        # ---- aggregation (aggr='add') over masked neighbours ----
        m_i = jnp.sum(mask * m3, axis=1)                                    # (TI, M)
        # CoorsNorm: rel / clamp(|rel|, 1e-8) * scale  (scale folded into w4/b4)
        inv_norm = jnp.minimum(jax.lax.rsqrt(d2), 1e8)                      # (TI, Np, 1)
        mhat = jnp.sum((mask * cw3 * inv_norm) * rel, axis=1)               # (TI, 3)
        coors_new = coors_t + mhat

        # ---- node MLP on LayerNorm'ed feats + residual ----
        nh = _silu_small(
            jnp.dot(normed_t.astype(jnp.bfloat16), w_ref[R_W5A:R_W5A + F, :2 * F],
                    preferred_element_type=jnp.float32)
            + jnp.dot(m_i.astype(jnp.bfloat16), w_ref[R_W5B:R_W5B + M, :2 * F],
                      preferred_element_type=jnp.float32)
            + b_ref[B_B5:B_B5 + 1, :2 * F])                                 # (TI, 2F)
        upd = jnp.dot(nh.astype(jnp.bfloat16), w_ref[R_W6:R_W6 + 2 * F, :F],
                      preferred_element_type=jnp.float32) + b_ref[B_B6:B_B6 + 1, :F]
        feats_new = feats_t + upd                                           # (TI, F)

        # ---- single lane-dense (TI, 128) unmasked store: [coors | feats | 0] ----
        pad = jnp.zeros((ti, OUT_W - POS - F), jnp.float32)
        out_ref[...] = jnp.concatenate([coors_new, feats_new, pad], axis=-1)

    return kernel


def egnn_sparse_layer(coors_p, feats_p, lp, *, n_valid, ti, cutoff, num_radial, cfg):
    """One EGNN_Sparse layer on padded (Np,3)/(Np,F) node arrays."""
    np_ = coors_p.shape[0]
    ew_dtype = cfg['ew_dtype']

    # Per-layer hoists (grid-invariant, O(N) work):
    # torch_geometric graph-mode LayerNorm, batch=None path: (x - mean) / (std + eps)
    fv = feats_p[:n_valid]
    mu = jnp.mean(fv)
    std = jnp.sqrt(jnp.mean((fv - mu) ** 2))                    # unbiased=False
    normed_p = (feats_p - mu) / (std + 1e-5) * lp['ln_w'] + lp['ln_b']
    # source-side half of the first edge-MLP layer (+ b1 folded in); cast to the
    # kernel's elementwise dtype so the big resident array is half-size on v6e/v7x.
    xjw1_p = (feats_p @ lp['w1b'] + lp['b1']).astype(ew_dtype)  # (Np, H1P)

    kernel = _make_layer_kernel(n_valid, ti, np_, cutoff, num_radial,
                                ew_dtype, cfg['use_recip'])

    packed = pl.pallas_call(
        kernel,
        out_shape=jax.ShapeDtypeStruct((np_, OUT_W), jnp.float32),
        grid_spec=pltpu.PrefetchScalarGridSpec(
            num_scalar_prefetch=0,
            grid=(np_ // ti,),
            in_specs=[_invariant_spec((np_, POS)),      # coors     (resident)
                      _invariant_spec((np_, F)),        # raw feats (resident)
                      _invariant_spec((np_, F)),        # LayerNorm'ed feats
                      _invariant_spec((np_, H1P)),      # feats @ W1b + b1
                      _invariant_spec((W_ROWS, H1P)),   # packed weight slab (bf16)
                      _invariant_spec((8, H1P))],       # packed bias slab   (f32)
            out_specs=pl.BlockSpec((ti, OUT_W), lambda i: (i, 0))),
        compiler_params=pltpu.CompilerParams(
            # each grid step owns a disjoint target tile -> shard across v7x's 2 TCs
            dimension_semantics=("parallel",),
            vmem_limit_bytes=cfg['vmem_limit']),
    )(coors_p, feats_p, normed_p, xjw1_p, lp['w_slab'], lp['b_slab'])

    return packed[:, :POS], packed[:, POS:POS + F]


def egnn_forward(z, pos, emb, layers, cutoff=CUTOFF, num_radial=FF):
    """EGNN.forward: x = cat([pos, Embedding(z)]); NUM_BLOCKS EGNN_Sparse layers;
    return the node features x[:, 3:]."""
    assert num_radial == FF, "weight-slab layout assumes num_radial == FF"
    n = pos.shape[0]
    feats = emb[z].astype(jnp.float32)          # node_init embedding gather (XLA glue)
    coors = pos.astype(jnp.float32)

    cfg = _gen_config()
    np0 = _round_up(n, 8)
    ti = _choose_tile(np0, cfg)
    np_ = _round_up(np0, ti)
    pad = np_ - n
    coors_p = jnp.pad(coors, ((0, pad), (0, 0)))
    feats_p = jnp.pad(feats, ((0, pad), (0, 0)))

    for lp in layers:
        coors_p, feats_p = egnn_sparse_layer(
            coors_p, feats_p, lp, n_valid=n, ti=ti,
            cutoff=cutoff, num_radial=num_radial, cfg=cfg)
    return feats_p[:n]


# ---- deterministic parameter init + packing (shapes from EGNN_Sparse.__init__) ----
def _xavier_normal(key, fan_in, fan_out):
    std = (2.0 / (fan_in + fan_out)) ** 0.5
    # stored as (in, out) == torch Linear.weight.T ; forward is x @ W + b
    return (std * jax.random.normal(key, (fan_in, fan_out))).astype(jnp.float32)


def pack_layer_params(p):
    """Pack one EGNN_Sparse layer's params into a lane-padded bf16 weight slab, an
    f32 bias slab, and the wrapper-side pieces (W1b/b1 precompute, LN affine)."""
    w1p = jnp.zeros((EDGE_IN, H1P), jnp.float32).at[:, :H1].set(p['w1'])
    w1a, w1b, w1c = w1p[:F], w1p[F:2 * F], w1p[2 * F:]
    b1p = jnp.zeros((1, H1P), jnp.float32).at[0, :H1].set(p['b1'])
    w2p = jnp.zeros((H1P, M), jnp.float32).at[:H1].set(p['w2'])

    w_slab = jnp.zeros((W_ROWS, H1P), jnp.float32)
    w_slab = w_slab.at[R_W1A:R_W1A + F, :].set(w1a)
    w_slab = w_slab.at[R_W1C:R_W1C + NC, :].set(w1c)      # rows NC..NCP-1 stay zero
    w_slab = w_slab.at[R_W2:R_W2 + H1P, :M].set(w2p)
    w_slab = w_slab.at[R_W3:R_W3 + M, :4 * M].set(p['w3'])
    w_slab = w_slab.at[R_W5A:R_W5A + F, :2 * F].set(p['w5'][:F])
    w_slab = w_slab.at[R_W5B:R_W5B + M, :2 * F].set(p['w5'][F:])
    w_slab = w_slab.at[R_W6:R_W6 + 2 * F, :F].set(p['w6'])

    scale = p['coors_scale']                     # CoorsNorm scale, folded into w4/b4
    b_slab = jnp.zeros((8, H1P), jnp.float32)
    b_slab = b_slab.at[B_B2, :M].set(p['b2'])
    b_slab = b_slab.at[B_B3, :4 * M].set(p['b3'])
    b_slab = b_slab.at[B_W4, :4 * M].set(p['w4'][:, 0] * scale)
    b_slab = b_slab.at[B_B4, 0].set(p['b4'][0] * scale)
    b_slab = b_slab.at[B_B5, :2 * F].set(p['b5'])
    b_slab = b_slab.at[B_B6, :F].set(p['b6'])

    return {'w_slab': w_slab.astype(jnp.bfloat16),   # all MXU operands are bf16
            'b_slab': b_slab,                        # biases / w4 stay f32 (VPU adds)
            'w1b': w1b, 'b1': b1p,
            'ln_w': p['ln_w'][None, :], 'ln_b': p['ln_b'][None, :]}


def init_params(key, num_blocks=NUM_BLOCKS):
    keys = jax.random.split(key, 1 + num_blocks)
    emb = jax.random.normal(keys[0], (NUM_EMB, F), dtype=jnp.float32)   # nn.Embedding(95, F)
    layers = []
    for l in range(num_blocks):
        lk = jax.random.split(keys[1 + l], 6)
        raw = {
            # edge_mlp: Linear(EDGE_IN, 2*EDGE_IN) -> SiLU -> Linear(2*EDGE_IN, M) -> SiLU
            'w1': _xavier_normal(lk[0], EDGE_IN, 2 * EDGE_IN), 'b1': jnp.zeros((2 * EDGE_IN,), jnp.float32),
            'w2': _xavier_normal(lk[1], 2 * EDGE_IN, M),       'b2': jnp.zeros((M,), jnp.float32),
            # coors_mlp: Linear(M, 4M) -> SiLU -> Linear(4M, 1)
            'w3': _xavier_normal(lk[2], M, 4 * M),             'b3': jnp.zeros((4 * M,), jnp.float32),
            'w4': _xavier_normal(lk[3], 4 * M, 1),             'b4': jnp.zeros((1,), jnp.float32),
            # node_mlp: Linear(F+M, 2F) -> SiLU -> Linear(2F, F)
            'w5': _xavier_normal(lk[4], F + M, 2 * F),         'b5': jnp.zeros((2 * F,), jnp.float32),
            'w6': _xavier_normal(lk[5], 2 * F, F),             'b6': jnp.zeros((F,), jnp.float32),
            # torch_geometric graph-mode LayerNorm(F) affine + CoorsNorm(scale_init=0.01)
            'ln_w': jnp.ones((F,), jnp.float32), 'ln_b': jnp.zeros((F,), jnp.float32),
            'coors_scale': jnp.float32(0.01),
        }
        layers.append(pack_layer_params(raw))
    return emb, layers


if __name__ == "__main__":
    key = jax.random.PRNGKey(0)
    k_z, k_pos, k_par = jax.random.split(key, 3)

    n_nodes = 16
    z = jax.random.randint(k_z, (n_nodes,), 0, NUM_EMB)                  # atom types
    pos = 2.0 * jax.random.normal(k_pos, (n_nodes, POS), dtype=jnp.float32)
    emb, layers = init_params(k_par)

    out = jax.jit(egnn_forward)(z, pos, emb, layers)
    out = jax.block_until_ready(out)

    assert out.shape == (n_nodes, F), out.shape
    assert bool(jnp.all(jnp.isfinite(out)))
    print("KERNEL_OK")
</pallas_src>

<mosaic_0001>
module attributes {stable_mosaic.version = 11 : i64} {
  func.func @kernel(%arg0: i32, %arg1: memref<16x3xf32, #tpu.memory_space<vmem>>, %arg2: memref<16x32xf32, #tpu.memory_space<vmem>>, %arg3: memref<16x32xf32, #tpu.memory_space<vmem>>, %arg4: memref<16x256xf32, #tpu.memory_space<vmem>>, %arg5: memref<464x256xbf16, #tpu.memory_space<vmem>>, %arg6: memref<8x256xf32, #tpu.memory_space<vmem>>, %arg7: memref<16x128xf32, #tpu.memory_space<vmem>>) attributes {dimension_semantics = [#tpu.dimension_semantics<parallel>], iteration_bounds = array<i64: 1>, scalar_prefetch = 0 : i64, scratch_operands = 0 : i64, tpu.core_type = #tpu.core_type<tc>, window_params = [{pipeline_mode = #tpu.pipeline_mode<synchronous>, transform_indices = @transform_0, window_bounds = array<i64: 16, 3>}, {pipeline_mode = #tpu.pipeline_mode<synchronous>, transform_indices = @transform_1, window_bounds = array<i64: 16, 32>}, {pipeline_mode = #tpu.pipeline_mode<synchronous>, transform_indices = @transform_2, window_bounds = array<i64: 16, 32>}, {pipeline_mode = #tpu.pipeline_mode<synchronous>, transform_indices = @transform_3, window_bounds = array<i64: 16, 256>}, {pipeline_mode = #tpu.pipeline_mode<synchronous>, transform_indices = @transform_4, window_bounds = array<i64: 464, 256>}, {pipeline_mode = #tpu.pipeline_mode<synchronous>, transform_indices = @transform_5, window_bounds = array<i64: 8, 256>}, {transform_indices = @transform_6, window_bounds = array<i64: 16, 128>}]} {
    %c16_i32 = arith.constant 16 : i32
    %0 = arith.muli %arg0, %c16_i32 : i32
    %1 = tpu.assume_multiple %0, 16 : i32
    %c0 = arith.constant 0 : index
    %c0_0 = arith.constant 0 : index
    %2 = vector.load %arg1[%c0, %c0_0] : memref<16x3xf32, #tpu.memory_space<vmem>>, vector<16x3xf32>
    %3 = arith.index_cast %1 : i32 to index
    %c0_1 = arith.constant 0 : index
    %4 = vector.load %arg1[%3, %c0_1] : memref<16x3xf32, #tpu.memory_space<vmem>>, vector<16x3xf32>
    %5 = arith.index_cast %1 : i32 to index
    %c0_2 = arith.constant 0 : index
    %6 = vector.load %arg2[%5, %c0_2] : memref<16x32xf32, #tpu.memory_space<vmem>>, vector<16x32xf32>
    %7 = arith.index_cast %1 : i32 to index
    %c0_3 = arith.constant 0 : index
    %8 = vector.load %arg3[%7, %c0_3] : memref<16x32xf32, #tpu.memory_space<vmem>>, vector<16x32xf32>
    %9 = vector.shape_cast %2 : vector<16x3xf32> to vector<1x16x3xf32>
    %10 = vector.shape_cast %4 : vector<16x3xf32> to vector<16x1x3xf32>
    %11 = vector.broadcast %9 : vector<1x16x3xf32> to vector<16x16x3xf32>
    %12 = vector.broadcast %10 : vector<16x1x3xf32> to vector<16x16x3xf32>
    %13 = arith.subf %11, %12 : vector<16x16x3xf32>
    %14 = arith.mulf %13, %13 : vector<16x16x3xf32>
    %cst = arith.constant dense<0.000000e+00> : vector<16x16xf32>
    %15 = vector.multi_reduction <add>, %14, %cst [2] : vector<16x16x3xf32> to vector<16x16xf32>
    %16 = vector.shape_cast %15 : vector<16x16xf32> to vector<16x16x1xf32>
    %17 = tpu.iota {dimensions = array<i32: 0>} : vector<16x1xi32>
    %18 = vector.shape_cast %17 : vector<16x1xi32> to vector<1x16x1xi32>
    %19 = tpu.iota {dimensions = array<i32: 0>} : vector<16x1xi32>
    %20 = vector.shape_cast %19 : vector<16x1xi32> to vector<16x1x1xi32>
    %21 = vector.broadcast %1 : i32 to vector<16x1x1xi32>
    %22 = arith.addi %20, %21 : vector<16x1x1xi32>
    %cst_4 = arith.constant 2.500000e+01 : f32
    %23 = vector.broadcast %cst_4 : f32 to vector<16x16x1xf32>
    %24 = arith.cmpf olt, %16, %23 : vector<16x16x1xf32>
    %25 = vector.broadcast %18 : vector<1x16x1xi32> to vector<16x16x1xi32>
    %26 = vector.broadcast %22 : vector<16x1x1xi32> to vector<16x16x1xi32>
    %27 = arith.cmpi ne, %25, %26 : vector<16x16x1xi32>
    %28 = arith.andi %24, %27 : vector<16x16x1xi1>
    %c16_i32_5 = arith.constant 16 : i32
    %29 = vector.broadcast %c16_i32_5 : i32 to vector<1x16x1xi32>
    %30 = arith.cmpi slt, %18, %29 : vector<1x16x1xi32>
    %31 = vector.broadcast %30 : vector<1x16x1xi1> to vector<16x16x1xi1>
    %32 = arith.andi %28, %31 : vector<16x16x1xi1>
    %33 = arith.extui %32 : vector<16x16x1xi1> to vector<16x16x1xi32>
    %34 = arith.sitofp %33 : vector<16x16x1xi32> to vector<16x16x1xf32>
    %cst_6 = arith.constant 1.000000e+00 : f32
    %35 = vector.broadcast %cst_6 : f32 to vector<16x16x1xf32>
    %36 = arith.mulf %16, %35 : vector<16x16x1xf32>
    %cst_7 = arith.constant 5.000000e-01 : f32
    %37 = vector.broadcast %cst_7 : f32 to vector<16x16x1xf32>
    %38 = arith.mulf %16, %37 : vector<16x16x1xf32>
    %cst_8 = arith.constant 2.500000e-01 : f32
    %39 = vector.broadcast %cst_8 : f32 to vector<16x16x1xf32>
    %40 = arith.mulf %16, %39 : vector<16x16x1xf32>
    %cst_9 = arith.constant 1.250000e-01 : f32
    %41 = vector.broadcast %cst_9 : f32 to vector<16x16x1xf32>
    %42 = arith.mulf %16, %41 : vector<16x16x1xf32>
    %43 = tpu.concatenate %36, %38, %40, %42 in 2 : vector<16x16x1xf32>, vector<16x16x1xf32>, vector<16x16x1xf32>, vector<16x16x1xf32> -> vector<16x16x4xf32>
    %cst_10 = arith.constant 0.000000e+00 : f32
    %44 = vector.broadcast %cst_10 : f32 to vector<16x16x7xf32>
    %45 = math.sin %43 : vector<16x16x4xf32>
    %46 = math.cos %43 : vector<16x16x4xf32>
    %47 = tpu.concatenate %45, %46, %16, %44 in 2 : vector<16x16x4xf32>, vector<16x16x4xf32>, vector<16x16x1xf32>, vector<16x16x7xf32> -> vector<16x16x16xf32>
    %48 = vector.shape_cast %47 : vector<16x16x16xf32> to vector<256x16xf32>
    %49 = arith.truncf %48 : vector<256x16xf32> to vector<256x16xbf16>
    %c32 = arith.constant 32 : index
    %c0_11 = arith.constant 0 : index
    %50 = vector.load %arg5[%c32, %c0_11] : memref<464x256xbf16, #tpu.memory_space<vmem>>, vector<16x256xbf16>
    %cst_12 = arith.constant dense<0.000000e+00> : vector<256x256xf32>
    %51 = tpu.matmul %49, %50, %cst_12 {dimension_numbers = #tpu.dot_dimension_numbers<[1], [0], [0], [1], [0, 0, 1, 1], [], []>} : vector<256x16xbf16>, vector<16x256xbf16>, vector<256x256xf32> -> vector<256x256xf32>
    %52 = vector.shape_cast %51 : vector<256x256xf32> to vector<16x16x256xf32>
    %53 = arith.truncf %6 : vector<16x32xf32> to vector<16x32xbf16>
    %c0_13 = arith.constant 0 : index
    %c0_14 = arith.constant 0 : index
    %54 = vector.load %arg5[%c0_13, %c0_14] : memref<464x256xbf16, #tpu.memory_space<vmem>>, vector<32x256xbf16>
    %cst_15 = arith.constant dense<0.000000e+00> : vector<16x256xf32>
    %55 = tpu.matmul %53, %54, %cst_15 {dimension_numbers = #tpu.dot_dimension_numbers<[1], [0], [0], [1], [0, 0, 1, 1], [], []>} : vector<16x32xbf16>, vector<32x256xbf16>, vector<16x256xf32> -> vector<16x256xf32>
    %56 = vector.shape_cast %55 : vector<16x256xf32> to vector<16x1x256xf32>
    %57 = vector.broadcast %56 : vector<16x1x256xf32> to vector<16x16x256xf32>
    %58 = arith.addf %52, %57 : vector<16x16x256xf32>
    %c0_16 = arith.constant 0 : index
    %c0_17 = arith.constant 0 : index
    %59 = vector.load %arg4[%c0_16, %c0_17] : memref<16x256xf32, #tpu.memory_space<vmem>>, vector<16x256xf32>
    %60 = vector.shape_cast %59 : vector<16x256xf32> to vector<1x16x256xf32>
    %61 = vector.broadcast %60 : vector<1x16x256xf32> to vector<16x16x256xf32>
    %62 = arith.addf %58, %61 : vector<16x16x256xf32>
    %cst_18 = arith.constant 5.000000e-01 : f32
    %63 = vector.broadcast %cst_18 : f32 to vector<16x16x256xf32>
    %64 = arith.mulf %63, %62 : vector<16x16x256xf32>
    %65 = math.tanh %64 : vector<16x16x256xf32>
    %cst_19 = arith.constant 5.000000e-01 : f32
    %66 = vector.broadcast %cst_19 : f32 to vector<16x16x256xf32>
    %67 = arith.mulf %66, %65 : vector<16x16x256xf32>
    %cst_20 = arith.constant 5.000000e-01 : f32
    %68 = vector.broadcast %cst_20 : f32 to vector<16x16x256xf32>
    %69 = arith.addf %67, %68 : vector<16x16x256xf32>
    %70 = arith.mulf %62, %69 : vector<16x16x256xf32>
    %71 = vector.shape_cast %70 : vector<16x16x256xf32> to vector<256x256xf32>
    %72 = arith.truncf %71 : vector<256x256xf32> to vector<256x256xbf16>
    %c48 = arith.constant 48 : index
    %c0_21 = arith.constant 0 : index
    %73 = vector.load %arg5[%c48, %c0_21] : memref<464x256xbf16, #tpu.memory_space<vmem>>, vector<256x32xbf16>
    %cst_22 = arith.constant dense<0.000000e+00> : vector<256x32xf32>
    %74 = tpu.matmul %72, %73, %cst_22 {dimension_numbers = #tpu.dot_dimension_numbers<[1], [0], [0], [1], [0, 0, 1, 1], [], []>} : vector<256x256xbf16>, vector<256x32xbf16>, vector<256x32xf32> -> vector<256x32xf32>
    %c0_23 = arith.constant 0 : index
    %c0_24 = arith.constant 0 : index
    %75 = vector.load %arg6[%c0_23, %c0_24] : memref<8x256xf32, #tpu.memory_space<vmem>>, vector<1x32xf32>
    %76 = vector.broadcast %75 : vector<1x32xf32> to vector<256x32xf32>
    %77 = arith.addf %74, %76 : vector<256x32xf32>
    %cst_25 = arith.constant 5.000000e-01 : f32
    %78 = vector.broadcast %cst_25 : f32 to vector<256x32xf32>
    %79 = arith.mulf %78, %77 : vector<256x32xf32>
    %80 = math.tanh %79 : vector<256x32xf32>
    %cst_26 = arith.constant 5.000000e-01 : f32
    %81 = vector.broadcast %cst_26 : f32 to vector<256x32xf32>
    %82 = arith.mulf %81, %80 : vector<256x32xf32>
    %cst_27 = arith.constant 5.000000e-01 : f32
    %83 = vector.broadcast %cst_27 : f32 to vector<256x32xf32>
    %84 = arith.addf %82, %83 : vector<256x32xf32>
    %85 = arith.mulf %77, %84 : vector<256x32xf32>
    %86 = arith.truncf %85 : vector<256x32xf32> to vector<256x32xbf16>
    %c304 = arith.constant 304 : index
    %c0_28 = arith.constant 0 : index
    %87 = vector.load %arg5[%c304, %c0_28] : memref<464x256xbf16, #tpu.memory_space<vmem>>, vector<32x128xbf16>
    %cst_29 = arith.constant dense<0.000000e+00> : vector<256x128xf32>
    %88 = tpu.matmul %86, %87, %cst_29 {dimension_numbers = #tpu.dot_dimension_numbers<[1], [0], [0], [1], [0, 0, 1, 1], [], []>} : vector<256x32xbf16>, vector<32x128xbf16>, vector<256x128xf32> -> vector<256x128xf32>
    %c1 = arith.constant 1 : index
    %c0_30 = arith.constant 0 : index
    %89 = vector.load %arg6[%c1, %c0_30] : memref<8x256xf32, #tpu.memory_space<vmem>>, vector<1x128xf32>
    %90 = vector.broadcast %89 : vector<1x128xf32> to vector<256x128xf32>
    %91 = arith.addf %88, %90 : vector<256x128xf32>
    %cst_31 = arith.constant 5.000000e-01 : f32
    %92 = vector.broadcast %cst_31 : f32 to vector<256x128xf32>
    %93 = arith.mulf %92, %91 : vector<256x128xf32>
    %94 = math.tanh %93 : vector<256x128xf32>
    %cst_32 = arith.constant 5.000000e-01 : f32
    %95 = vector.broadcast %cst_32 : f32 to vector<256x128xf32>
    %96 = arith.mulf %95, %94 : vector<256x128xf32>
    %cst_33 = arith.constant 5.000000e-01 : f32
    %97 = vector.broadcast %cst_33 : f32 to vector<256x128xf32>
    %98 = arith.addf %96, %97 : vector<256x128xf32>
    %99 = arith.mulf %91, %98 : vector<256x128xf32>
    %c2 = arith.constant 2 : index
    %c0_34 = arith.constant 0 : index
    %100 = vector.load %arg6[%c2, %c0_34] : memref<8x256xf32, #tpu.memory_space<vmem>>, vector<1x128xf32>
    %c3 = arith.constant 3 : index
    %c0_35 = arith.constant 0 : index
    %101 = vector.load %arg6[%c3, %c0_35] : memref<8x256xf32, #tpu.memory_space<vmem>>, vector<1x1xf32>
    %102 = vector.shape_cast %99 : vector<256x128xf32> to vector<16x16x128xf32>
    %103 = vector.shape_cast %100 : vector<1x128xf32> to vector<1x1x128xf32>
    %104 = vector.broadcast %103 : vector<1x1x128xf32> to vector<16x16x128xf32>
    %105 = arith.mulf %102, %104 : vector<16x16x128xf32>
    %cst_36 = arith.constant dense<0.000000e+00> : vector<16x16xf32>
    %106 = vector.multi_reduction <add>, %105, %cst_36 [2] : vector<16x16x128xf32> to vector<16x16xf32>
    %107 = vector.shape_cast %106 : vector<16x16xf32> to vector<16x16x1xf32>
    %108 = vector.shape_cast %101 : vector<1x1xf32> to vector<1x1x1xf32>
    %109 = vector.broadcast %108 : vector<1x1x1xf32> to vector<16x16x1xf32>
    %110 = arith.addf %107, %109 : vector<16x16x1xf32>
    %111 = vector.shape_cast %85 : vector<256x32xf32> to vector<16x16x32xf32>
    %112 = vector.broadcast %34 : vector<16x16x1xf32> to vector<16x16x32xf32>
    %113 = arith.mulf %112, %111 : vector<16x16x32xf32>
    %cst_37 = arith.constant dense<0.000000e+00> : vector<16x32xf32>
    %114 = vector.multi_reduction <add>, %113, %cst_37 [1] : vector<16x16x32xf32> to vector<16x32xf32>
    %115 = math.rsqrt %16 : vector<16x16x1xf32>
    %cst_38 = arith.constant 1.000000e+08 : f32
    %116 = vector.broadcast %cst_38 : f32 to vector<16x16x1xf32>
    %117 = arith.minimumf %115, %116 : vector<16x16x1xf32>
    %118 = arith.mulf %34, %110 : vector<16x16x1xf32>
    %119 = arith.mulf %118, %117 : vector<16x16x1xf32>
    %120 = vector.broadcast %119 : vector<16x16x1xf32> to vector<16x16x3xf32>
    %121 = arith.mulf %120, %13 : vector<16x16x3xf32>
    %cst_39 = arith.constant dense<0.000000e+00> : vector<16x3xf32>
    %122 = vector.multi_reduction <add>, %121, %cst_39 [1] : vector<16x16x3xf32> to vector<16x3xf32>
    %123 = arith.addf %4, %122 : vector<16x3xf32>
    %124 = arith.truncf %8 : vector<16x32xf32> to vector<16x32xbf16>
    %c336 = arith.constant 336 : index
    %c0_40 = arith.constant 0 : index
    %125 = vector.load %arg5[%c336, %c0_40] : memref<464x256xbf16, #tpu.memory_space<vmem>>, vector<32x64xbf16>
    %cst_41 = arith.constant dense<0.000000e+00> : vector<16x64xf32>
    %126 = tpu.matmul %124, %125, %cst_41 {dimension_numbers = #tpu.dot_dimension_numbers<[1], [0], [0], [1], [0, 0, 1, 1], [], []>} : vector<16x32xbf16>, vector<32x64xbf16>, vector<16x64xf32> -> vector<16x64xf32>
    %127 = arith.truncf %114 : vector<16x32xf32> to vector<16x32xbf16>
    %c368 = arith.constant 368 : index
    %c0_42 = arith.constant 0 : index
    %128 = vector.load %arg5[%c368, %c0_42] : memref<464x256xbf16, #tpu.memory_space<vmem>>, vector<32x64xbf16>
    %cst_43 = arith.constant dense<0.000000e+00> : vector<16x64xf32>
    %129 = tpu.matmul %127, %128, %cst_43 {dimension_numbers = #tpu.dot_dimension_numbers<[1], [0], [0], [1], [0, 0, 1, 1], [], []>} : vector<16x32xbf16>, vector<32x64xbf16>, vector<16x64xf32> -> vector<16x64xf32>
    %130 = arith.addf %126, %129 : vector<16x64xf32>
    %c4 = arith.constant 4 : index
    %c0_44 = arith.constant 0 : index
    %131 = vector.load %arg6[%c4, %c0_44] : memref<8x256xf32, #tpu.memory_space<vmem>>, vector<1x64xf32>
    %132 = vector.broadcast %131 : vector<1x64xf32> to vector<16x64xf32>
    %133 = arith.addf %130, %132 : vector<16x64xf32>
    %cst_45 = arith.constant 5.000000e-01 : f32
    %134 = vector.broadcast %cst_45 : f32 to vector<16x64xf32>
    %135 = arith.mulf %134, %133 : vector<16x64xf32>
    %136 = math.tanh %135 : vector<16x64xf32>
    %cst_46 = arith.constant 5.000000e-01 : f32
    %137 = vector.broadcast %cst_46 : f32 to vector<16x64xf32>
    %138 = arith.mulf %137, %136 : vector<16x64xf32>
    %cst_47 = arith.constant 5.000000e-01 : f32
    %139 = vector.broadcast %cst_47 : f32 to vector<16x64xf32>
    %140 = arith.addf %138, %139 : vector<16x64xf32>
    %141 = arith.mulf %133, %140 : vector<16x64xf32>
    %142 = arith.truncf %141 : vector<16x64xf32> to vector<16x64xbf16>
    %c400 = arith.constant 400 : index
    %c0_48 = arith.constant 0 : index
    %143 = vector.load %arg5[%c400, %c0_48] : memref<464x256xbf16, #tpu.memory_space<vmem>>, vector<64x32xbf16>
    %cst_49 = arith.constant dense<0.000000e+00> : vector<16x32xf32>
    %144 = tpu.matmul %142, %143, %cst_49 {dimension_numbers = #tpu.dot_dimension_numbers<[1], [0], [0], [1], [0, 0, 1, 1], [], []>} : vector<16x64xbf16>, vector<64x32xbf16>, vector<16x32xf32> -> vector<16x32xf32>
    %c5 = arith.constant 5 : index
    %c0_50 = arith.constant 0 : index
    %145 = vector.load %arg6[%c5, %c0_50] : memref<8x256xf32, #tpu.memory_space<vmem>>, vector<1x32xf32>
    %146 = vector.broadcast %145 : vector<1x32xf32> to vector<16x32xf32>
    %147 = arith.addf %144, %146 : vector<16x32xf32>
    %148 = arith.addf %6, %147 : vector<16x32xf32>
    %cst_51 = arith.constant 0.000000e+00 : f32
    %149 = vector.broadcast %cst_51 : f32 to vector<16x93xf32>
    %150 = tpu.concatenate %123, %148, %149 in 1 : vector<16x3xf32>, vector<16x32xf32>, vector<16x93xf32> -> vector<16x128xf32>
    %c0_52 = arith.constant 0 : index
    %c0_53 = arith.constant 0 : index
    %151 = vector.load %arg7[%c0_52, %c0_53] : memref<16x128xf32, #tpu.memory_space<vmem>>, vector<16x128xf32>
    tpu.vector_store %arg7[%c0_52, %c0_53], %150 {strides = array<i32>} : memref<16x128xf32, #tpu.memory_space<vmem>>, vector<16x128xf32>,
    return
  }
  func.func @transform_0(%arg0: i32) -> (i32, i32) {
    %c0_i32 = arith.constant 0 : i32
    %c0_i32_0 = arith.constant 0 : i32
    %c0_i32_1 = arith.constant 0 : i32
    return %c0_i32, %c0_i32_0 : i32, i32
  }
  func.func @transform_1(%arg0: i32) -> (i32, i32) {
    %c0_i32 = arith.constant 0 : i32
    %c0_i32_0 = arith.constant 0 : i32
    %c0_i32_1 = arith.constant 0 : i32
    return %c0_i32, %c0_i32_0 : i32, i32
  }
  func.func @transform_2(%arg0: i32) -> (i32, i32) {
    %c0_i32 = arith.constant 0 : i32
    %c0_i32_0 = arith.constant 0 : i32
    %c0_i32_1 = arith.constant 0 : i32
    return %c0_i32, %c0_i32_0 : i32, i32
  }
  func.func @transform_3(%arg0: i32) -> (i32, i32) {
    %c0_i32 = arith.constant 0 : i32
    %c0_i32_0 = arith.constant 0 : i32
    %c0_i32_1 = arith.constant 0 : i32
    return %c0_i32, %c0_i32_0 : i32, i32
  }
  func.func @transform_4(%arg0: i32) -> (i32, i32) {
    %c0_i32 = arith.constant 0 : i32
    %c0_i32_0 = arith.constant 0 : i32
    %c0_i32_1 = arith.constant 0 : i32
    return %c0_i32, %c0_i32_0 : i32, i32
  }
  func.func @transform_5(%arg0: i32) -> (i32, i32) {
    %c0_i32 = arith.constant 0 : i32
    %c0_i32_0 = arith.constant 0 : i32
    %c0_i32_1 = arith.constant 0 : i32
    return %c0_i32, %c0_i32_0 : i32, i32
  }
  func.func @transform_6(%arg0: i32) -> (i32, i32) {
    %c0_i32 = arith.constant 0 : i32
    %c0_i32_0 = arith.constant 0 : i32
    return %arg0, %c0_i32 : i32, i32
  }
}

</mosaic_0001>

<llo_original>
// kernel: egnn_forward.2
$region0: #{egnn_forward.2}
  #allocation0 [shape = 'u32[]', space=smem, size = 0x4, offset = 0x4, fixed_abs, tag = 'smem constant byte address 0x4 - core index']
  #allocation1 [shape = 'u32[144,128]{1,0:T(1,128)}', space=vmem, size = 0x12000, scoped, tag = 'internal scratch']
  %s0 = inlined_call_operand.vmem [shape: f32[16,3], index: 0, kind: input, shape index: {}]
  %s1 = inlined_call_operand.vmem [shape: f32[16,32], index: 1, kind: input, shape index: {}]
  %s2 = inlined_call_operand.vmem [shape: f32[16,32], index: 2, kind: input, shape index: {}]
  %s3 = inlined_call_operand.vmem [shape: f32[16,256], index: 3, kind: input, shape index: {}]
  %s4 = inlined_call_operand.vmem [shape: bf16[464,256], index: 4, kind: input, shape index: {}]
  %s5 = inlined_call_operand.vmem [shape: f32[8,256], index: 5, kind: input, shape index: {}]
  %s6 = inlined_call_operand.vmem [shape: f32[16,128], index: 6, kind: output, shape index: {}]
  %s7 = sld [smem:[#allocation0]]
  $region34: #{egnn_forward.2} parent=0
    _
  %s9 = ssub.s32 1, %s7
  %s10 = scalar_select 0, %s9, %s7
  // Predicated region
  $region2: #{egnn_forward.2} parent=0 // pred_check
    _
  $region3: #{egnn_forward.2} parent=0 // pred_check_branch
    %12 = sbr.rel (0) target = $region5
  $region4: #{egnn_forward.2} parent=0 // pred_region
    _
  $region5: #{egnn_forward.2} parent=0 // pred_fallthru
    _
  // Predicated region
  $region6: #{egnn_forward.2} parent=0 // pred_check
    _
  $region7: #{egnn_forward.2} parent=0 // pred_check_branch
    %14 = sbr.rel (0) target = $region9
  $region8: #{egnn_forward.2} parent=0 // pred_region
    _
  $region9: #{egnn_forward.2} parent=0 // pred_fallthru
    _
  // Predicated region
  $region10: #{egnn_forward.2} parent=0 // pred_check
    _
  $region11: #{egnn_forward.2} parent=0 // pred_check_branch
    %16 = sbr.rel (0) target = $region13
  $region12: #{egnn_forward.2} parent=0 // pred_region
    _
  $region13: #{egnn_forward.2} parent=0 // pred_fallthru
    _
  // Predicated region
  $region14: #{egnn_forward.2} parent=0 // pred_check
    _
  $region15: #{egnn_forward.2} parent=0 // pred_check_branch
    %18 = sbr.rel (0) target = $region17
  $region16: #{egnn_forward.2} parent=0 // pred_region
    _
  $region17: #{egnn_forward.2} parent=0 // pred_fallthru
    _
  // Predicated region
  $region18: #{egnn_forward.2} parent=0 // pred_check
    _
  $region19: #{egnn_forward.2} parent=0 // pred_check_branch
    %20 = sbr.rel (0) target = $region21
  $region20: #{egnn_forward.2} parent=0 // pred_region
    _
  $region21: #{egnn_forward.2} parent=0 // pred_fallthru
    _
  // Predicated region
  $region22: #{egnn_forward.2} parent=0 // pred_check
    _
  $region23: #{egnn_forward.2} parent=0 // pred_check_branch
    %22 = sbr.rel (0) target = $region25
  $region24: #{egnn_forward.2} parent=0 // pred_region
    _
  $region25: #{egnn_forward.2} parent=0 // pred_fallthru
    _
  %s24 = smul.u32 0, 16
  %v25 = vld [vmem:[%s0] sm:$0xff]
  %v26 = vld [vmem:[%s0 + $0x8] sm:$0xff]
  %s27 = scalar_lea.vmem %s0, %s24
  %v28 = vld [vmem:[%s27] sm:$0xff]
  %v29 = vld [vmem:[%s27 + $0x8] sm:$0xff]
  %s30 = scalar_lea.vmem %s1, %s24
  %v31 = vld [vmem:[%s30] sm:$0xff]
  %v32 = vld [vmem:[%s30 + $0x8] sm:$0xff]
  %s33 = scalar_lea.vmem %s2, %s24
  %v34 = vld [vmem:[%s33] sm:$0xff]
  %v35 = vld [vmem:[%s33 + $0x8] sm:$0xff]
  %v38 = vcombine.high %v28, %v28
  %v40 = vunpack.c.l.s4 1966171168
  %v41 = vunpack.c.0.s8 %v40
  %v42 = vlaneseq
  %v43 = vshrl.u32 %v42, 7
  %v44 = vsub.s32 %v41, %v43
  %v45 = vrot.slane %v28, %v44
  %v47 = vunpack.c.l.s4 1966171168
  %v48 = vunpack.c.0.s8 %v47
  %v49 = vlaneseq
  %v50 = vshrl.u32 %v49, 7
  %v51 = vsub.s32 %v48, %v50
  %v52 = vrot.slane %v38, %v51
  %v53 = vcombine.high %v45, %v45
  %v54 = vcombine.high %v52, %v52
  %v56 = vunpack.c.l.s4 1966171168
  %v57 = vunpack.c.0.s8 %v56
  %v58 = vlaneseq
  %v59 = vshrl.u32 %v58, 7
  %v60 = vsub.s32 %v57, %v59
  %v61 = vrot.slane %v45, %v60
  %v63 = vunpack.c.l.s4 1966171168
  %v64 = vunpack.c.0.s8 %v63
  %v65 = vlaneseq
  %v66 = vshrl.u32 %v65, 7
  %v67 = vsub.s32 %v64, %v66
  %v68 = vrot.slane %v52, %v67
  %v70 = vunpack.c.l.s4 1966171168
  %v71 = vunpack.c.0.s8 %v70
  %v72 = vlaneseq
  %v73 = vshrl.u32 %v72, 7
  %v74 = vsub.s32 %v71, %v73
  %v75 = vrot.slane %v53, %v74
  %v77 = vunpack.c.l.s4 1966171168
  %v78 = vunpack.c.0.s8 %v77
  %v79 = vlaneseq
  %v80 = vshrl.u32 %v79, 7
  %v81 = vsub.s32 %v78, %v80
  %v82 = vrot.slane %v54, %v81
  %v83 = vcombine.high %v61, %v61
  %v84 = vcombine.high %v68, %v68
  %v85 = vcombine.high %v75, %v75
  %v86 = vcombine.high %v82, %v82
  %v87 = vcombine.high %v29, %v29
  %v89 = vunpack.c.l.s4 1966171168
  %v90 = vunpack.c.0.s8 %v89
  %v91 = vlaneseq
  %v92 = vshrl.u32 %v91, 7
  %v93 = vsub.s32 %v90, %v92
  %v94 = vrot.slane %v29, %v93
  %v96 = vunpack.c.l.s4 1966171168
  %v97 = vunpack.c.0.s8 %v96
  %v98 = vlaneseq
  %v99 = vshrl.u32 %v98, 7
  %v100 = vsub.s32 %v97, %v99
  %v101 = vrot.slane %v87, %v100
  %v102 = vcombine.high %v94, %v94
  %v103 = vcombine.high %v101, %v101
  %v105 = vunpack.c.l.s4 1966171168
  %v106 = vunpack.c.0.s8 %v105
  %v107 = vlaneseq
  %v108 = vshrl.u32 %v107, 7
  %v109 = vsub.s32 %v106, %v108
  %v110 = vrot.slane %v94, %v109
  %v112 = vunpack.c.l.s4 1966171168
  %v113 = vunpack.c.0.s8 %v112
  %v114 = vlaneseq
  %v115 = vshrl.u32 %v114, 7
  %v116 = vsub.s32 %v113, %v115
  %v117 = vrot.slane %v101, %v116
  %v119 = vunpack.c.l.s4 1966171168
  %v120 = vunpack.c.0.s8 %v119
  %v121 = vlaneseq
  %v122 = vshrl.u32 %v121, 7
  %v123 = vsub.s32 %v120, %v122
  %v124 = vrot.slane %v102, %v123
  %v126 = vunpack.c.l.s4 1966171168
  %v127 = vunpack.c.0.s8 %v126
  %v128 = vlaneseq
  %v129 = vshrl.u32 %v128, 7
  %v130 = vsub.s32 %v127, %v129
  %v131 = vrot.slane %v103, %v130
  %v132 = vcombine.high %v110, %v110
  %v133 = vcombine.high %v117, %v117
  %v134 = vcombine.high %v124, %v124
  %v135 = vcombine.high %v131, %v131
  %v136 = vlaneseq
  %v137 = vshrl.u32 %v136, 7
  %v138 = vsub.s32 0, %v137
  %v139 = vrot.slane %v61, %v138
  %v140 = vlaneseq
  %v141 = vshrl.u32 %v140, 7
  %v142 = vsub.s32 0, %v141
  %v143 = vrot.slane %v75, %v142
  %v144 = vlaneseq
  %v145 = vshrl.u32 %v144, 7
  %v146 = vsub.s32 0, %v145
  %v147 = vrot.slane %v83, %v146
  %v148 = vlaneseq
  %v149 = vshrl.u32 %v148, 7
  %v150 = vsub.s32 0, %v149
  %v151 = vrot.slane %v85, %v150
  %v152 = vlaneseq
  %v153 = vshrl.u32 %v152, 7
  %v154 = vsub.s32 0, %v153
  %v155 = vrot.slane %v68, %v154
  %v156 = vlaneseq
  %v157 = vshrl.u32 %v156, 7
  %v158 = vsub.s32 0, %v157
  %v159 = vrot.slane %v82, %v158
  %v160 = vlaneseq
  %v161 = vshrl.u32 %v160, 7
  %v162 = vsub.s32 0, %v161
  %v163 = vrot.slane %v84, %v162
  %v164 = vlaneseq
  %v165 = vshrl.u32 %v164, 7
  %v166 = vsub.s32 0, %v165
  %v167 = vrot.slane %v86, %v166
  %v168 = vlaneseq
  %v169 = vshrl.u32 %v168, 7
  %v170 = vsub.s32 0, %v169
  %v171 = vrot.slane %v110, %v170
  %v172 = vlaneseq
  %v173 = vshrl.u32 %v172, 7
  %v174 = vsub.s32 0, %v173
  %v175 = vrot.slane %v124, %v174
  %v176 = vlaneseq
  %v177 = vshrl.u32 %v176, 7
  %v178 = vsub.s32 0, %v177
  %v179 = vrot.slane %v132, %v178
  %v180 = vlaneseq
  %v181 = vshrl.u32 %v180, 7
  %v182 = vsub.s32 0, %v181
  %v183 = vrot.slane %v134, %v182
  %v184 = vlaneseq
  %v185 = vshrl.u32 %v184, 7
  %v186 = vsub.s32 0, %v185
  %v187 = vrot.slane %v117, %v186
  %v188 = vlaneseq
  %v189 = vshrl.u32 %v188, 7
  %v190 = vsub.s32 0, %v189
  %v191 = vrot.slane %v131, %v190
  %v192 = vlaneseq
  %v193 = vshrl.u32 %v192, 7
  %v194 = vsub.s32 0, %v193
  %v195 = vrot.slane %v133, %v194
  %v196 = vlaneseq
  %v197 = vshrl.u32 %v196, 7
  %v198 = vsub.s32 0, %v197
  %v199 = vrot.slane %v135, %v198
  %v216 = vsub.f32 %v25, %v139
  %v217 = vsub.f32 %v26, %v139
  %v218 = vsub.f32 %v25, %v143
  %v219 = vsub.f32 %v26, %v143
  %v220 = vsub.f32 %v25, %v147
  %v221 = vsub.f32 %v26, %v147
  %v222 = vsub.f32 %v25, %v151
  %v223 = vsub.f32 %v26, %v151
  %v224 = vsub.f32 %v25, %v155
  %v225 = vsub.f32 %v26, %v155
  %v226 = vsub.f32 %v25, %v159
  %v227 = vsub.f32 %v26, %v159
  %v228 = vsub.f32 %v25, %v163
  %v229 = vsub.f32 %v26, %v163
  %v230 = vsub.f32 %v25, %v167
  %v231 = vsub.f32 %v26, %v167
  %v232 = vsub.f32 %v25, %v171
  %v233 = vsub.f32 %v26, %v171
  %v234 = vsub.f32 %v25, %v175
  %v235 = vsub.f32 %v26, %v175
  %v236 = vsub.f32 %v25, %v179
  %v237 = vsub.f32 %v26, %v179
  %v238 = vsub.f32 %v25, %v183
  %v239 = vsub.f32 %v26, %v183
  %v240 = vsub.f32 %v25, %v187
  %v241 = vsub.f32 %v26, %v187
  %v242 = vsub.f32 %v25, %v191
  %v243 = vsub.f32 %v26, %v191
  %v244 = vsub.f32 %v25, %v195
  %v245 = vsub.f32 %v26, %v195
  %v246 = vsub.f32 %v25, %v199
  %v247 = vsub.f32 %v26, %v199
  %v248 = vmul.f32 %v216, %v216
  %v249 = vmul.f32 %v217, %v217
  %v250 = vmul.f32 %v218, %v218
  %v251 = vmul.f32 %v219, %v219
  %v252 = vmul.f32 %v220, %v220
  %v253 = vmul.f32 %v221, %v221
  %v254 = vmul.f32 %v222, %v222
  %v255 = vmul.f32 %v223, %v223
  %v256 = vmul.f32 %v224, %v224
  %v257 = vmul.f32 %v225, %v225
  %v258 = vmul.f32 %v226, %v226
  %v259 = vmul.f32 %v227, %v227
  %v260 = vmul.f32 %v228, %v228
  %v261 = vmul.f32 %v229, %v229
  %v262 = vmul.f32 %v230, %v230
  %v263 = vmul.f32 %v231, %v231
  %v264 = vmul.f32 %v232, %v232
  %v265 = vmul.f32 %v233, %v233
  %v266 = vmul.f32 %v234, %v234
  %v267 = vmul.f32 %v235, %v235
  %v268 = vmul.f32 %v236, %v236
  %v269 = vmul.f32 %v237, %v237
  %v270 = vmul.f32 %v238, %v238
  %v271 = vmul.f32 %v239, %v239
  %v272 = vmul.f32 %v240, %v240
  %v273 = vmul.f32 %v241, %v241
  %v274 = vmul.f32 %v242, %v242
  %v275 = vmul.f32 %v243, %v243
  %v276 = vmul.f32 %v244, %v244
  %v277 = vmul.f32 %v245, %v245
  %v278 = vmul.f32 %v246, %v246
  %v279 = vmul.f32 %v247, %v247
  %vm280 = vcmask 23552
  %v281 = vsel %vm280, %v248, 0.0
  %282 = vadd.xlane.f32.xlu0 %v281
  %v283 = vpop.xlane.xlu0 %282
  %v284 = vsel %vm280, %v249, 0.0
  %285 = vadd.xlane.f32.xlu0 %v284
  %v286 = vpop.xlane.xlu0 %285
  %v287 = vsel %vm280, %v250, 0.0
  %288 = vadd.xlane.f32.xlu0 %v287
  %v289 = vpop.xlane.xlu0 %288
  %v290 = vsel %vm280, %v251, 0.0
  %291 = vadd.xlane.f32.xlu0 %v290
  %v292 = vpop.xlane.xlu0 %291
  %v293 = vsel %vm280, %v252, 0.0
  %294 = vadd.xlane.f32.xlu0 %v293
  %v295 = vpop.xlane.xlu0 %294
  %v296 = vsel %vm280, %v253, 0.0
  %297 = vadd.xlane.f32.xlu0 %v296
  %v298 = vpop.xlane.xlu0 %297
  %v299 = vsel %vm280, %v254, 0.0
  %300 = vadd.xlane.f32.xlu0 %v299
  %v301 = vpop.xlane.xlu0 %300
  %v302 = vsel %vm280, %v255, 0.0
  %303 = vadd.xlane.f32.xlu0 %v302
  %v304 = vpop.xlane.xlu0 %303
  %v305 = vsel %vm280, %v256, 0.0
  %306 = vadd.xlane.f32.xlu0 %v305
  %v307 = vpop.xlane.xlu0 %306
  %v308 = vsel %vm280, %v257, 0.0
  %309 = vadd.xlane.f32.xlu0 %v308
  %v310 = vpop.xlane.xlu0 %309
  %v311 = vsel %vm280, %v258, 0.0
  %312 = vadd.xlane.f32.xlu0 %v311
  %v313 = vpop.xlane.xlu0 %312
  %v314 = vsel %vm280, %v259, 0.0
  %315 = vadd.xlane.f32.xlu0 %v314
  %v316 = vpop.xlane.xlu0 %315
  %v317 = vsel %vm280, %v260, 0.0
  %318 = vadd.xlane.f32.xlu0 %v317
  %v319 = vpop.xlane.xlu0 %318
  %v320 = vsel %vm280, %v261, 0.0
  %321 = vadd.xlane.f32.xlu0 %v320
  %v322 = vpop.xlane.xlu0 %321
  %v323 = vsel %vm280, %v262, 0.0
  %324 = vadd.xlane.f32.xlu0 %v323
  %v325 = vpop.xlane.xlu0 %324
  %v326 = vsel %vm280, %v263, 0.0
  %327 = vadd.xlane.f32.xlu0 %v326
  %v328 = vpop.xlane.xlu0 %327
  %v329 = vsel %vm280, %v264, 0.0
  %330 = vadd.xlane.f32.xlu0 %v329
  %v331 = vpop.xlane.xlu0 %330
  %v332 = vsel %vm280, %v265, 0.0
  %333 = vadd.xlane.f32.xlu0 %v332
  %v334 = vpop.xlane.xlu0 %333
  %v335 = vsel %vm280, %v266, 0.0
  %336 = vadd.xlane.f32.xlu0 %v335
  %v337 = vpop.xlane.xlu0 %336
  %v338 = vsel %vm280, %v267, 0.0
  %339 = vadd.xlane.f32.xlu0 %v338
  %v340 = vpop.xlane.xlu0 %339
  %v341 = vsel %vm280, %v268, 0.0
  %342 = vadd.xlane.f32.xlu0 %v341
  %v343 = vpop.xlane.xlu0 %342
  %v344 = vsel %vm280, %v269, 0.0
  %345 = vadd.xlane.f32.xlu0 %v344
  %v346 = vpop.xlane.xlu0 %345
  %v347 = vsel %vm280, %v270, 0.0
  %348 = vadd.xlane.f32.xlu0 %v347
  %v349 = vpop.xlane.xlu0 %348
  %v350 = vsel %vm280, %v271, 0.0
  %351 = vadd.xlane.f32.xlu0 %v350
  %v352 = vpop.xlane.xlu0 %351
  %v353 = vsel %vm280, %v272, 0.0
  %354 = vadd.xlane.f32.xlu0 %v353
  %v355 = vpop.xlane.xlu0 %354
  %v356 = vsel %vm280, %v273, 0.0
  %357 = vadd.xlane.f32.xlu0 %v356
  %v358 = vpop.xlane.xlu0 %357
  %v359 = vsel %vm280, %v274, 0.0
  %360 = vadd.xlane.f32.xlu0 %v359
  %v361 = vpop.xlane.xlu0 %360
  %v362 = vsel %vm280, %v275, 0.0
  %363 = vadd.xlane.f32.xlu0 %v362
  %v364 = vpop.xlane.xlu0 %363
  %v365 = vsel %vm280, %v276, 0.0
  %366 = vadd.xlane.f32.xlu0 %v365
  %v367 = vpop.xlane.xlu0 %366
  %v368 = vsel %vm280, %v277, 0.0
  %369 = vadd.xlane.f32.xlu0 %v368
  %v370 = vpop.xlane.xlu0 %369
  %v371 = vsel %vm280, %v278, 0.0
  %372 = vadd.xlane.f32.xlu0 %v371
  %v373 = vpop.xlane.xlu0 %372
  %v374 = vsel %vm280, %v279, 0.0
  %375 = vadd.xlane.f32.xlu0 %v374
  %v376 = vpop.xlane.xlu0 %375
  %v377 = vlaneseq
  %v378 = vshrl.u32 %v377, 7
  %v379 = vadd.s32 %v378, 8
  %v380 = vlaneseq
  %v381 = vshrl.u32 %v380, 7
  %v382 = vsub.s32 0, %v381
  %v383 = vrot.slane %v378, %v382
  %v384 = vlaneseq
  %v385 = vshrl.u32 %v384, 7
  %v386 = vsub.s32 1, %v385
  %v387 = vrot.slane %v378, %v386
  %v388 = vlaneseq
  %v389 = vshrl.u32 %v388, 7
  %v390 = vsub.s32 2, %v389
  %v391 = vrot.slane %v378, %v390
  %v392 = vlaneseq
  %v393 = vshrl.u32 %v392, 7
  %v394 = vsub.s32 3, %v393
  %v395 = vrot.slane %v378, %v394
  %v396 = vlaneseq
  %v397 = vshrl.u32 %v396, 7
  %v398 = vsub.s32 4, %v397
  %v399 = vrot.slane %v378, %v398
  %v400 = vlaneseq
  %v401 = vshrl.u32 %v400, 7
  %v402 = vsub.s32 5, %v401
  %v403 = vrot.slane %v378, %v402
  %v404 = vlaneseq
  %v405 = vshrl.u32 %v404, 7
  %v406 = vsub.s32 6, %v405
  %v407 = vrot.slane %v378, %v406
  %v408 = vlaneseq
  %v409 = vshrl.u32 %v408, 7
  %v410 = vsub.s32 7, %v409
  %v411 = vrot.slane %v378, %v410
  %v412 = vlaneseq
  %v413 = vshrl.u32 %v412, 7
  %v414 = vsub.s32 0, %v413
  %v415 = vrot.slane %v379, %v414
  %v416 = vlaneseq
  %v417 = vshrl.u32 %v416, 7
  %v418 = vsub.s32 1, %v417
  %v419 = vrot.slane %v379, %v418
  %v420 = vlaneseq
  %v421 = vshrl.u32 %v420, 7
  %v422 = vsub.s32 2, %v421
  %v423 = vrot.slane %v379, %v422
  %v424 = vlaneseq
  %v425 = vshrl.u32 %v424, 7
  %v426 = vsub.s32 3, %v425
  %v427 = vrot.slane %v379, %v426
  %v428 = vlaneseq
  %v429 = vshrl.u32 %v428, 7
  %v430 = vsub.s32 4, %v429
  %v431 = vrot.slane %v379, %v430
  %v432 = vlaneseq
  %v433 = vshrl.u32 %v432, 7
  %v434 = vsub.s32 5, %v433
  %v435 = vrot.slane %v379, %v434
  %v436 = vlaneseq
  %v437 = vshrl.u32 %v436, 7
  %v438 = vsub.s32 6, %v437
  %v439 = vrot.slane %v379, %v438
  %v440 = vlaneseq
  %v441 = vshrl.u32 %v440, 7
  %v442 = vsub.s32 7, %v441
  %v443 = vrot.slane %v379, %v442
  %v444 = vstv %s24
  %v445 = vadd.s32 %v383, %v444
  %v446 = vadd.s32 %v387, %v444
  %v447 = vadd.s32 %v391, %v444
  %v448 = vadd.s32 %v395, %v444
  %v449 = vadd.s32 %v399, %v444
  %v450 = vadd.s32 %v403, %v444
  %v451 = vadd.s32 %v407, %v444
  %v452 = vadd.s32 %v411, %v444
  %v453 = vadd.s32 %v415, %v444
  %v454 = vadd.s32 %v419, %v444
  %v455 = vadd.s32 %v423, %v444
  %v456 = vadd.s32 %v427, %v444
  %v457 = vadd.s32 %v431, %v444
  %v458 = vadd.s32 %v435, %v444
  %v459 = vadd.s32 %v439, %v444
  %v460 = vadd.s32 %v443, %v444
  %vm461 = vcmp.lt.f32.partialorder %v283, 25.0
  %vm462 = vcmp.lt.f32.partialorder %v286, 25.0
  %vm463 = vcmp.lt.f32.partialorder %v289, 25.0
  %vm464 = vcmp.lt.f32.partialorder %v292, 25.0
  %vm465 = vcmp.lt.f32.partialorder %v295, 25.0
  %vm466 = vcmp.lt.f32.partialorder %v298, 25.0
  %vm467 = vcmp.lt.f32.partialorder %v301, 25.0
  %vm468 = vcmp.lt.f32.partialorder %v304, 25.0
  %vm469 = vcmp.lt.f32.partialorder %v307, 25.0
  %vm470 = vcmp.lt.f32.partialorder %v310, 25.0
  %vm471 = vcmp.lt.f32.partialorder %v313, 25.0
  %vm472 = vcmp.lt.f32.partialorder %v316, 25.0
  %vm473 = vcmp.lt.f32.partialorder %v319, 25.0
  %vm474 = vcmp.lt.f32.partialorder %v322, 25.0
  %vm475 = vcmp.lt.f32.partialorder %v325, 25.0
  %vm476 = vcmp.lt.f32.partialorder %v328, 25.0
  %vm477 = vcmp.lt.f32.partialorder %v331, 25.0
  %vm478 = vcmp.lt.f32.partialorder %v334, 25.0
  %vm479 = vcmp.lt.f32.partialorder %v337, 25.0
  %vm480 = vcmp.lt.f32.partialorder %v340, 25.0
  %vm481 = vcmp.lt.f32.partialorder %v343, 25.0
  %vm482 = vcmp.lt.f32.partialorder %v346, 25.0
  %vm483 = vcmp.lt.f32.partialorder %v349, 25.0
  %vm484 = vcmp.lt.f32.partialorder %v352, 25.0
  %vm485 = vcmp.lt.f32.partialorder %v355, 25.0
  %vm486 = vcmp.lt.f32.partialorder %v358, 25.0
  %vm487 = vcmp.lt.f32.partialorder %v361, 25.0
  %vm488 = vcmp.lt.f32.partialorder %v364, 25.0
  %vm489 = vcmp.lt.f32.partialorder %v367, 25.0
  %vm490 = vcmp.lt.f32.partialorder %v370, 25.0
  %vm491 = vcmp.lt.f32.partialorder %v373, 25.0
  %vm492 = vcmp.lt.f32.partialorder %v376, 25.0
  %vm493 = vcmp.ne.s32.totalorder %v378, %v445
  %vm494 = vcmp.ne.s32.totalorder %v379, %v445
  %vm495 = vcmp.ne.s32.totalorder %v378, %v446
  %vm496 = vcmp.ne.s32.totalorder %v379, %v446
  %vm497 = vcmp.ne.s32.totalorder %v378, %v447
  %vm498 = vcmp.ne.s32.totalorder %v379, %v447
  %vm499 = vcmp.ne.s32.totalorder %v378, %v448
  %vm500 = vcmp.ne.s32.totalorder %v379, %v448
  %vm501 = vcmp.ne.s32.totalorder %v378, %v449
  %vm502 = vcmp.ne.s32.totalorder %v379, %v449
  %vm503 = vcmp.ne.s32.totalorder %v378, %v450
  %vm504 = vcmp.ne.s32.totalorder %v379, %v450
  %vm505 = vcmp.ne.s32.totalorder %v378, %v451
  %vm506 = vcmp.ne.s32.totalorder %v379, %v451
  %vm507 = vcmp.ne.s32.totalorder %v378, %v452
  %vm508 = vcmp.ne.s32.totalorder %v379, %v452
  %vm509 = vcmp.ne.s32.totalorder %v378, %v453
  %vm510 = vcmp.ne.s32.totalorder %v379, %v453
  %vm511 = vcmp.ne.s32.totalorder %v378, %v454
  %vm512 = vcmp.ne.s32.totalorder %v379, %v454
  %vm513 = vcmp.ne.s32.totalorder %v378, %v455
  %vm514 = vcmp.ne.s32.totalorder %v379, %v455
  %vm515 = vcmp.ne.s32.totalorder %v378, %v456
  %vm516 = vcmp.ne.s32.totalorder %v379, %v456
  %vm517 = vcmp.ne.s32.totalorder %v378, %v457
  %vm518 = vcmp.ne.s32.totalorder %v379, %v457
  %vm519 = vcmp.ne.s32.totalorder %v378, %v458
  %vm520 = vcmp.ne.s32.totalorder %v379, %v458
  %vm521 = vcmp.ne.s32.totalorder %v378, %v459
  %vm522 = vcmp.ne.s32.totalorder %v379, %v459
  %vm523 = vcmp.ne.s32.totalorder %v378, %v460
  %vm524 = vcmp.ne.s32.totalorder %v379, %v460
  %vm525 = vmand %vm461, %vm493
  %vm526 = vmand %vm462, %vm494
  %vm527 = vmand %vm463, %vm495
  %vm528 = vmand %vm464, %vm496
  %vm529 = vmand %vm465, %vm497
  %vm530 = vmand %vm466, %vm498
  %vm531 = vmand %vm467, %vm499
  %vm532 = vmand %vm468, %vm500
  %vm533 = vmand %vm469, %vm501
  %vm534 = vmand %vm470, %vm502
  %vm535 = vmand %vm471, %vm503
  %vm536 = vmand %vm472, %vm504
  %vm537 = vmand %vm473, %vm505
  %vm538 = vmand %vm474, %vm506
  %vm539 = vmand %vm475, %vm507
  %vm540 = vmand %vm476, %vm508
  %vm541 = vmand %vm477, %vm509
  %vm542 = vmand %vm478, %vm510
  %vm543 = vmand %vm479, %vm511
  %vm544 = vmand %vm480, %vm512
  %vm545 = vmand %vm481, %vm513
  %vm546 = vmand %vm482, %vm514
  %vm547 = vmand %vm483, %vm515
  %vm548 = vmand %vm484, %vm516
  %vm549 = vmand %vm485, %vm517
  %vm550 = vmand %vm486, %vm518
  %vm551 = vmand %vm487, %vm519
  %vm552 = vmand %vm488, %vm520
  %vm553 = vmand %vm489, %vm521
  %vm554 = vmand %vm490, %vm522
  %vm555 = vmand %vm491, %vm523
  %vm556 = vmand %vm492, %vm524
  %vm557 = vcmp.lt.s32.totalorder %v378, 16
  %vm558 = vcmp.lt.s32.totalorder %v379, 16
  %v559 = vsel %vm557, 1, 0
  %v560 = vsel %vm558, 1, 0
  %vm561 = vcmp.eq.s32.totalorder %v559, 1
  %vm562 = vcmp.eq.s32.totalorder %v560, 1
  %vm563 = vmand %vm525, %vm561
  %vm564 = vmand %vm526, %vm562
  %vm565 = vmand %vm527, %vm561
  %vm566 = vmand %vm528, %vm562
  %vm567 = vmand %vm529, %vm561
  %vm568 = vmand %vm530, %vm562
  %vm569 = vmand %vm531, %vm561
  %vm570 = vmand %vm532, %vm562
  %vm571 = vmand %vm533, %vm561
  %vm572 = vmand %vm534, %vm562
  %vm573 = vmand %vm535, %vm561
  %vm574 = vmand %vm536, %vm562
  %vm575 = vmand %vm537, %vm561
  %vm576 = vmand %vm538, %vm562
  %vm577 = vmand %vm539, %vm561
  %vm578 = vmand %vm540, %vm562
  %vm579 = vmand %vm541, %vm561
  %vm580 = vmand %vm542, %vm562
  %vm581 = vmand %vm543, %vm561
  %vm582 = vmand %vm544, %vm562
  %vm583 = vmand %vm545, %vm561
  %vm584 = vmand %vm546, %vm562
  %vm585 = vmand %vm547, %vm561
  %vm586 = vmand %vm548, %vm562
  %vm587 = vmand %vm549, %vm561
  %vm588 = vmand %vm550, %vm562
  %vm589 = vmand %vm551, %vm561
  %vm590 = vmand %vm552, %vm562
  %vm591 = vmand %vm553, %vm561
  %vm592 = vmand %vm554, %vm562
  %vm593 = vmand %vm555, %vm561
  %vm594 = vmand %vm556, %vm562
  %v595 = vsel %vm563, 1, 0
  %v596 = vsel %vm564, 1, 0
  %v597 = vsel %vm565, 1, 0
  %v598 = vsel %vm566, 1, 0
  %v599 = vsel %vm567, 1, 0
  %v600 = vsel %vm568, 1, 0
  %v601 = vsel %vm569, 1, 0
  %v602 = vsel %vm570, 1, 0
  %v603 = vsel %vm571, 1, 0
  %v604 = vsel %vm572, 1, 0
  %v605 = vsel %vm573, 1, 0
  %v606 = vsel %vm574, 1, 0
  %v607 = vsel %vm575, 1, 0
  %v608 = vsel %vm576, 1, 0
  %v609 = vsel %vm577, 1, 0
  %v610 = vsel %vm578, 1, 0
  %v611 = vsel %vm579, 1, 0
  %v612 = vsel %vm580, 1, 0
  %v613 = vsel %vm581, 1, 0
  %v614 = vsel %vm582, 1, 0
  %v615 = vsel %vm583, 1, 0
  %v616 = vsel %vm584, 1, 0
  %v617 = vsel %vm585, 1, 0
  %v618 = vsel %vm586, 1, 0
  %v619 = vsel %vm587, 1, 0
  %v620 = vsel %vm588, 1, 0
  %v621 = vsel %vm589, 1, 0
  %v622 = vsel %vm590, 1, 0
  %v623 = vsel %vm591, 1, 0
  %v624 = vsel %vm592, 1, 0
  %v625 = vsel %vm593, 1, 0
  %v626 = vsel %vm594, 1, 0
  %v627 = vcvt.s32.f32 %v595
  %v628 = vcvt.s32.f32 %v596
  %v629 = vcvt.s32.f32 %v597
  %v630 = vcvt.s32.f32 %v598
  %v631 = vcvt.s32.f32 %v599
  %v632 = vcvt.s32.f32 %v600
  %v633 = vcvt.s32.f32 %v601
  %v634 = vcvt.s32.f32 %v602
  %v635 = vcvt.s32.f32 %v603
  %v636 = vcvt.s32.f32 %v604
  %v637 = vcvt.s32.f32 %v605
  %v638 = vcvt.s32.f32 %v606
  %v639 = vcvt.s32.f32 %v607
  %v640 = vcvt.s32.f32 %v608
  %v641 = vcvt.s32.f32 %v609
  %v642 = vcvt.s32.f32 %v610
  %v643 = vcvt.s32.f32 %v611
  %v644 = vcvt.s32.f32 %v612
  %v645 = vcvt.s32.f32 %v613
  %v646 = vcvt.s32.f32 %v614
  %v647 = vcvt.s32.f32 %v615
  %v648 = vcvt.s32.f32 %v616
  %v649 = vcvt.s32.f32 %v617
  %v650 = vcvt.s32.f32 %v618
  %v651 = vcvt.s32.f32 %v619
  %v652 = vcvt.s32.f32 %v620
  %v653 = vcvt.s32.f32 %v621
  %v654 = vcvt.s32.f32 %v622
  %v655 = vcvt.s32.f32 %v623
  %v656 = vcvt.s32.f32 %v624
  %v657 = vcvt.s32.f32 %v625
  %v658 = vcvt.s32.f32 %v626
  %v659 = vmul.f32 %v283, 0.5
  %v660 = vmul.f32 %v286, 0.5
  %v661 = vmul.f32 %v289, 0.5
  %v662 = vmul.f32 %v292, 0.5
  %v663 = vmul.f32 %v295, 0.5
  %v664 = vmul.f32 %v298, 0.5
  %v665 = vmul.f32 %v301, 0.5
  %v666 = vmul.f32 %v304, 0.5
  %v667 = vmul.f32 %v307, 0.5
  %v668 = vmul.f32 %v310, 0.5
  %v669 = vmul.f32 %v313, 0.5
  %v670 = vmul.f32 %v316, 0.5
  %v671 = vmul.f32 %v319, 0.5
  %v672 = vmul.f32 %v322, 0.5
  %v673 = vmul.f32 %v325, 0.5
  %v674 = vmul.f32 %v328, 0.5
  %v675 = vmul.f32 %v331, 0.5
  %v676 = vmul.f32 %v334, 0.5
  %v677 = vmul.f32 %v337, 0.5
  %v678 = vmul.f32 %v340, 0.5
  %v679 = vmul.f32 %v343, 0.5
  %v680 = vmul.f32 %v346, 0.5
  %v681 = vmul.f32 %v349, 0.5
  %v682 = vmul.f32 %v352, 0.5
  %v683 = vmul.f32 %v355, 0.5
  %v684 = vmul.f32 %v358, 0.5
  %v685 = vmul.f32 %v361, 0.5
  %v686 = vmul.f32 %v364, 0.5
  %v687 = vmul.f32 %v367, 0.5
  %v688 = vmul.f32 %v370, 0.5
  %v689 = vmul.f32 %v373, 0.5
  %v690 = vmul.f32 %v376, 0.5
  %v691 = vmul.f32 %v283, 0.25
  %v692 = vmul.f32 %v286, 0.25
  %v693 = vmul.f32 %v289, 0.25
  %v694 = vmul.f32 %v292, 0.25
  %v695 = vmul.f32 %v295, 0.25
  %v696 = vmul.f32 %v298, 0.25
  %v697 = vmul.f32 %v301, 0.25
  %v698 = vmul.f32 %v304, 0.25
  %v699 = vmul.f32 %v307, 0.25
  %v700 = vmul.f32 %v310, 0.25
  %v701 = vmul.f32 %v313, 0.25
  %v702 = vmul.f32 %v316, 0.25
  %v703 = vmul.f32 %v319, 0.25
  %v704 = vmul.f32 %v322, 0.25
  %v705 = vmul.f32 %v325, 0.25
  %v706 = vmul.f32 %v328, 0.25
  %v707 = vmul.f32 %v331, 0.25
  %v708 = vmul.f32 %v334, 0.25
  %v709 = vmul.f32 %v337, 0.25
  %v710 = vmul.f32 %v340, 0.25
  %v711 = vmul.f32 %v343, 0.25
  %v712 = vmul.f32 %v346, 0.25
  %v713 = vmul.f32 %v349, 0.25
  %v714 = vmul.f32 %v352, 0.25
  %v715 = vmul.f32 %v355, 0.25
  %v716 = vmul.f32 %v358, 0.25
  %v717 = vmul.f32 %v361, 0.25
  %v718 = vmul.f32 %v364, 0.25
  %v719 = vmul.f32 %v367, 0.25
  %v720 = vmul.f32 %v370, 0.25
  %v721 = vmul.f32 %v373, 0.25
  %v722 = vmul.f32 %v376, 0.25
  %v723 = vmul.f32 %v283, 0.125
  %v724 = vmul.f32 %v286, 0.125
  %v725 = vmul.f32 %v289, 0.125
  %v726 = vmul.f32 %v292, 0.125
  %v727 = vmul.f32 %v295, 0.125
  %v728 = vmul.f32 %v298, 0.125
  %v729 = vmul.f32 %v301, 0.125
  %v730 = vmul.f32 %v304, 0.125
  %v731 = vmul.f32 %v307, 0.125
  %v732 = vmul.f32 %v310, 0.125
  %v733 = vmul.f32 %v313, 0.125
  %v734 = vmul.f32 %v316, 0.125
  %v735 = vmul.f32 %v319, 0.125
  %v736 = vmul.f32 %v322, 0.125
  %v737 = vmul.f32 %v325, 0.125
  %v738 = vmul.f32 %v328, 0.125
  %v739 = vmul.f32 %v331, 0.125
  %v740 = vmul.f32 %v334, 0.125
  %v741 = vmul.f32 %v337, 0.125
  %v742 = vmul.f32 %v340, 0.125
  %v743 = vmul.f32 %v343, 0.125
  %v744 = vmul.f32 %v346, 0.125
  %v745 = vmul.f32 %v349, 0.125
  %v746 = vmul.f32 %v352, 0.125
  %v747 = vmul.f32 %v355, 0.125
  %v748 = vmul.f32 %v358, 0.125
  %v749 = vmul.f32 %v361, 0.125
  %v750 = vmul.f32 %v364, 0.125
  %v751 = vmul.f32 %v367, 0.125
  %v752 = vmul.f32 %v370, 0.125
  %v753 = vmul.f32 %v373, 0.125
  %v754 = vmul.f32 %v376, 0.125
  %vm755 = vcmask 7168
  %v756 = vsel %vm755, %v283, %v659
  %v757 = vsel %vm755, %v286, %v660
  %v758 = vsel %vm755, %v289, %v661
  %v759 = vsel %vm755, %v292, %v662
  %v760 = vsel %vm755, %v295, %v663
  %v761 = vsel %vm755, %v298, %v664
  %v762 = vsel %vm755, %v301, %v665
  %v763 = vsel %vm755, %v304, %v666
  %v764 = vsel %vm755, %v307, %v667
  %v765 = vsel %vm755, %v310, %v668
  %v766 = vsel %vm755, %v313, %v669
  %v767 = vsel %vm755, %v316, %v670
  %v768 = vsel %vm755, %v319, %v671
  %v769 = vsel %vm755, %v322, %v672
  %v770 = vsel %vm755, %v325, %v673
  %v771 = vsel %vm755, %v328, %v674
  %v772 = vsel %vm755, %v331, %v675
  %v773 = vsel %vm755, %v334, %v676
  %v774 = vsel %vm755, %v337, %v677
  %v775 = vsel %vm755, %v340, %v678
  %v776 = vsel %vm755, %v343, %v679
  %v777 = vsel %vm755, %v346, %v680
  %v778 = vsel %vm755, %v349, %v681
  %v779 = vsel %vm755, %v352, %v682
  %v780 = vsel %vm755, %v355, %v683
  %v781 = vsel %vm755, %v358, %v684
  %v782 = vsel %vm755, %v361, %v685
  %v783 = vsel %vm755, %v364, %v686
  %v784 = vsel %vm755, %v367, %v687
  %v785 = vsel %vm755, %v370, %v688
  %v786 = vsel %vm755, %v373, %v689
  %v787 = vsel %vm755, %v376, %v690
  %vm788 = vcmask 15360
  %v789 = vsel %vm788, %v756, %v691
  %v790 = vsel %vm788, %v757, %v692
  %v791 = vsel %vm788, %v758, %v693
  %v792 = vsel %vm788, %v759, %v694
  %v793 = vsel %vm788, %v760, %v695
  %v794 = vsel %vm788, %v761, %v696
  %v795 = vsel %vm788, %v762, %v697
  %v796 = vsel %vm788, %v763, %v698
  %v797 = vsel %vm788, %v764, %v699
  %v798 = vsel %vm788, %v765, %v700
  %v799 = vsel %vm788, %v766, %v701
  %v800 = vsel %vm788, %v767, %v702
  %v801 = vsel %vm788, %v768, %v703
  %v802 = vsel %vm788, %v769, %v704
  %v803 = vsel %vm788, %v770, %v705
  %v804 = vsel %vm788, %v771, %v706
  %v805 = vsel %vm788, %v772, %v707
  %v806 = vsel %vm788, %v773, %v708
  %v807 = vsel %vm788, %v774, %v709
  %v808 = vsel %vm788, %v775, %v710
  %v809 = vsel %vm788, %v776, %v711
  %v810 = vsel %vm788, %v777, %v712
  %v811 = vsel %vm788, %v778, %v713
  %v812 = vsel %vm788, %v779, %v714
  %v813 = vsel %vm788, %v780, %v715
  %v814 = vsel %vm788, %v781, %v716
  %v815 = vsel %vm788, %v782, %v717
  %v816 = vsel %vm788, %v783, %v718
  %v817 = vsel %vm788, %v784, %v719
  %v818 = vsel %vm788, %v785, %v720
  %v819 = vsel %vm788, %v786, %v721
  %v820 = vsel %vm788, %v787, %v722
  %v821 = vsel %vm280, %v789, %v723
  %v822 = vsel %vm280, %v790, %v724
  %v823 = vsel %vm280, %v791, %v725
  %v824 = vsel %vm280, %v792, %v726
  %v825 = vsel %vm280, %v793, %v727
  %v826 = vsel %vm280, %v794, %v728
  %v827 = vsel %vm280, %v795, %v729
  %v828 = vsel %vm280, %v796, %v730
  %v829 = vsel %vm280, %v797, %v731
  %v830 = vsel %vm280, %v798, %v732
  %v831 = vsel %vm280, %v799, %v733
  %v832 = vsel %vm280, %v800, %v734
  %v833 = vsel %vm280, %v801, %v735
  %v834 = vsel %vm280, %v802, %v736
  %v835 = vsel %vm280, %v803, %v737
  %v836 = vsel %vm280, %v804, %v738
  %v837 = vsel %vm280, %v805, %v739
  %v838 = vsel %vm280, %v806, %v740
  %v839 = vsel %vm280, %v807, %v741
  %v840 = vsel %vm280, %v808, %v742
  %v841 = vsel %vm280, %v809, %v743
  %v842 = vsel %vm280, %v810, %v744
  %v843 = vsel %vm280, %v811, %v745
  %v844 = vsel %vm280, %v812, %v746
  %v845 = vsel %vm280, %v813, %v747
  %v846 = vsel %vm280, %v814, %v748
  %v847 = vsel %vm280, %v815, %v749
  %v848 = vsel %vm280, %v816, %v750
  %v849 = vsel %vm280, %v817, %v751
  %v850 = vsel %vm280, %v818, %v752
  %v851 = vsel %vm280, %v819, %v753
  %v852 = vsel %vm280, %v820, %v754
  %v853 = vand.u32 2147483647, %v821
  %vm854 = vcmp.le.f32.partialorder %v853, 0.7853982
  %vm855 = vcmp.lt.s32.totalorder %v821, 0
  %v856 = vand.u32 %v821, 2139095040
  %v857 = vshrl.u32 %v856, 23
  %v858 = vsub.s32 %v857, 127
  %v859 = vand.u32 2147483647, %v821
  %v860 = vand.u32 %v859, 8388607
  %v861 = vor.u32 %v860, 8388608
  %v862 = vsub.s32 0, %v861
  %v863 = vadd.s32 %v858, 1
  %vm864 = vcmp.gt.s32.totalorder %v863, 0
  %v865 = vsel %vm864, %v863, 0
  %v866 = vshrl.u32 %v865, 5
  %v867 = vand.u32 %v865, 31
  %v868 = vsub.s32 32, %v867
  %v869 = vshrl.u32 683565275, %v868
  %v870 = vshll.u32 683565275, %v867
  %v871 = vshrl.u32 2475754826, %v868
  %v872 = vor.u32 %v870, %v871
  %v873 = vshll.u32 2475754826, %v867
  %v874 = vshrl.u32 2131351028, %v868
  %v875 = vor.u32 %v873, %v874
  %v876 = vshll.u32 2131351028, %v867
  %v877 = vshrl.u32 2102212464, %v868
  %v878 = vor.u32 %v876, %v877
  %v879 = vshll.u32 2102212464, %v867
  %v880 = vshrl.u32 920167782, %v868
  %v881 = vor.u32 %v879, %v880
  %v882 = vshll.u32 920167782, %v867
  %v883 = vshrl.u32 1326507024, %v868
  %v884 = vor.u32 %v882, %v883
  %vm885 = vcmp.lt.s32.totalorder %v866, 1
  %vm886 = vcmp.lt.s32.totalorder %v866, 2
  %vm887 = vcmp.lt.s32.totalorder %v866, 3
  %vm888 = vcmp.lt.s32.totalorder %v866, 4
  %v889 = vsel %vm885, %v869, %v872
  %v890 = vsel %vm888, %v878, 2102212464
  %v891 = vsel %vm887, %v875, %v890
  %v892 = vsel %vm886, %v889, %v891
  %v893 = vsel %vm885, %v872, %v875
  %v894 = vsel %vm888, %v881, 920167782
  %v895 = vsel %vm887, %v878, %v894
  %v896 = vsel %vm886, %v893, %v895
  %v897 = vsel %vm885, %v875, %v878
  %v898 = vsel %vm888, %v884, 1326507024
  %v899 = vsel %vm887, %v881, %v898
  %v900 = vsel %vm886, %v897, %v899
  %v901 = vshll.u32 %v861, 8
  %v902 = vmul.u32.u64.compose %v901, %v900
  %v903 = vextract.low.u32 %v902
  %v904 = vextract.high.u32 %v902
  %v905 = vmul.u32.u64.compose %v901, %v896
  %v906 = vextract.low.u32 %v905
  %v907 = vextract.high.u32 %v905
  %v908 = vmul.u32 %v901, %v892
  %v909 = vadd.s32 %v904, %v906
  %vm910 = vc.u32 %v904, %v906
  %v911 = vadd.s32 %v907, 1
  %v912 = vsel %vm910, %v911, %v907
  %v913 = vadd.s32 %v908, %v912
  %v914 = vadd.s32 %v913, 536870912
  %v915 = vshrl.u32 %v914, 30
  %v916 = vshll.u32 %v915, 30
  %v917 = vsub.s32 %v913, %v916
  %vm918 = vcmp.lt.s32.totalorder %v917, 0
  %v919 = vsub.s32 0, %v917
  %v920 = vsel %vm918, %v919, %v917
  %v921 = vclz %v920
  %v922 = vsub.s32 %v921, 2
  %vm923 = vcmp.gt.s32.totalorder 0, %v922
  %v924 = vsel %vm923, 0, %v922
  %v925 = vsub.s32 32, %v924
  %v926 = vshll.u32 %v917, %v924
  %v927 = vshrl.u32 %v909, %v925
  %v928 = vor.u32 %v926, %v927
  %v929 = vsub.s32 4294967266, %v924
  %v930 = vadd.s32 %v929, 127
  %v931 = vshll.u32 %v930, 23
  %v932 = vor.u32 4788187, %v931
  %v933 = vand.u32 2147483647, %v932
  %v935 = vcvt.s32.f32 %v928
  %v936 = vmul.f32 %v935, %v933
  %v937 = vxor.u32 %v936, 2147483648
  %v938 = vsel %vm855, %v937, %v936
  %v939 = vsub.s32 4, %v915
  %v940 = vsel %vm855, %v939, %v915
  %v941 = vsel %vm854, %v821, %v938
  %v942 = vsel %vm854, 0, %v940
  %v943 = vcosq.f32.pop %v941
  %v944 = vsinq.f32.pop %v941
  %vm945 = vweird.f32 %v821
  %v946 = vadd.s32 %v942, 3
  %v947 = vand.u32 %v946, 3
  %vm948 = vcmp.lt.s32.totalorder %v947, 2
  %vm949 = vcmp.eq.s32.totalorder %v947, 0
  %v950 = vxor.u32 %v944, 2147483648
  %v951 = vsel %vm949, %v943, %v950
  %vm952 = vcmp.eq.s32.totalorder %v947, 2
  %v953 = vxor.u32 %v943, 2147483648
  %v954 = vsel %vm952, %v953, %v944
  %v955 = vsel %vm948, %v951, %v954
  %v956 = vsel %vm945, nan, %v955
  %v957 = vand.u32 2147483647, %v822
  %vm958 = vcmp.le.f32.partialorder %v957, 0.7853982
  %vm959 = vcmp.lt.s32.totalorder %v822, 0
  %v960 = vand.u32 %v822, 2139095040
  %v961 = vshrl.u32 %v960, 23
  %v962 = vsub.s32 %v961, 127
  %v963 = vand.u32 2147483647, %v822
  %v964 = vand.u32 %v963, 8388607
  %v965 = vor.u32 %v964, 8388608
  %v966 = vsub.s32 0, %v965
  %v967 = vadd.s32 %v962, 1
  %vm968 = vcmp.gt.s32.totalorder %v967, 0
  %v969 = vsel %vm968, %v967, 0
  %v970 = vshrl.u32 %v969, 5
  %v971 = vand.u32 %v969, 31
  %v972 = vsub.s32 32, %v971
  %v973 = vshrl.u32 683565275, %v972
  %v974 = vshll.u32 683565275, %v971
  %v975 = vshrl.u32 2475754826, %v972
  %v976 = vor.u32 %v974, %v975
  %v977 = vshll.u32 2475754826, %v971
  %v978 = vshrl.u32 2131351028, %v972
  %v979 = vor.u32 %v977, %v978
  %v980 = vshll.u32 2131351028, %v971
  %v981 = vshrl.u32 2102212464, %v972
  %v982 = vor.u32 %v980, %v981
  %v983 = vshll.u32 2102212464, %v971
  %v984 = vshrl.u32 920167782, %v972
  %v985 = vor.u32 %v983, %v984
  %v986 = vshll.u32 920167782, %v971
  %v987 = vshrl.u32 1326507024, %v972
  %v988 = vor.u32 %v986, %v987
  %vm989 = vcmp.lt.s32.totalorder %v970, 1
  %vm990 = vcmp.lt.s32.totalorder %v970, 2
  %vm991 = vcmp.lt.s32.totalorder %v970, 3
  %vm992 = vcmp.lt.s32.totalorder %v970, 4
  %v993 = vsel %vm989, %v973, %v976
  %v994 = vsel %vm992, %v982, 2102212464
  %v995 = vsel %vm991, %v979, %v994
  %v996 = vsel %vm990, %v993, %v995
  %v997 = vsel %vm989, %v976, %v979
  %v998 = vsel %vm992, %v985, 920167782
  %v999 = vsel %vm991, %v982, %v998
  %v1000 = vsel %vm990, %v997, %v999
  %v1001 = vsel %vm989, %v979, %v982
  %v1002 = vsel %vm992, %v988, 1326507024
  %v1003 = vsel %vm991, %v985, %v1002
  %v1004 = vsel %vm990, %v1001, %v1003
  %v1005 = vshll.u32 %v965, 8
  %v1006 = vmul.u32.u64.compose %v1005, %v1004
  %v1007 = vextract.low.u32 %v1006
  %v1008 = vextract.high.u32 %v1006
  %v1009 = vmul.u32.u64.compose %v1005, %v1000
  %v1010 = vextract.low.u32 %v1009
  %v1011 = vextract.high.u32 %v1009
  %v1012 = vmul.u32 %v1005, %v996
  %v1013 = vadd.s32 %v1008, %v1010
  %vm1014 = vc.u32 %v1008, %v1010
  %v1015 = vadd.s32 %v1011, 1
  %v1016 = vsel %vm1014, %v1015, %v1011
  %v1017 = vadd.s32 %v1012, %v1016
  %v1018 = vadd.s32 %v1017, 536870912
  %v1019 = vshrl.u32 %v1018, 30
  %v1020 = vshll.u32 %v1019, 30
  %v1021 = vsub.s32 %v1017, %v1020
  %vm1022 = vcmp.lt.s32.totalorder %v1021, 0
  %v1023 = vsub.s32 0, %v1021
  %v1024 = vsel %vm1022, %v1023, %v1021
  %v1025 = vclz %v1024
  %v1026 = vsub.s32 %v1025, 2
  %vm1027 = vcmp.gt.s32.totalorder 0, %v1026
  %v1028 = vsel %vm1027, 0, %v1026
  %v1029 = vsub.s32 32, %v1028
  %v1030 = vshll.u32 %v1021, %v1028
  %v1031 = vshrl.u32 %v1013, %v1029
  %v1032 = vor.u32 %v1030, %v1031
  %v1033 = vsub.s32 4294967266, %v1028
  %v1034 = vadd.s32 %v1033, 127
  %v1035 = vshll.u32 %v1034, 23
  %v1036 = vor.u32 4788187, %v1035
  %v1037 = vand.u32 2147483647, %v1036
  %v1039 = vcvt.s32.f32 %v1032
  %v1040 = vmul.f32 %v1039, %v1037
  %v1041 = vxor.u32 %v1040, 2147483648
  %v1042 = vsel %vm959, %v1041, %v1040
  %v1043 = vsub.s32 4, %v1019
  %v1044 = vsel %vm959, %v1043, %v1019
  %v1045 = vsel %vm958, %v822, %v1042
  %v1046 = vsel %vm958, 0, %v1044
  %v1047 = vcosq.f32.pop %v1045
  %v1048 = vsinq.f32.pop %v1045
  %vm1049 = vweird.f32 %v822
  %v1050 = vadd.s32 %v1046, 3
  %v1051 = vand.u32 %v1050, 3
  %vm1052 = vcmp.lt.s32.totalorder %v1051, 2
  %vm1053 = vcmp.eq.s32.totalorder %v1051, 0
  %v1054 = vxor.u32 %v1048, 2147483648
  %v1055 = vsel %vm1053, %v1047, %v1054
  %vm1056 = vcmp.eq.s32.totalorder %v1051, 2
  %v1057 = vxor.u32 %v1047, 2147483648
  %v1058 = vsel %vm1056, %v1057, %v1048
  %v1059 = vsel %vm1052, %v1055, %v1058
  %v1060 = vsel %vm1049, nan, %v1059
  %v1061 = vand.u32 2147483647, %v823
  %vm1062 = vcmp.le.f32.partialorder %v1061, 0.7853982
  %vm1063 = vcmp.lt.s32.totalorder %v823, 0
  %v1064 = vand.u32 %v823, 2139095040
  %v1065 = vshrl.u32 %v1064, 23
  %v1066 = vsub.s32 %v1065, 127
  %v1067 = vand.u32 2147483647, %v823
  %v1068 = vand.u32 %v1067, 8388607
  %v1069 = vor.u32 %v1068, 8388608
  %v1070 = vsub.s32 0, %v1069
  %v1071 = vadd.s32 %v1066, 1
  %vm1072 = vcmp.gt.s32.totalorder %v1071, 0
  %v1073 = vsel %vm1072, %v1071, 0
  %v1074 = vshrl.u32 %v1073, 5
  %v1075 = vand.u32 %v1073, 31
  %v1076 = vsub.s32 32, %v1075
  %v1077 = vshrl.u32 683565275, %v1076
  %v1078 = vshll.u32 683565275, %v1075
  %v1079 = vshrl.u32 2475754826, %v1076
  %v1080 = vor.u32 %v1078, %v1079
  %v1081 = vshll.u32 2475754826, %v1075
  %v1082 = vshrl.u32 2131351028, %v1076
  %v1083 = vor.u32 %v1081, %v1082
  %v1084 = vshll.u32 2131351028, %v1075
  %v1085 = vshrl.u32 2102212464, %v1076
  %v1086 = vor.u32 %v1084, %v1085
  %v1087 = vshll.u32 2102212464, %v1075
  %v1088 = vshrl.u32 920167782, %v1076
  %v1089 = vor.u32 %v1087, %v1088
  %v1090 = vshll.u32 920167782, %v1075
  %v1091 = vshrl.u32 1326507024, %v1076
  %v1092 = vor.u32 %v1090, %v1091
  %vm1093 = vcmp.lt.s32.totalorder %v1074, 1
  %vm1094 = vcmp.lt.s32.totalorder %v1074, 2
  %vm1095 = vcmp.lt.s32.totalorder %v1074, 3
  %vm1096 = vcmp.lt.s32.totalorder %v1074, 4
  %v1097 = vsel %vm1093, %v1077, %v1080
  %v1098 = vsel %vm1096, %v1086, 2102212464
  %v1099 = vsel %vm1095, %v1083, %v1098
  %v1100 = vsel %vm1094, %v1097, %v1099
  %v1101 = vsel %vm1093, %v1080, %v1083
  %v1102 = vsel %vm1096, %v1089, 920167782
  %v1103 = vsel %vm1095, %v1086, %v1102
  %v1104 = vsel %vm1094, %v1101, %v1103
  %v1105 = vsel %vm1093, %v1083, %v1086
  %v1106 = vsel %vm1096, %v1092, 1326507024
  %v1107 = vsel %vm1095, %v1089, %v1106
  %v1108 = vsel %vm1094, %v1105, %v1107
  %v1109 = vshll.u32 %v1069, 8
  %v1110 = vmul.u32.u64.compose %v1109, %v1108
  %v1111 = vextract.low.u32 %v1110
  %v1112 = vextract.high.u32 %v1110
  %v1113 = vmul.u32.u64.compose %v1109, %v1104
  %v1114 = vextract.low.u32 %v1113
  %v1115 = vextract.high.u32 %v1113
  %v1116 = vmul.u32 %v1109, %v1100
  %v1117 = vadd.s32 %v1112, %v1114
  %vm1118 = vc.u32 %v1112, %v1114
  %v1119 = vadd.s32 %v1115, 1
  %v1120 = vsel %vm1118, %v1119, %v1115
  %v1121 = vadd.s32 %v1116, %v1120
  %v1122 = vadd.s32 %v1121, 536870912
  %v1123 = vshrl.u32 %v1122, 30
  %v1124 = vshll.u32 %v1123, 30
  %v1125 = vsub.s32 %v1121, %v1124
  %vm1126 = vcmp.lt.s32.totalorder %v1125, 0
  %v1127 = vsub.s32 0, %v1125
  %v1128 = vsel %vm1126, %v1127, %v1125
  %v1129 = vclz %v1128
  %v1130 = vsub.s32 %v1129, 2
  %vm1131 = vcmp.gt.s32.totalorder 0, %v1130
  %v1132 = vsel %vm1131, 0, %v1130
  %v1133 = vsub.s32 32, %v1132
  %v1134 = vshll.u32 %v1125, %v1132
  %v1135 = vshrl.u32 %v1117, %v1133
  %v1136 = vor.u32 %v1134, %v1135
  %v1137 = vsub.s32 4294967266, %v1132
  %v1138 = vadd.s32 %v1137, 127
  %v1139 = vshll.u32 %v1138, 23
  %v1140 = vor.u32 4788187, %v1139
  %v1141 = vand.u32 2147483647, %v1140
  %v1143 = vcvt.s32.f32 %v1136
  %v1144 = vmul.f32 %v1143, %v1141
  %v1145 = vxor.u32 %v1144, 2147483648
  %v1146 = vsel %vm1063, %v1145, %v1144
  %v1147 = vsub.s32 4, %v1123
  %v1148 = vsel %vm1063, %v1147, %v1123
  %v1149 = vsel %vm1062, %v823, %v1146
  %v1150 = vsel %vm1062, 0, %v1148
  %v1151 = vcosq.f32.pop %v1149
  %v1152 = vsinq.f32.pop %v1149
  %vm1153 = vweird.f32 %v823
  %v1154 = vadd.s32 %v1150, 3
  %v1155 = vand.u32 %v1154, 3
  %vm1156 = vcmp.lt.s32.totalorder %v1155, 2
  %vm1157 = vcmp.eq.s32.totalorder %v1155, 0
  %v1158 = vxor.u32 %v1152, 2147483648
  %v1159 = vsel %vm1157, %v1151, %v1158
  %vm1160 = vcmp.eq.s32.totalorder %v1155, 2
  %v1161 = vxor.u32 %v1151, 2147483648
  %v1162 = vsel %vm1160, %v1161, %v1152
  %v1163 = vsel %vm1156, %v1159, %v1162
  %v1164 = vsel %vm1153, nan, %v1163
  %v1165 = vand.u32 2147483647, %v824
  %vm1166 = vcmp.le.f32.partialorder %v1165, 0.7853982
  %vm1167 = vcmp.lt.s32.totalorder %v824, 0
  %v1168 = vand.u32 %v824, 2139095040
  %v1169 = vshrl.u32 %v1168, 23
  %v1170 = vsub.s32 %v1169, 127
  %v1171 = vand.u32 2147483647, %v824
  %v1172 = vand.u32 %v1171, 8388607
  %v1173 = vor.u32 %v1172, 8388608
  %v1174 = vsub.s32 0, %v1173
  %v1175 = vadd.s32 %v1170, 1
  %vm1176 = vcmp.gt.s32.totalorder %v1175, 0
  %v1177 = vsel %vm1176, %v1175, 0
  %v1178 = vshrl.u32 %v1177, 5
  %v1179 = vand.u32 %v1177, 31
  %v1180 = vsub.s32 32, %v1179
  %v1181 = vshrl.u32 683565275, %v1180
  %v1182 = vshll.u32 683565275, %v1179
  %v1183 = vshrl.u32 2475754826, %v1180
  %v1184 = vor.u32 %v1182, %v1183
  %v1185 = vshll.u32 2475754826, %v1179
  %v1186 = vshrl.u32 2131351028, %v1180
  %v1187 = vor.u32 %v1185, %v1186
  %v1188 = vshll.u32 2131351028, %v1179
  %v1189 = vshrl.u32 2102212464, %v1180
  %v1190 = vor.u32 %v1188, %v1189
  %v1191 = vshll.u32 2102212464, %v1179
  %v1192 = vshrl.u32 920167782, %v1180
  %v1193 = vor.u32 %v1191, %v1192
  %v1194 = vshll.u32 920167782, %v1179
  %v1195 = vshrl.u32 1326507024, %v1180
  %v1196 = vor.u32 %v1194, %v1195
  %vm1197 = vcmp.lt.s32.totalorder %v1178, 1
  %vm1198 = vcmp.lt.s32.totalorder %v1178, 2
  %vm1199 = vcmp.lt.s32.totalorder %v1178, 3
  %vm1200 = vcmp.lt.s32.totalorder %v1178, 4
  %v1201 = vsel %vm1197, %v1181, %v1184
  %v1202 = vsel %vm1200, %v1190, 2102212464
  %v1203 = vsel %vm1199, %v1187, %v1202
  %v1204 = vsel %vm1198, %v1201, %v1203
  %v1205 = vsel %vm1197, %v1184, %v1187
  %v1206 = vsel %vm1200, %v1193, 920167782
  %v1207 = vsel %vm1199, %v1190, %v1206
  %v1208 = vsel %vm1198, %v1205, %v1207
  %v1209 = vsel %vm1197, %v1187, %v1190
  %v1210 = vsel %vm1200, %v1196, 1326507024
  %v1211 = vsel %vm1199, %v1193, %v1210
  %v1212 = vsel %vm1198, %v1209, %v1211
  %v1213 = vshll.u32 %v1173, 8
  %v1214 = vmul.u32.u64.compose %v1213, %v1212
  %v1215 = vextract.low.u32 %v1214
  %v1216 = vextract.high.u32 %v1214
  %v1217 = vmul.u32.u64.compose %v1213, %v1208
  %v1218 = vextract.low.u32 %v1217
  %v1219 = vextract.high.u32 %v1217
  %v1220 = vmul.u32 %v1213, %v1204
  %v1221 = vadd.s32 %v1216, %v1218
  %vm1222 = vc.u32 %v1216, %v1218
  %v1223 = vadd.s32 %v1219, 1
  %v1224 = vsel %vm1222, %v1223, %v1219
  %v1225 = vadd.s32 %v1220, %v1224
  %v1226 = vadd.s32 %v1225, 536870912
  %v1227 = vshrl.u32 %v1226, 30
  %v1228 = vshll.u32 %v1227, 30
  %v1229 = vsub.s32 %v1225, %v1228
  %vm1230 = vcmp.lt.s32.totalorder %v1229, 0
  %v1231 = vsub.s32 0, %v1229
  %v1232 = vsel %vm1230, %v1231, %v1229
  %v1233 = vclz %v1232
  %v1234 = vsub.s32 %v1233, 2
  %vm1235 = vcmp.gt.s32.totalorder 0, %v1234
  %v1236 = vsel %vm1235, 0, %v1234
  %v1237 = vsub.s32 32, %v1236
  %v1238 = vshll.u32 %v1229, %v1236
  %v1239 = vshrl.u32 %v1221, %v1237
  %v1240 = vor.u32 %v1238, %v1239
  %v1241 = vsub.s32 4294967266, %v1236
  %v1242 = vadd.s32 %v1241, 127
  %v1243 = vshll.u32 %v1242, 23
  %v1244 = vor.u32 4788187, %v1243
  %v1245 = vand.u32 2147483647, %v1244
  %v1247 = vcvt.s32.f32 %v1240
  %v1248 = vmul.f32 %v1247, %v1245
  %v1249 = vxor.u32 %v1248, 2147483648
  %v1250 = vsel %vm1167, %v1249, %v1248
  %v1251 = vsub.s32 4, %v1227
  %v1252 = vsel %vm1167, %v1251, %v1227
  %v1253 = vsel %vm1166, %v824, %v1250
  %v1254 = vsel %vm1166, 0, %v1252
  %v1255 = vcosq.f32.pop %v1253
  %v1256 = vsinq.f32.pop %v1253
  %vm1257 = vweird.f32 %v824
  %v1258 = vadd.s32 %v1254, 3
  %v1259 = vand.u32 %v1258, 3
  %vm1260 = vcmp.lt.s32.totalorder %v1259, 2
  %vm1261 = vcmp.eq.s32.totalorder %v1259, 0
  %v1262 = vxor.u32 %v1256, 2147483648
  %v1263 = vsel %vm1261, %v1255, %v1262
  %vm1264 = vcmp.eq.s32.totalorder %v1259, 2
  %v1265 = vxor.u32 %v1255, 2147483648
  %v1266 = vsel %vm1264, %v1265, %v1256
  %v1267 = vsel %vm1260, %v1263, %v1266
  %v1268 = vsel %vm1257, nan, %v1267
  %v1269 = vand.u32 2147483647, %v825
  %vm1270 = vcmp.le.f32.partialorder %v1269, 0.7853982
  %vm1271 = vcmp.lt.s32.totalorder %v825, 0
  %v1272 = vand.u32 %v825, 2139095040
  %v1273 = vshrl.u32 %v1272, 23
  %v1274 = vsub.s32 %v1273, 127
  %v1275 = vand.u32 2147483647, %v825
  %v1276 = vand.u32 %v1275, 8388607
  %v1277 = vor.u32 %v1276, 8388608
  %v1278 = vsub.s32 0, %v1277
  %v1279 = vadd.s32 %v1274, 1
  %vm1280 = vcmp.gt.s32.totalorder %v1279, 0
  %v1281 = vsel %vm1280, %v1279, 0
  %v1282 = vshrl.u32 %v1281, 5
  %v1283 = vand.u32 %v1281, 31
  %v1284 = vsub.s32 32, %v1283
  %v1285 = vshrl.u32 683565275, %v1284
  %v1286 = vshll.u32 683565275, %v1283
  %v1287 = vshrl.u32 2475754826, %v1284
  %v1288 = vor.u32 %v1286, %v1287
  %v1289 = vshll.u32 2475754826, %v1283
  %v1290 = vshrl.u32 2131351028, %v1284
  %v1291 = vor.u32 %v1289, %v1290
  %v1292 = vshll.u32 2131351028, %v1283
  %v1293 = vshrl.u32 2102212464, %v1284
  %v1294 = vor.u32 %v1292, %v1293
  %v1295 = vshll.u32 2102212464, %v1283
  %v1296 = vshrl.u32 920167782, %v1284
  %v1297 = vor.u32 %v1295, %v1296
  %v1298 = vshll.u32 920167782, %v1283
  %v1299 = vshrl.u32 1326507024, %v1284
  %v1300 = vor.u32 %v1298, %v1299
  %vm1301 = vcmp.lt.s32.totalorder %v1282, 1
  %vm1302 = vcmp.lt.s32.totalorder %v1282, 2
  %vm1303 = vcmp.lt.s32.totalorder %v1282, 3
  %vm1304 = vcmp.lt.s32.totalorder %v1282, 4
  %v1305 = vsel %vm1301, %v1285, %v1288
  %v1306 = vsel %vm1304, %v1294, 2102212464
  %v1307 = vsel %vm1303, %v1291, %v1306
  %v1308 = vsel %vm1302, %v1305, %v1307
  %v1309 = vsel %vm1301, %v1288, %v1291
  %v1310 = vsel %vm1304, %v1297, 920167782
  %v1311 = vsel %vm1303, %v1294, %v1310
  %v1312 = vsel %vm1302, %v1309, %v1311
  %v1313 = vsel %vm1301, %v1291, %v1294
  %v1314 = vsel %vm1304, %v1300, 1326507024
  %v1315 = vsel %vm1303, %v1297, %v1314
  %v1316 = vsel %vm1302, %v1313, %v1315
  %v1317 = vshll.u32 %v1277, 8
  %v1318 = vmul.u32.u64.compose %v1317, %v1316
  %v1319 = vextract.low.u32 %v1318
  %v1320 = vextract.high.u32 %v1318
  %v1321 = vmul.u32.u64.compose %v1317, %v1312
  %v1322 = vextract.low.u32 %v1321
  %v1323 = vextract.high.u32 %v1321
  %v1324 = vmul.u32 %v1317, %v1308
  %v1325 = vadd.s32 %v1320, %v1322
  %vm1326 = vc.u32 %v1320, %v1322
  %v1327 = vadd.s32 %v1323, 1
  %v1328 = vsel %vm1326, %v1327, %v1323
  %v1329 = vadd.s32 %v1324, %v1328
  %v1330 = vadd.s32 %v1329, 536870912
  %v1331 = vshrl.u32 %v1330, 30
  %v1332 = vshll.u32 %v1331, 30
  %v1333 = vsub.s32 %v1329, %v1332
  %vm1334 = vcmp.lt.s32.totalorder %v1333, 0
  %v1335 = vsub.s32 0, %v1333
  %v1336 = vsel %vm1334, %v1335, %v1333
  %v1337 = vclz %v1336
  %v1338 = vsub.s32 %v1337, 2
  %vm1339 = vcmp.gt.s32.totalorder 0, %v1338
  %v1340 = vsel %vm1339, 0, %v1338
  %v1341 = vsub.s32 32, %v1340
  %v1342 = vshll.u32 %v1333, %v1340
  %v1343 = vshrl.u32 %v1325, %v1341
  %v1344 = vor.u32 %v1342, %v1343
  %v1345 = vsub.s32 4294967266, %v1340
  %v1346 = vadd.s32 %v1345, 127
  %v1347 = vshll.u32 %v1346, 23
  %v1348 = vor.u32 4788187, %v1347
  %v1349 = vand.u32 2147483647, %v1348
  %v1351 = vcvt.s32.f32 %v1344
  %v1352 = vmul.f32 %v1351, %v1349
  %v1353 = vxor.u32 %v1352, 2147483648
  %v1354 = vsel %vm1271, %v1353, %v1352
  %v1355 = vsub.s32 4, %v1331
  %v1356 = vsel %vm1271, %v1355, %v1331
  %v1357 = vsel %vm1270, %v825, %v1354
  %v1358 = vsel %vm1270, 0, %v1356
  %v1359 = vcosq.f32.pop %v1357
  %v1360 = vsinq.f32.pop %v1357
  %vm1361 = vweird.f32 %v825
  %v1362 = vadd.s32 %v1358, 3
  %v1363 = vand.u32 %v1362, 3
  %vm1364 = vcmp.lt.s32.totalorder %v1363, 2
  %vm1365 = vcmp.eq.s32.totalorder %v1363, 0
  %v1366 = vxor.u32 %v1360, 2147483648
  %v1367 = vsel %vm1365, %v1359, %v1366
  %vm1368 = vcmp.eq.s32.totalorder %v1363, 2
  %v1369 = vxor.u32 %v1359, 2147483648
  %v1370 = vsel %vm1368, %v1369, %v1360
  %v1371 = vsel %vm1364, %v1367, %v1370
  %v1372 = vsel %vm1361, nan, %v1371
  %v1373 = vand.u32 2147483647, %v826
  %vm1374 = vcmp.le.f32.partialorder %v1373, 0.7853982
  %vm1375 = vcmp.lt.s32.totalorder %v826, 0
  %v1376 = vand.u32 %v826, 2139095040
  %v1377 = vshrl.u32 %v1376, 23
  %v1378 = vsub.s32 %v1377, 127
  %v1379 = vand.u32 2147483647, %v826
  %v1380 = vand.u32 %v1379, 8388607
  %v1381 = vor.u32 %v1380, 8388608
  %v1382 = vsub.s32 0, %v1381
  %v1383 = vadd.s32 %v1378, 1
  %vm1384 = vcmp.gt.s32.totalorder %v1383, 0
  %v1385 = vsel %vm1384, %v1383, 0
  %v1386 = vshrl.u32 %v1385, 5
  %v1387 = vand.u32 %v1385, 31
  %v1388 = vsub.s32 32, %v1387
  %v1389 = vshrl.u32 683565275, %v1388
  %v1390 = vshll.u32 683565275, %v1387
  %v1391 = vshrl.u32 2475754826, %v1388
  %v1392 = vor.u32 %v1390, %v1391
  %v1393 = vshll.u32 2475754826, %v1387
  %v1394 = vshrl.u32 2131351028, %v1388
  %v1395 = vor.u32 %v1393, %v1394
  %v1396 = vshll.u32 2131351028, %v1387
  %v1397 = vshrl.u32 2102212464, %v1388
  %v1398 = vor.u32 %v1396, %v1397
  %v1399 = vshll.u32 2102212464, %v1387
  %v1400 = vshrl.u32 920167782, %v1388
  %v1401 = vor.u32 %v1399, %v1400
  %v1402 = vshll.u32 920167782, %v1387
  %v1403 = vshrl.u32 1326507024, %v1388
  %v1404 = vor.u32 %v1402, %v1403
  %vm1405 = vcmp.lt.s32.totalorder %v1386, 1
  %vm1406 = vcmp.lt.s32.totalorder %v1386, 2
  %vm1407 = vcmp.lt.s32.totalorder %v1386, 3
  %vm1408 = vcmp.lt.s32.totalorder %v1386, 4
  %v1409 = vsel %vm1405, %v1389, %v1392
  %v1410 = vsel %vm1408, %v1398, 2102212464
  %v1411 = vsel %vm1407, %v1395, %v1410
  %v1412 = vsel %vm1406, %v1409, %v1411
  %v1413 = vsel %vm1405, %v1392, %v1395
  %v1414 = vsel %vm1408, %v1401, 920167782
  %v1415 = vsel %vm1407, %v1398, %v1414
  %v1416 = vsel %vm1406, %v1413, %v1415
  %v1417 = vsel %vm1405, %v1395, %v1398
  %v1418 = vsel %vm1408, %v1404, 1326507024
  %v1419 = vsel %vm1407, %v1401, %v1418
  %v1420 = vsel %vm1406, %v1417, %v1419
  %v1421 = vshll.u32 %v1381, 8
  %v1422 = vmul.u32.u64.compose %v1421, %v1420
  %v1423 = vextract.low.u32 %v1422
  %v1424 = vextract.high.u32 %v1422
  %v1425 = vmul.u32.u64.compose %v1421, %v1416
  %v1426 = vextract.low.u32 %v1425
  %v1427 = vextract.high.u32 %v1425
  %v1428 = vmul.u32 %v1421, %v1412
  %v1429 = vadd.s32 %v1424, %v1426
  %vm1430 = vc.u32 %v1424, %v1426
  %v1431 = vadd.s32 %v1427, 1
  %v1432 = vsel %vm1430, %v1431, %v1427
  %v1433 = vadd.s32 %v1428, %v1432
  %v1434 = vadd.s32 %v1433, 536870912
  %v1435 = vshrl.u32 %v1434, 30
  %v1436 = vshll.u32 %v1435, 30
  %v1437 = vsub.s32 %v1433, %v1436
  %vm1438 = vcmp.lt.s32.totalorder %v1437, 0
  %v1439 = vsub.s32 0, %v1437
  %v1440 = vsel %vm1438, %v1439, %v1437
  %v1441 = vclz %v1440
  %v1442 = vsub.s32 %v1441, 2
  %vm1443 = vcmp.gt.s32.totalorder 0, %v1442
  %v1444 = vsel %vm1443, 0, %v1442
  %v1445 = vsub.s32 32, %v1444
  %v1446 = vshll.u32 %v1437, %v1444
  %v1447 = vshrl.u32 %v1429, %v1445
  %v1448 = vor.u32 %v1446, %v1447
  %v1449 = vsub.s32 4294967266, %v1444
  %v1450 = vadd.s32 %v1449, 127
  %v1451 = vshll.u32 %v1450, 23
  %v1452 = vor.u32 4788187, %v1451
  %v1453 = vand.u32 2147483647, %v1452
  %v1455 = vcvt.s32.f32 %v1448
  %v1456 = vmul.f32 %v1455, %v1453
  %v1457 = vxor.u32 %v1456, 2147483648
  %v1458 = vsel %vm1375, %v1457, %v1456
  %v1459 = vsub.s32 4, %v1435
  %v1460 = vsel %vm1375, %v1459, %v1435
  %v1461 = vsel %vm1374, %v826, %v1458
  %v1462 = vsel %vm1374, 0, %v1460
  %v1463 = vcosq.f32.pop %v1461
  %v1464 = vsinq.f32.pop %v1461
  %vm1465 = vweird.f32 %v826
  %v1466 = vadd.s32 %v1462, 3
  %v1467 = vand.u32 %v1466, 3
  %vm1468 = vcmp.lt.s32.totalorder %v1467, 2
  %vm1469 = vcmp.eq.s32.totalorder %v1467, 0
  %v1470 = vxor.u32 %v1464, 2147483648
  %v1471 = vsel %vm1469, %v1463, %v1470
  %vm1472 = vcmp.eq.s32.totalorder %v1467, 2
  %v1473 = vxor.u32 %v1463, 2147483648
  %v1474 = vsel %vm1472, %v1473, %v1464
  %v1475 = vsel %vm1468, %v1471, %v1474
  %v1476 = vsel %vm1465, nan, %v1475
  %v1477 = vand.u32 2147483647, %v827
  %vm1478 = vcmp.le.f32.partialorder %v1477, 0.7853982
  %vm1479 = vcmp.lt.s32.totalorder %v827, 0
  %v1480 = vand.u32 %v827, 2139095040
  %v1481 = vshrl.u32 %v1480, 23
  %v1482 = vsub.s32 %v1481, 127
  %v1483 = vand.u32 2147483647, %v827
  %v1484 = vand.u32 %v1483, 8388607
  %v1485 = vor.u32 %v1484, 8388608
  %v1486 = vsub.s32 0, %v1485
  %v1487 = vadd.s32 %v1482, 1
  %vm1488 = vcmp.gt.s32.totalorder %v1487, 0
  %v1489 = vsel %vm1488, %v1487, 0
  %v1490 = vshrl.u32 %v1489, 5
  %v1491 = vand.u32 %v1489, 31
  %v1492 = vsub.s32 32, %v1491
  %v1493 = vshrl.u32 683565275, %v1492
  %v1494 = vshll.u32 683565275, %v1491
  %v1495 = vshrl.u32 2475754826, %v1492
  %v1496 = vor.u32 %v1494, %v1495
  %v1497 = vshll.u32 2475754826, %v1491
  %v1498 = vshrl.u32 2131351028, %v1492
  %v1499 = vor.u32 %v1497, %v1498
  %v1500 = vshll.u32 2131351028, %v1491
  %v1501 = vshrl.u32 2102212464, %v1492
  %v1502 = vor.u32 %v1500, %v1501
  %v1503 = vshll.u32 2102212464, %v1491
  %v1504 = vshrl.u32 920167782, %v1492
  %v1505 = vor.u32 %v1503, %v1504
  %v1506 = vshll.u32 920167782, %v1491
  %v1507 = vshrl.u32 1326507024, %v1492
  %v1508 = vor.u32 %v1506, %v1507
  %vm1509 = vcmp.lt.s32.totalorder %v1490, 1
  %vm1510 = vcmp.lt.s32.totalorder %v1490, 2
  %vm1511 = vcmp.lt.s32.totalorder %v1490, 3
  %vm1512 = vcmp.lt.s32.totalorder %v1490, 4
  %v1513 = vsel %vm1509, %v1493, %v1496
  %v1514 = vsel %vm1512, %v1502, 2102212464
  %v1515 = vsel %vm1511, %v1499, %v1514
  %v1516 = vsel %vm1510, %v1513, %v1515
  %v1517 = vsel %vm1509, %v1496, %v1499
  %v1518 = vsel %vm1512, %v1505, 920167782
  %v1519 = vsel %vm1511, %v1502, %v1518
  %v1520 = vsel %vm1510, %v1517, %v1519
  %v1521 = vsel %vm1509, %v1499, %v1502
  %v1522 = vsel %vm1512, %v1508, 1326507024
  %v1523 = vsel %vm1511, %v1505, %v1522
  %v1524 = vsel %vm1510, %v1521, %v1523
  %v1525 = vshll.u32 %v1485, 8
  %v1526 = vmul.u32.u64.compose %v1525, %v1524
  %v1527 = vextract.low.u32 %v1526
  %v1528 = vextract.high.u32 %v1526
  %v1529 = vmul.u32.u64.compose %v1525, %v1520
  %v1530 = vextract.low.u32 %v1529
  %v1531 = vextract.high.u32 %v1529
  %v1532 = vmul.u32 %v1525, %v1516
  %v1533 = vadd.s32 %v1528, %v1530
  %vm1534 = vc.u32 %v1528, %v1530
  %v1535 = vadd.s32 %v1531, 1
  %v1536 = vsel %vm1534, %v1535, %v1531
  %v1537 = vadd.s32 %v1532, %v1536
  %v1538 = vadd.s32 %v1537, 536870912
  %v1539 = vshrl.u32 %v1538, 30
  %v1540 = vshll.u32 %v1539, 30
  %v1541 = vsub.s32 %v1537, %v1540
  %vm1542 = vcmp.lt.s32.totalorder %v1541, 0
  %v1543 = vsub.s32 0, %v1541
  %v1544 = vsel %vm1542, %v1543, %v1541
  %v1545 = vclz %v1544
  %v1546 = vsub.s32 %v1545, 2
  %vm1547 = vcmp.gt.s32.totalorder 0, %v1546
  %v1548 = vsel %vm1547, 0, %v1546
  %v1549 = vsub.s32 32, %v1548
  %v1550 = vshll.u32 %v1541, %v1548
  %v1551 = vshrl.u32 %v1533, %v1549
  %v1552 = vor.u32 %v1550, %v1551
  %v1553 = vsub.s32 4294967266, %v1548
  %v1554 = vadd.s32 %v1553, 127
  %v1555 = vshll.u32 %v1554, 23
  %v1556 = vor.u32 4788187, %v1555
  %v1557 = vand.u32 2147483647, %v1556
  %v1559 = vcvt.s32.f32 %v1552
  %v1560 = vmul.f32 %v1559, %v1557
  %v1561 = vxor.u32 %v1560, 2147483648
  %v1562 = vsel %vm1479, %v1561, %v1560
  %v1563 = vsub.s32 4, %v1539
  %v1564 = vsel %vm1479, %v1563, %v1539
  %v1565 = vsel %vm1478, %v827, %v1562
  %v1566 = vsel %vm1478, 0, %v1564
  %v1567 = vcosq.f32.pop %v1565
  %v1568 = vsinq.f32.pop %v1565
  %vm1569 = vweird.f32 %v827
  %v1570 = vadd.s32 %v1566, 3
  %v1571 = vand.u32 %v1570, 3
  %vm1572 = vcmp.lt.s32.totalorder %v1571, 2
  %vm1573 = vcmp.eq.s32.totalorder %v1571, 0
  %v1574 = vxor.u32 %v1568, 2147483648
  %v1575 = vsel %vm1573, %v1567, %v1574
  %vm1576 = vcmp.eq.s32.totalorder %v1571, 2
  %v1577 = vxor.u32 %v1567, 2147483648
  %v1578 = vsel %vm1576, %v1577, %v1568
  %v1579 = vsel %vm1572, %v1575, %v1578
  %v1580 = vsel %vm1569, nan, %v1579
  %v1581 = vand.u32 2147483647, %v828
  %vm1582 = vcmp.le.f32.partialorder %v1581, 0.7853982
  %vm1583 = vcmp.lt.s32.totalorder %v828, 0
  %v1584 = vand.u32 %v828, 2139095040
  %v1585 = vshrl.u32 %v1584, 23
  %v1586 = vsub.s32 %v1585, 127
  %v1587 = vand.u32 2147483647, %v828
  %v1588 = vand.u32 %v1587, 8388607
  %v1589 = vor.u32 %v1588, 8388608
  %v1590 = vsub.s32 0, %v1589
  %v1591 = vadd.s32 %v1586, 1
  %vm1592 = vcmp.gt.s32.totalorder %v1591, 0
  %v1593 = vsel %vm1592, %v1591, 0
  %v1594 = vshrl.u32 %v1593, 5
  %v1595 = vand.u32 %v1593, 31
  %v1596 = vsub.s32 32, %v1595
  %v1597 = vshrl.u32 683565275, %v1596
  %v1598 = vshll.u32 683565275, %v1595
  %v1599 = vshrl.u32 2475754826, %v1596
  %v1600 = vor.u32 %v1598, %v1599
  %v1601 = vshll.u32 2475754826, %v1595
  %v1602 = vshrl.u32 2131351028, %v1596
  %v1603 = vor.u32 %v1601, %v1602
  %v1604 = vshll.u32 2131351028, %v1595
  %v1605 = vshrl.u32 2102212464, %v1596
  %v1606 = vor.u32 %v1604, %v1605
  %v1607 = vshll.u32 2102212464, %v1595
  %v1608 = vshrl.u32 920167782, %v1596
  %v1609 = vor.u32 %v1607, %v1608
  %v1610 = vshll.u32 920167782, %v1595
  %v1611 = vshrl.u32 1326507024, %v1596
  %v1612 = vor.u32 %v1610, %v1611
  %vm1613 = vcmp.lt.s32.totalorder %v1594, 1
  %vm1614 = vcmp.lt.s32.totalorder %v1594, 2
  %vm1615 = vcmp.lt.s32.totalorder %v1594, 3
  %vm1616 = vcmp.lt.s32.totalorder %v1594, 4
  %v1617 = vsel %vm1613, %v1597, %v1600
  %v1618 = vsel %vm1616, %v1606, 2102212464
  %v1619 = vsel %vm1615, %v1603, %v1618
  %v1620 = vsel %vm1614, %v1617, %v1619
  %v1621 = vsel %vm1613, %v1600, %v1603
  %v1622 = vsel %vm1616, %v1609, 920167782
  %v1623 = vsel %vm1615, %v1606, %v1622
  %v1624 = vsel %vm1614, %v1621, %v1623
  %v1625 = vsel %vm1613, %v1603, %v1606
  %v1626 = vsel %vm1616, %v1612, 1326507024
  %v1627 = vsel %vm1615, %v1609, %v1626
  %v1628 = vsel %vm1614, %v1625, %v1627
  %v1629 = vshll.u32 %v1589, 8
  %v1630 = vmul.u32.u64.compose %v1629, %v1628
  %v1631 = vextract.low.u32 %v1630
  %v1632 = vextract.high.u32 %v1630
  %v1633 = vmul.u32.u64.compose %v1629, %v1624
  %v1634 = vextract.low.u32 %v1633
  %v1635 = vextract.high.u32 %v1633
  %v1636 = vmul.u32 %v1629, %v1620
  %v1637 = vadd.s32 %v1632, %v1634
  %vm1638 = vc.u32 %v1632, %v1634
  %v1639 = vadd.s32 %v1635, 1
  %v1640 = vsel %vm1638, %v1639, %v1635
  %v1641 = vadd.s32 %v1636, %v1640
  %v1642 = vadd.s32 %v1641, 536870912
  %v1643 = vshrl.u32 %v1642, 30
  %v1644 = vshll.u32 %v1643, 30
  %v1645 = vsub.s32 %v1641, %v1644
  %vm1646 = vcmp.lt.s32.totalorder %v1645, 0
  %v1647 = vsub.s32 0, %v1645
  %v1648 = vsel %vm1646, %v1647, %v1645
  %v1649 = vclz %v1648
  %v1650 = vsub.s32 %v1649, 2
  %vm1651 = vcmp.gt.s32.totalorder 0, %v1650
  %v1652 = vsel %vm1651, 0, %v1650
  %v1653 = vsub.s32 32, %v1652
  %v1654 = vshll.u32 %v1645, %v1652
  %v1655 = vshrl.u32 %v1637, %v1653
  %v1656 = vor.u32 %v1654, %v1655
  %v1657 = vsub.s32 4294967266, %v1652
  %v1658 = vadd.s32 %v1657, 127
  %v1659 = vshll.u32 %v1658, 23
  %v1660 = vor.u32 4788187, %v1659
  %v1661 = vand.u32 2147483647, %v1660
  %v1663 = vcvt.s32.f32 %v1656
  %v1664 = vmul.f32 %v1663, %v1661
  %v1665 = vxor.u32 %v1664, 2147483648
  %v1666 = vsel %vm1583, %v1665, %v1664
  %v1667 = vsub.s32 4, %v1643
  %v1668 = vsel %vm1583, %v1667, %v1643
  %v1669 = vsel %vm1582, %v828, %v1666
  %v1670 = vsel %vm1582, 0, %v1668
  %v1671 = vcosq.f32.pop %v1669
  %v1672 = vsinq.f32.pop %v1669
  %vm1673 = vweird.f32 %v828
  %v1674 = vadd.s32 %v1670, 3
  %v1675 = vand.u32 %v1674, 3
  %vm1676 = vcmp.lt.s32.totalorder %v1675, 2
  %vm1677 = vcmp.eq.s32.totalorder %v1675, 0
  %v1678 = vxor.u32 %v1672, 2147483648
  %v1679 = vsel %vm1677, %v1671, %v1678
  %vm1680 = vcmp.eq.s32.totalorder %v1675, 2
  %v1681 = vxor.u32 %v1671, 2147483648
  %v1682 = vsel %vm1680, %v1681, %v1672
  %v1683 = vsel %vm1676, %v1679, %v1682
  %v1684 = vsel %vm1673, nan, %v1683
  %v1685 = vand.u32 2147483647, %v829
  %vm1686 = vcmp.le.f32.partialorder %v1685, 0.7853982
  %vm1687 = vcmp.lt.s32.totalorder %v829, 0
  %v1688 = vand.u32 %v829, 2139095040
  %v1689 = vshrl.u32 %v1688, 23
  %v1690 = vsub.s32 %v1689, 127
  %v1691 = vand.u32 2147483647, %v829
  %v1692 = vand.u32 %v1691, 8388607
  %v1693 = vor.u32 %v1692, 8388608
  %v1694 = vsub.s32 0, %v1693
  %v1695 = vadd.s32 %v1690, 1
  %vm1696 = vcmp.gt.s32.totalorder %v1695, 0
  %v1697 = vsel %vm1696, %v1695, 0
  %v1698 = vshrl.u32 %v1697, 5
  %v1699 = vand.u32 %v1697, 31
  %v1700 = vsub.s32 32, %v1699
  %v1701 = vshrl.u32 683565275, %v1700
  %v1702 = vshll.u32 683565275, %v1699
  %v1703 = vshrl.u32 2475754826, %v1700
  %v1704 = vor.u32 %v1702, %v1703
  %v1705 = vshll.u32 2475754826, %v1699
  %v1706 = vshrl.u32 2131351028, %v1700
  %v1707 = vor.u32 %v1705, %v1706
  %v1708 = vshll.u32 2131351028, %v1699
  %v1709 = vshrl.u32 2102212464, %v1700
  %v1710 = vor.u32 %v1708, %v1709
  %v1711 = vshll.u32 2102212464, %v1699
  %v1712 = vshrl.u32 920167782, %v1700
  %v1713 = vor.u32 %v1711, %v1712
  %v1714 = vshll.u32 920167782, %v1699
  %v1715 = vshrl.u32 1326507024, %v1700
  %v1716 = vor.u32 %v1714, %v1715
  %vm1717 = vcmp.lt.s32.totalorder %v1698, 1
  %vm1718 = vcmp.lt.s32.totalorder %v1698, 2
  %vm1719 = vcmp.lt.s32.totalorder %v1698, 3
  %vm1720 = vcmp.lt.s32.totalorder %v1698, 4
  %v1721 = vsel %vm1717, %v1701, %v1704
  %v1722 = vsel %vm1720, %v1710, 2102212464
  %v1723 = vsel %vm1719, %v1707, %v1722
  %v1724 = vsel %vm1718, %v1721, %v1723
  %v1725 = vsel %vm1717, %v1704, %v1707
  %v1726 = vsel %vm1720, %v1713, 920167782
  %v1727 = vsel %vm1719, %v1710, %v1726
  %v1728 = vsel %vm1718, %v1725, %v1727
  %v1729 = vsel %vm1717, %v1707, %v1710
  %v1730 = vsel %vm1720, %v1716, 1326507024
  %v1731 = vsel %vm1719, %v1713, %v1730
  %v1732 = vsel %vm1718, %v1729, %v1731
  %v1733 = vshll.u32 %v1693, 8
  %v1734 = vmul.u32.u64.compose %v1733, %v1732
  %v1735 = vextract.low.u32 %v1734
  %v1736 = vextract.high.u32 %v1734
  %v1737 = vmul.u32.u64.compose %v1733, %v1728
  %v1738 = vextract.low.u32 %v1737
  %v1739 = vextract.high.u32 %v1737
  %v1740 = vmul.u32 %v1733, %v1724
  %v1741 = vadd.s32 %v1736, %v1738
  %vm1742 = vc.u32 %v1736, %v1738
  %v1743 = vadd.s32 %v1739, 1
  %v1744 = vsel %vm1742, %v1743, %v1739
  %v1745 = vadd.s32 %v1740, %v1744
  %v1746 = vadd.s32 %v1745, 536870912
  %v1747 = vshrl.u32 %v1746, 30
  %v1748 = vshll.u32 %v1747, 30
  %v1749 = vsub.s32 %v1745, %v1748
  %vm1750 = vcmp.lt.s32.totalorder %v1749, 0
  %v1751 = vsub.s32 0, %v1749
  %v1752 = vsel %vm1750, %v1751, %v1749
  %v1753 = vclz %v1752
  %v1754 = vsub.s32 %v1753, 2
  %vm1755 = vcmp.gt.s32.totalorder 0, %v1754
  %v1756 = vsel %vm1755, 0, %v1754
  %v1757 = vsub.s32 32, %v1756
  %v1758 = vshll.u32 %v1749, %v1756
  %v1759 = vshrl.u32 %v1741, %v1757
  %v1760 = vor.u32 %v1758, %v1759
  %v1761 = vsub.s32 4294967266, %v1756
  %v1762 = vadd.s32 %v1761, 127
  %v1763 = vshll.u32 %v1762, 23
  %v1764 = vor.u32 4788187, %v1763
  %v1765 = vand.u32 2147483647, %v1764
  %v1767 = vcvt.s32.f32 %v1760
  %v1768 = vmul.f32 %v1767, %v1765
  %v1769 = vxor.u32 %v1768, 2147483648
  %v1770 = vsel %vm1687, %v1769, %v1768
  %v1771 = vsub.s32 4, %v1747
  %v1772 = vsel %vm1687, %v1771, %v1747
  %v1773 = vsel %vm1686, %v829, %v1770
  %v1774 = vsel %vm1686, 0, %v1772
  %v1775 = vcosq.f32.pop %v1773
  %v1776 = vsinq.f32.pop %v1773
  %vm1777 = vweird.f32 %v829
  %v1778 = vadd.s32 %v1774, 3
  %v1779 = vand.u32 %v1778, 3
  %vm1780 = vcmp.lt.s32.totalorder %v1779, 2
  %vm1781 = vcmp.eq.s32.totalorder %v1779, 0
  %v1782 = vxor.u32 %v1776, 2147483648
  %v1783 = vsel %vm1781, %v1775, %v1782
  %vm1784 = vcmp.eq.s32.totalorder %v1779, 2
  %v1785 = vxor.u32 %v1775, 2147483648
  %v1786 = vsel %vm1784, %v1785, %v1776
  %v1787 = vsel %vm1780, %v1783, %v1786
  %v1788 = vsel %vm1777, nan, %v1787
  %v1789 = vand.u32 2147483647, %v830
  %vm1790 = vcmp.le.f32.partialorder %v1789, 0.7853982
  %vm1791 = vcmp.lt.s32.totalorder %v830, 0
  %v1792 = vand.u32 %v830, 2139095040
  %v1793 = vshrl.u32 %v1792, 23
  %v1794 = vsub.s32 %v1793, 127
  %v1795 = vand.u32 2147483647, %v830
  %v1796 = vand.u32 %v1795, 8388607
  %v1797 = vor.u32 %v1796, 8388608
  %v1798 = vsub.s32 0, %v1797
  %v1799 = vadd.s32 %v1794, 1
  %vm1800 = vcmp.gt.s32.totalorder %v1799, 0
  %v1801 = vsel %vm1800, %v1799, 0
  %v1802 = vshrl.u32 %v1801, 5
  %v1803 = vand.u32 %v1801, 31
  %v1804 = vsub.s32 32, %v1803
  %v1805 = vshrl.u32 683565275, %v1804
  %v1806 = vshll.u32 683565275, %v1803
  %v1807 = vshrl.u32 2475754826, %v1804
  %v1808 = vor.u32 %v1806, %v1807
  %v1809 = vshll.u32 2475754826, %v1803
  %v1810 = vshrl.u32 2131351028, %v1804
  %v1811 = vor.u32 %v1809, %v1810
  %v1812 = vshll.u32 2131351028, %v1803
  %v1813 = vshrl.u32 2102212464, %v1804
  %v1814 = vor.u32 %v1812, %v1813
  %v1815 = vshll.u32 2102212464, %v1803
  %v1816 = vshrl.u32 920167782, %v1804
  %v1817 = vor.u32 %v1815, %v1816
  %v1818 = vshll.u32 920167782, %v1803
  %v1819 = vshrl.u32 1326507024, %v1804
  %v1820 = vor.u32 %v1818, %v1819
  %vm1821 = vcmp.lt.s32.totalorder %v1802, 1
  %vm1822 = vcmp.lt.s32.totalorder %v1802, 2
  %vm1823 = vcmp.lt.s32.totalorder %v1802, 3
  %vm1824 = vcmp.lt.s32.totalorder %v1802, 4
  %v1825 = vsel %vm1821, %v1805, %v1808
  %v1826 = vsel %vm1824, %v1814, 2102212464
  %v1827 = vsel %vm1823, %v1811, %v1826
  %v1828 = vsel %vm1822, %v1825, %v1827
  %v1829 = vsel %vm1821, %v1808, %v1811
  %v1830 = vsel %vm1824, %v1817, 920167782
  %v1831 = vsel %vm1823, %v1814, %v1830
  %v1832 = vsel %vm1822, %v1829, %v1831
  %v1833 = vsel %vm1821, %v1811, %v1814
  %v1834 = vsel %vm1824, %v1820, 1326507024
  %v1835 = vsel %vm1823, %v1817, %v1834
  %v1836 = vsel %vm1822, %v1833, %v1835
  %v1837 = vshll.u32 %v1797, 8
  %v1838 = vmul.u32.u64.compose %v1837, %v1836
  %v1839 = vextract.low.u32 %v1838
  %v1840 = vextract.high.u32 %v1838
  %v1841 = vmul.u32.u64.compose %v1837, %v1832
  %v1842 = vextract.low.u32 %v1841
  %v1843 = vextract.high.u32 %v1841
  %v1844 = vmul.u32 %v1837, %v1828
  %v1845 = vadd.s32 %v1840, %v1842
  %vm1846 = vc.u32 %v1840, %v1842
  %v1847 = vadd.s32 %v1843, 1
  %v1848 = vsel %vm1846, %v1847, %v1843
  %v1849 = vadd.s32 %v1844, %v1848
  %v1850 = vadd.s32 %v1849, 536870912
  %v1851 = vshrl.u32 %v1850, 30
  %v1852 = vshll.u32 %v1851, 30
  %v1853 = vsub.s32 %v1849, %v1852
  %vm1854 = vcmp.lt.s32.totalorder %v1853, 0
  %v1855 = vsub.s32 0, %v1853
  %v1856 = vsel %vm1854, %v1855, %v1853
  %v1857 = vclz %v1856
  %v1858 = vsub.s32 %v1857, 2
  %vm1859 = vcmp.gt.s32.totalorder 0, %v1858
  %v1860 = vsel %vm1859, 0, %v1858
  %v1861 = vsub.s32 32, %v1860
  %v1862 = vshll.u32 %v1853, %v1860
  %v1863 = vshrl.u32 %v1845, %v1861
  %v1864 = vor.u32 %v1862, %v1863
  %v1865 = vsub.s32 4294967266, %v1860
  %v1866 = vadd.s32 %v1865, 127
  %v1867 = vshll.u32 %v1866, 23
  %v1868 = vor.u32 4788187, %v1867
  %v1869 = vand.u32 2147483647, %v1868
  %v1871 = vcvt.s32.f32 %v1864
  %v1872 = vmul.f32 %v1871, %v1869
  %v1873 = vxor.u32 %v1872, 2147483648
  %v1874 = vsel %vm1791, %v1873, %v1872
  %v1875 = vsub.s32 4, %v1851
  %v1876 = vsel %vm1791, %v1875, %v1851
  %v1877 = vsel %vm1790, %v830, %v1874
  %v1878 = vsel %vm1790, 0, %v1876
  %v1879 = vcosq.f32.pop %v1877
  %v1880 = vsinq.f32.pop %v1877
  %vm1881 = vweird.f32 %v830
  %v1882 = vadd.s32 %v1878, 3
  %v1883 = vand.u32 %v1882, 3
  %vm1884 = vcmp.lt.s32.totalorder %v1883, 2
  %vm1885 = vcmp.eq.s32.totalorder %v1883, 0
  %v1886 = vxor.u32 %v1880, 2147483648
  %v1887 = vsel %vm1885, %v1879, %v1886
  %vm1888 = vcmp.eq.s32.totalorder %v1883, 2
  %v1889 = vxor.u32 %v1879, 2147483648
  %v1890 = vsel %vm1888, %v1889, %v1880
  %v1891 = vsel %vm1884, %v1887, %v1890
  %v1892 = vsel %vm1881, nan, %v1891
  %v1893 = vand.u32 2147483647, %v831
  %vm1894 = vcmp.le.f32.partialorder %v1893, 0.7853982
  %vm1895 = vcmp.lt.s32.totalorder %v831, 0
  %v1896 = vand.u32 %v831, 2139095040
  %v1897 = vshrl.u32 %v1896, 23
  %v1898 = vsub.s32 %v1897, 127
  %v1899 = vand.u32 2147483647, %v831
  %v1900 = vand.u32 %v1899, 8388607
  %v1901 = vor.u32 %v1900, 8388608
  %v1902 = vsub.s32 0, %v1901
  %v1903 = vadd.s32 %v1898, 1
  %vm1904 = vcmp.gt.s32.totalorder %v1903, 0
  %v1905 = vsel %vm1904, %v1903, 0
  %v1906 = vshrl.u32 %v1905, 5
  %v1907 = vand.u32 %v1905, 31
  %v1908 = vsub.s32 32, %v1907
  %v1909 = vshrl.u32 683565275, %v1908
  %v1910 = vshll.u32 683565275, %v1907
  %v1911 = vshrl.u32 2475754826, %v1908
  %v1912 = vor.u32 %v1910, %v1911
  %v1913 = vshll.u32 2475754826, %v1907
  %v1914 = vshrl.u32 2131351028, %v1908
  %v1915 = vor.u32 %v1913, %v1914
  %v1916 = vshll.u32 2131351028, %v1907
  %v1917 = vshrl.u32 2102212464, %v1908
  %v1918 = vor.u32 %v1916, %v1917
  %v1919 = vshll.u32 2102212464, %v1907
  %v1920 = vshrl.u32 920167782, %v1908
  %v1921 = vor.u32 %v1919, %v1920
  %v1922 = vshll.u32 920167782, %v1907
  %v1923 = vshrl.u32 1326507024, %v1908
  %v1924 = vor.u32 %v1922, %v1923
  %vm1925 = vcmp.lt.s32.totalorder %v1906, 1
  %vm1926 = vcmp.lt.s32.totalorder %v1906, 2
  %vm1927 = vcmp.lt.s32.totalorder %v1906, 3
  %vm1928 = vcmp.lt.s32.totalorder %v1906, 4
  %v1929 = vsel %vm1925, %v1909, %v1912
  %v1930 = vsel %vm1928, %v1918, 2102212464
  %v1931 = vsel %vm1927, %v1915, %v1930
  %v1932 = vsel %vm1926, %v1929, %v1931
  %v1933 = vsel %vm1925, %v1912, %v1915
  %v1934 = vsel %vm1928, %v1921, 920167782
  %v1935 = vsel %vm1927, %v1918, %v1934
  %v1936 = vsel %vm1926, %v1933, %v1935
  %v1937 = vsel %vm1925, %v1915, %v1918
  %v1938 = vsel %vm1928, %v1924, 1326507024
  %v1939 = vsel %vm1927, %v1921, %v1938
  %v1940 = vsel %vm1926, %v1937, %v1939
  %v1941 = vshll.u32 %v1901, 8
  %v1942 = vmul.u32.u64.compose %v1941, %v1940
  %v1943 = vextract.low.u32 %v1942
  %v1944 = vextract.high.u32 %v1942
  %v1945 = vmul.u32.u64.compose %v1941, %v1936
  %v1946 = vextract.low.u32 %v1945
  %v1947 = vextract.high.u32 %v1945
  %v1948 = vmul.u32 %v1941, %v1932
  %v1949 = vadd.s32 %v1944, %v1946
  %vm1950 = vc.u32 %v1944, %v1946
  %v1951 = vadd.s32 %v1947, 1
  %v1952 = vsel %vm1950, %v1951, %v1947
  %v1953 = vadd.s32 %v1948, %v1952
  %v1954 = vadd.s32 %v1953, 536870912
  %v1955 = vshrl.u32 %v1954, 30
  %v1956 = vshll.u32 %v1955, 30
  %v1957 = vsub.s32 %v1953, %v1956
  %vm1958 = vcmp.lt.s32.totalorder %v1957, 0
  %v1959 = vsub.s32 0, %v1957
  %v1960 = vsel %vm1958, %v1959, %v1957
  %v1961 = vclz %v1960
  %v1962 = vsub.s32 %v1961, 2
  %vm1963 = vcmp.gt.s32.totalorder 0, %v1962
  %v1964 = vsel %vm1963, 0, %v1962
  %v1965 = vsub.s32 32, %v1964
  %v1966 = vshll.u32 %v1957, %v1964
  %v1967 = vshrl.u32 %v1949, %v1965
  %v1968 = vor.u32 %v1966, %v1967
  %v1969 = vsub.s32 4294967266, %v1964
  %v1970 = vadd.s32 %v1969, 127
  %v1971 = vshll.u32 %v1970, 23
  %v1972 = vor.u32 4788187, %v1971
  %v1973 = vand.u32 2147483647, %v1972
  %v1975 = vcvt.s32.f32 %v1968
  %v1976 = vmul.f32 %v1975, %v1973
  %v1977 = vxor.u32 %v1976, 2147483648
  %v1978 = vsel %vm1895, %v1977, %v1976
  %v1979 = vsub.s32 4, %v1955
  %v1980 = vsel %vm1895, %v1979, %v1955
  %v1981 = vsel %vm1894, %v831, %v1978
  %v1982 = vsel %vm1894, 0, %v1980
  %v1983 = vcosq.f32.pop %v1981
  %v1984 = vsinq.f32.pop %v1981
  %vm1985 = vweird.f32 %v831
  %v1986 = vadd.s32 %v1982, 3
  %v1987 = vand.u32 %v1986, 3
  %vm1988 = vcmp.lt.s32.totalorder %v1987, 2
  %vm1989 = vcmp.eq.s32.totalorder %v1987, 0
  %v1990 = vxor.u32 %v1984, 2147483648
  %v1991 = vsel %vm1989, %v1983, %v1990
  %vm1992 = vcmp.eq.s32.totalorder %v1987, 2
  %v1993 = vxor.u32 %v1983, 2147483648
  %v1994 = vsel %vm1992, %v1993, %v1984
  %v1995 = vsel %vm1988, %v1991, %v1994
  %v1996 = vsel %vm1985, nan, %v1995
  %v1997 = vand.u32 2147483647, %v832
  %vm1998 = vcmp.le.f32.partialorder %v1997, 0.7853982
  %vm1999 = vcmp.lt.s32.totalorder %v832, 0
  %v2000 = vand.u32 %v832, 2139095040
  %v2001 = vshrl.u32 %v2000, 23
  %v2002 = vsub.s32 %v2001, 127
  %v2003 = vand.u32 2147483647, %v832
  %v2004 = vand.u32 %v2003, 8388607
  %v2005 = vor.u32 %v2004, 8388608
  %v2006 = vsub.s32 0, %v2005
  %v2007 = vadd.s32 %v2002, 1
  %vm2008 = vcmp.gt.s32.totalorder %v2007, 0
  %v2009 = vsel %vm2008, %v2007, 0
  %v2010 = vshrl.u32 %v2009, 5
  %v2011 = vand.u32 %v2009, 31
  %v2012 = vsub.s32 32, %v2011
  %v2013 = vshrl.u32 683565275, %v2012
  %v2014 = vshll.u32 683565275, %v2011
  %v2015 = vshrl.u32 2475754826, %v2012
  %v2016 = vor.u32 %v2014, %v2015
  %v2017 = vshll.u32 2475754826, %v2011
  %v2018 = vshrl.u32 2131351028, %v2012
  %v2019 = vor.u32 %v2017, %v2018
  %v2020 = vshll.u32 2131351028, %v2011
  %v2021 = vshrl.u32 2102212464, %v2012
  %v2022 = vor.u32 %v2020, %v2021
  %v2023 = vshll.u32 2102212464, %v2011
  %v2024 = vshrl.u32 920167782, %v2012
  %v2025 = vor.u32 %v2023, %v2024
  %v2026 = vshll.u32 920167782, %v2011
  %v2027 = vshrl.u32 1326507024, %v2012
  %v2028 = vor.u32 %v2026, %v2027
  %vm2029 = vcmp.lt.s32.totalorder %v2010, 1
  %vm2030 = vcmp.lt.s32.totalorder %v2010, 2
  %vm2031 = vcmp.lt.s32.totalorder %v2010, 3
  %vm2032 = vcmp.lt.s32.totalorder %v2010, 4
  %v2033 = vsel %vm2029, %v2013, %v2016
  %v2034 = vsel %vm2032, %v2022, 2102212464
  %v2035 = vsel %vm2031, %v2019, %v2034
  %v2036 = vsel %vm2030, %v2033, %v2035
  %v2037 = vsel %vm2029, %v2016, %v2019
  %v2038 = vsel %vm2032, %v2025, 920167782
  %v2039 = vsel %vm2031, %v2022, %v2038
  %v2040 = vsel %vm2030, %v2037, %v2039
  %v2041 = vsel %vm2029, %v2019, %v2022
  %v2042 = vsel %vm2032, %v2028, 1326507024
  %v2043 = vsel %vm2031, %v2025, %v2042
  %v2044 = vsel %vm2030, %v2041, %v2043
  %v2045 = vshll.u32 %v2005, 8
  %v2046 = vmul.u32.u64.compose %v2045, %v2044
  %v2047 = vextract.low.u32 %v2046
  %v2048 = vextract.high.u32 %v2046
  %v2049 = vmul.u32.u64.compose %v2045, %v2040
  %v2050 = vextract.low.u32 %v2049
  %v2051 = vextract.high.u32 %v2049
  %v2052 = vmul.u32 %v2045, %v2036
  %v2053 = vadd.s32 %v2048, %v2050
  %vm2054 = vc.u32 %v2048, %v2050
  %v2055 = vadd.s32 %v2051, 1
  %v2056 = vsel %vm2054, %v2055, %v2051
  %v2057 = vadd.s32 %v2052, %v2056
  %v2058 = vadd.s32 %v2057, 536870912
  %v2059 = vshrl.u32 %v2058, 30
  %v2060 = vshll.u32 %v2059, 30
  %v2061 = vsub.s32 %v2057, %v2060
  %vm2062 = vcmp.lt.s32.totalorder %v2061, 0
  %v2063 = vsub.s32 0, %v2061
  %v2064 = vsel %vm2062, %v2063, %v2061
  %v2065 = vclz %v2064
  %v2066 = vsub.s32 %v2065, 2
  %vm2067 = vcmp.gt.s32.totalorder 0, %v2066
  %v2068 = vsel %vm2067, 0, %v2066
  %v2069 = vsub.s32 32, %v2068
  %v2070 = vshll.u32 %v2061, %v2068
  %v2071 = vshrl.u32 %v2053, %v2069
  %v2072 = vor.u32 %v2070, %v2071
  %v2073 = vsub.s32 4294967266, %v2068
  %v2074 = vadd.s32 %v2073, 127
  %v2075 = vshll.u32 %v2074, 23
  %v2076 = vor.u32 4788187, %v2075
  %v2077 = vand.u32 2147483647, %v2076
  %v2079 = vcvt.s32.f32 %v2072
  %v2080 = vmul.f32 %v2079, %v2077
  %v2081 = vxor.u32 %v2080, 2147483648
  %v2082 = vsel %vm1999, %v2081, %v2080
  %v2083 = vsub.s32 4, %v2059
  %v2084 = vsel %vm1999, %v2083, %v2059
  %v2085 = vsel %vm1998, %v832, %v2082
  %v2086 = vsel %vm1998, 0, %v2084
  %v2087 = vcosq.f32.pop %v2085
  %v2088 = vsinq.f32.pop %v2085
  %vm2089 = vweird.f32 %v832
  %v2090 = vadd.s32 %v2086, 3
  %v2091 = vand.u32 %v2090, 3
  %vm2092 = vcmp.lt.s32.totalorder %v2091, 2
  %vm2093 = vcmp.eq.s32.totalorder %v2091, 0
  %v2094 = vxor.u32 %v2088, 2147483648
  %v2095 = vsel %vm2093, %v2087, %v2094
  %vm2096 = vcmp.eq.s32.totalorder %v2091, 2
  %v2097 = vxor.u32 %v2087, 2147483648
  %v2098 = vsel %vm2096, %v2097, %v2088
  %v2099 = vsel %vm2092, %v2095, %v2098
  %v2100 = vsel %vm2089, nan, %v2099
  %v2101 = vand.u32 2147483647, %v833
  %vm2102 = vcmp.le.f32.partialorder %v2101, 0.7853982
  %vm2103 = vcmp.lt.s32.totalorder %v833, 0
  %v2104 = vand.u32 %v833, 2139095040
  %v2105 = vshrl.u32 %v2104, 23
  %v2106 = vsub.s32 %v2105, 127
  %v2107 = vand.u32 2147483647, %v833
  %v2108 = vand.u32 %v2107, 8388607
  %v2109 = vor.u32 %v2108, 8388608
  %v2110 = vsub.s32 0, %v2109
  %v2111 = vadd.s32 %v2106, 1
  %vm2112 = vcmp.gt.s32.totalorder %v2111, 0
  %v2113 = vsel %vm2112, %v2111, 0
  %v2114 = vshrl.u32 %v2113, 5
  %v2115 = vand.u32 %v2113, 31
  %v2116 = vsub.s32 32, %v2115
  %v2117 = vshrl.u32 683565275, %v2116
  %v2118 = vshll.u32 683565275, %v2115
  %v2119 = vshrl.u32 2475754826, %v2116
  %v2120 = vor.u32 %v2118, %v2119
  %v2121 = vshll.u32 2475754826, %v2115
  %v2122 = vshrl.u32 2131351028, %v2116
  %v2123 = vor.u32 %v2121, %v2122
  %v2124 = vshll.u32 2131351028, %v2115
  %v2125 = vshrl.u32 2102212464, %v2116
  %v2126 = vor.u32 %v2124, %v2125
  %v2127 = vshll.u32 2102212464, %v2115
  %v2128 = vshrl.u32 920167782, %v2116
  %v2129 = vor.u32 %v2127, %v2128
  %v2130 = vshll.u32 920167782, %v2115
  %v2131 = vshrl.u32 1326507024, %v2116
  %v2132 = vor.u32 %v2130, %v2131
  %vm2133 = vcmp.lt.s32.totalorder %v2114, 1
  %vm2134 = vcmp.lt.s32.totalorder %v2114, 2
  %vm2135 = vcmp.lt.s32.totalorder %v2114, 3
  %vm2136 = vcmp.lt.s32.totalorder %v2114, 4
  %v2137 = vsel %vm2133, %v2117, %v2120
  %v2138 = vsel %vm2136, %v2126, 2102212464
  %v2139 = vsel %vm2135, %v2123, %v2138
  %v2140 = vsel %vm2134, %v2137, %v2139
  %v2141 = vsel %vm2133, %v2120, %v2123
  %v2142 = vsel %vm2136, %v2129, 920167782
  %v2143 = vsel %vm2135, %v2126, %v2142
  %v2144 = vsel %vm2134, %v2141, %v2143
  %v2145 = vsel %vm2133, %v2123, %v2126
  %v2146 = vsel %vm2136, %v2132, 1326507024
  %v2147 = vsel %vm2135, %v2129, %v2146
  %v2148 = vsel %vm2134, %v2145, %v2147
  %v2149 = vshll.u32 %v2109, 8
  %v2150 = vmul.u32.u64.compose %v2149, %v2148
  %v2151 = vextract.low.u32 %v2150
  %v2152 = vextract.high.u32 %v2150
  %v2153 = vmul.u32.u64.compose %v2149, %v2144
  %v2154 = vextract.low.u32 %v2153
  %v2155 = vextract.high.u32 %v2153
  %v2156 = vmul.u32 %v2149, %v2140
  %v2157 = vadd.s32 %v2152, %v2154
  %vm2158 = vc.u32 %v2152, %v2154
  %v2159 = vadd.s32 %v2155, 1
  %v2160 = vsel %vm2158, %v2159, %v2155
  %v2161 = vadd.s32 %v2156, %v2160
  %v2162 = vadd.s32 %v2161, 536870912
  %v2163 = vshrl.u32 %v2162, 30
  %v2164 = vshll.u32 %v2163, 30
  %v2165 = vsub.s32 %v2161, %v2164
  %vm2166 = vcmp.lt.s32.totalorder %v2165, 0
  %v2167 = vsub.s32 0, %v2165
  %v2168 = vsel %vm2166, %v2167, %v2165
  %v2169 = vclz %v2168
  %v2170 = vsub.s32 %v2169, 2
  %vm2171 = vcmp.gt.s32.totalorder 0, %v2170
  %v2172 = vsel %vm2171, 0, %v2170
  %v2173 = vsub.s32 32, %v2172
  %v2174 = vshll.u32 %v2165, %v2172
  %v2175 = vshrl.u32 %v2157, %v2173
  %v2176 = vor.u32 %v2174, %v2175
  %v2177 = vsub.s32 4294967266, %v2172
  %v2178 = vadd.s32 %v2177, 127
  %v2179 = vshll.u32 %v2178, 23
  %v2180 = vor.u32 4788187, %v2179
  %v2181 = vand.u32 2147483647, %v2180
  %v2183 = vcvt.s32.f32 %v2176
  %v2184 = vmul.f32 %v2183, %v2181
  %v2185 = vxor.u32 %v2184, 2147483648
  %v2186 = vsel %vm2103, %v2185, %v2184
  %v2187 = vsub.s32 4, %v2163
  %v2188 = vsel %vm2103, %v2187, %v2163
  %v2189 = vsel %vm2102, %v833, %v2186
  %v2190 = vsel %vm2102, 0, %v2188
  %v2191 = vcosq.f32.pop %v2189
  %v2192 = vsinq.f32.pop %v2189
  %vm2193 = vweird.f32 %v833
  %v2194 = vadd.s32 %v2190, 3
  %v2195 = vand.u32 %v2194, 3
  %vm2196 = vcmp.lt.s32.totalorder %v2195, 2
  %vm2197 = vcmp.eq.s32.totalorder %v2195, 0
  %v2198 = vxor.u32 %v2192, 2147483648
  %v2199 = vsel %vm2197, %v2191, %v2198
  %vm2200 = vcmp.eq.s32.totalorder %v2195, 2
  %v2201 = vxor.u32 %v2191, 2147483648
  %v2202 = vsel %vm2200, %v2201, %v2192
  %v2203 = vsel %vm2196, %v2199, %v2202
  %v2204 = vsel %vm2193, nan, %v2203
  %v2205 = vand.u32 2147483647, %v834
  %vm2206 = vcmp.le.f32.partialorder %v2205, 0.7853982
  %vm2207 = vcmp.lt.s32.totalorder %v834, 0
  %v2208 = vand.u32 %v834, 2139095040
  %v2209 = vshrl.u32 %v2208, 23
  %v2210 = vsub.s32 %v2209, 127
  %v2211 = vand.u32 2147483647, %v834
  %v2212 = vand.u32 %v2211, 8388607
  %v2213 = vor.u32 %v2212, 8388608
  %v2214 = vsub.s32 0, %v2213
  %v2215 = vadd.s32 %v2210, 1
  %vm2216 = vcmp.gt.s32.totalorder %v2215, 0
  %v2217 = vsel %vm2216, %v2215, 0
  %v2218 = vshrl.u32 %v2217, 5
  %v2219 = vand.u32 %v2217, 31
  %v2220 = vsub.s32 32, %v2219
  %v2221 = vshrl.u32 683565275, %v2220
  %v2222 = vshll.u32 683565275, %v2219
  %v2223 = vshrl.u32 2475754826, %v2220
  %v2224 = vor.u32 %v2222, %v2223
  %v2225 = vshll.u32 2475754826, %v2219
  %v2226 = vshrl.u32 2131351028, %v2220
  %v2227 = vor.u32 %v2225, %v2226
  %v2228 = vshll.u32 2131351028, %v2219
  %v2229 = vshrl.u32 2102212464, %v2220
  %v2230 = vor.u32 %v2228, %v2229
  %v2231 = vshll.u32 2102212464, %v2219
  %v2232 = vshrl.u32 920167782, %v2220
  %v2233 = vor.u32 %v2231, %v2232
  %v2234 = vshll.u32 920167782, %v2219
  %v2235 = vshrl.u32 1326507024, %v2220
  %v2236 = vor.u32 %v2234, %v2235
  %vm2237 = vcmp.lt.s32.totalorder %v2218, 1
  %vm2238 = vcmp.lt.s32.totalorder %v2218, 2
  %vm2239 = vcmp.lt.s32.totalorder %v2218, 3
  %vm2240 = vcmp.lt.s32.totalorder %v2218, 4
  %v2241 = vsel %vm2237, %v2221, %v2224
  %v2242 = vsel %vm2240, %v2230, 2102212464
  %v2243 = vsel %vm2239, %v2227, %v2242
  %v2244 = vsel %vm2238, %v2241, %v2243
  %v2245 = vsel %vm2237, %v2224, %v2227
  %v2246 = vsel %vm2240, %v2233, 920167782
  %v2247 = vsel %vm2239, %v2230, %v2246
  %v2248 = vsel %vm2238, %v2245, %v2247
  %v2249 = vsel %vm2237, %v2227, %v2230
  %v2250 = vsel %vm2240, %v2236, 1326507024
  %v2251 = vsel %vm2239, %v2233, %v2250
  %v2252 = vsel %vm2238, %v2249, %v2251
  %v2253 = vshll.u32 %v2213, 8
  %v2254 = vmul.u32.u64.compose %v2253, %v2252
  %v2255 = vextract.low.u32 %v2254
  %v2256 = vextract.high.u32 %v2254
  %v2257 = vmul.u32.u64.compose %v2253, %v2248
  %v2258 = vextract.low.u32 %v2257
  %v2259 = vextract.high.u32 %v2257
  %v2260 = vmul.u32 %v2253, %v2244
  %v2261 = vadd.s32 %v2256, %v2258
  %vm2262 = vc.u32 %v2256, %v2258
  %v2263 = vadd.s32 %v2259, 1
  %v2264 = vsel %vm2262, %v2263, %v2259
  %v2265 = vadd.s32 %v2260, %v2264
  %v2266 = vadd.s32 %v2265, 536870912
  %v2267 = vshrl.u32 %v2266, 30
  %v2268 = vshll.u32 %v2267, 30
  %v2269 = vsub.s32 %v2265, %v2268
  %vm2270 = vcmp.lt.s32.totalorder %v2269, 0
  %v2271 = vsub.s32 0, %v2269
  %v2272 = vsel %vm2270, %v2271, %v2269
  %v2273 = vclz %v2272
  %v2274 = vsub.s32 %v2273, 2
  %vm2275 = vcmp.gt.s32.totalorder 0, %v2274
  %v2276 = vsel %vm2275, 0, %v2274
  %v2277 = vsub.s32 32, %v2276
  %v2278 = vshll.u32 %v2269, %v2276
  %v2279 = vshrl.u32 %v2261, %v2277
  %v2280 = vor.u32 %v2278, %v2279
  %v2281 = vsub.s32 4294967266, %v2276
  %v2282 = vadd.s32 %v2281, 127
  %v2283 = vshll.u32 %v2282, 23
  %v2284 = vor.u32 4788187, %v2283
  %v2285 = vand.u32 2147483647, %v2284
  %v2287 = vcvt.s32.f32 %v2280
  %v2288 = vmul.f32 %v2287, %v2285
  %v2289 = vxor.u32 %v2288, 2147483648
  %v2290 = vsel %vm2207, %v2289, %v2288
  %v2291 = vsub.s32 4, %v2267
  %v2292 = vsel %vm2207, %v2291, %v2267
  %v2293 = vsel %vm2206, %v834, %v2290
  %v2294 = vsel %vm2206, 0, %v2292
  %v2295 = vcosq.f32.pop %v2293
  %v2296 = vsinq.f32.pop %v2293
  %vm2297 = vweird.f32 %v834
  %v2298 = vadd.s32 %v2294, 3
  %v2299 = vand.u32 %v2298, 3
  %vm2300 = vcmp.lt.s32.totalorder %v2299, 2
  %vm2301 = vcmp.eq.s32.totalorder %v2299, 0
  %v2302 = vxor.u32 %v2296, 2147483648
  %v2303 = vsel %vm2301, %v2295, %v2302
  %vm2304 = vcmp.eq.s32.totalorder %v2299, 2
  %v2305 = vxor.u32 %v2295, 2147483648
  %v2306 = vsel %vm2304, %v2305, %v2296
  %v2307 = vsel %vm2300, %v2303, %v2306
  %v2308 = vsel %vm2297, nan, %v2307
  %v2309 = vand.u32 2147483647, %v835
  %vm2310 = vcmp.le.f32.partialorder %v2309, 0.7853982
  %vm2311 = vcmp.lt.s32.totalorder %v835, 0
  %v2312 = vand.u32 %v835, 2139095040
  %v2313 = vshrl.u32 %v2312, 23
  %v2314 = vsub.s32 %v2313, 127
  %v2315 = vand.u32 2147483647, %v835
  %v2316 = vand.u32 %v2315, 8388607
  %v2317 = vor.u32 %v2316, 8388608
  %v2318 = vsub.s32 0, %v2317
  %v2319 = vadd.s32 %v2314, 1
  %vm2320 = vcmp.gt.s32.totalorder %v2319, 0
  %v2321 = vsel %vm2320, %v2319, 0
  %v2322 = vshrl.u32 %v2321, 5
  %v2323 = vand.u32 %v2321, 31
  %v2324 = vsub.s32 32, %v2323
  %v2325 = vshrl.u32 683565275, %v2324
  %v2326 = vshll.u32 683565275, %v2323
  %v2327 = vshrl.u32 2475754826, %v2324
  %v2328 = vor.u32 %v2326, %v2327
  %v2329 = vshll.u32 2475754826, %v2323
  %v2330 = vshrl.u32 2131351028, %v2324
  %v2331 = vor.u32 %v2329, %v2330
  %v2332 = vshll.u32 2131351028, %v2323
  %v2333 = vshrl.u32 2102212464, %v2324
  %v2334 = vor.u32 %v2332, %v2333
  %v2335 = vshll.u32 2102212464, %v2323
  %v2336 = vshrl.u32 920167782, %v2324
  %v2337 = vor.u32 %v2335, %v2336
  %v2338 = vshll.u32 920167782, %v2323
  %v2339 = vshrl.u32 1326507024, %v2324
  %v2340 = vor.u32 %v2338, %v2339
  %vm2341 = vcmp.lt.s32.totalorder %v2322, 1
  %vm2342 = vcmp.lt.s32.totalorder %v2322, 2
  %vm2343 = vcmp.lt.s32.totalorder %v2322, 3
  %vm2344 = vcmp.lt.s32.totalorder %v2322, 4
  %v2345 = vsel %vm2341, %v2325, %v2328
  %v2346 = vsel %vm2344, %v2334, 2102212464
  %v2347 = vsel %vm2343, %v2331, %v2346
  %v2348 = vsel %vm2342, %v2345, %v2347
  %v2349 = vsel %vm2341, %v2328, %v2331
  %v2350 = vsel %vm2344, %v2337, 920167782
  %v2351 = vsel %vm2343, %v2334, %v2350
  %v2352 = vsel %vm2342, %v2349, %v2351
  %v2353 = vsel %vm2341, %v2331, %v2334
  %v2354 = vsel %vm2344, %v2340, 1326507024
  %v2355 = vsel %vm2343, %v2337, %v2354
  %v2356 = vsel %vm2342, %v2353, %v2355
  %v2357 = vshll.u32 %v2317, 8
  %v2358 = vmul.u32.u64.compose %v2357, %v2356
  %v2359 = vextract.low.u32 %v2358
  %v2360 = vextract.high.u32 %v2358
  %v2361 = vmul.u32.u64.compose %v2357, %v2352
  %v2362 = vextract.low.u32 %v2361
  %v2363 = vextract.high.u32 %v2361
  %v2364 = vmul.u32 %v2357, %v2348
  %v2365 = vadd.s32 %v2360, %v2362
  %vm2366 = vc.u32 %v2360, %v2362
  %v2367 = vadd.s32 %v2363, 1
  %v2368 = vsel %vm2366, %v2367, %v2363
  %v2369 = vadd.s32 %v2364, %v2368
  %v2370 = vadd.s32 %v2369, 536870912
  %v2371 = vshrl.u32 %v2370, 30
  %v2372 = vshll.u32 %v2371, 30
  %v2373 = vsub.s32 %v2369, %v2372
  %vm2374 = vcmp.lt.s32.totalorder %v2373, 0
  %v2375 = vsub.s32 0, %v2373
  %v2376 = vsel %vm2374, %v2375, %v2373
  %v2377 = vclz %v2376
  %v2378 = vsub.s32 %v2377, 2
  %vm2379 = vcmp.gt.s32.totalorder 0, %v2378
  %v2380 = vsel %vm2379, 0, %v2378
  %v2381 = vsub.s32 32, %v2380
  %v2382 = vshll.u32 %v2373, %v2380
  %v2383 = vshrl.u32 %v2365, %v2381
  %v2384 = vor.u32 %v2382, %v2383
  %v2385 = vsub.s32 4294967266, %v2380
  %v2386 = vadd.s32 %v2385, 127
  %v2387 = vshll.u32 %v2386, 23
  %v2388 = vor.u32 4788187, %v2387
  %v2389 = vand.u32 2147483647, %v2388
  %v2391 = vcvt.s32.f32 %v2384
  %v2392 = vmul.f32 %v2391, %v2389
  %v2393 = vxor.u32 %v2392, 2147483648
  %v2394 = vsel %vm2311, %v2393, %v2392
  %v2395 = vsub.s32 4, %v2371
  %v2396 = vsel %vm2311, %v2395, %v2371
  %v2397 = vsel %vm2310, %v835, %v2394
  %v2398 = vsel %vm2310, 0, %v2396
  %v2399 = vcosq.f32.pop %v2397
  %v2400 = vsinq.f32.pop %v2397
  %vm2401 = vweird.f32 %v835
  %v2402 = vadd.s32 %v2398, 3
  %v2403 = vand.u32 %v2402, 3
  %vm2404 = vcmp.lt.s32.totalorder %v2403, 2
  %vm2405 = vcmp.eq.s32.totalorder %v2403, 0
  %v2406 = vxor.u32 %v2400, 2147483648
  %v2407 = vsel %vm2405, %v2399, %v2406
  %vm2408 = vcmp.eq.s32.totalorder %v2403, 2
  %v2409 = vxor.u32 %v2399, 2147483648
  %v2410 = vsel %vm2408, %v2409, %v2400
  %v2411 = vsel %vm2404, %v2407, %v2410
  %v2412 = vsel %vm2401, nan, %v2411
  %v2413 = vand.u32 2147483647, %v836
  %vm2414 = vcmp.le.f32.partialorder %v2413, 0.7853982
  %vm2415 = vcmp.lt.s32.totalorder %v836, 0
  %v2416 = vand.u32 %v836, 2139095040
  %v2417 = vshrl.u32 %v2416, 23
  %v2418 = vsub.s32 %v2417, 127
  %v2419 = vand.u32 2147483647, %v836
  %v2420 = vand.u32 %v2419, 8388607
  %v2421 = vor.u32 %v2420, 8388608
  %v2422 = vsub.s32 0, %v2421
  %v2423 = vadd.s32 %v2418, 1
  %vm2424 = vcmp.gt.s32.totalorder %v2423, 0
  %v2425 = vsel %vm2424, %v2423, 0
  %v2426 = vshrl.u32 %v2425, 5
  %v2427 = vand.u32 %v2425, 31
  %v2428 = vsub.s32 32, %v2427
  %v2429 = vshrl.u32 683565275, %v2428
  %v2430 = vshll.u32 683565275, %v2427
  %v2431 = vshrl.u32 2475754826, %v2428
  %v2432 = vor.u32 %v2430, %v2431
  %v2433 = vshll.u32 2475754826, %v2427
  %v2434 = vshrl.u32 2131351028, %v2428
  %v2435 = vor.u32 %v2433, %v2434
  %v2436 = vshll.u32 2131351028, %v2427
  %v2437 = vshrl.u32 2102212464, %v2428
  %v2438 = vor.u32 %v2436, %v2437
  %v2439 = vshll.u32 2102212464, %v2427
  %v2440 = vshrl.u32 920167782, %v2428
  %v2441 = vor.u32 %v2439, %v2440
  %v2442 = vshll.u32 920167782, %v2427
  %v2443 = vshrl.u32 1326507024, %v2428
  %v2444 = vor.u32 %v2442, %v2443
  %vm2445 = vcmp.lt.s32.totalorder %v2426, 1
  %vm2446 = vcmp.lt.s32.totalorder %v2426, 2
  %vm2447 = vcmp.lt.s32.totalorder %v2426, 3
  %vm2448 = vcmp.lt.s32.totalorder %v2426, 4
  %v2449 = vsel %vm2445, %v2429, %v2432
  %v2450 = vsel %vm2448, %v2438, 2102212464
  %v2451 = vsel %vm2447, %v2435, %v2450
  %v2452 = vsel %vm2446, %v2449, %v2451
  %v2453 = vsel %vm2445, %v2432, %v2435
  %v2454 = vsel %vm2448, %v2441, 920167782
  %v2455 = vsel %vm2447, %v2438, %v2454
  %v2456 = vsel %vm2446, %v2453, %v2455
  %v2457 = vsel %vm2445, %v2435, %v2438
  %v2458 = vsel %vm2448, %v2444, 1326507024
  %v2459 = vsel %vm2447, %v2441, %v2458
  %v2460 = vsel %vm2446, %v2457, %v2459
  %v2461 = vshll.u32 %v2421, 8
  %v2462 = vmul.u32.u64.compose %v2461, %v2460
  %v2463 = vextract.low.u32 %v2462
  %v2464 = vextract.high.u32 %v2462
  %v2465 = vmul.u32.u64.compose %v2461, %v2456
  %v2466 = vextract.low.u32 %v2465
  %v2467 = vextract.high.u32 %v2465
  %v2468 = vmul.u32 %v2461, %v2452
  %v2469 = vadd.s32 %v2464, %v2466
  %vm2470 = vc.u32 %v2464, %v2466
  %v2471 = vadd.s32 %v2467, 1
  %v2472 = vsel %vm2470, %v2471, %v2467
  %v2473 = vadd.s32 %v2468, %v2472
  %v2474 = vadd.s32 %v2473, 536870912
  %v2475 = vshrl.u32 %v2474, 30
  %v2476 = vshll.u32 %v2475, 30
  %v2477 = vsub.s32 %v2473, %v2476
  %vm2478 = vcmp.lt.s32.totalorder %v2477, 0
  %v2479 = vsub.s32 0, %v2477
  %v2480 = vsel %vm2478, %v2479, %v2477
  %v2481 = vclz %v2480
  %v2482 = vsub.s32 %v2481, 2
  %vm2483 = vcmp.gt.s32.totalorder 0, %v2482
  %v2484 = vsel %vm2483, 0, %v2482
  %v2485 = vsub.s32 32, %v2484
  %v2486 = vshll.u32 %v2477, %v2484
  %v2487 = vshrl.u32 %v2469, %v2485
  %v2488 = vor.u32 %v2486, %v2487
  %v2489 = vsub.s32 4294967266, %v2484
  %v2490 = vadd.s32 %v2489, 127
  %v2491 = vshll.u32 %v2490, 23
  %v2492 = vor.u32 4788187, %v2491
  %v2493 = vand.u32 2147483647, %v2492
  %v2495 = vcvt.s32.f32 %v2488
  %v2496 = vmul.f32 %v2495, %v2493
  %v2497 = vxor.u32 %v2496, 2147483648
  %v2498 = vsel %vm2415, %v2497, %v2496
  %v2499 = vsub.s32 4, %v2475
  %v2500 = vsel %vm2415, %v2499, %v2475
  %v2501 = vsel %vm2414, %v836, %v2498
  %v2502 = vsel %vm2414, 0, %v2500
  %v2503 = vcosq.f32.pop %v2501
  %v2504 = vsinq.f32.pop %v2501
  %vm2505 = vweird.f32 %v836
  %v2506 = vadd.s32 %v2502, 3
  %v2507 = vand.u32 %v2506, 3
  %vm2508 = vcmp.lt.s32.totalorder %v2507, 2
  %vm2509 = vcmp.eq.s32.totalorder %v2507, 0
  %v2510 = vxor.u32 %v2504, 2147483648
  %v2511 = vsel %vm2509, %v2503, %v2510
  %vm2512 = vcmp.eq.s32.totalorder %v2507, 2
  %v2513 = vxor.u32 %v2503, 2147483648
  %v2514 = vsel %vm2512, %v2513, %v2504
  %v2515 = vsel %vm2508, %v2511, %v2514
  %v2516 = vsel %vm2505, nan, %v2515
  %v2517 = vand.u32 2147483647, %v837
  %vm2518 = vcmp.le.f32.partialorder %v2517, 0.7853982
  %vm2519 = vcmp.lt.s32.totalorder %v837, 0
  %v2520 = vand.u32 %v837, 2139095040
  %v2521 = vshrl.u32 %v2520, 23
  %v2522 = vsub.s32 %v2521, 127
  %v2523 = vand.u32 2147483647, %v837
  %v2524 = vand.u32 %v2523, 8388607
  %v2525 = vor.u32 %v2524, 8388608
  %v2526 = vsub.s32 0, %v2525
  %v2527 = vadd.s32 %v2522, 1
  %vm2528 = vcmp.gt.s32.totalorder %v2527, 0
  %v2529 = vsel %vm2528, %v2527, 0
  %v2530 = vshrl.u32 %v2529, 5
  %v2531 = vand.u32 %v2529, 31
  %v2532 = vsub.s32 32, %v2531
  %v2533 = vshrl.u32 683565275, %v2532
  %v2534 = vshll.u32 683565275, %v2531
  %v2535 = vshrl.u32 2475754826, %v2532
  %v2536 = vor.u32 %v2534, %v2535
  %v2537 = vshll.u32 2475754826, %v2531
  %v2538 = vshrl.u32 2131351028, %v2532
  %v2539 = vor.u32 %v2537, %v2538
  %v2540 = vshll.u32 2131351028, %v2531
  %v2541 = vshrl.u32 2102212464, %v2532
  %v2542 = vor.u32 %v2540, %v2541
  %v2543 = vshll.u32 2102212464, %v2531
  %v2544 = vshrl.u32 920167782, %v2532
  %v2545 = vor.u32 %v2543, %v2544
  %v2546 = vshll.u32 920167782, %v2531
  %v2547 = vshrl.u32 1326507024, %v2532
  %v2548 = vor.u32 %v2546, %v2547
  %vm2549 = vcmp.lt.s32.totalorder %v2530, 1
  %vm2550 = vcmp.lt.s32.totalorder %v2530, 2
  %vm2551 = vcmp.lt.s32.totalorder %v2530, 3
  %vm2552 = vcmp.lt.s32.totalorder %v2530, 4
  %v2553 = vsel %vm2549, %v2533, %v2536
  %v2554 = vsel %vm2552, %v2542, 2102212464
  %v2555 = vsel %vm2551, %v2539, %v2554
  %v2556 = vsel %vm2550, %v2553, %v2555
  %v2557 = vsel %vm2549, %v2536, %v2539
  %v2558 = vsel %vm2552, %v2545, 920167782
  %v2559 = vsel %vm2551, %v2542, %v2558
  %v2560 = vsel %vm2550, %v2557, %v2559
  %v2561 = vsel %vm2549, %v2539, %v2542
  %v2562 = vsel %vm2552, %v2548, 1326507024
  %v2563 = vsel %vm2551, %v2545, %v2562
  %v2564 = vsel %vm2550, %v2561, %v2563
  %v2565 = vshll.u32 %v2525, 8
  %v2566 = vmul.u32.u64.compose %v2565, %v2564
  %v2567 = vextract.low.u32 %v2566
  %v2568 = vextract.high.u32 %v2566
  %v2569 = vmul.u32.u64.compose %v2565, %v2560
  %v2570 = vextract.low.u32 %v2569
  %v2571 = vextract.high.u32 %v2569
  %v2572 = vmul.u32 %v2565, %v2556
  %v2573 = vadd.s32 %v2568, %v2570
  %vm2574 = vc.u32 %v2568, %v2570
  %v2575 = vadd.s32 %v2571, 1
  %v2576 = vsel %vm2574, %v2575, %v2571
  %v2577 = vadd.s32 %v2572, %v2576
  %v2578 = vadd.s32 %v2577, 536870912
  %v2579 = vshrl.u32 %v2578, 30
  %v2580 = vshll.u32 %v2579, 30
  %v2581 = vsub.s32 %v2577, %v2580
  %vm2582 = vcmp.lt.s32.totalorder %v2581, 0
  %v2583 = vsub.s32 0, %v2581
  %v2584 = vsel %vm2582, %v2583, %v2581
  %v2585 = vclz %v2584
  %v2586 = vsub.s32 %v2585, 2
  %vm2587 = vcmp.gt.s32.totalorder 0, %v2586
  %v2588 = vsel %vm2587, 0, %v2586
  %v2589 = vsub.s32 32, %v2588
  %v2590 = vshll.u32 %v2581, %v2588
  %v2591 = vshrl.u32 %v2573, %v2589
  %v2592 = vor.u32 %v2590, %v2591
  %v2593 = vsub.s32 4294967266, %v2588
  %v2594 = vadd.s32 %v2593, 127
  %v2595 = vshll.u32 %v2594, 23
  %v2596 = vor.u32 4788187, %v2595
  %v2597 = vand.u32 2147483647, %v2596
  %v2599 = vcvt.s32.f32 %v2592
  %v2600 = vmul.f32 %v2599, %v2597
  %v2601 = vxor.u32 %v2600, 2147483648
  %v2602 = vsel %vm2519, %v2601, %v2600
  %v2603 = vsub.s32 4, %v2579
  %v2604 = vsel %vm2519, %v2603, %v2579
  %v2605 = vsel %vm2518, %v837, %v2602
  %v2606 = vsel %vm2518, 0, %v2604
  %v2607 = vcosq.f32.pop %v2605
  %v2608 = vsinq.f32.pop %v2605
  %vm2609 = vweird.f32 %v837
  %v2610 = vadd.s32 %v2606, 3
  %v2611 = vand.u32 %v2610, 3
  %vm2612 = vcmp.lt.s32.totalorder %v2611, 2
  %vm2613 = vcmp.eq.s32.totalorder %v2611, 0
  %v2614 = vxor.u32 %v2608, 2147483648
  %v2615 = vsel %vm2613, %v2607, %v2614
  %vm2616 = vcmp.eq.s32.totalorder %v2611, 2
  %v2617 = vxor.u32 %v2607, 2147483648
  %v2618 = vsel %vm2616, %v2617, %v2608
  %v2619 = vsel %vm2612, %v2615, %v2618
  %v2620 = vsel %vm2609, nan, %v2619
  %v2621 = vand.u32 2147483647, %v838
  %vm2622 = vcmp.le.f32.partialorder %v2621, 0.7853982
  %vm2623 = vcmp.lt.s32.totalorder %v838, 0
  %v2624 = vand.u32 %v838, 2139095040
  %v2625 = vshrl.u32 %v2624, 23
  %v2626 = vsub.s32 %v2625, 127
  %v2627 = vand.u32 2147483647, %v838
  %v2628 = vand.u32 %v2627, 8388607
  %v2629 = vor.u32 %v2628, 8388608
  %v2630 = vsub.s32 0, %v2629
  %v2631 = vadd.s32 %v2626, 1
  %vm2632 = vcmp.gt.s32.totalorder %v2631, 0
  %v2633 = vsel %vm2632, %v2631, 0
  %v2634 = vshrl.u32 %v2633, 5
  %v2635 = vand.u32 %v2633, 31
  %v2636 = vsub.s32 32, %v2635
  %v2637 = vshrl.u32 683565275, %v2636
  %v2638 = vshll.u32 683565275, %v2635
  %v2639 = vshrl.u32 2475754826, %v2636
  %v2640 = vor.u32 %v2638, %v2639
  %v2641 = vshll.u32 2475754826, %v2635
  %v2642 = vshrl.u32 2131351028, %v2636
  %v2643 = vor.u32 %v2641, %v2642
  %v2644 = vshll.u32 2131351028, %v2635
  %v2645 = vshrl.u32 2102212464, %v2636
  %v2646 = vor.u32 %v2644, %v2645
  %v2647 = vshll.u32 2102212464, %v2635
  %v2648 = vshrl.u32 920167782, %v2636
  %v2649 = vor.u32 %v2647, %v2648
  %v2650 = vshll.u32 920167782, %v2635
  %v2651 = vshrl.u32 1326507024, %v2636
  %v2652 = vor.u32 %v2650, %v2651
  %vm2653 = vcmp.lt.s32.totalorder %v2634, 1
  %vm2654 = vcmp.lt.s32.totalorder %v2634, 2
  %vm2655 = vcmp.lt.s32.totalorder %v2634, 3
  %vm2656 = vcmp.lt.s32.totalorder %v2634, 4
  %v2657 = vsel %vm2653, %v2637, %v2640
  %v2658 = vsel %vm2656, %v2646, 2102212464
  %v2659 = vsel %vm2655, %v2643, %v2658
  %v2660 = vsel %vm2654, %v2657, %v2659
  %v2661 = vsel %vm2653, %v2640, %v2643
  %v2662 = vsel %vm2656, %v2649, 920167782
  %v2663 = vsel %vm2655, %v2646, %v2662
  %v2664 = vsel %vm2654, %v2661, %v2663
  %v2665 = vsel %vm2653, %v2643, %v2646
  %v2666 = vsel %vm2656, %v2652, 1326507024
  %v2667 = vsel %vm2655, %v2649, %v2666
  %v2668 = vsel %vm2654, %v2665, %v2667
  %v2669 = vshll.u32 %v2629, 8
  %v2670 = vmul.u32.u64.compose %v2669, %v2668
  %v2671 = vextract.low.u32 %v2670
  %v2672 = vextract.high.u32 %v2670
  %v2673 = vmul.u32.u64.compose %v2669, %v2664
  %v2674 = vextract.low.u32 %v2673
  %v2675 = vextract.high.u32 %v2673
  %v2676 = vmul.u32 %v2669, %v2660
  %v2677 = vadd.s32 %v2672, %v2674
  %vm2678 = vc.u32 %v2672, %v2674
  %v2679 = vadd.s32 %v2675, 1
  %v2680 = vsel %vm2678, %v2679, %v2675
  %v2681 = vadd.s32 %v2676, %v2680
  %v2682 = vadd.s32 %v2681, 536870912
  %v2683 = vshrl.u32 %v2682, 30
  %v2684 = vshll.u32 %v2683, 30
  %v2685 = vsub.s32 %v2681, %v2684
  %vm2686 = vcmp.lt.s32.totalorder %v2685, 0
  %v2687 = vsub.s32 0, %v2685
  %v2688 = vsel %vm2686, %v2687, %v2685
  %v2689 = vclz %v2688
  %v2690 = vsub.s32 %v2689, 2
  %vm2691 = vcmp.gt.s32.totalorder 0, %v2690
  %v2692 = vsel %vm2691, 0, %v2690
  %v2693 = vsub.s32 32, %v2692
  %v2694 = vshll.u32 %v2685, %v2692
  %v2695 = vshrl.u32 %v2677, %v2693
  %v2696 = vor.u32 %v2694, %v2695
  %v2697 = vsub.s32 4294967266, %v2692
  %v2698 = vadd.s32 %v2697, 127
  %v2699 = vshll.u32 %v2698, 23
  %v2700 = vor.u32 4788187, %v2699
  %v2701 = vand.u32 2147483647, %v2700
  %v2703 = vcvt.s32.f32 %v2696
  %v2704 = vmul.f32 %v2703, %v2701
  %v2705 = vxor.u32 %v2704, 2147483648
  %v2706 = vsel %vm2623, %v2705, %v2704
  %v2707 = vsub.s32 4, %v2683
  %v2708 = vsel %vm2623, %v2707, %v2683
  %v2709 = vsel %vm2622, %v838, %v2706
  %v2710 = vsel %vm2622, 0, %v2708
  %v2711 = vcosq.f32.pop %v2709
  %v2712 = vsinq.f32.pop %v2709
  %vm2713 = vweird.f32 %v838
  %v2714 = vadd.s32 %v2710, 3
  %v2715 = vand.u32 %v2714, 3
  %vm2716 = vcmp.lt.s32.totalorder %v2715, 2
  %vm2717 = vcmp.eq.s32.totalorder %v2715, 0
  %v2718 = vxor.u32 %v2712, 2147483648
  %v2719 = vsel %vm2717, %v2711, %v2718
  %vm2720 = vcmp.eq.s32.totalorder %v2715, 2
  %v2721 = vxor.u32 %v2711, 2147483648
  %v2722 = vsel %vm2720, %v2721, %v2712
  %v2723 = vsel %vm2716, %v2719, %v2722
  %v2724 = vsel %vm2713, nan, %v2723
  %v2725 = vand.u32 2147483647, %v839
  %vm2726 = vcmp.le.f32.partialorder %v2725, 0.7853982
  %vm2727 = vcmp.lt.s32.totalorder %v839, 0
  %v2728 = vand.u32 %v839, 2139095040
  %v2729 = vshrl.u32 %v2728, 23
  %v2730 = vsub.s32 %v2729, 127
  %v2731 = vand.u32 2147483647, %v839
  %v2732 = vand.u32 %v2731, 8388607
  %v2733 = vor.u32 %v2732, 8388608
  %v2734 = vsub.s32 0, %v2733
  %v2735 = vadd.s32 %v2730, 1
  %vm2736 = vcmp.gt.s32.totalorder %v2735, 0
  %v2737 = vsel %vm2736, %v2735, 0
  %v2738 = vshrl.u32 %v2737, 5
  %v2739 = vand.u32 %v2737, 31
  %v2740 = vsub.s32 32, %v2739
  %v2741 = vshrl.u32 683565275, %v2740
  %v2742 = vshll.u32 683565275, %v2739
  %v2743 = vshrl.u32 2475754826, %v2740
  %v2744 = vor.u32 %v2742, %v2743
  %v2745 = vshll.u32 2475754826, %v2739
  %v2746 = vshrl.u32 2131351028, %v2740
  %v2747 = vor.u32 %v2745, %v2746
  %v2748 = vshll.u32 2131351028, %v2739
  %v2749 = vshrl.u32 2102212464, %v2740
  %v2750 = vor.u32 %v2748, %v2749
  %v2751 = vshll.u32 2102212464, %v2739
  %v2752 = vshrl.u32 920167782, %v2740
  %v2753 = vor.u32 %v2751, %v2752
  %v2754 = vshll.u32 920167782, %v2739
  %v2755 = vshrl.u32 1326507024, %v2740
  %v2756 = vor.u32 %v2754, %v2755
  %vm2757 = vcmp.lt.s32.totalorder %v2738, 1
  %vm2758 = vcmp.lt.s32.totalorder %v2738, 2
  %vm2759 = vcmp.lt.s32.totalorder %v2738, 3
  %vm2760 = vcmp.lt.s32.totalorder %v2738, 4
  %v2761 = vsel %vm2757, %v2741, %v2744
  %v2762 = vsel %vm2760, %v2750, 2102212464
  %v2763 = vsel %vm2759, %v2747, %v2762
  %v2764 = vsel %vm2758, %v2761, %v2763
  %v2765 = vsel %vm2757, %v2744, %v2747
  %v2766 = vsel %vm2760, %v2753, 920167782
  %v2767 = vsel %vm2759, %v2750, %v2766
  %v2768 = vsel %vm2758, %v2765, %v2767
  %v2769 = vsel %vm2757, %v2747, %v2750
  %v2770 = vsel %vm2760, %v2756, 1326507024
  %v2771 = vsel %vm2759, %v2753, %v2770
  %v2772 = vsel %vm2758, %v2769, %v2771
  %v2773 = vshll.u32 %v2733, 8
  %v2774 = vmul.u32.u64.compose %v2773, %v2772
  %v2775 = vextract.low.u32 %v2774
  %v2776 = vextract.high.u32 %v2774
  %v2777 = vmul.u32.u64.compose %v2773, %v2768
  %v2778 = vextract.low.u32 %v2777
  %v2779 = vextract.high.u32 %v2777
  %v2780 = vmul.u32 %v2773, %v2764
  %v2781 = vadd.s32 %v2776, %v2778
  %vm2782 = vc.u32 %v2776, %v2778
  %v2783 = vadd.s32 %v2779, 1
  %v2784 = vsel %vm2782, %v2783, %v2779
  %v2785 = vadd.s32 %v2780, %v2784
  %v2786 = vadd.s32 %v2785, 536870912
  %v2787 = vshrl.u32 %v2786, 30
  %v2788 = vshll.u32 %v2787, 30
  %v2789 = vsub.s32 %v2785, %v2788
  %vm2790 = vcmp.lt.s32.totalorder %v2789, 0
  %v2791 = vsub.s32 0, %v2789
  %v2792 = vsel %vm2790, %v2791, %v2789
  %v2793 = vclz %v2792
  %v2794 = vsub.s32 %v2793, 2
  %vm2795 = vcmp.gt.s32.totalorder 0, %v2794
  %v2796 = vsel %vm2795, 0, %v2794
  %v2797 = vsub.s32 32, %v2796
  %v2798 = vshll.u32 %v2789, %v2796
  %v2799 = vshrl.u32 %v2781, %v2797
  %v2800 = vor.u32 %v2798, %v2799
  %v2801 = vsub.s32 4294967266, %v2796
  %v2802 = vadd.s32 %v2801, 127
  %v2803 = vshll.u32 %v2802, 23
  %v2804 = vor.u32 4788187, %v2803
  %v2805 = vand.u32 2147483647, %v2804
  %v2807 = vcvt.s32.f32 %v2800
  %v2808 = vmul.f32 %v2807, %v2805
  %v2809 = vxor.u32 %v2808, 2147483648
  %v2810 = vsel %vm2727, %v2809, %v2808
  %v2811 = vsub.s32 4, %v2787
  %v2812 = vsel %vm2727, %v2811, %v2787
  %v2813 = vsel %vm2726, %v839, %v2810
  %v2814 = vsel %vm2726, 0, %v2812
  %v2815 = vcosq.f32.pop %v2813
  %v2816 = vsinq.f32.pop %v2813
  %vm2817 = vweird.f32 %v839
  %v2818 = vadd.s32 %v2814, 3
  %v2819 = vand.u32 %v2818, 3
  %vm2820 = vcmp.lt.s32.totalorder %v2819, 2
  %vm2821 = vcmp.eq.s32.totalorder %v2819, 0
  %v2822 = vxor.u32 %v2816, 2147483648
  %v2823 = vsel %vm2821, %v2815, %v2822
  %vm2824 = vcmp.eq.s32.totalorder %v2819, 2
  %v2825 = vxor.u32 %v2815, 2147483648
  %v2826 = vsel %vm2824, %v2825, %v2816
  %v2827 = vsel %vm2820, %v2823, %v2826
  %v2828 = vsel %vm2817, nan, %v2827
  %v2829 = vand.u32 2147483647, %v840
  %vm2830 = vcmp.le.f32.partialorder %v2829, 0.7853982
  %vm2831 = vcmp.lt.s32.totalorder %v840, 0
  %v2832 = vand.u32 %v840, 2139095040
  %v2833 = vshrl.u32 %v2832, 23
  %v2834 = vsub.s32 %v2833, 127
  %v2835 = vand.u32 2147483647, %v840
  %v2836 = vand.u32 %v2835, 8388607
  %v2837 = vor.u32 %v2836, 8388608
  %v2838 = vsub.s32 0, %v2837
  %v2839 = vadd.s32 %v2834, 1
  %vm2840 = vcmp.gt.s32.totalorder %v2839, 0
  %v2841 = vsel %vm2840, %v2839, 0
  %v2842 = vshrl.u32 %v2841, 5
  %v2843 = vand.u32 %v2841, 31
  %v2844 = vsub.s32 32, %v2843
  %v2845 = vshrl.u32 683565275, %v2844
  %v2846 = vshll.u32 683565275, %v2843
  %v2847 = vshrl.u32 2475754826, %v2844
  %v2848 = vor.u32 %v2846, %v2847
  %v2849 = vshll.u32 2475754826, %v2843
  %v2850 = vshrl.u32 2131351028, %v2844
  %v2851 = vor.u32 %v2849, %v2850
  %v2852 = vshll.u32 2131351028, %v2843
  %v2853 = vshrl.u32 2102212464, %v2844
  %v2854 = vor.u32 %v2852, %v2853
  %v2855 = vshll.u32 2102212464, %v2843
  %v2856 = vshrl.u32 920167782, %v2844
  %v2857 = vor.u32 %v2855, %v2856
  %v2858 = vshll.u32 920167782, %v2843
  %v2859 = vshrl.u32 1326507024, %v2844
  %v2860 = vor.u32 %v2858, %v2859
  %vm2861 = vcmp.lt.s32.totalorder %v2842, 1
  %vm2862 = vcmp.lt.s32.totalorder %v2842, 2
  %vm2863 = vcmp.lt.s32.totalorder %v2842, 3
  %vm2864 = vcmp.lt.s32.totalorder %v2842, 4
  %v2865 = vsel %vm2861, %v2845, %v2848
  %v2866 = vsel %vm2864, %v2854, 2102212464
  %v2867 = vsel %vm2863, %v2851, %v2866
  %v2868 = vsel %vm2862, %v2865, %v2867
  %v2869 = vsel %vm2861, %v2848, %v2851
  %v2870 = vsel %vm2864, %v2857, 920167782
  %v2871 = vsel %vm2863, %v2854, %v2870
  %v2872 = vsel %vm2862, %v2869, %v2871
  %v2873 = vsel %vm2861, %v2851, %v2854
  %v2874 = vsel %vm2864, %v2860, 1326507024
  %v2875 = vsel %vm2863, %v2857, %v2874
  %v2876 = vsel %vm2862, %v2873, %v2875
  %v2877 = vshll.u32 %v2837, 8
  %v2878 = vmul.u32.u64.compose %v2877, %v2876
  %v2879 = vextract.low.u32 %v2878
  %v2880 = vextract.high.u32 %v2878
  %v2881 = vmul.u32.u64.compose %v2877, %v2872
  %v2882 = vextract.low.u32 %v2881
  %v2883 = vextract.high.u32 %v2881
  %v2884 = vmul.u32 %v2877, %v2868
  %v2885 = vadd.s32 %v2880, %v2882
  %vm2886 = vc.u32 %v2880, %v2882
  %v2887 = vadd.s32 %v2883, 1
  %v2888 = vsel %vm2886, %v2887, %v2883
  %v2889 = vadd.s32 %v2884, %v2888
  %v2890 = vadd.s32 %v2889, 536870912
  %v2891 = vshrl.u32 %v2890, 30
  %v2892 = vshll.u32 %v2891, 30
  %v2893 = vsub.s32 %v2889, %v2892
  %vm2894 = vcmp.lt.s32.totalorder %v2893, 0
  %v2895 = vsub.s32 0, %v2893
  %v2896 = vsel %vm2894, %v2895, %v2893
  %v2897 = vclz %v2896
  %v2898 = vsub.s32 %v2897, 2
  %vm2899 = vcmp.gt.s32.totalorder 0, %v2898
  %v2900 = vsel %vm2899, 0, %v2898
  %v2901 = vsub.s32 32, %v2900
  %v2902 = vshll.u32 %v2893, %v2900
  %v2903 = vshrl.u32 %v2885, %v2901
  %v2904 = vor.u32 %v2902, %v2903
  %v2905 = vsub.s32 4294967266, %v2900
  %v2906 = vadd.s32 %v2905, 127
  %v2907 = vshll.u32 %v2906, 23
  %v2908 = vor.u32 4788187, %v2907
  %v2909 = vand.u32 2147483647, %v2908
  %v2911 = vcvt.s32.f32 %v2904
  %v2912 = vmul.f32 %v2911, %v2909
  %v2913 = vxor.u32 %v2912, 2147483648
  %v2914 = vsel %vm2831, %v2913, %v2912
  %v2915 = vsub.s32 4, %v2891
  %v2916 = vsel %vm2831, %v2915, %v2891
  %v2917 = vsel %vm2830, %v840, %v2914
  %v2918 = vsel %vm2830, 0, %v2916
  %v2919 = vcosq.f32.pop %v2917
  %v2920 = vsinq.f32.pop %v2917
  %vm2921 = vweird.f32 %v840
  %v2922 = vadd.s32 %v2918, 3
  %v2923 = vand.u32 %v2922, 3
  %vm2924 = vcmp.lt.s32.totalorder %v2923, 2
  %vm2925 = vcmp.eq.s32.totalorder %v2923, 0
  %v2926 = vxor.u32 %v2920, 2147483648
  %v2927 = vsel %vm2925, %v2919, %v2926
  %vm2928 = vcmp.eq.s32.totalorder %v2923, 2
  %v2929 = vxor.u32 %v2919, 2147483648
  %v2930 = vsel %vm2928, %v2929, %v2920
  %v2931 = vsel %vm2924, %v2927, %v2930
  %v2932 = vsel %vm2921, nan, %v2931
  %v2933 = vand.u32 2147483647, %v841
  %vm2934 = vcmp.le.f32.partialorder %v2933, 0.7853982
  %vm2935 = vcmp.lt.s32.totalorder %v841, 0
  %v2936 = vand.u32 %v841, 2139095040
  %v2937 = vshrl.u32 %v2936, 23
  %v2938 = vsub.s32 %v2937, 127
  %v2939 = vand.u32 2147483647, %v841
  %v2940 = vand.u32 %v2939, 8388607
  %v2941 = vor.u32 %v2940, 8388608
  %v2942 = vsub.s32 0, %v2941
  %v2943 = vadd.s32 %v2938, 1
  %vm2944 = vcmp.gt.s32.totalorder %v2943, 0
  %v2945 = vsel %vm2944, %v2943, 0
  %v2946 = vshrl.u32 %v2945, 5
  %v2947 = vand.u32 %v2945, 31
  %v2948 = vsub.s32 32, %v2947
  %v2949 = vshrl.u32 683565275, %v2948
  %v2950 = vshll.u32 683565275, %v2947
  %v2951 = vshrl.u32 2475754826, %v2948
  %v2952 = vor.u32 %v2950, %v2951
  %v2953 = vshll.u32 2475754826, %v2947
  %v2954 = vshrl.u32 2131351028, %v2948
  %v2955 = vor.u32 %v2953, %v2954
  %v2956 = vshll.u32 2131351028, %v2947
  %v2957 = vshrl.u32 2102212464, %v2948
  %v2958 = vor.u32 %v2956, %v2957
  %v2959 = vshll.u32 2102212464, %v2947
  %v2960 = vshrl.u32 920167782, %v2948
  %v2961 = vor.u32 %v2959, %v2960
  %v2962 = vshll.u32 920167782, %v2947
  %v2963 = vshrl.u32 1326507024, %v2948
  %v2964 = vor.u32 %v2962, %v2963
  %vm2965 = vcmp.lt.s32.totalorder %v2946, 1
  %vm2966 = vcmp.lt.s32.totalorder %v2946, 2
  %vm2967 = vcmp.lt.s32.totalorder %v2946, 3
  %vm2968 = vcmp.lt.s32.totalorder %v2946, 4
  %v2969 = vsel %vm2965, %v2949, %v2952
  %v2970 = vsel %vm2968, %v2958, 2102212464
  %v2971 = vsel %vm2967, %v2955, %v2970
  %v2972 = vsel %vm2966, %v2969, %v2971
  %v2973 = vsel %vm2965, %v2952, %v2955
  %v2974 = vsel %vm2968, %v2961, 920167782
  %v2975 = vsel %vm2967, %v2958, %v2974
  %v2976 = vsel %vm2966, %v2973, %v2975
  %v2977 = vsel %vm2965, %v2955, %v2958
  %v2978 = vsel %vm2968, %v2964, 1326507024
  %v2979 = vsel %vm2967, %v2961, %v2978
  %v2980 = vsel %vm2966, %v2977, %v2979
  %v2981 = vshll.u32 %v2941, 8
  %v2982 = vmul.u32.u64.compose %v2981, %v2980
  %v2983 = vextract.low.u32 %v2982
  %v2984 = vextract.high.u32 %v2982
  %v2985 = vmul.u32.u64.compose %v2981, %v2976
  %v2986 = vextract.low.u32 %v2985
  %v2987 = vextract.high.u32 %v2985
  %v2988 = vmul.u32 %v2981, %v2972
  %v2989 = vadd.s32 %v2984, %v2986
  %vm2990 = vc.u32 %v2984, %v2986
  %v2991 = vadd.s32 %v2987, 1
  %v2992 = vsel %vm2990, %v2991, %v2987
  %v2993 = vadd.s32 %v2988, %v2992
  %v2994 = vadd.s32 %v2993, 536870912
  %v2995 = vshrl.u32 %v2994, 30
  %v2996 = vshll.u32 %v2995, 30
  %v2997 = vsub.s32 %v2993, %v2996
  %vm2998 = vcmp.lt.s32.totalorder %v2997, 0
  %v2999 = vsub.s32 0, %v2997
  %v3000 = vsel %vm2998, %v2999, %v2997
  %v3001 = vclz %v3000
  %v3002 = vsub.s32 %v3001, 2
  %vm3003 = vcmp.gt.s32.totalorder 0, %v3002
  %v3004 = vsel %vm3003, 0, %v3002
  %v3005 = vsub.s32 32, %v3004
  %v3006 = vshll.u32 %v2997, %v3004
  %v3007 = vshrl.u32 %v2989, %v3005
  %v3008 = vor.u32 %v3006, %v3007
  %v3009 = vsub.s32 4294967266, %v3004
  %v3010 = vadd.s32 %v3009, 127
  %v3011 = vshll.u32 %v3010, 23
  %v3012 = vor.u32 4788187, %v3011
  %v3013 = vand.u32 2147483647, %v3012
  %v3015 = vcvt.s32.f32 %v3008
  %v3016 = vmul.f32 %v3015, %v3013
  %v3017 = vxor.u32 %v3016, 2147483648
  %v3018 = vsel %vm2935, %v3017, %v3016
  %v3019 = vsub.s32 4, %v2995
  %v3020 = vsel %vm2935, %v3019, %v2995
  %v3021 = vsel %vm2934, %v841, %v3018
  %v3022 = vsel %vm2934, 0, %v3020
  %v3023 = vcosq.f32.pop %v3021
  %v3024 = vsinq.f32.pop %v3021
  %vm3025 = vweird.f32 %v841
  %v3026 = vadd.s32 %v3022, 3
  %v3027 = vand.u32 %v3026, 3
  %vm3028 = vcmp.lt.s32.totalorder %v3027, 2
  %vm3029 = vcmp.eq.s32.totalorder %v3027, 0
  %v3030 = vxor.u32 %v3024, 2147483648
  %v3031 = vsel %vm3029, %v3023, %v3030
  %vm3032 = vcmp.eq.s32.totalorder %v3027, 2
  %v3033 = vxor.u32 %v3023, 2147483648
  %v3034 = vsel %vm3032, %v3033, %v3024
  %v3035 = vsel %vm3028, %v3031, %v3034
  %v3036 = vsel %vm3025, nan, %v3035
  %v3037 = vand.u32 2147483647, %v842
  %vm3038 = vcmp.le.f32.partialorder %v3037, 0.7853982
  %vm3039 = vcmp.lt.s32.totalorder %v842, 0
  %v3040 = vand.u32 %v842, 2139095040
  %v3041 = vshrl.u32 %v3040, 23
  %v3042 = vsub.s32 %v3041, 127
  %v3043 = vand.u32 2147483647, %v842
  %v3044 = vand.u32 %v3043, 8388607
  %v3045 = vor.u32 %v3044, 8388608
  %v3046 = vsub.s32 0, %v3045
  %v3047 = vadd.s32 %v3042, 1
  %vm3048 = vcmp.gt.s32.totalorder %v3047, 0
  %v3049 = vsel %vm3048, %v3047, 0
  %v3050 = vshrl.u32 %v3049, 5
  %v3051 = vand.u32 %v3049, 31
  %v3052 = vsub.s32 32, %v3051
  %v3053 = vshrl.u32 683565275, %v3052
  %v3054 = vshll.u32 683565275, %v3051
  %v3055 = vshrl.u32 2475754826, %v3052
  %v3056 = vor.u32 %v3054, %v3055
  %v3057 = vshll.u32 2475754826, %v3051
  %v3058 = vshrl.u32 2131351028, %v3052
  %v3059 = vor.u32 %v3057, %v3058
  %v3060 = vshll.u32 2131351028, %v3051
  %v3061 = vshrl.u32 2102212464, %v3052
  %v3062 = vor.u32 %v3060, %v3061
  %v3063 = vshll.u32 2102212464, %v3051
  %v3064 = vshrl.u32 920167782, %v3052
  %v3065 = vor.u32 %v3063, %v3064
  %v3066 = vshll.u32 920167782, %v3051
  %v3067 = vshrl.u32 1326507024, %v3052
  %v3068 = vor.u32 %v3066, %v3067
  %vm3069 = vcmp.lt.s32.totalorder %v3050, 1
  %vm3070 = vcmp.lt.s32.totalorder %v3050, 2
  %vm3071 = vcmp.lt.s32.totalorder %v3050, 3
  %vm3072 = vcmp.lt.s32.totalorder %v3050, 4
  %v3073 = vsel %vm3069, %v3053, %v3056
  %v3074 = vsel %vm3072, %v3062, 2102212464
  %v3075 = vsel %vm3071, %v3059, %v3074
  %v3076 = vsel %vm3070, %v3073, %v3075
  %v3077 = vsel %vm3069, %v3056, %v3059
  %v3078 = vsel %vm3072, %v3065, 920167782
  %v3079 = vsel %vm3071, %v3062, %v3078
  %v3080 = vsel %vm3070, %v3077, %v3079
  %v3081 = vsel %vm3069, %v3059, %v3062
  %v3082 = vsel %vm3072, %v3068, 1326507024
  %v3083 = vsel %vm3071, %v3065, %v3082
  %v3084 = vsel %vm3070, %v3081, %v3083
  %v3085 = vshll.u32 %v3045, 8
  %v3086 = vmul.u32.u64.compose %v3085, %v3084
  %v3087 = vextract.low.u32 %v3086
  %v3088 = vextract.high.u32 %v3086
  %v3089 = vmul.u32.u64.compose %v3085, %v3080
  %v3090 = vextract.low.u32 %v3089
  %v3091 = vextract.high.u32 %v3089
  %v3092 = vmul.u32 %v3085, %v3076
  %v3093 = vadd.s32 %v3088, %v3090
  %vm3094 = vc.u32 %v3088, %v3090
  %v3095 = vadd.s32 %v3091, 1
  %v3096 = vsel %vm3094, %v3095, %v3091
  %v3097 = vadd.s32 %v3092, %v3096
  %v3098 = vadd.s32 %v3097, 536870912
  %v3099 = vshrl.u32 %v3098, 30
  %v3100 = vshll.u32 %v3099, 30
  %v3101 = vsub.s32 %v3097, %v3100
  %vm3102 = vcmp.lt.s32.totalorder %v3101, 0
  %v3103 = vsub.s32 0, %v3101
  %v3104 = vsel %vm3102, %v3103, %v3101
  %v3105 = vclz %v3104
  %v3106 = vsub.s32 %v3105, 2
  %vm3107 = vcmp.gt.s32.totalorder 0, %v3106
  %v3108 = vsel %vm3107, 0, %v3106
  %v3109 = vsub.s32 32, %v3108
  %v3110 = vshll.u32 %v3101, %v3108
  %v3111 = vshrl.u32 %v3093, %v3109
  %v3112 = vor.u32 %v3110, %v3111
  %v3113 = vsub.s32 4294967266, %v3108
  %v3114 = vadd.s32 %v3113, 127
  %v3115 = vshll.u32 %v3114, 23
  %v3116 = vor.u32 4788187, %v3115
  %v3117 = vand.u32 2147483647, %v3116
  %v3119 = vcvt.s32.f32 %v3112
  %v3120 = vmul.f32 %v3119, %v3117
  %v3121 = vxor.u32 %v3120, 2147483648
  %v3122 = vsel %vm3039, %v3121, %v3120
  %v3123 = vsub.s32 4, %v3099
  %v3124 = vsel %vm3039, %v3123, %v3099
  %v3125 = vsel %vm3038, %v842, %v3122
  %v3126 = vsel %vm3038, 0, %v3124
  %v3127 = vcosq.f32.pop %v3125
  %v3128 = vsinq.f32.pop %v3125
  %vm3129 = vweird.f32 %v842
  %v3130 = vadd.s32 %v3126, 3
  %v3131 = vand.u32 %v3130, 3
  %vm3132 = vcmp.lt.s32.totalorder %v3131, 2
  %vm3133 = vcmp.eq.s32.totalorder %v3131, 0
  %v3134 = vxor.u32 %v3128, 2147483648
  %v3135 = vsel %vm3133, %v3127, %v3134
  %vm3136 = vcmp.eq.s32.totalorder %v3131, 2
  %v3137 = vxor.u32 %v3127, 2147483648
  %v3138 = vsel %vm3136, %v3137, %v3128
  %v3139 = vsel %vm3132, %v3135, %v3138
  %v3140 = vsel %vm3129, nan, %v3139
  %v3141 = vand.u32 2147483647, %v843
  %vm3142 = vcmp.le.f32.partialorder %v3141, 0.7853982
  %vm3143 = vcmp.lt.s32.totalorder %v843, 0
  %v3144 = vand.u32 %v843, 2139095040
  %v3145 = vshrl.u32 %v3144, 23
  %v3146 = vsub.s32 %v3145, 127
  %v3147 = vand.u32 2147483647, %v843
  %v3148 = vand.u32 %v3147, 8388607
  %v3149 = vor.u32 %v3148, 8388608
  %v3150 = vsub.s32 0, %v3149
  %v3151 = vadd.s32 %v3146, 1
  %vm3152 = vcmp.gt.s32.totalorder %v3151, 0
  %v3153 = vsel %vm3152, %v3151, 0
  %v3154 = vshrl.u32 %v3153, 5
  %v3155 = vand.u32 %v3153, 31
  %v3156 = vsub.s32 32, %v3155
  %v3157 = vshrl.u32 683565275, %v3156
  %v3158 = vshll.u32 683565275, %v3155
  %v3159 = vshrl.u32 2475754826, %v3156
  %v3160 = vor.u32 %v3158, %v3159
  %v3161 = vshll.u32 2475754826, %v3155
  %v3162 = vshrl.u32 2131351028, %v3156
  %v3163 = vor.u32 %v3161, %v3162
  %v3164 = vshll.u32 2131351028, %v3155
  %v3165 = vshrl.u32 2102212464, %v3156
  %v3166 = vor.u32 %v3164, %v3165
  %v3167 = vshll.u32 2102212464, %v3155
  %v3168 = vshrl.u32 920167782, %v3156
  %v3169 = vor.u32 %v3167, %v3168
  %v3170 = vshll.u32 920167782, %v3155
  %v3171 = vshrl.u32 1326507024, %v3156
  %v3172 = vor.u32 %v3170, %v3171
  %vm3173 = vcmp.lt.s32.totalorder %v3154, 1
  %vm3174 = vcmp.lt.s32.totalorder %v3154, 2
  %vm3175 = vcmp.lt.s32.totalorder %v3154, 3
  %vm3176 = vcmp.lt.s32.totalorder %v3154, 4
  %v3177 = vsel %vm3173, %v3157, %v3160
  %v3178 = vsel %vm3176, %v3166, 2102212464
  %v3179 = vsel %vm3175, %v3163, %v3178
  %v3180 = vsel %vm3174, %v3177, %v3179
  %v3181 = vsel %vm3173, %v3160, %v3163
  %v3182 = vsel %vm3176, %v3169, 920167782
  %v3183 = vsel %vm3175, %v3166, %v3182
  %v3184 = vsel %vm3174, %v3181, %v3183
  %v3185 = vsel %vm3173, %v3163, %v3166
  %v3186 = vsel %vm3176, %v3172, 1326507024
  %v3187 = vsel %vm3175, %v3169, %v3186
  %v3188 = vsel %vm3174, %v3185, %v3187
  %v3189 = vshll.u32 %v3149, 8
  %v3190 = vmul.u32.u64.compose %v3189, %v3188
  %v3191 = vextract.low.u32 %v3190
  %v3192 = vextract.high.u32 %v3190
  %v3193 = vmul.u32.u64.compose %v3189, %v3184
  %v3194 = vextract.low.u32 %v3193
  %v3195 = vextract.high.u32 %v3193
  %v3196 = vmul.u32 %v3189, %v3180
  %v3197 = vadd.s32 %v3192, %v3194
  %vm3198 = vc.u32 %v3192, %v3194
  %v3199 = vadd.s32 %v3195, 1
  %v3200 = vsel %vm3198, %v3199, %v3195
  %v3201 = vadd.s32 %v3196, %v3200
  %v3202 = vadd.s32 %v3201, 536870912
  %v3203 = vshrl.u32 %v3202, 30
  %v3204 = vshll.u32 %v3203, 30
  %v3205 = vsub.s32 %v3201, %v3204
  %vm3206 = vcmp.lt.s32.totalorder %v3205, 0
  %v3207 = vsub.s32 0, %v3205
  %v3208 = vsel %vm3206, %v3207, %v3205
  %v3209 = vclz %v3208
  %v3210 = vsub.s32 %v3209, 2
  %vm3211 = vcmp.gt.s32.totalorder 0, %v3210
  %v3212 = vsel %vm3211, 0, %v3210
  %v3213 = vsub.s32 32, %v3212
  %v3214 = vshll.u32 %v3205, %v3212
  %v3215 = vshrl.u32 %v3197, %v3213
  %v3216 = vor.u32 %v3214, %v3215
  %v3217 = vsub.s32 4294967266, %v3212
  %v3218 = vadd.s32 %v3217, 127
  %v3219 = vshll.u32 %v3218, 23
  %v3220 = vor.u32 4788187, %v3219
  %v3221 = vand.u32 2147483647, %v3220
  %v3223 = vcvt.s32.f32 %v3216
  %v3224 = vmul.f32 %v3223, %v3221
  %v3225 = vxor.u32 %v3224, 2147483648
  %v3226 = vsel %vm3143, %v3225, %v3224
  %v3227 = vsub.s32 4, %v3203
  %v3228 = vsel %vm3143, %v3227, %v3203
  %v3229 = vsel %vm3142, %v843, %v3226
  %v3230 = vsel %vm3142, 0, %v3228
  %v3231 = vcosq.f32.pop %v3229
  %v3232 = vsinq.f32.pop %v3229
  %vm3233 = vweird.f32 %v843
  %v3234 = vadd.s32 %v3230, 3
  %v3235 = vand.u32 %v3234, 3
  %vm3236 = vcmp.lt.s32.totalorder %v3235, 2
  %vm3237 = vcmp.eq.s32.totalorder %v3235, 0
  %v3238 = vxor.u32 %v3232, 2147483648
  %v3239 = vsel %vm3237, %v3231, %v3238
  %vm3240 = vcmp.eq.s32.totalorder %v3235, 2
  %v3241 = vxor.u32 %v3231, 2147483648
  %v3242 = vsel %vm3240, %v3241, %v3232
  %v3243 = vsel %vm3236, %v3239, %v3242
  %v3244 = vsel %vm3233, nan, %v3243
  %v3245 = vand.u32 2147483647, %v844
  %vm3246 = vcmp.le.f32.partialorder %v3245, 0.7853982
  %vm3247 = vcmp.lt.s32.totalorder %v844, 0
  %v3248 = vand.u32 %v844, 2139095040
  %v3249 = vshrl.u32 %v3248, 23
  %v3250 = vsub.s32 %v3249, 127
  %v3251 = vand.u32 2147483647, %v844
  %v3252 = vand.u32 %v3251, 8388607
  %v3253 = vor.u32 %v3252, 8388608
  %v3254 = vsub.s32 0, %v3253
  %v3255 = vadd.s32 %v3250, 1
  %vm3256 = vcmp.gt.s32.totalorder %v3255, 0
  %v3257 = vsel %vm3256, %v3255, 0
  %v3258 = vshrl.u32 %v3257, 5
  %v3259 = vand.u32 %v3257, 31
  %v3260 = vsub.s32 32, %v3259
  %v3261 = vshrl.u32 683565275, %v3260
  %v3262 = vshll.u32 683565275, %v3259
  %v3263 = vshrl.u32 2475754826, %v3260
  %v3264 = vor.u32 %v3262, %v3263
  %v3265 = vshll.u32 2475754826, %v3259
  %v3266 = vshrl.u32 2131351028, %v3260
  %v3267 = vor.u32 %v3265, %v3266
  %v3268 = vshll.u32 2131351028, %v3259
  %v3269 = vshrl.u32 2102212464, %v3260
  %v3270 = vor.u32 %v3268, %v3269
  %v3271 = vshll.u32 2102212464, %v3259
  %v3272 = vshrl.u32 920167782, %v3260
  %v3273 = vor.u32 %v3271, %v3272
  %v3274 = vshll.u32 920167782, %v3259
  %v3275 = vshrl.u32 1326507024, %v3260
  %v3276 = vor.u32 %v3274, %v3275
  %vm3277 = vcmp.lt.s32.totalorder %v3258, 1
  %vm3278 = vcmp.lt.s32.totalorder %v3258, 2
  %vm3279 = vcmp.lt.s32.totalorder %v3258, 3
  %vm3280 = vcmp.lt.s32.totalorder %v3258, 4
  %v3281 = vsel %vm3277, %v3261, %v3264
  %v3282 = vsel %vm3280, %v3270, 2102212464
  %v3283 = vsel %vm3279, %v3267, %v3282
  %v3284 = vsel %vm3278, %v3281, %v3283
  %v3285 = vsel %vm3277, %v3264, %v3267
  %v3286 = vsel %vm3280, %v3273, 920167782
  %v3287 = vsel %vm3279, %v3270, %v3286
  %v3288 = vsel %vm3278, %v3285, %v3287
  %v3289 = vsel %vm3277, %v3267, %v3270
  %v3290 = vsel %vm3280, %v3276, 1326507024
  %v3291 = vsel %vm3279, %v3273, %v3290
  %v3292 = vsel %vm3278, %v3289, %v3291
  %v3293 = vshll.u32 %v3253, 8
  %v3294 = vmul.u32.u64.compose %v3293, %v3292
  %v3295 = vextract.low.u32 %v3294
  %v3296 = vextract.high.u32 %v3294
  %v3297 = vmul.u32.u64.compose %v3293, %v3288
  %v3298 = vextract.low.u32 %v3297
  %v3299 = vextract.high.u32 %v3297
  %v3300 = vmul.u32 %v3293, %v3284
  %v3301 = vadd.s32 %v3296, %v3298
  %vm3302 = vc.u32 %v3296, %v3298
  %v3303 = vadd.s32 %v3299, 1
  %v3304 = vsel %vm3302, %v3303, %v3299
  %v3305 = vadd.s32 %v3300, %v3304
  %v3306 = vadd.s32 %v3305, 536870912
  %v3307 = vshrl.u32 %v3306, 30
  %v3308 = vshll.u32 %v3307, 30
  %v3309 = vsub.s32 %v3305, %v3308
  %vm3310 = vcmp.lt.s32.totalorder %v3309, 0
  %v3311 = vsub.s32 0, %v3309
  %v3312 = vsel %vm3310, %v3311, %v3309
  %v3313 = vclz %v3312
  %v3314 = vsub.s32 %v3313, 2
  %vm3315 = vcmp.gt.s32.totalorder 0, %v3314
  %v3316 = vsel %vm3315, 0, %v3314
  %v3317 = vsub.s32 32, %v3316
  %v3318 = vshll.u32 %v3309, %v3316
  %v3319 = vshrl.u32 %v3301, %v3317
  %v3320 = vor.u32 %v3318, %v3319
  %v3321 = vsub.s32 4294967266, %v3316
  %v3322 = vadd.s32 %v3321, 127
  %v3323 = vshll.u32 %v3322, 23
  %v3324 = vor.u32 4788187, %v3323
  %v3325 = vand.u32 2147483647, %v3324
  %v3327 = vcvt.s32.f32 %v3320
  %v3328 = vmul.f32 %v3327, %v3325
  %v3329 = vxor.u32 %v3328, 2147483648
  %v3330 = vsel %vm3247, %v3329, %v3328
  %v3331 = vsub.s32 4, %v3307
  %v3332 = vsel %vm3247, %v3331, %v3307
  %v3333 = vsel %vm3246, %v844, %v3330
  %v3334 = vsel %vm3246, 0, %v3332
  %v3335 = vcosq.f32.pop %v3333
  %v3336 = vsinq.f32.pop %v3333
  %vm3337 = vweird.f32 %v844
  %v3338 = vadd.s32 %v3334, 3
  %v3339 = vand.u32 %v3338, 3
  %vm3340 = vcmp.lt.s32.totalorder %v3339, 2
  %vm3341 = vcmp.eq.s32.totalorder %v3339, 0
  %v3342 = vxor.u32 %v3336, 2147483648
  %v3343 = vsel %vm3341, %v3335, %v3342
  %vm3344 = vcmp.eq.s32.totalorder %v3339, 2
  %v3345 = vxor.u32 %v3335, 2147483648
  %v3346 = vsel %vm3344, %v3345, %v3336
  %v3347 = vsel %vm3340, %v3343, %v3346
  %v3348 = vsel %vm3337, nan, %v3347
  %v3349 = vand.u32 2147483647, %v845
  %vm3350 = vcmp.le.f32.partialorder %v3349, 0.7853982
  %vm3351 = vcmp.lt.s32.totalorder %v845, 0
  %v3352 = vand.u32 %v845, 2139095040
  %v3353 = vshrl.u32 %v3352, 23
  %v3354 = vsub.s32 %v3353, 127
  %v3355 = vand.u32 2147483647, %v845
  %v3356 = vand.u32 %v3355, 8388607
  %v3357 = vor.u32 %v3356, 8388608
  %v3358 = vsub.s32 0, %v3357
  %v3359 = vadd.s32 %v3354, 1
  %vm3360 = vcmp.gt.s32.totalorder %v3359, 0
  %v3361 = vsel %vm3360, %v3359, 0
  %v3362 = vshrl.u32 %v3361, 5
  %v3363 = vand.u32 %v3361, 31
  %v3364 = vsub.s32 32, %v3363
  %v3365 = vshrl.u32 683565275, %v3364
  %v3366 = vshll.u32 683565275, %v3363
  %v3367 = vshrl.u32 2475754826, %v3364
  %v3368 = vor.u32 %v3366, %v3367
  %v3369 = vshll.u32 2475754826, %v3363
  %v3370 = vshrl.u32 2131351028, %v3364
  %v3371 = vor.u32 %v3369, %v3370
  %v3372 = vshll.u32 2131351028, %v3363
  %v3373 = vshrl.u32 2102212464, %v3364
  %v3374 = vor.u32 %v3372, %v3373
  %v3375 = vshll.u32 2102212464, %v3363
  %v3376 = vshrl.u32 920167782, %v3364
  %v3377 = vor.u32 %v3375, %v3376
  %v3378 = vshll.u32 920167782, %v3363
  %v3379 = vshrl.u32 1326507024, %v3364
  %v3380 = vor.u32 %v3378, %v3379
  %vm3381 = vcmp.lt.s32.totalorder %v3362, 1
  %vm3382 = vcmp.lt.s32.totalorder %v3362, 2
  %vm3383 = vcmp.lt.s32.totalorder %v3362, 3
  %vm3384 = vcmp.lt.s32.totalorder %v3362, 4
  %v3385 = vsel %vm3381, %v3365, %v3368
  %v3386 = vsel %vm3384, %v3374, 2102212464
  %v3387 = vsel %vm3383, %v3371, %v3386
  %v3388 = vsel %vm3382, %v3385, %v3387
  %v3389 = vsel %vm3381, %v3368, %v3371
  %v3390 = vsel %vm3384, %v3377, 920167782
  %v3391 = vsel %vm3383, %v3374, %v3390
  %v3392 = vsel %vm3382, %v3389, %v3391
  %v3393 = vsel %vm3381, %v3371, %v3374
  %v3394 = vsel %vm3384, %v3380, 1326507024
  %v3395 = vsel %vm3383, %v3377, %v3394
  %v3396 = vsel %vm3382, %v3393, %v3395
  %v3397 = vshll.u32 %v3357, 8
  %v3398 = vmul.u32.u64.compose %v3397, %v3396
  %v3399 = vextract.low.u32 %v3398
  %v3400 = vextract.high.u32 %v3398
  %v3401 = vmul.u32.u64.compose %v3397, %v3392
  %v3402 = vextract.low.u32 %v3401
  %v3403 = vextract.high.u32 %v3401
  %v3404 = vmul.u32 %v3397, %v3388
  %v3405 = vadd.s32 %v3400, %v3402
  %vm3406 = vc.u32 %v3400, %v3402
  %v3407 = vadd.s32 %v3403, 1
  %v3408 = vsel %vm3406, %v3407, %v3403
  %v3409 = vadd.s32 %v3404, %v3408
  %v3410 = vadd.s32 %v3409, 536870912
  %v3411 = vshrl.u32 %v3410, 30
  %v3412 = vshll.u32 %v3411, 30
  %v3413 = vsub.s32 %v3409, %v3412
  %vm3414 = vcmp.lt.s32.totalorder %v3413, 0
  %v3415 = vsub.s32 0, %v3413
  %v3416 = vsel %vm3414, %v3415, %v3413
  %v3417 = vclz %v3416
  %v3418 = vsub.s32 %v3417, 2
  %vm3419 = vcmp.gt.s32.totalorder 0, %v3418
  %v3420 = vsel %vm3419, 0, %v3418
  %v3421 = vsub.s32 32, %v3420
  %v3422 = vshll.u32 %v3413, %v3420
  %v3423 = vshrl.u32 %v3405, %v3421
  %v3424 = vor.u32 %v3422, %v3423
  %v3425 = vsub.s32 4294967266, %v3420
  %v3426 = vadd.s32 %v3425, 127
  %v3427 = vshll.u32 %v3426, 23
  %v3428 = vor.u32 4788187, %v3427
  %v3429 = vand.u32 2147483647, %v3428
  %v3431 = vcvt.s32.f32 %v3424
  %v3432 = vmul.f32 %v3431, %v3429
  %v3433 = vxor.u32 %v3432, 2147483648
  %v3434 = vsel %vm3351, %v3433, %v3432
  %v3435 = vsub.s32 4, %v3411
  %v3436 = vsel %vm3351, %v3435, %v3411
  %v3437 = vsel %vm3350, %v845, %v3434
  %v3438 = vsel %vm3350, 0, %v3436
  %v3439 = vcosq.f32.pop %v3437
  %v3440 = vsinq.f32.pop %v3437
  %vm3441 = vweird.f32 %v845
  %v3442 = vadd.s32 %v3438, 3
  %v3443 = vand.u32 %v3442, 3
  %vm3444 = vcmp.lt.s32.totalorder %v3443, 2
  %vm3445 = vcmp.eq.s32.totalorder %v3443, 0
  %v3446 = vxor.u32 %v3440, 2147483648
  %v3447 = vsel %vm3445, %v3439, %v3446
  %vm3448 = vcmp.eq.s32.totalorder %v3443, 2
  %v3449 = vxor.u32 %v3439, 2147483648
  %v3450 = vsel %vm3448, %v3449, %v3440
  %v3451 = vsel %vm3444, %v3447, %v3450
  %v3452 = vsel %vm3441, nan, %v3451
  %v3453 = vand.u32 2147483647, %v846
  %vm3454 = vcmp.le.f32.partialorder %v3453, 0.7853982
  %vm3455 = vcmp.lt.s32.totalorder %v846, 0
  %v3456 = vand.u32 %v846, 2139095040
  %v3457 = vshrl.u32 %v3456, 23
  %v3458 = vsub.s32 %v3457, 127
  %v3459 = vand.u32 2147483647, %v846
  %v3460 = vand.u32 %v3459, 8388607
  %v3461 = vor.u32 %v3460, 8388608
  %v3462 = vsub.s32 0, %v3461
  %v3463 = vadd.s32 %v3458, 1
  %vm3464 = vcmp.gt.s32.totalorder %v3463, 0
  %v3465 = vsel %vm3464, %v3463, 0
  %v3466 = vshrl.u32 %v3465, 5
  %v3467 = vand.u32 %v3465, 31
  %v3468 = vsub.s32 32, %v3467
  %v3469 = vshrl.u32 683565275, %v3468
  %v3470 = vshll.u32 683565275, %v3467
  %v3471 = vshrl.u32 2475754826, %v3468
  %v3472 = vor.u32 %v3470, %v3471
  %v3473 = vshll.u32 2475754826, %v3467
  %v3474 = vshrl.u32 2131351028, %v3468
  %v3475 = vor.u32 %v3473, %v3474
  %v3476 = vshll.u32 2131351028, %v3467
  %v3477 = vshrl.u32 2102212464, %v3468
  %v3478 = vor.u32 %v3476, %v3477
  %v3479 = vshll.u32 2102212464, %v3467
  %v3480 = vshrl.u32 920167782, %v3468
  %v3481 = vor.u32 %v3479, %v3480
  %v3482 = vshll.u32 920167782, %v3467
  %v3483 = vshrl.u32 1326507024, %v3468
  %v3484 = vor.u32 %v3482, %v3483
  %vm3485 = vcmp.lt.s32.totalorder %v3466, 1
  %vm3486 = vcmp.lt.s32.totalorder %v3466, 2
  %vm3487 = vcmp.lt.s32.totalorder %v3466, 3
  %vm3488 = vcmp.lt.s32.totalorder %v3466, 4
  %v3489 = vsel %vm3485, %v3469, %v3472
  %v3490 = vsel %vm3488, %v3478, 2102212464
  %v3491 = vsel %vm3487, %v3475, %v3490
  %v3492 = vsel %vm3486, %v3489, %v3491
  %v3493 = vsel %vm3485, %v3472, %v3475
  %v3494 = vsel %vm3488, %v3481, 920167782
  %v3495 = vsel %vm3487, %v3478, %v3494
  %v3496 = vsel %vm3486, %v3493, %v3495
  %v3497 = vsel %vm3485, %v3475, %v3478
  %v3498 = vsel %vm3488, %v3484, 1326507024
  %v3499 = vsel %vm3487, %v3481, %v3498
  %v3500 = vsel %vm3486, %v3497, %v3499
  %v3501 = vshll.u32 %v3461, 8
  %v3502 = vmul.u32.u64.compose %v3501, %v3500
  %v3503 = vextract.low.u32 %v3502
  %v3504 = vextract.high.u32 %v3502
  %v3505 = vmul.u32.u64.compose %v3501, %v3496
  %v3506 = vextract.low.u32 %v3505
  %v3507 = vextract.high.u32 %v3505
  %v3508 = vmul.u32 %v3501, %v3492
  %v3509 = vadd.s32 %v3504, %v3506
  %vm3510 = vc.u32 %v3504, %v3506
  %v3511 = vadd.s32 %v3507, 1
  %v3512 = vsel %vm3510, %v3511, %v3507
  %v3513 = vadd.s32 %v3508, %v3512
  %v3514 = vadd.s32 %v3513, 536870912
  %v3515 = vshrl.u32 %v3514, 30
  %v3516 = vshll.u32 %v3515, 30
  %v3517 = vsub.s32 %v3513, %v3516
  %vm3518 = vcmp.lt.s32.totalorder %v3517, 0
  %v3519 = vsub.s32 0, %v3517
  %v3520 = vsel %vm3518, %v3519, %v3517
  %v3521 = vclz %v3520
  %v3522 = vsub.s32 %v3521, 2
  %vm3523 = vcmp.gt.s32.totalorder 0, %v3522
  %v3524 = vsel %vm3523, 0, %v3522
  %v3525 = vsub.s32 32, %v3524
  %v3526 = vshll.u32 %v3517, %v3524
  %v3527 = vshrl.u32 %v3509, %v3525
  %v3528 = vor.u32 %v3526, %v3527
  %v3529 = vsub.s32 4294967266, %v3524
  %v3530 = vadd.s32 %v3529, 127
  %v3531 = vshll.u32 %v3530, 23
  %v3532 = vor.u32 4788187, %v3531
  %v3533 = vand.u32 2147483647, %v3532
  %v3535 = vcvt.s32.f32 %v3528
  %v3536 = vmul.f32 %v3535, %v3533
  %v3537 = vxor.u32 %v3536, 2147483648
  %v3538 = vsel %vm3455, %v3537, %v3536
  %v3539 = vsub.s32 4, %v3515
  %v3540 = vsel %vm3455, %v3539, %v3515
  %v3541 = vsel %vm3454, %v846, %v3538
  %v3542 = vsel %vm3454, 0, %v3540
  %v3543 = vcosq.f32.pop %v3541
  %v3544 = vsinq.f32.pop %v3541
  %vm3545 = vweird.f32 %v846
  %v3546 = vadd.s32 %v3542, 3
  %v3547 = vand.u32 %v3546, 3
  %vm3548 = vcmp.lt.s32.totalorder %v3547, 2
  %vm3549 = vcmp.eq.s32.totalorder %v3547, 0
  %v3550 = vxor.u32 %v3544, 2147483648
  %v3551 = vsel %vm3549, %v3543, %v3550
  %vm3552 = vcmp.eq.s32.totalorder %v3547, 2
  %v3553 = vxor.u32 %v3543, 2147483648
  %v3554 = vsel %vm3552, %v3553, %v3544
  %v3555 = vsel %vm3548, %v3551, %v3554
  %v3556 = vsel %vm3545, nan, %v3555
  %v3557 = vand.u32 2147483647, %v847
  %vm3558 = vcmp.le.f32.partialorder %v3557, 0.7853982
  %vm3559 = vcmp.lt.s32.totalorder %v847, 0
  %v3560 = vand.u32 %v847, 2139095040
  %v3561 = vshrl.u32 %v3560, 23
  %v3562 = vsub.s32 %v3561, 127
  %v3563 = vand.u32 2147483647, %v847
  %v3564 = vand.u32 %v3563, 8388607
  %v3565 = vor.u32 %v3564, 8388608
  %v3566 = vsub.s32 0, %v3565
  %v3567 = vadd.s32 %v3562, 1
  %vm3568 = vcmp.gt.s32.totalorder %v3567, 0
  %v3569 = vsel %vm3568, %v3567, 0
  %v3570 = vshrl.u32 %v3569, 5
  %v3571 = vand.u32 %v3569, 31
  %v3572 = vsub.s32 32, %v3571
  %v3573 = vshrl.u32 683565275, %v3572
  %v3574 = vshll.u32 683565275, %v3571
  %v3575 = vshrl.u32 2475754826, %v3572
  %v3576 = vor.u32 %v3574, %v3575
  %v3577 = vshll.u32 2475754826, %v3571
  %v3578 = vshrl.u32 2131351028, %v3572
  %v3579 = vor.u32 %v3577, %v3578
  %v3580 = vshll.u32 2131351028, %v3571
  %v3581 = vshrl.u32 2102212464, %v3572
  %v3582 = vor.u32 %v3580, %v3581
  %v3583 = vshll.u32 2102212464, %v3571
  %v3584 = vshrl.u32 920167782, %v3572
  %v3585 = vor.u32 %v3583, %v3584
  %v3586 = vshll.u32 920167782, %v3571
  %v3587 = vshrl.u32 1326507024, %v3572
  %v3588 = vor.u32 %v3586, %v3587
  %vm3589 = vcmp.lt.s32.totalorder %v3570, 1
  %vm3590 = vcmp.lt.s32.totalorder %v3570, 2
  %vm3591 = vcmp.lt.s32.totalorder %v3570, 3
  %vm3592 = vcmp.lt.s32.totalorder %v3570, 4
  %v3593 = vsel %vm3589, %v3573, %v3576
  %v3594 = vsel %vm3592, %v3582, 2102212464
  %v3595 = vsel %vm3591, %v3579, %v3594
  %v3596 = vsel %vm3590, %v3593, %v3595
  %v3597 = vsel %vm3589, %v3576, %v3579
  %v3598 = vsel %vm3592, %v3585, 920167782
  %v3599 = vsel %vm3591, %v3582, %v3598
  %v3600 = vsel %vm3590, %v3597, %v3599
  %v3601 = vsel %vm3589, %v3579, %v3582
  %v3602 = vsel %vm3592, %v3588, 1326507024
  %v3603 = vsel %vm3591, %v3585, %v3602
  %v3604 = vsel %vm3590, %v3601, %v3603
  %v3605 = vshll.u32 %v3565, 8
  %v3606 = vmul.u32.u64.compose %v3605, %v3604
  %v3607 = vextract.low.u32 %v3606
  %v3608 = vextract.high.u32 %v3606
  %v3609 = vmul.u32.u64.compose %v3605, %v3600
  %v3610 = vextract.low.u32 %v3609
  %v3611 = vextract.high.u32 %v3609
  %v3612 = vmul.u32 %v3605, %v3596
  %v3613 = vadd.s32 %v3608, %v3610
  %vm3614 = vc.u32 %v3608, %v3610
  %v3615 = vadd.s32 %v3611, 1
  %v3616 = vsel %vm3614, %v3615, %v3611
  %v3617 = vadd.s32 %v3612, %v3616
  %v3618 = vadd.s32 %v3617, 536870912
  %v3619 = vshrl.u32 %v3618, 30
  %v3620 = vshll.u32 %v3619, 30
  %v3621 = vsub.s32 %v3617, %v3620
  %vm3622 = vcmp.lt.s32.totalorder %v3621, 0
  %v3623 = vsub.s32 0, %v3621
  %v3624 = vsel %vm3622, %v3623, %v3621
  %v3625 = vclz %v3624
  %v3626 = vsub.s32 %v3625, 2
  %vm3627 = vcmp.gt.s32.totalorder 0, %v3626
  %v3628 = vsel %vm3627, 0, %v3626
  %v3629 = vsub.s32 32, %v3628
  %v3630 = vshll.u32 %v3621, %v3628
  %v3631 = vshrl.u32 %v3613, %v3629
  %v3632 = vor.u32 %v3630, %v3631
  %v3633 = vsub.s32 4294967266, %v3628
  %v3634 = vadd.s32 %v3633, 127
  %v3635 = vshll.u32 %v3634, 23
  %v3636 = vor.u32 4788187, %v3635
  %v3637 = vand.u32 2147483647, %v3636
  %v3639 = vcvt.s32.f32 %v3632
  %v3640 = vmul.f32 %v3639, %v3637
  %v3641 = vxor.u32 %v3640, 2147483648
  %v3642 = vsel %vm3559, %v3641, %v3640
  %v3643 = vsub.s32 4, %v3619
  %v3644 = vsel %vm3559, %v3643, %v3619
  %v3645 = vsel %vm3558, %v847, %v3642
  %v3646 = vsel %vm3558, 0, %v3644
  %v3647 = vcosq.f32.pop %v3645
  %v3648 = vsinq.f32.pop %v3645
  %vm3649 = vweird.f32 %v847
  %v3650 = vadd.s32 %v3646, 3
  %v3651 = vand.u32 %v3650, 3
  %vm3652 = vcmp.lt.s32.totalorder %v3651, 2
  %vm3653 = vcmp.eq.s32.totalorder %v3651, 0
  %v3654 = vxor.u32 %v3648, 2147483648
  %v3655 = vsel %vm3653, %v3647, %v3654
  %vm3656 = vcmp.eq.s32.totalorder %v3651, 2
  %v3657 = vxor.u32 %v3647, 2147483648
  %v3658 = vsel %vm3656, %v3657, %v3648
  %v3659 = vsel %vm3652, %v3655, %v3658
  %v3660 = vsel %vm3649, nan, %v3659
  %v3661 = vand.u32 2147483647, %v848
  %vm3662 = vcmp.le.f32.partialorder %v3661, 0.7853982
  %vm3663 = vcmp.lt.s32.totalorder %v848, 0
  %v3664 = vand.u32 %v848, 2139095040
  %v3665 = vshrl.u32 %v3664, 23
  %v3666 = vsub.s32 %v3665, 127
  %v3667 = vand.u32 2147483647, %v848
  %v3668 = vand.u32 %v3667, 8388607
  %v3669 = vor.u32 %v3668, 8388608
  %v3670 = vsub.s32 0, %v3669
  %v3671 = vadd.s32 %v3666, 1
  %vm3672 = vcmp.gt.s32.totalorder %v3671, 0
  %v3673 = vsel %vm3672, %v3671, 0
  %v3674 = vshrl.u32 %v3673, 5
  %v3675 = vand.u32 %v3673, 31
  %v3676 = vsub.s32 32, %v3675
  %v3677 = vshrl.u32 683565275, %v3676
  %v3678 = vshll.u32 683565275, %v3675
  %v3679 = vshrl.u32 2475754826, %v3676
  %v3680 = vor.u32 %v3678, %v3679
  %v3681 = vshll.u32 2475754826, %v3675
  %v3682 = vshrl.u32 2131351028, %v3676
  %v3683 = vor.u32 %v3681, %v3682
  %v3684 = vshll.u32 2131351028, %v3675
  %v3685 = vshrl.u32 2102212464, %v3676
  %v3686 = vor.u32 %v3684, %v3685
  %v3687 = vshll.u32 2102212464, %v3675
  %v3688 = vshrl.u32 920167782, %v3676
  %v3689 = vor.u32 %v3687, %v3688
  %v3690 = vshll.u32 920167782, %v3675
  %v3691 = vshrl.u32 1326507024, %v3676
  %v3692 = vor.u32 %v3690, %v3691
  %vm3693 = vcmp.lt.s32.totalorder %v3674, 1
  %vm3694 = vcmp.lt.s32.totalorder %v3674, 2
  %vm3695 = vcmp.lt.s32.totalorder %v3674, 3
  %vm3696 = vcmp.lt.s32.totalorder %v3674, 4
  %v3697 = vsel %vm3693, %v3677, %v3680
  %v3698 = vsel %vm3696, %v3686, 2102212464
  %v3699 = vsel %vm3695, %v3683, %v3698
  %v3700 = vsel %vm3694, %v3697, %v3699
  %v3701 = vsel %vm3693, %v3680, %v3683
  %v3702 = vsel %vm3696, %v3689, 920167782
  %v3703 = vsel %vm3695, %v3686, %v3702
  %v3704 = vsel %vm3694, %v3701, %v3703
  %v3705 = vsel %vm3693, %v3683, %v3686
  %v3706 = vsel %vm3696, %v3692, 1326507024
  %v3707 = vsel %vm3695, %v3689, %v3706
  %v3708 = vsel %vm3694, %v3705, %v3707
  %v3709 = vshll.u32 %v3669, 8
  %v3710 = vmul.u32.u64.compose %v3709, %v3708
  %v3711 = vextract.low.u32 %v3710
  %v3712 = vextract.high.u32 %v3710
  %v3713 = vmul.u32.u64.compose %v3709, %v3704
  %v3714 = vextract.low.u32 %v3713
  %v3715 = vextract.high.u32 %v3713
  %v3716 = vmul.u32 %v3709, %v3700
  %v3717 = vadd.s32 %v3712, %v3714
  %vm3718 = vc.u32 %v3712, %v3714
  %v3719 = vadd.s32 %v3715, 1
  %v3720 = vsel %vm3718, %v3719, %v3715
  %v3721 = vadd.s32 %v3716, %v3720
  %v3722 = vadd.s32 %v3721, 536870912
  %v3723 = vshrl.u32 %v3722, 30
  %v3724 = vshll.u32 %v3723, 30
  %v3725 = vsub.s32 %v3721, %v3724
  %vm3726 = vcmp.lt.s32.totalorder %v3725, 0
  %v3727 = vsub.s32 0, %v3725
  %v3728 = vsel %vm3726, %v3727, %v3725
  %v3729 = vclz %v3728
  %v3730 = vsub.s32 %v3729, 2
  %vm3731 = vcmp.gt.s32.totalorder 0, %v3730
  %v3732 = vsel %vm3731, 0, %v3730
  %v3733 = vsub.s32 32, %v3732
  %v3734 = vshll.u32 %v3725, %v3732
  %v3735 = vshrl.u32 %v3717, %v3733
  %v3736 = vor.u32 %v3734, %v3735
  %v3737 = vsub.s32 4294967266, %v3732
  %v3738 = vadd.s32 %v3737, 127
  %v3739 = vshll.u32 %v3738, 23
  %v3740 = vor.u32 4788187, %v3739
  %v3741 = vand.u32 2147483647, %v3740
  %v3743 = vcvt.s32.f32 %v3736
  %v3744 = vmul.f32 %v3743, %v3741
  %v3745 = vxor.u32 %v3744, 2147483648
  %v3746 = vsel %vm3663, %v3745, %v3744
  %v3747 = vsub.s32 4, %v3723
  %v3748 = vsel %vm3663, %v3747, %v3723
  %v3749 = vsel %vm3662, %v848, %v3746
  %v3750 = vsel %vm3662, 0, %v3748
  %v3751 = vcosq.f32.pop %v3749
  %v3752 = vsinq.f32.pop %v3749
  %vm3753 = vweird.f32 %v848
  %v3754 = vadd.s32 %v3750, 3
  %v3755 = vand.u32 %v3754, 3
  %vm3756 = vcmp.lt.s32.totalorder %v3755, 2
  %vm3757 = vcmp.eq.s32.totalorder %v3755, 0
  %v3758 = vxor.u32 %v3752, 2147483648
  %v3759 = vsel %vm3757, %v3751, %v3758
  %vm3760 = vcmp.eq.s32.totalorder %v3755, 2
  %v3761 = vxor.u32 %v3751, 2147483648
  %v3762 = vsel %vm3760, %v3761, %v3752
  %v3763 = vsel %vm3756, %v3759, %v3762
  %v3764 = vsel %vm3753, nan, %v3763
  %v3765 = vand.u32 2147483647, %v849
  %vm3766 = vcmp.le.f32.partialorder %v3765, 0.7853982
  %vm3767 = vcmp.lt.s32.totalorder %v849, 0
  %v3768 = vand.u32 %v849, 2139095040
  %v3769 = vshrl.u32 %v3768, 23
  %v3770 = vsub.s32 %v3769, 127
  %v3771 = vand.u32 2147483647, %v849
  %v3772 = vand.u32 %v3771, 8388607
  %v3773 = vor.u32 %v3772, 8388608
  %v3774 = vsub.s32 0, %v3773
  %v3775 = vadd.s32 %v3770, 1
  %vm3776 = vcmp.gt.s32.totalorder %v3775, 0
  %v3777 = vsel %vm3776, %v3775, 0
  %v3778 = vshrl.u32 %v3777, 5
  %v3779 = vand.u32 %v3777, 31
  %v3780 = vsub.s32 32, %v3779
  %v3781 = vshrl.u32 683565275, %v3780
  %v3782 = vshll.u32 683565275, %v3779
  %v3783 = vshrl.u32 2475754826, %v3780
  %v3784 = vor.u32 %v3782, %v3783
  %v3785 = vshll.u32 2475754826, %v3779
  %v3786 = vshrl.u32 2131351028, %v3780
  %v3787 = vor.u32 %v3785, %v3786
  %v3788 = vshll.u32 2131351028, %v3779
  %v3789 = vshrl.u32 2102212464, %v3780
  %v3790 = vor.u32 %v3788, %v3789
  %v3791 = vshll.u32 2102212464, %v3779
  %v3792 = vshrl.u32 920167782, %v3780
  %v3793 = vor.u32 %v3791, %v3792
  %v3794 = vshll.u32 920167782, %v3779
  %v3795 = vshrl.u32 1326507024, %v3780
  %v3796 = vor.u32 %v3794, %v3795
  %vm3797 = vcmp.lt.s32.totalorder %v3778, 1
  %vm3798 = vcmp.lt.s32.totalorder %v3778, 2
  %vm3799 = vcmp.lt.s32.totalorder %v3778, 3
  %vm3800 = vcmp.lt.s32.totalorder %v3778, 4
  %v3801 = vsel %vm3797, %v3781, %v3784
  %v3802 = vsel %vm3800, %v3790, 2102212464
  %v3803 = vsel %vm3799, %v3787, %v3802
  %v3804 = vsel %vm3798, %v3801, %v3803
  %v3805 = vsel %vm3797, %v3784, %v3787
  %v3806 = vsel %vm3800, %v3793, 920167782
  %v3807 = vsel %vm3799, %v3790, %v3806
  %v3808 = vsel %vm3798, %v3805, %v3807
  %v3809 = vsel %vm3797, %v3787, %v3790
  %v3810 = vsel %vm3800, %v3796, 1326507024
  %v3811 = vsel %vm3799, %v3793, %v3810
  %v3812 = vsel %vm3798, %v3809, %v3811
  %v3813 = vshll.u32 %v3773, 8
  %v3814 = vmul.u32.u64.compose %v3813, %v3812
  %v3815 = vextract.low.u32 %v3814
  %v3816 = vextract.high.u32 %v3814
  %v3817 = vmul.u32.u64.compose %v3813, %v3808
  %v3818 = vextract.low.u32 %v3817
  %v3819 = vextract.high.u32 %v3817
  %v3820 = vmul.u32 %v3813, %v3804
  %v3821 = vadd.s32 %v3816, %v3818
  %vm3822 = vc.u32 %v3816, %v3818
  %v3823 = vadd.s32 %v3819, 1
  %v3824 = vsel %vm3822, %v3823, %v3819
  %v3825 = vadd.s32 %v3820, %v3824
  %v3826 = vadd.s32 %v3825, 536870912
  %v3827 = vshrl.u32 %v3826, 30
  %v3828 = vshll.u32 %v3827, 30
  %v3829 = vsub.s32 %v3825, %v3828
  %vm3830 = vcmp.lt.s32.totalorder %v3829, 0
  %v3831 = vsub.s32 0, %v3829
  %v3832 = vsel %vm3830, %v3831, %v3829
  %v3833 = vclz %v3832
  %v3834 = vsub.s32 %v3833, 2
  %vm3835 = vcmp.gt.s32.totalorder 0, %v3834
  %v3836 = vsel %vm3835, 0, %v3834
  %v3837 = vsub.s32 32, %v3836
  %v3838 = vshll.u32 %v3829, %v3836
  %v3839 = vshrl.u32 %v3821, %v3837
  %v3840 = vor.u32 %v3838, %v3839
  %v3841 = vsub.s32 4294967266, %v3836
  %v3842 = vadd.s32 %v3841, 127
  %v3843 = vshll.u32 %v3842, 23
  %v3844 = vor.u32 4788187, %v3843
  %v3845 = vand.u32 2147483647, %v3844
  %v3847 = vcvt.s32.f32 %v3840
  %v3848 = vmul.f32 %v3847, %v3845
  %v3849 = vxor.u32 %v3848, 2147483648
  %v3850 = vsel %vm3767, %v3849, %v3848
  %v3851 = vsub.s32 4, %v3827
  %v3852 = vsel %vm3767, %v3851, %v3827
  %v3853 = vsel %vm3766, %v849, %v3850
  %v3854 = vsel %vm3766, 0, %v3852
  %v3855 = vcosq.f32.pop %v3853
  %v3856 = vsinq.f32.pop %v3853
  %vm3857 = vweird.f32 %v849
  %v3858 = vadd.s32 %v3854, 3
  %v3859 = vand.u32 %v3858, 3
  %vm3860 = vcmp.lt.s32.totalorder %v3859, 2
  %vm3861 = vcmp.eq.s32.totalorder %v3859, 0
  %v3862 = vxor.u32 %v3856, 2147483648
  %v3863 = vsel %vm3861, %v3855, %v3862
  %vm3864 = vcmp.eq.s32.totalorder %v3859, 2
  %v3865 = vxor.u32 %v3855, 2147483648
  %v3866 = vsel %vm3864, %v3865, %v3856
  %v3867 = vsel %vm3860, %v3863, %v3866
  %v3868 = vsel %vm3857, nan, %v3867
  %v3869 = vand.u32 2147483647, %v850
  %vm3870 = vcmp.le.f32.partialorder %v3869, 0.7853982
  %vm3871 = vcmp.lt.s32.totalorder %v850, 0
  %v3872 = vand.u32 %v850, 2139095040
  %v3873 = vshrl.u32 %v3872, 23
  %v3874 = vsub.s32 %v3873, 127
  %v3875 = vand.u32 2147483647, %v850
  %v3876 = vand.u32 %v3875, 8388607
  %v3877 = vor.u32 %v3876, 8388608
  %v3878 = vsub.s32 0, %v3877
  %v3879 = vadd.s32 %v3874, 1
  %vm3880 = vcmp.gt.s32.totalorder %v3879, 0
  %v3881 = vsel %vm3880, %v3879, 0
  %v3882 = vshrl.u32 %v3881, 5
  %v3883 = vand.u32 %v3881, 31
  %v3884 = vsub.s32 32, %v3883
  %v3885 = vshrl.u32 683565275, %v3884
  %v3886 = vshll.u32 683565275, %v3883
  %v3887 = vshrl.u32 2475754826, %v3884
  %v3888 = vor.u32 %v3886, %v3887
  %v3889 = vshll.u32 2475754826, %v3883
  %v3890 = vshrl.u32 2131351028, %v3884
  %v3891 = vor.u32 %v3889, %v3890
  %v3892 = vshll.u32 2131351028, %v3883
  %v3893 = vshrl.u32 2102212464, %v3884
  %v3894 = vor.u32 %v3892, %v3893
  %v3895 = vshll.u32 2102212464, %v3883
  %v3896 = vshrl.u32 920167782, %v3884
  %v3897 = vor.u32 %v3895, %v3896
  %v3898 = vshll.u32 920167782, %v3883
  %v3899 = vshrl.u32 1326507024, %v3884
  %v3900 = vor.u32 %v3898, %v3899
  %vm3901 = vcmp.lt.s32.totalorder %v3882, 1
  %vm3902 = vcmp.lt.s32.totalorder %v3882, 2
  %vm3903 = vcmp.lt.s32.totalorder %v3882, 3
  %vm3904 = vcmp.lt.s32.totalorder %v3882, 4
  %v3905 = vsel %vm3901, %v3885, %v3888
  %v3906 = vsel %vm3904, %v3894, 2102212464
  %v3907 = vsel %vm3903, %v3891, %v3906
  %v3908 = vsel %vm3902, %v3905, %v3907
  %v3909 = vsel %vm3901, %v3888, %v3891
  %v3910 = vsel %vm3904, %v3897, 920167782
  %v3911 = vsel %vm3903, %v3894, %v3910
  %v3912 = vsel %vm3902, %v3909, %v3911
  %v3913 = vsel %vm3901, %v3891, %v3894
  %v3914 = vsel %vm3904, %v3900, 1326507024
  %v3915 = vsel %vm3903, %v3897, %v3914
  %v3916 = vsel %vm3902, %v3913, %v3915
  %v3917 = vshll.u32 %v3877, 8
  %v3918 = vmul.u32.u64.compose %v3917, %v3916
  %v3919 = vextract.low.u32 %v3918
  %v3920 = vextract.high.u32 %v3918
  %v3921 = vmul.u32.u64.compose %v3917, %v3912
  %v3922 = vextract.low.u32 %v3921
  %v3923 = vextract.high.u32 %v3921
  %v3924 = vmul.u32 %v3917, %v3908
  %v3925 = vadd.s32 %v3920, %v3922
  %vm3926 = vc.u32 %v3920, %v3922
  %v3927 = vadd.s32 %v3923, 1
  %v3928 = vsel %vm3926, %v3927, %v3923
  %v3929 = vadd.s32 %v3924, %v3928
  %v3930 = vadd.s32 %v3929, 536870912
  %v3931 = vshrl.u32 %v3930, 30
  %v3932 = vshll.u32 %v3931, 30
  %v3933 = vsub.s32 %v3929, %v3932
  %vm3934 = vcmp.lt.s32.totalorder %v3933, 0
  %v3935 = vsub.s32 0, %v3933
  %v3936 = vsel %vm3934, %v3935, %v3933
  %v3937 = vclz %v3936
  %v3938 = vsub.s32 %v3937, 2
  %vm3939 = vcmp.gt.s32.totalorder 0, %v3938
  %v3940 = vsel %vm3939, 0, %v3938
  %v3941 = vsub.s32 32, %v3940
  %v3942 = vshll.u32 %v3933, %v3940
  %v3943 = vshrl.u32 %v3925, %v3941
  %v3944 = vor.u32 %v3942, %v3943
  %v3945 = vsub.s32 4294967266, %v3940
  %v3946 = vadd.s32 %v3945, 127
  %v3947 = vshll.u32 %v3946, 23
  %v3948 = vor.u32 4788187, %v3947
  %v3949 = vand.u32 2147483647, %v3948
  %v3951 = vcvt.s32.f32 %v3944
  %v3952 = vmul.f32 %v3951, %v3949
  %v3953 = vxor.u32 %v3952, 2147483648
  %v3954 = vsel %vm3871, %v3953, %v3952
  %v3955 = vsub.s32 4, %v3931
  %v3956 = vsel %vm3871, %v3955, %v3931
  %v3957 = vsel %vm3870, %v850, %v3954
  %v3958 = vsel %vm3870, 0, %v3956
  %v3959 = vcosq.f32.pop %v3957
  %v3960 = vsinq.f32.pop %v3957
  %vm3961 = vweird.f32 %v850
  %v3962 = vadd.s32 %v3958, 3
  %v3963 = vand.u32 %v3962, 3
  %vm3964 = vcmp.lt.s32.totalorder %v3963, 2
  %vm3965 = vcmp.eq.s32.totalorder %v3963, 0
  %v3966 = vxor.u32 %v3960, 2147483648
  %v3967 = vsel %vm3965, %v3959, %v3966
  %vm3968 = vcmp.eq.s32.totalorder %v3963, 2
  %v3969 = vxor.u32 %v3959, 2147483648
  %v3970 = vsel %vm3968, %v3969, %v3960
  %v3971 = vsel %vm3964, %v3967, %v3970
  %v3972 = vsel %vm3961, nan, %v3971
  %v3973 = vand.u32 2147483647, %v851
  %vm3974 = vcmp.le.f32.partialorder %v3973, 0.7853982
  %vm3975 = vcmp.lt.s32.totalorder %v851, 0
  %v3976 = vand.u32 %v851, 2139095040
  %v3977 = vshrl.u32 %v3976, 23
  %v3978 = vsub.s32 %v3977, 127
  %v3979 = vand.u32 2147483647, %v851
  %v3980 = vand.u32 %v3979, 8388607
  %v3981 = vor.u32 %v3980, 8388608
  %v3982 = vsub.s32 0, %v3981
  %v3983 = vadd.s32 %v3978, 1
  %vm3984 = vcmp.gt.s32.totalorder %v3983, 0
  %v3985 = vsel %vm3984, %v3983, 0
  %v3986 = vshrl.u32 %v3985, 5
  %v3987 = vand.u32 %v3985, 31
  %v3988 = vsub.s32 32, %v3987
  %v3989 = vshrl.u32 683565275, %v3988
  %v3990 = vshll.u32 683565275, %v3987
  %v3991 = vshrl.u32 2475754826, %v3988
  %v3992 = vor.u32 %v3990, %v3991
  %v3993 = vshll.u32 2475754826, %v3987
  %v3994 = vshrl.u32 2131351028, %v3988
  %v3995 = vor.u32 %v3993, %v3994
  %v3996 = vshll.u32 2131351028, %v3987
  %v3997 = vshrl.u32 2102212464, %v3988
  %v3998 = vor.u32 %v3996, %v3997
  %v3999 = vshll.u32 2102212464, %v3987
  %v4000 = vshrl.u32 920167782, %v3988
  %v4001 = vor.u32 %v3999, %v4000
  %v4002 = vshll.u32 920167782, %v3987
  %v4003 = vshrl.u32 1326507024, %v3988
  %v4004 = vor.u32 %v4002, %v4003
  %vm4005 = vcmp.lt.s32.totalorder %v3986, 1
  %vm4006 = vcmp.lt.s32.totalorder %v3986, 2
  %vm4007 = vcmp.lt.s32.totalorder %v3986, 3
  %vm4008 = vcmp.lt.s32.totalorder %v3986, 4
  %v4009 = vsel %vm4005, %v3989, %v3992
  %v4010 = vsel %vm4008, %v3998, 2102212464
  %v4011 = vsel %vm4007, %v3995, %v4010
  %v4012 = vsel %vm4006, %v4009, %v4011
  %v4013 = vsel %vm4005, %v3992, %v3995
  %v4014 = vsel %vm4008, %v4001, 920167782
  %v4015 = vsel %vm4007, %v3998, %v4014
  %v4016 = vsel %vm4006, %v4013, %v4015
  %v4017 = vsel %vm4005, %v3995, %v3998
  %v4018 = vsel %vm4008, %v4004, 1326507024
  %v4019 = vsel %vm4007, %v4001, %v4018
  %v4020 = vsel %vm4006, %v4017, %v4019
  %v4021 = vshll.u32 %v3981, 8
  %v4022 = vmul.u32.u64.compose %v4021, %v4020
  %v4023 = vextract.low.u32 %v4022
  %v4024 = vextract.high.u32 %v4022
  %v4025 = vmul.u32.u64.compose %v4021, %v4016
  %v4026 = vextract.low.u32 %v4025
  %v4027 = vextract.high.u32 %v4025
  %v4028 = vmul.u32 %v4021, %v4012
  %v4029 = vadd.s32 %v4024, %v4026
  %vm4030 = vc.u32 %v4024, %v4026
  %v4031 = vadd.s32 %v4027, 1
  %v4032 = vsel %vm4030, %v4031, %v4027
  %v4033 = vadd.s32 %v4028, %v4032
  %v4034 = vadd.s32 %v4033, 536870912
  %v4035 = vshrl.u32 %v4034, 30
  %v4036 = vshll.u32 %v4035, 30
  %v4037 = vsub.s32 %v4033, %v4036
  %vm4038 = vcmp.lt.s32.totalorder %v4037, 0
  %v4039 = vsub.s32 0, %v4037
  %v4040 = vsel %vm4038, %v4039, %v4037
  %v4041 = vclz %v4040
  %v4042 = vsub.s32 %v4041, 2
  %vm4043 = vcmp.gt.s32.totalorder 0, %v4042
  %v4044 = vsel %vm4043, 0, %v4042
  %v4045 = vsub.s32 32, %v4044
  %v4046 = vshll.u32 %v4037, %v4044
  %v4047 = vshrl.u32 %v4029, %v4045
  %v4048 = vor.u32 %v4046, %v4047
  %v4049 = vsub.s32 4294967266, %v4044
  %v4050 = vadd.s32 %v4049, 127
  %v4051 = vshll.u32 %v4050, 23
  %v4052 = vor.u32 4788187, %v4051
  %v4053 = vand.u32 2147483647, %v4052
  %v4055 = vcvt.s32.f32 %v4048
  %v4056 = vmul.f32 %v4055, %v4053
  %v4057 = vxor.u32 %v4056, 2147483648
  %v4058 = vsel %vm3975, %v4057, %v4056
  %v4059 = vsub.s32 4, %v4035
  %v4060 = vsel %vm3975, %v4059, %v4035
  %v4061 = vsel %vm3974, %v851, %v4058
  %v4062 = vsel %vm3974, 0, %v4060
  %v4063 = vcosq.f32.pop %v4061
  %v4064 = vsinq.f32.pop %v4061
  %vm4065 = vweird.f32 %v851
  %v4066 = vadd.s32 %v4062, 3
  %v4067 = vand.u32 %v4066, 3
  %vm4068 = vcmp.lt.s32.totalorder %v4067, 2
  %vm4069 = vcmp.eq.s32.totalorder %v4067, 0
  %v4070 = vxor.u32 %v4064, 2147483648
  %v4071 = vsel %vm4069, %v4063, %v4070
  %vm4072 = vcmp.eq.s32.totalorder %v4067, 2
  %v4073 = vxor.u32 %v4063, 2147483648
  %v4074 = vsel %vm4072, %v4073, %v4064
  %v4075 = vsel %vm4068, %v4071, %v4074
  %v4076 = vsel %vm4065, nan, %v4075
  %v4077 = vand.u32 2147483647, %v852
  %vm4078 = vcmp.le.f32.partialorder %v4077, 0.7853982
  %vm4079 = vcmp.lt.s32.totalorder %v852, 0
  %v4080 = vand.u32 %v852, 2139095040
  %v4081 = vshrl.u32 %v4080, 23
  %v4082 = vsub.s32 %v4081, 127
  %v4083 = vand.u32 2147483647, %v852
  %v4084 = vand.u32 %v4083, 8388607
  %v4085 = vor.u32 %v4084, 8388608
  %v4086 = vsub.s32 0, %v4085
  %v4087 = vadd.s32 %v4082, 1
  %vm4088 = vcmp.gt.s32.totalorder %v4087, 0
  %v4089 = vsel %vm4088, %v4087, 0
  %v4090 = vshrl.u32 %v4089, 5
  %v4091 = vand.u32 %v4089, 31
  %v4092 = vsub.s32 32, %v4091
  %v4093 = vshrl.u32 683565275, %v4092
  %v4094 = vshll.u32 683565275, %v4091
  %v4095 = vshrl.u32 2475754826, %v4092
  %v4096 = vor.u32 %v4094, %v4095
  %v4097 = vshll.u32 2475754826, %v4091
  %v4098 = vshrl.u32 2131351028, %v4092
  %v4099 = vor.u32 %v4097, %v4098
  %v4100 = vshll.u32 2131351028, %v4091
  %v4101 = vshrl.u32 2102212464, %v4092
  %v4102 = vor.u32 %v4100, %v4101
  %v4103 = vshll.u32 2102212464, %v4091
  %v4104 = vshrl.u32 920167782, %v4092
  %v4105 = vor.u32 %v4103, %v4104
  %v4106 = vshll.u32 920167782, %v4091
  %v4107 = vshrl.u32 1326507024, %v4092
  %v4108 = vor.u32 %v4106, %v4107
  %vm4109 = vcmp.lt.s32.totalorder %v4090, 1
  %vm4110 = vcmp.lt.s32.totalorder %v4090, 2
  %vm4111 = vcmp.lt.s32.totalorder %v4090, 3
  %vm4112 = vcmp.lt.s32.totalorder %v4090, 4
  %v4113 = vsel %vm4109, %v4093, %v4096
  %v4114 = vsel %vm4112, %v4102, 2102212464
  %v4115 = vsel %vm4111, %v4099, %v4114
  %v4116 = vsel %vm4110, %v4113, %v4115
  %v4117 = vsel %vm4109, %v4096, %v4099
  %v4118 = vsel %vm4112, %v4105, 920167782
  %v4119 = vsel %vm4111, %v4102, %v4118
  %v4120 = vsel %vm4110, %v4117, %v4119
  %v4121 = vsel %vm4109, %v4099, %v4102
  %v4122 = vsel %vm4112, %v4108, 1326507024
  %v4123 = vsel %vm4111, %v4105, %v4122
  %v4124 = vsel %vm4110, %v4121, %v4123
  %v4125 = vshll.u32 %v4085, 8
  %v4126 = vmul.u32.u64.compose %v4125, %v4124
  %v4127 = vextract.low.u32 %v4126
  %v4128 = vextract.high.u32 %v4126
  %v4129 = vmul.u32.u64.compose %v4125, %v4120
  %v4130 = vextract.low.u32 %v4129
  %v4131 = vextract.high.u32 %v4129
  %v4132 = vmul.u32 %v4125, %v4116
  %v4133 = vadd.s32 %v4128, %v4130
  %vm4134 = vc.u32 %v4128, %v4130
  %v4135 = vadd.s32 %v4131, 1
  %v4136 = vsel %vm4134, %v4135, %v4131
  %v4137 = vadd.s32 %v4132, %v4136
  %v4138 = vadd.s32 %v4137, 536870912
  %v4139 = vshrl.u32 %v4138, 30
  %v4140 = vshll.u32 %v4139, 30
  %v4141 = vsub.s32 %v4137, %v4140
  %vm4142 = vcmp.lt.s32.totalorder %v4141, 0
  %v4143 = vsub.s32 0, %v4141
  %v4144 = vsel %vm4142, %v4143, %v4141
  %v4145 = vclz %v4144
  %v4146 = vsub.s32 %v4145, 2
  %vm4147 = vcmp.gt.s32.totalorder 0, %v4146
  %v4148 = vsel %vm4147, 0, %v4146
  %v4149 = vsub.s32 32, %v4148
  %v4150 = vshll.u32 %v4141, %v4148
  %v4151 = vshrl.u32 %v4133, %v4149
  %v4152 = vor.u32 %v4150, %v4151
  %v4153 = vsub.s32 4294967266, %v4148
  %v4154 = vadd.s32 %v4153, 127
  %v4155 = vshll.u32 %v4154, 23
  %v4156 = vor.u32 4788187, %v4155
  %v4157 = vand.u32 2147483647, %v4156
  %v4159 = vcvt.s32.f32 %v4152
  %v4160 = vmul.f32 %v4159, %v4157
  %v4161 = vxor.u32 %v4160, 2147483648
  %v4162 = vsel %vm4079, %v4161, %v4160
  %v4163 = vsub.s32 4, %v4139
  %v4164 = vsel %vm4079, %v4163, %v4139
  %v4165 = vsel %vm4078, %v852, %v4162
  %v4166 = vsel %vm4078, 0, %v4164
  %v4167 = vcosq.f32.pop %v4165
  %v4168 = vsinq.f32.pop %v4165
  %vm4169 = vweird.f32 %v852
  %v4170 = vadd.s32 %v4166, 3
  %v4171 = vand.u32 %v4170, 3
  %vm4172 = vcmp.lt.s32.totalorder %v4171, 2
  %vm4173 = vcmp.eq.s32.totalorder %v4171, 0
  %v4174 = vxor.u32 %v4168, 2147483648
  %v4175 = vsel %vm4173, %v4167, %v4174
  %vm4176 = vcmp.eq.s32.totalorder %v4171, 2
  %v4177 = vxor.u32 %v4167, 2147483648
  %v4178 = vsel %vm4176, %v4177, %v4168
  %v4179 = vsel %vm4172, %v4175, %v4178
  %v4180 = vsel %vm4169, nan, %v4179
  %v4181 = vand.u32 2147483647, %v821
  %vm4182 = vcmp.le.f32.partialorder %v4181, 0.7853982
  %vm4183 = vcmp.lt.s32.totalorder %v821, 0
  %v4184 = vand.u32 %v821, 2139095040
  %v4185 = vshrl.u32 %v4184, 23
  %v4186 = vsub.s32 %v4185, 127
  %v4187 = vand.u32 2147483647, %v821
  %v4188 = vand.u32 %v4187, 8388607
  %v4189 = vor.u32 %v4188, 8388608
  %v4190 = vsub.s32 0, %v4189
  %v4191 = vadd.s32 %v4186, 1
  %vm4192 = vcmp.gt.s32.totalorder %v4191, 0
  %v4193 = vsel %vm4192, %v4191, 0
  %v4194 = vshrl.u32 %v4193, 5
  %v4195 = vand.u32 %v4193, 31
  %v4196 = vsub.s32 32, %v4195
  %v4197 = vshrl.u32 683565275, %v4196
  %v4198 = vshll.u32 683565275, %v4195
  %v4199 = vshrl.u32 2475754826, %v4196
  %v4200 = vor.u32 %v4198, %v4199
  %v4201 = vshll.u32 2475754826, %v4195
  %v4202 = vshrl.u32 2131351028, %v4196
  %v4203 = vor.u32 %v4201, %v4202
  %v4204 = vshll.u32 2131351028, %v4195
  %v4205 = vshrl.u32 2102212464, %v4196
  %v4206 = vor.u32 %v4204, %v4205
  %v4207 = vshll.u32 2102212464, %v4195
  %v4208 = vshrl.u32 920167782, %v4196
  %v4209 = vor.u32 %v4207, %v4208
  %v4210 = vshll.u32 920167782, %v4195
  %v4211 = vshrl.u32 1326507024, %v4196
  %v4212 = vor.u32 %v4210, %v4211
  %vm4213 = vcmp.lt.s32.totalorder %v4194, 1
  %vm4214 = vcmp.lt.s32.totalorder %v4194, 2
  %vm4215 = vcmp.lt.s32.totalorder %v4194, 3
  %vm4216 = vcmp.lt.s32.totalorder %v4194, 4
  %v4217 = vsel %vm4213, %v4197, %v4200
  %v4218 = vsel %vm4216, %v4206, 2102212464
  %v4219 = vsel %vm4215, %v4203, %v4218
  %v4220 = vsel %vm4214, %v4217, %v4219
  %v4221 = vsel %vm4213, %v4200, %v4203
  %v4222 = vsel %vm4216, %v4209, 920167782
  %v4223 = vsel %vm4215, %v4206, %v4222
  %v4224 = vsel %vm4214, %v4221, %v4223
  %v4225 = vsel %vm4213, %v4203, %v4206
  %v4226 = vsel %vm4216, %v4212, 1326507024
  %v4227 = vsel %vm4215, %v4209, %v4226
  %v4228 = vsel %vm4214, %v4225, %v4227
  %v4229 = vshll.u32 %v4189, 8
  %v4230 = vmul.u32.u64.compose %v4229, %v4228
  %v4231 = vextract.low.u32 %v4230
  %v4232 = vextract.high.u32 %v4230
  %v4233 = vmul.u32.u64.compose %v4229, %v4224
  %v4234 = vextract.low.u32 %v4233
  %v4235 = vextract.high.u32 %v4233
  %v4236 = vmul.u32 %v4229, %v4220
  %v4237 = vadd.s32 %v4232, %v4234
  %vm4238 = vc.u32 %v4232, %v4234
  %v4239 = vadd.s32 %v4235, 1
  %v4240 = vsel %vm4238, %v4239, %v4235
  %v4241 = vadd.s32 %v4236, %v4240
  %v4242 = vadd.s32 %v4241, 536870912
  %v4243 = vshrl.u32 %v4242, 30
  %v4244 = vshll.u32 %v4243, 30
  %v4245 = vsub.s32 %v4241, %v4244
  %vm4246 = vcmp.lt.s32.totalorder %v4245, 0
  %v4247 = vsub.s32 0, %v4245
  %v4248 = vsel %vm4246, %v4247, %v4245
  %v4249 = vclz %v4248
  %v4250 = vsub.s32 %v4249, 2
  %vm4251 = vcmp.gt.s32.totalorder 0, %v4250
  %v4252 = vsel %vm4251, 0, %v4250
  %v4253 = vsub.s32 32, %v4252
  %v4254 = vshll.u32 %v4245, %v4252
  %v4255 = vshrl.u32 %v4237, %v4253
  %v4256 = vor.u32 %v4254, %v4255
  %v4257 = vsub.s32 4294967266, %v4252
  %v4258 = vadd.s32 %v4257, 127
  %v4259 = vshll.u32 %v4258, 23
  %v4260 = vor.u32 4788187, %v4259
  %v4261 = vand.u32 2147483647, %v4260
  %v4263 = vcvt.s32.f32 %v4256
  %v4264 = vmul.f32 %v4263, %v4261
  %v4265 = vxor.u32 %v4264, 2147483648
  %v4266 = vsel %vm4183, %v4265, %v4264
  %v4267 = vsub.s32 4, %v4243
  %v4268 = vsel %vm4183, %v4267, %v4243
  %v4269 = vsel %vm4182, %v821, %v4266
  %v4270 = vsel %vm4182, 0, %v4268
  %v4271 = vcosq.f32.pop %v4269
  %v4272 = vsinq.f32.pop %v4269
  %vm4273 = vweird.f32 %v821
  %v4274 = vand.u32 %v4270, 3
  %vm4275 = vcmp.lt.s32.totalorder %v4274, 2
  %vm4276 = vcmp.eq.s32.totalorder %v4274, 0
  %v4277 = vxor.u32 %v4272, 2147483648
  %v4278 = vsel %vm4276, %v4271, %v4277
  %vm4279 = vcmp.eq.s32.totalorder %v4274, 2
  %v4280 = vxor.u32 %v4271, 2147483648
  %v4281 = vsel %vm4279, %v4280, %v4272
  %v4282 = vsel %vm4275, %v4278, %v4281
  %v4283 = vsel %vm4273, nan, %v4282
  %v4284 = vand.u32 2147483647, %v822
  %vm4285 = vcmp.le.f32.partialorder %v4284, 0.7853982
  %vm4286 = vcmp.lt.s32.totalorder %v822, 0
  %v4287 = vand.u32 %v822, 2139095040
  %v4288 = vshrl.u32 %v4287, 23
  %v4289 = vsub.s32 %v4288, 127
  %v4290 = vand.u32 2147483647, %v822
  %v4291 = vand.u32 %v4290, 8388607
  %v4292 = vor.u32 %v4291, 8388608
  %v4293 = vsub.s32 0, %v4292
  %v4294 = vadd.s32 %v4289, 1
  %vm4295 = vcmp.gt.s32.totalorder %v4294, 0
  %v4296 = vsel %vm4295, %v4294, 0
  %v4297 = vshrl.u32 %v4296, 5
  %v4298 = vand.u32 %v4296, 31
  %v4299 = vsub.s32 32, %v4298
  %v4300 = vshrl.u32 683565275, %v4299
  %v4301 = vshll.u32 683565275, %v4298
  %v4302 = vshrl.u32 2475754826, %v4299
  %v4303 = vor.u32 %v4301, %v4302
  %v4304 = vshll.u32 2475754826, %v4298
  %v4305 = vshrl.u32 2131351028, %v4299
  %v4306 = vor.u32 %v4304, %v4305
  %v4307 = vshll.u32 2131351028, %v4298
  %v4308 = vshrl.u32 2102212464, %v4299
  %v4309 = vor.u32 %v4307, %v4308
  %v4310 = vshll.u32 2102212464, %v4298
  %v4311 = vshrl.u32 920167782, %v4299
  %v4312 = vor.u32 %v4310, %v4311
  %v4313 = vshll.u32 920167782, %v4298
  %v4314 = vshrl.u32 1326507024, %v4299
  %v4315 = vor.u32 %v4313, %v4314
  %vm4316 = vcmp.lt.s32.totalorder %v4297, 1
  %vm4317 = vcmp.lt.s32.totalorder %v4297, 2
  %vm4318 = vcmp.lt.s32.totalorder %v4297, 3
  %vm4319 = vcmp.lt.s32.totalorder %v4297, 4
  %v4320 = vsel %vm4316, %v4300, %v4303
  %v4321 = vsel %vm4319, %v4309, 2102212464
  %v4322 = vsel %vm4318, %v4306, %v4321
  %v4323 = vsel %vm4317, %v4320, %v4322
  %v4324 = vsel %vm4316, %v4303, %v4306
  %v4325 = vsel %vm4319, %v4312, 920167782
  %v4326 = vsel %vm4318, %v4309, %v4325
  %v4327 = vsel %vm4317, %v4324, %v4326
  %v4328 = vsel %vm4316, %v4306, %v4309
  %v4329 = vsel %vm4319, %v4315, 1326507024
  %v4330 = vsel %vm4318, %v4312, %v4329
  %v4331 = vsel %vm4317, %v4328, %v4330
  %v4332 = vshll.u32 %v4292, 8
  %v4333 = vmul.u32.u64.compose %v4332, %v4331
  %v4334 = vextract.low.u32 %v4333
  %v4335 = vextract.high.u32 %v4333
  %v4336 = vmul.u32.u64.compose %v4332, %v4327
  %v4337 = vextract.low.u32 %v4336
  %v4338 = vextract.high.u32 %v4336
  %v4339 = vmul.u32 %v4332, %v4323
  %v4340 = vadd.s32 %v4335, %v4337
  %vm4341 = vc.u32 %v4335, %v4337
  %v4342 = vadd.s32 %v4338, 1
  %v4343 = vsel %vm4341, %v4342, %v4338
  %v4344 = vadd.s32 %v4339, %v4343
  %v4345 = vadd.s32 %v4344, 536870912
  %v4346 = vshrl.u32 %v4345, 30
  %v4347 = vshll.u32 %v4346, 30
  %v4348 = vsub.s32 %v4344, %v4347
  %vm4349 = vcmp.lt.s32.totalorder %v4348, 0
  %v4350 = vsub.s32 0, %v4348
  %v4351 = vsel %vm4349, %v4350, %v4348
  %v4352 = vclz %v4351
  %v4353 = vsub.s32 %v4352, 2
  %vm4354 = vcmp.gt.s32.totalorder 0, %v4353
  %v4355 = vsel %vm4354, 0, %v4353
  %v4356 = vsub.s32 32, %v4355
  %v4357 = vshll.u32 %v4348, %v4355
  %v4358 = vshrl.u32 %v4340, %v4356
  %v4359 = vor.u32 %v4357, %v4358
  %v4360 = vsub.s32 4294967266, %v4355
  %v4361 = vadd.s32 %v4360, 127
  %v4362 = vshll.u32 %v4361, 23
  %v4363 = vor.u32 4788187, %v4362
  %v4364 = vand.u32 2147483647, %v4363
  %v4366 = vcvt.s32.f32 %v4359
  %v4367 = vmul.f32 %v4366, %v4364
  %v4368 = vxor.u32 %v4367, 2147483648
  %v4369 = vsel %vm4286, %v4368, %v4367
  %v4370 = vsub.s32 4, %v4346
  %v4371 = vsel %vm4286, %v4370, %v4346
  %v4372 = vsel %vm4285, %v822, %v4369
  %v4373 = vsel %vm4285, 0, %v4371
  %v4374 = vcosq.f32.pop %v4372
  %v4375 = vsinq.f32.pop %v4372
  %vm4376 = vweird.f32 %v822
  %v4377 = vand.u32 %v4373, 3
  %vm4378 = vcmp.lt.s32.totalorder %v4377, 2
  %vm4379 = vcmp.eq.s32.totalorder %v4377, 0
  %v4380 = vxor.u32 %v4375, 2147483648
  %v4381 = vsel %vm4379, %v4374, %v4380
  %vm4382 = vcmp.eq.s32.totalorder %v4377, 2
  %v4383 = vxor.u32 %v4374, 2147483648
  %v4384 = vsel %vm4382, %v4383, %v4375
  %v4385 = vsel %vm4378, %v4381, %v4384
  %v4386 = vsel %vm4376, nan, %v4385
  %v4387 = vand.u32 2147483647, %v823
  %vm4388 = vcmp.le.f32.partialorder %v4387, 0.7853982
  %vm4389 = vcmp.lt.s32.totalorder %v823, 0
  %v4390 = vand.u32 %v823, 2139095040
  %v4391 = vshrl.u32 %v4390, 23
  %v4392 = vsub.s32 %v4391, 127
  %v4393 = vand.u32 2147483647, %v823
  %v4394 = vand.u32 %v4393, 8388607
  %v4395 = vor.u32 %v4394, 8388608
  %v4396 = vsub.s32 0, %v4395
  %v4397 = vadd.s32 %v4392, 1
  %vm4398 = vcmp.gt.s32.totalorder %v4397, 0
  %v4399 = vsel %vm4398, %v4397, 0
  %v4400 = vshrl.u32 %v4399, 5
  %v4401 = vand.u32 %v4399, 31
  %v4402 = vsub.s32 32, %v4401
  %v4403 = vshrl.u32 683565275, %v4402
  %v4404 = vshll.u32 683565275, %v4401
  %v4405 = vshrl.u32 2475754826, %v4402
  %v4406 = vor.u32 %v4404, %v4405
  %v4407 = vshll.u32 2475754826, %v4401
  %v4408 = vshrl.u32 2131351028, %v4402
  %v4409 = vor.u32 %v4407, %v4408
  %v4410 = vshll.u32 2131351028, %v4401
  %v4411 = vshrl.u32 2102212464, %v4402
  %v4412 = vor.u32 %v4410, %v4411
  %v4413 = vshll.u32 2102212464, %v4401
  %v4414 = vshrl.u32 920167782, %v4402
  %v4415 = vor.u32 %v4413, %v4414
  %v4416 = vshll.u32 920167782, %v4401
  %v4417 = vshrl.u32 1326507024, %v4402
  %v4418 = vor.u32 %v4416, %v4417
  %vm4419 = vcmp.lt.s32.totalorder %v4400, 1
  %vm4420 = vcmp.lt.s32.totalorder %v4400, 2
  %vm4421 = vcmp.lt.s32.totalorder %v4400, 3
  %vm4422 = vcmp.lt.s32.totalorder %v4400, 4
  %v4423 = vsel %vm4419, %v4403, %v4406
  %v4424 = vsel %vm4422, %v4412, 2102212464
  %v4425 = vsel %vm4421, %v4409, %v4424
  %v4426 = vsel %vm4420, %v4423, %v4425
  %v4427 = vsel %vm4419, %v4406, %v4409
  %v4428 = vsel %vm4422, %v4415, 920167782
  %v4429 = vsel %vm4421, %v4412, %v4428
  %v4430 = vsel %vm4420, %v4427, %v4429
  %v4431 = vsel %vm4419, %v4409, %v4412
  %v4432 = vsel %vm4422, %v4418, 1326507024
  %v4433 = vsel %vm4421, %v4415, %v4432
  %v4434 = vsel %vm4420, %v4431, %v4433
  %v4435 = vshll.u32 %v4395, 8
  %v4436 = vmul.u32.u64.compose %v4435, %v4434
  %v4437 = vextract.low.u32 %v4436
  %v4438 = vextract.high.u32 %v4436
  %v4439 = vmul.u32.u64.compose %v4435, %v4430
  %v4440 = vextract.low.u32 %v4439
  %v4441 = vextract.high.u32 %v4439
  %v4442 = vmul.u32 %v4435, %v4426
  %v4443 = vadd.s32 %v4438, %v4440
  %vm4444 = vc.u32 %v4438, %v4440
  %v4445 = vadd.s32 %v4441, 1
  %v4446 = vsel %vm4444, %v4445, %v4441
  %v4447 = vadd.s32 %v4442, %v4446
  %v4448 = vadd.s32 %v4447, 536870912
  %v4449 = vshrl.u32 %v4448, 30
  %v4450 = vshll.u32 %v4449, 30
  %v4451 = vsub.s32 %v4447, %v4450
  %vm4452 = vcmp.lt.s32.totalorder %v4451, 0
  %v4453 = vsub.s32 0, %v4451
  %v4454 = vsel %vm4452, %v4453, %v4451
  %v4455 = vclz %v4454
  %v4456 = vsub.s32 %v4455, 2
  %vm4457 = vcmp.gt.s32.totalorder 0, %v4456
  %v4458 = vsel %vm4457, 0, %v4456
  %v4459 = vsub.s32 32, %v4458
  %v4460 = vshll.u32 %v4451, %v4458
  %v4461 = vshrl.u32 %v4443, %v4459
  %v4462 = vor.u32 %v4460, %v4461
  %v4463 = vsub.s32 4294967266, %v4458
  %v4464 = vadd.s32 %v4463, 127
  %v4465 = vshll.u32 %v4464, 23
  %v4466 = vor.u32 4788187, %v4465
  %v4467 = vand.u32 2147483647, %v4466
  %v4469 = vcvt.s32.f32 %v4462
  %v4470 = vmul.f32 %v4469, %v4467
  %v4471 = vxor.u32 %v4470, 2147483648
  %v4472 = vsel %vm4389, %v4471, %v4470
  %v4473 = vsub.s32 4, %v4449
  %v4474 = vsel %vm4389, %v4473, %v4449
  %v4475 = vsel %vm4388, %v823, %v4472
  %v4476 = vsel %vm4388, 0, %v4474
  %v4477 = vcosq.f32.pop %v4475
  %v4478 = vsinq.f32.pop %v4475
  %vm4479 = vweird.f32 %v823
  %v4480 = vand.u32 %v4476, 3
  %vm4481 = vcmp.lt.s32.totalorder %v4480, 2
  %vm4482 = vcmp.eq.s32.totalorder %v4480, 0
  %v4483 = vxor.u32 %v4478, 2147483648
  %v4484 = vsel %vm4482, %v4477, %v4483
  %vm4485 = vcmp.eq.s32.totalorder %v4480, 2
  %v4486 = vxor.u32 %v4477, 2147483648
  %v4487 = vsel %vm4485, %v4486, %v4478
  %v4488 = vsel %vm4481, %v4484, %v4487
  %v4489 = vsel %vm4479, nan, %v4488
  %v4490 = vand.u32 2147483647, %v824
  %vm4491 = vcmp.le.f32.partialorder %v4490, 0.7853982
  %vm4492 = vcmp.lt.s32.totalorder %v824, 0
  %v4493 = vand.u32 %v824, 2139095040
  %v4494 = vshrl.u32 %v4493, 23
  %v4495 = vsub.s32 %v4494, 127
  %v4496 = vand.u32 2147483647, %v824
  %v4497 = vand.u32 %v4496, 8388607
  %v4498 = vor.u32 %v4497, 8388608
  %v4499 = vsub.s32 0, %v4498
  %v4500 = vadd.s32 %v4495, 1
  %vm4501 = vcmp.gt.s32.totalorder %v4500, 0
  %v4502 = vsel %vm4501, %v4500, 0
  %v4503 = vshrl.u32 %v4502, 5
  %v4504 = vand.u32 %v4502, 31
  %v4505 = vsub.s32 32, %v4504
  %v4506 = vshrl.u32 683565275, %v4505
  %v4507 = vshll.u32 683565275, %v4504
  %v4508 = vshrl.u32 2475754826, %v4505
  %v4509 = vor.u32 %v4507, %v4508
  %v4510 = vshll.u32 2475754826, %v4504
  %v4511 = vshrl.u32 2131351028, %v4505
  %v4512 = vor.u32 %v4510, %v4511
  %v4513 = vshll.u32 2131351028, %v4504
  %v4514 = vshrl.u32 2102212464, %v4505
  %v4515 = vor.u32 %v4513, %v4514
  %v4516 = vshll.u32 2102212464, %v4504
  %v4517 = vshrl.u32 920167782, %v4505
  %v4518 = vor.u32 %v4516, %v4517
  %v4519 = vshll.u32 920167782, %v4504
  %v4520 = vshrl.u32 1326507024, %v4505
  %v4521 = vor.u32 %v4519, %v4520
  %vm4522 = vcmp.lt.s32.totalorder %v4503, 1
  %vm4523 = vcmp.lt.s32.totalorder %v4503, 2
  %vm4524 = vcmp.lt.s32.totalorder %v4503, 3
  %vm4525 = vcmp.lt.s32.totalorder %v4503, 4
  %v4526 = vsel %vm4522, %v4506, %v4509
  %v4527 = vsel %vm4525, %v4515, 2102212464
  %v4528 = vsel %vm4524, %v4512, %v4527
  %v4529 = vsel %vm4523, %v4526, %v4528
  %v4530 = vsel %vm4522, %v4509, %v4512
  %v4531 = vsel %vm4525, %v4518, 920167782
  %v4532 = vsel %vm4524, %v4515, %v4531
  %v4533 = vsel %vm4523, %v4530, %v4532
  %v4534 = vsel %vm4522, %v4512, %v4515
  %v4535 = vsel %vm4525, %v4521, 1326507024
  %v4536 = vsel %vm4524, %v4518, %v4535
  %v4537 = vsel %vm4523, %v4534, %v4536
  %v4538 = vshll.u32 %v4498, 8
  %v4539 = vmul.u32.u64.compose %v4538, %v4537
  %v4540 = vextract.low.u32 %v4539
  %v4541 = vextract.high.u32 %v4539
  %v4542 = vmul.u32.u64.compose %v4538, %v4533
  %v4543 = vextract.low.u32 %v4542
  %v4544 = vextract.high.u32 %v4542
  %v4545 = vmul.u32 %v4538, %v4529
  %v4546 = vadd.s32 %v4541, %v4543
  %vm4547 = vc.u32 %v4541, %v4543
  %v4548 = vadd.s32 %v4544, 1
  %v4549 = vsel %vm4547, %v4548, %v4544
  %v4550 = vadd.s32 %v4545, %v4549
  %v4551 = vadd.s32 %v4550, 536870912
  %v4552 = vshrl.u32 %v4551, 30
  %v4553 = vshll.u32 %v4552, 30
  %v4554 = vsub.s32 %v4550, %v4553
  %vm4555 = vcmp.lt.s32.totalorder %v4554, 0
  %v4556 = vsub.s32 0, %v4554
  %v4557 = vsel %vm4555, %v4556, %v4554
  %v4558 = vclz %v4557
  %v4559 = vsub.s32 %v4558, 2
  %vm4560 = vcmp.gt.s32.totalorder 0, %v4559
  %v4561 = vsel %vm4560, 0, %v4559
  %v4562 = vsub.s32 32, %v4561
  %v4563 = vshll.u32 %v4554, %v4561
  %v4564 = vshrl.u32 %v4546, %v4562
  %v4565 = vor.u32 %v4563, %v4564
  %v4566 = vsub.s32 4294967266, %v4561
  %v4567 = vadd.s32 %v4566, 127
  %v4568 = vshll.u32 %v4567, 23
  %v4569 = vor.u32 4788187, %v4568
  %v4570 = vand.u32 2147483647, %v4569
  %v4572 = vcvt.s32.f32 %v4565
  %v4573 = vmul.f32 %v4572, %v4570
  %v4574 = vxor.u32 %v4573, 2147483648
  %v4575 = vsel %vm4492, %v4574, %v4573
  %v4576 = vsub.s32 4, %v4552
  %v4577 = vsel %vm4492, %v4576, %v4552
  %v4578 = vsel %vm4491, %v824, %v4575
  %v4579 = vsel %vm4491, 0, %v4577
  %v4580 = vcosq.f32.pop %v4578
  %v4581 = vsinq.f32.pop %v4578
  %vm4582 = vweird.f32 %v824
  %v4583 = vand.u32 %v4579, 3
  %vm4584 = vcmp.lt.s32.totalorder %v4583, 2
  %vm4585 = vcmp.eq.s32.totalorder %v4583, 0
  %v4586 = vxor.u32 %v4581, 2147483648
  %v4587 = vsel %vm4585, %v4580, %v4586
  %vm4588 = vcmp.eq.s32.totalorder %v4583, 2
  %v4589 = vxor.u32 %v4580, 2147483648
  %v4590 = vsel %vm4588, %v4589, %v4581
  %v4591 = vsel %vm4584, %v4587, %v4590
  %v4592 = vsel %vm4582, nan, %v4591
  %v4593 = vand.u32 2147483647, %v825
  %vm4594 = vcmp.le.f32.partialorder %v4593, 0.7853982
  %vm4595 = vcmp.lt.s32.totalorder %v825, 0
  %v4596 = vand.u32 %v825, 2139095040
  %v4597 = vshrl.u32 %v4596, 23
  %v4598 = vsub.s32 %v4597, 127
  %v4599 = vand.u32 2147483647, %v825
  %v4600 = vand.u32 %v4599, 8388607
  %v4601 = vor.u32 %v4600, 8388608
  %v4602 = vsub.s32 0, %v4601
  %v4603 = vadd.s32 %v4598, 1
  %vm4604 = vcmp.gt.s32.totalorder %v4603, 0
  %v4605 = vsel %vm4604, %v4603, 0
  %v4606 = vshrl.u32 %v4605, 5
  %v4607 = vand.u32 %v4605, 31
  %v4608 = vsub.s32 32, %v4607
  %v4609 = vshrl.u32 683565275, %v4608
  %v4610 = vshll.u32 683565275, %v4607
  %v4611 = vshrl.u32 2475754826, %v4608
  %v4612 = vor.u32 %v4610, %v4611
  %v4613 = vshll.u32 2475754826, %v4607
  %v4614 = vshrl.u32 2131351028, %v4608
  %v4615 = vor.u32 %v4613, %v4614
  %v4616 = vshll.u32 2131351028, %v4607
  %v4617 = vshrl.u32 2102212464, %v4608
  %v4618 = vor.u32 %v4616, %v4617
  %v4619 = vshll.u32 2102212464, %v4607
  %v4620 = vshrl.u32 920167782, %v4608
  %v4621 = vor.u32 %v4619, %v4620
  %v4622 = vshll.u32 920167782, %v4607
  %v4623 = vshrl.u32 1326507024, %v4608
  %v4624 = vor.u32 %v4622, %v4623
  %vm4625 = vcmp.lt.s32.totalorder %v4606, 1
  %vm4626 = vcmp.lt.s32.totalorder %v4606, 2
  %vm4627 = vcmp.lt.s32.totalorder %v4606, 3
  %vm4628 = vcmp.lt.s32.totalorder %v4606, 4
  %v4629 = vsel %vm4625, %v4609, %v4612
  %v4630 = vsel %vm4628, %v4618, 2102212464
  %v4631 = vsel %vm4627, %v4615, %v4630
  %v4632 = vsel %vm4626, %v4629, %v4631
  %v4633 = vsel %vm4625, %v4612, %v4615
  %v4634 = vsel %vm4628, %v4621, 920167782
  %v4635 = vsel %vm4627, %v4618, %v4634
  %v4636 = vsel %vm4626, %v4633, %v4635
  %v4637 = vsel %vm4625, %v4615, %v4618
  %v4638 = vsel %vm4628, %v4624, 1326507024
  %v4639 = vsel %vm4627, %v4621, %v4638
  %v4640 = vsel %vm4626, %v4637, %v4639
  %v4641 = vshll.u32 %v4601, 8
  %v4642 = vmul.u32.u64.compose %v4641, %v4640
  %v4643 = vextract.low.u32 %v4642
  %v4644 = vextract.high.u32 %v4642
  %v4645 = vmul.u32.u64.compose %v4641, %v4636
  %v4646 = vextract.low.u32 %v4645
  %v4647 = vextract.high.u32 %v4645
  %v4648 = vmul.u32 %v4641, %v4632
  %v4649 = vadd.s32 %v4644, %v4646
  %vm4650 = vc.u32 %v4644, %v4646
  %v4651 = vadd.s32 %v4647, 1
  %v4652 = vsel %vm4650, %v4651, %v4647
  %v4653 = vadd.s32 %v4648, %v4652
  %v4654 = vadd.s32 %v4653, 536870912
  %v4655 = vshrl.u32 %v4654, 30
  %v4656 = vshll.u32 %v4655, 30
  %v4657 = vsub.s32 %v4653, %v4656
  %vm4658 = vcmp.lt.s32.totalorder %v4657, 0
  %v4659 = vsub.s32 0, %v4657
  %v4660 = vsel %vm4658, %v4659, %v4657
  %v4661 = vclz %v4660
  %v4662 = vsub.s32 %v4661, 2
  %vm4663 = vcmp.gt.s32.totalorder 0, %v4662
  %v4664 = vsel %vm4663, 0, %v4662
  %v4665 = vsub.s32 32, %v4664
  %v4666 = vshll.u32 %v4657, %v4664
  %v4667 = vshrl.u32 %v4649, %v4665
  %v4668 = vor.u32 %v4666, %v4667
  %v4669 = vsub.s32 4294967266, %v4664
  %v4670 = vadd.s32 %v4669, 127
  %v4671 = vshll.u32 %v4670, 23
  %v4672 = vor.u32 4788187, %v4671
  %v4673 = vand.u32 2147483647, %v4672
  %v4675 = vcvt.s32.f32 %v4668
  %v4676 = vmul.f32 %v4675, %v4673
  %v4677 = vxor.u32 %v4676, 2147483648
  %v4678 = vsel %vm4595, %v4677, %v4676
  %v4679 = vsub.s32 4, %v4655
  %v4680 = vsel %vm4595, %v4679, %v4655
  %v4681 = vsel %vm4594, %v825, %v4678
  %v4682 = vsel %vm4594, 0, %v4680
  %v4683 = vcosq.f32.pop %v4681
  %v4684 = vsinq.f32.pop %v4681
  %vm4685 = vweird.f32 %v825
  %v4686 = vand.u32 %v4682, 3
  %vm4687 = vcmp.lt.s32.totalorder %v4686, 2
  %vm4688 = vcmp.eq.s32.totalorder %v4686, 0
  %v4689 = vxor.u32 %v4684, 2147483648
  %v4690 = vsel %vm4688, %v4683, %v4689
  %vm4691 = vcmp.eq.s32.totalorder %v4686, 2
  %v4692 = vxor.u32 %v4683, 2147483648
  %v4693 = vsel %vm4691, %v4692, %v4684
  %v4694 = vsel %vm4687, %v4690, %v4693
  %v4695 = vsel %vm4685, nan, %v4694
  %v4696 = vand.u32 2147483647, %v826
  %vm4697 = vcmp.le.f32.partialorder %v4696, 0.7853982
  %vm4698 = vcmp.lt.s32.totalorder %v826, 0
  %v4699 = vand.u32 %v826, 2139095040
  %v4700 = vshrl.u32 %v4699, 23
  %v4701 = vsub.s32 %v4700, 127
  %v4702 = vand.u32 2147483647, %v826
  %v4703 = vand.u32 %v4702, 8388607
  %v4704 = vor.u32 %v4703, 8388608
  %v4705 = vsub.s32 0, %v4704
  %v4706 = vadd.s32 %v4701, 1
  %vm4707 = vcmp.gt.s32.totalorder %v4706, 0
  %v4708 = vsel %vm4707, %v4706, 0
  %v4709 = vshrl.u32 %v4708, 5
  %v4710 = vand.u32 %v4708, 31
  %v4711 = vsub.s32 32, %v4710
  %v4712 = vshrl.u32 683565275, %v4711
  %v4713 = vshll.u32 683565275, %v4710
  %v4714 = vshrl.u32 2475754826, %v4711
  %v4715 = vor.u32 %v4713, %v4714
  %v4716 = vshll.u32 2475754826, %v4710
  %v4717 = vshrl.u32 2131351028, %v4711
  %v4718 = vor.u32 %v4716, %v4717
  %v4719 = vshll.u32 2131351028, %v4710
  %v4720 = vshrl.u32 2102212464, %v4711
  %v4721 = vor.u32 %v4719, %v4720
  %v4722 = vshll.u32 2102212464, %v4710
  %v4723 = vshrl.u32 920167782, %v4711
  %v4724 = vor.u32 %v4722, %v4723
  %v4725 = vshll.u32 920167782, %v4710
  %v4726 = vshrl.u32 1326507024, %v4711
  %v4727 = vor.u32 %v4725, %v4726
  %vm4728 = vcmp.lt.s32.totalorder %v4709, 1
  %vm4729 = vcmp.lt.s32.totalorder %v4709, 2
  %vm4730 = vcmp.lt.s32.totalorder %v4709, 3
  %vm4731 = vcmp.lt.s32.totalorder %v4709, 4
  %v4732 = vsel %vm4728, %v4712, %v4715
  %v4733 = vsel %vm4731, %v4721, 2102212464
  %v4734 = vsel %vm4730, %v4718, %v4733
  %v4735 = vsel %vm4729, %v4732, %v4734
  %v4736 = vsel %vm4728, %v4715, %v4718
  %v4737 = vsel %vm4731, %v4724, 920167782
  %v4738 = vsel %vm4730, %v4721, %v4737
  %v4739 = vsel %vm4729, %v4736, %v4738
  %v4740 = vsel %vm4728, %v4718, %v4721
  %v4741 = vsel %vm4731, %v4727, 1326507024
  %v4742 = vsel %vm4730, %v4724, %v4741
  %v4743 = vsel %vm4729, %v4740, %v4742
  %v4744 = vshll.u32 %v4704, 8
  %v4745 = vmul.u32.u64.compose %v4744, %v4743
  %v4746 = vextract.low.u32 %v4745
  %v4747 = vextract.high.u32 %v4745
  %v4748 = vmul.u32.u64.compose %v4744, %v4739
  %v4749 = vextract.low.u32 %v4748
  %v4750 = vextract.high.u32 %v4748
  %v4751 = vmul.u32 %v4744, %v4735
  %v4752 = vadd.s32 %v4747, %v4749
  %vm4753 = vc.u32 %v4747, %v4749
  %v4754 = vadd.s32 %v4750, 1
  %v4755 = vsel %vm4753, %v4754, %v4750
  %v4756 = vadd.s32 %v4751, %v4755
  %v4757 = vadd.s32 %v4756, 536870912
  %v4758 = vshrl.u32 %v4757, 30
  %v4759 = vshll.u32 %v4758, 30
  %v4760 = vsub.s32 %v4756, %v4759
  %vm4761 = vcmp.lt.s32.totalorder %v4760, 0
  %v4762 = vsub.s32 0, %v4760
  %v4763 = vsel %vm4761, %v4762, %v4760
  %v4764 = vclz %v4763
  %v4765 = vsub.s32 %v4764, 2
  %vm4766 = vcmp.gt.s32.totalorder 0, %v4765
  %v4767 = vsel %vm4766, 0, %v4765
  %v4768 = vsub.s32 32, %v4767
  %v4769 = vshll.u32 %v4760, %v4767
  %v4770 = vshrl.u32 %v4752, %v4768
  %v4771 = vor.u32 %v4769, %v4770
  %v4772 = vsub.s32 4294967266, %v4767
  %v4773 = vadd.s32 %v4772, 127
  %v4774 = vshll.u32 %v4773, 23
  %v4775 = vor.u32 4788187, %v4774
  %v4776 = vand.u32 2147483647, %v4775
  %v4778 = vcvt.s32.f32 %v4771
  %v4779 = vmul.f32 %v4778, %v4776
  %v4780 = vxor.u32 %v4779, 2147483648
  %v4781 = vsel %vm4698, %v4780, %v4779
  %v4782 = vsub.s32 4, %v4758
  %v4783 = vsel %vm4698, %v4782, %v4758
  %v4784 = vsel %vm4697, %v826, %v4781
  %v4785 = vsel %vm4697, 0, %v4783
  %v4786 = vcosq.f32.pop %v4784
  %v4787 = vsinq.f32.pop %v4784
  %vm4788 = vweird.f32 %v826
  %v4789 = vand.u32 %v4785, 3
  %vm4790 = vcmp.lt.s32.totalorder %v4789, 2
  %vm4791 = vcmp.eq.s32.totalorder %v4789, 0
  %v4792 = vxor.u32 %v4787, 2147483648
  %v4793 = vsel %vm4791, %v4786, %v4792
  %vm4794 = vcmp.eq.s32.totalorder %v4789, 2
  %v4795 = vxor.u32 %v4786, 2147483648
  %v4796 = vsel %vm4794, %v4795, %v4787
  %v4797 = vsel %vm4790, %v4793, %v4796
  %v4798 = vsel %vm4788, nan, %v4797
  %v4799 = vand.u32 2147483647, %v827
  %vm4800 = vcmp.le.f32.partialorder %v4799, 0.7853982
  %vm4801 = vcmp.lt.s32.totalorder %v827, 0
  %v4802 = vand.u32 %v827, 2139095040
  %v4803 = vshrl.u32 %v4802, 23
  %v4804 = vsub.s32 %v4803, 127
  %v4805 = vand.u32 2147483647, %v827
  %v4806 = vand.u32 %v4805, 8388607
  %v4807 = vor.u32 %v4806, 8388608
  %v4808 = vsub.s32 0, %v4807
  %v4809 = vadd.s32 %v4804, 1
  %vm4810 = vcmp.gt.s32.totalorder %v4809, 0
  %v4811 = vsel %vm4810, %v4809, 0
  %v4812 = vshrl.u32 %v4811, 5
  %v4813 = vand.u32 %v4811, 31
  %v4814 = vsub.s32 32, %v4813
  %v4815 = vshrl.u32 683565275, %v4814
  %v4816 = vshll.u32 683565275, %v4813
  %v4817 = vshrl.u32 2475754826, %v4814
  %v4818 = vor.u32 %v4816, %v4817
  %v4819 = vshll.u32 2475754826, %v4813
  %v4820 = vshrl.u32 2131351028, %v4814
  %v4821 = vor.u32 %v4819, %v4820
  %v4822 = vshll.u32 2131351028, %v4813
  %v4823 = vshrl.u32 2102212464, %v4814
  %v4824 = vor.u32 %v4822, %v4823
  %v4825 = vshll.u32 2102212464, %v4813
  %v4826 = vshrl.u32 920167782, %v4814
  %v4827 = vor.u32 %v4825, %v4826
  %v4828 = vshll.u32 920167782, %v4813
  %v4829 = vshrl.u32 1326507024, %v4814
  %v4830 = vor.u32 %v4828, %v4829
  %vm4831 = vcmp.lt.s32.totalorder %v4812, 1
  %vm4832 = vcmp.lt.s32.totalorder %v4812, 2
  %vm4833 = vcmp.lt.s32.totalorder %v4812, 3
  %vm4834 = vcmp.lt.s32.totalorder %v4812, 4
  %v4835 = vsel %vm4831, %v4815, %v4818
  %v4836 = vsel %vm4834, %v4824, 2102212464
  %v4837 = vsel %vm4833, %v4821, %v4836
  %v4838 = vsel %vm4832, %v4835, %v4837
  %v4839 = vsel %vm4831, %v4818, %v4821
  %v4840 = vsel %vm4834, %v4827, 920167782
  %v4841 = vsel %vm4833, %v4824, %v4840
  %v4842 = vsel %vm4832, %v4839, %v4841
  %v4843 = vsel %vm4831, %v4821, %v4824
  %v4844 = vsel %vm4834, %v4830, 1326507024
  %v4845 = vsel %vm4833, %v4827, %v4844
  %v4846 = vsel %vm4832, %v4843, %v4845
  %v4847 = vshll.u32 %v4807, 8
  %v4848 = vmul.u32.u64.compose %v4847, %v4846
  %v4849 = vextract.low.u32 %v4848
  %v4850 = vextract.high.u32 %v4848
  %v4851 = vmul.u32.u64.compose %v4847, %v4842
  %v4852 = vextract.low.u32 %v4851
  %v4853 = vextract.high.u32 %v4851
  %v4854 = vmul.u32 %v4847, %v4838
  %v4855 = vadd.s32 %v4850, %v4852
  %vm4856 = vc.u32 %v4850, %v4852
  %v4857 = vadd.s32 %v4853, 1
  %v4858 = vsel %vm4856, %v4857, %v4853
  %v4859 = vadd.s32 %v4854, %v4858
  %v4860 = vadd.s32 %v4859, 536870912
  %v4861 = vshrl.u32 %v4860, 30
  %v4862 = vshll.u32 %v4861, 30
  %v4863 = vsub.s32 %v4859, %v4862
  %vm4864 = vcmp.lt.s32.totalorder %v4863, 0
  %v4865 = vsub.s32 0, %v4863
  %v4866 = vsel %vm4864, %v4865, %v4863
  %v4867 = vclz %v4866
  %v4868 = vsub.s32 %v4867, 2
  %vm4869 = vcmp.gt.s32.totalorder 0, %v4868
  %v4870 = vsel %vm4869, 0, %v4868
  %v4871 = vsub.s32 32, %v4870
  %v4872 = vshll.u32 %v4863, %v4870
  %v4873 = vshrl.u32 %v4855, %v4871
  %v4874 = vor.u32 %v4872, %v4873
  %v4875 = vsub.s32 4294967266, %v4870
  %v4876 = vadd.s32 %v4875, 127
  %v4877 = vshll.u32 %v4876, 23
  %v4878 = vor.u32 4788187, %v4877
  %v4879 = vand.u32 2147483647, %v4878
  %v4881 = vcvt.s32.f32 %v4874
  %v4882 = vmul.f32 %v4881, %v4879
  %v4883 = vxor.u32 %v4882, 2147483648
  %v4884 = vsel %vm4801, %v4883, %v4882
  %v4885 = vsub.s32 4, %v4861
  %v4886 = vsel %vm4801, %v4885, %v4861
  %v4887 = vsel %vm4800, %v827, %v4884
  %v4888 = vsel %vm4800, 0, %v4886
  %v4889 = vcosq.f32.pop %v4887
  %v4890 = vsinq.f32.pop %v4887
  %vm4891 = vweird.f32 %v827
  %v4892 = vand.u32 %v4888, 3
  %vm4893 = vcmp.lt.s32.totalorder %v4892, 2
  %vm4894 = vcmp.eq.s32.totalorder %v4892, 0
  %v4895 = vxor.u32 %v4890, 2147483648
  %v4896 = vsel %vm4894, %v4889, %v4895
  %vm4897 = vcmp.eq.s32.totalorder %v4892, 2
  %v4898 = vxor.u32 %v4889, 2147483648
  %v4899 = vsel %vm4897, %v4898, %v4890
  %v4900 = vsel %vm4893, %v4896, %v4899
  %v4901 = vsel %vm4891, nan, %v4900
  %v4902 = vand.u32 2147483647, %v828
  %vm4903 = vcmp.le.f32.partialorder %v4902, 0.7853982
  %vm4904 = vcmp.lt.s32.totalorder %v828, 0
  %v4905 = vand.u32 %v828, 2139095040
  %v4906 = vshrl.u32 %v4905, 23
  %v4907 = vsub.s32 %v4906, 127
  %v4908 = vand.u32 2147483647, %v828
  %v4909 = vand.u32 %v4908, 8388607
  %v4910 = vor.u32 %v4909, 8388608
  %v4911 = vsub.s32 0, %v4910
  %v4912 = vadd.s32 %v4907, 1
  %vm4913 = vcmp.gt.s32.totalorder %v4912, 0
  %v4914 = vsel %vm4913, %v4912, 0
  %v4915 = vshrl.u32 %v4914, 5
  %v4916 = vand.u32 %v4914, 31
  %v4917 = vsub.s32 32, %v4916
  %v4918 = vshrl.u32 683565275, %v4917
  %v4919 = vshll.u32 683565275, %v4916
  %v4920 = vshrl.u32 2475754826, %v4917
  %v4921 = vor.u32 %v4919, %v4920
  %v4922 = vshll.u32 2475754826, %v4916
  %v4923 = vshrl.u32 2131351028, %v4917
  %v4924 = vor.u32 %v4922, %v4923
  %v4925 = vshll.u32 2131351028, %v4916
  %v4926 = vshrl.u32 2102212464, %v4917
  %v4927 = vor.u32 %v4925, %v4926
  %v4928 = vshll.u32 2102212464, %v4916
  %v4929 = vshrl.u32 920167782, %v4917
  %v4930 = vor.u32 %v4928, %v4929
  %v4931 = vshll.u32 920167782, %v4916
  %v4932 = vshrl.u32 1326507024, %v4917
  %v4933 = vor.u32 %v4931, %v4932
  %vm4934 = vcmp.lt.s32.totalorder %v4915, 1
  %vm4935 = vcmp.lt.s32.totalorder %v4915, 2
  %vm4936 = vcmp.lt.s32.totalorder %v4915, 3
  %vm4937 = vcmp.lt.s32.totalorder %v4915, 4
  %v4938 = vsel %vm4934, %v4918, %v4921
  %v4939 = vsel %vm4937, %v4927, 2102212464
  %v4940 = vsel %vm4936, %v4924, %v4939
  %v4941 = vsel %vm4935, %v4938, %v4940
  %v4942 = vsel %vm4934, %v4921, %v4924
  %v4943 = vsel %vm4937, %v4930, 920167782
  %v4944 = vsel %vm4936, %v4927, %v4943
  %v4945 = vsel %vm4935, %v4942, %v4944
  %v4946 = vsel %vm4934, %v4924, %v4927
  %v4947 = vsel %vm4937, %v4933, 1326507024
  %v4948 = vsel %vm4936, %v4930, %v4947
  %v4949 = vsel %vm4935, %v4946, %v4948
  %v4950 = vshll.u32 %v4910, 8
  %v4951 = vmul.u32.u64.compose %v4950, %v4949
  %v4952 = vextract.low.u32 %v4951
  %v4953 = vextract.high.u32 %v4951
  %v4954 = vmul.u32.u64.compose %v4950, %v4945
  %v4955 = vextract.low.u32 %v4954
  %v4956 = vextract.high.u32 %v4954
  %v4957 = vmul.u32 %v4950, %v4941
  %v4958 = vadd.s32 %v4953, %v4955
  %vm4959 = vc.u32 %v4953, %v4955
  %v4960 = vadd.s32 %v4956, 1
  %v4961 = vsel %vm4959, %v4960, %v4956
  %v4962 = vadd.s32 %v4957, %v4961
  %v4963 = vadd.s32 %v4962, 536870912
  %v4964 = vshrl.u32 %v4963, 30
  %v4965 = vshll.u32 %v4964, 30
  %v4966 = vsub.s32 %v4962, %v4965
  %vm4967 = vcmp.lt.s32.totalorder %v4966, 0
  %v4968 = vsub.s32 0, %v4966
  %v4969 = vsel %vm4967, %v4968, %v4966
  %v4970 = vclz %v4969
  %v4971 = vsub.s32 %v4970, 2
  %vm4972 = vcmp.gt.s32.totalorder 0, %v4971
  %v4973 = vsel %vm4972, 0, %v4971
  %v4974 = vsub.s32 32, %v4973
  %v4975 = vshll.u32 %v4966, %v4973
  %v4976 = vshrl.u32 %v4958, %v4974
  %v4977 = vor.u32 %v4975, %v4976
  %v4978 = vsub.s32 4294967266, %v4973
  %v4979 = vadd.s32 %v4978, 127
  %v4980 = vshll.u32 %v4979, 23
  %v4981 = vor.u32 4788187, %v4980
  %v4982 = vand.u32 2147483647, %v4981
  %v4984 = vcvt.s32.f32 %v4977
  %v4985 = vmul.f32 %v4984, %v4982
  %v4986 = vxor.u32 %v4985, 2147483648
  %v4987 = vsel %vm4904, %v4986, %v4985
  %v4988 = vsub.s32 4, %v4964
  %v4989 = vsel %vm4904, %v4988, %v4964
  %v4990 = vsel %vm4903, %v828, %v4987
  %v4991 = vsel %vm4903, 0, %v4989
  %v4992 = vcosq.f32.pop %v4990
  %v4993 = vsinq.f32.pop %v4990
  %vm4994 = vweird.f32 %v828
  %v4995 = vand.u32 %v4991, 3
  %vm4996 = vcmp.lt.s32.totalorder %v4995, 2
  %vm4997 = vcmp.eq.s32.totalorder %v4995, 0
  %v4998 = vxor.u32 %v4993, 2147483648
  %v4999 = vsel %vm4997, %v4992, %v4998
  %vm5000 = vcmp.eq.s32.totalorder %v4995, 2
  %v5001 = vxor.u32 %v4992, 2147483648
  %v5002 = vsel %vm5000, %v5001, %v4993
  %v5003 = vsel %vm4996, %v4999, %v5002
  %v5004 = vsel %vm4994, nan, %v5003
  %v5005 = vand.u32 2147483647, %v829
  %vm5006 = vcmp.le.f32.partialorder %v5005, 0.7853982
  %vm5007 = vcmp.lt.s32.totalorder %v829, 0
  %v5008 = vand.u32 %v829, 2139095040
  %v5009 = vshrl.u32 %v5008, 23
  %v5010 = vsub.s32 %v5009, 127
  %v5011 = vand.u32 2147483647, %v829
  %v5012 = vand.u32 %v5011, 8388607
  %v5013 = vor.u32 %v5012, 8388608
  %v5014 = vsub.s32 0, %v5013
  %v5015 = vadd.s32 %v5010, 1
  %vm5016 = vcmp.gt.s32.totalorder %v5015, 0
  %v5017 = vsel %vm5016, %v5015, 0
  %v5018 = vshrl.u32 %v5017, 5
  %v5019 = vand.u32 %v5017, 31
  %v5020 = vsub.s32 32, %v5019
  %v5021 = vshrl.u32 683565275, %v5020
  %v5022 = vshll.u32 683565275, %v5019
  %v5023 = vshrl.u32 2475754826, %v5020
  %v5024 = vor.u32 %v5022, %v5023
  %v5025 = vshll.u32 2475754826, %v5019
  %v5026 = vshrl.u32 2131351028, %v5020
  %v5027 = vor.u32 %v5025, %v5026
  %v5028 = vshll.u32 2131351028, %v5019
  %v5029 = vshrl.u32 2102212464, %v5020
  %v5030 = vor.u32 %v5028, %v5029
  %v5031 = vshll.u32 2102212464, %v5019
  %v5032 = vshrl.u32 920167782, %v5020
  %v5033 = vor.u32 %v5031, %v5032
  %v5034 = vshll.u32 920167782, %v5019
  %v5035 = vshrl.u32 1326507024, %v5020
  %v5036 = vor.u32 %v5034, %v5035
  %vm5037 = vcmp.lt.s32.totalorder %v5018, 1
  %vm5038 = vcmp.lt.s32.totalorder %v5018, 2
  %vm5039 = vcmp.lt.s32.totalorder %v5018, 3
  %vm5040 = vcmp.lt.s32.totalorder %v5018, 4
  %v5041 = vsel %vm5037, %v5021, %v5024
  %v5042 = vsel %vm5040, %v5030, 2102212464
  %v5043 = vsel %vm5039, %v5027, %v5042
  %v5044 = vsel %vm5038, %v5041, %v5043
  %v5045 = vsel %vm5037, %v5024, %v5027
  %v5046 = vsel %vm5040, %v5033, 920167782
  %v5047 = vsel %vm5039, %v5030, %v5046
  %v5048 = vsel %vm5038, %v5045, %v5047
  %v5049 = vsel %vm5037, %v5027, %v5030
  %v5050 = vsel %vm5040, %v5036, 1326507024
  %v5051 = vsel %vm5039, %v5033, %v5050
  %v5052 = vsel %vm5038, %v5049, %v5051
  %v5053 = vshll.u32 %v5013, 8
  %v5054 = vmul.u32.u64.compose %v5053, %v5052
  %v5055 = vextract.low.u32 %v5054
  %v5056 = vextract.high.u32 %v5054
  %v5057 = vmul.u32.u64.compose %v5053, %v5048
  %v5058 = vextract.low.u32 %v5057
  %v5059 = vextract.high.u32 %v5057
  %v5060 = vmul.u32 %v5053, %v5044
  %v5061 = vadd.s32 %v5056, %v5058
  %vm5062 = vc.u32 %v5056, %v5058
  %v5063 = vadd.s32 %v5059, 1
  %v5064 = vsel %vm5062, %v5063, %v5059
  %v5065 = vadd.s32 %v5060, %v5064
  %v5066 = vadd.s32 %v5065, 536870912
  %v5067 = vshrl.u32 %v5066, 30
  %v5068 = vshll.u32 %v5067, 30
  %v5069 = vsub.s32 %v5065, %v5068
  %vm5070 = vcmp.lt.s32.totalorder %v5069, 0
  %v5071 = vsub.s32 0, %v5069
  %v5072 = vsel %vm5070, %v5071, %v5069
  %v5073 = vclz %v5072
  %v5074 = vsub.s32 %v5073, 2
  %vm5075 = vcmp.gt.s32.totalorder 0, %v5074
  %v5076 = vsel %vm5075, 0, %v5074
  %v5077 = vsub.s32 32, %v5076
  %v5078 = vshll.u32 %v5069, %v5076
  %v5079 = vshrl.u32 %v5061, %v5077
  %v5080 = vor.u32 %v5078, %v5079
  %v5081 = vsub.s32 4294967266, %v5076
  %v5082 = vadd.s32 %v5081, 127
  %v5083 = vshll.u32 %v5082, 23
  %v5084 = vor.u32 4788187, %v5083
  %v5085 = vand.u32 2147483647, %v5084
  %v5087 = vcvt.s32.f32 %v5080
  %v5088 = vmul.f32 %v5087, %v5085
  %v5089 = vxor.u32 %v5088, 2147483648
  %v5090 = vsel %vm5007, %v5089, %v5088
  %v5091 = vsub.s32 4, %v5067
  %v5092 = vsel %vm5007, %v5091, %v5067
  %v5093 = vsel %vm5006, %v829, %v5090
  %v5094 = vsel %vm5006, 0, %v5092
  %v5095 = vcosq.f32.pop %v5093
  %v5096 = vsinq.f32.pop %v5093
  %vm5097 = vweird.f32 %v829
  %v5098 = vand.u32 %v5094, 3
  %vm5099 = vcmp.lt.s32.totalorder %v5098, 2
  %vm5100 = vcmp.eq.s32.totalorder %v5098, 0
  %v5101 = vxor.u32 %v5096, 2147483648
  %v5102 = vsel %vm5100, %v5095, %v5101
  %vm5103 = vcmp.eq.s32.totalorder %v5098, 2
  %v5104 = vxor.u32 %v5095, 2147483648
  %v5105 = vsel %vm5103, %v5104, %v5096
  %v5106 = vsel %vm5099, %v5102, %v5105
  %v5107 = vsel %vm5097, nan, %v5106
  %v5108 = vand.u32 2147483647, %v830
  %vm5109 = vcmp.le.f32.partialorder %v5108, 0.7853982
  %vm5110 = vcmp.lt.s32.totalorder %v830, 0
  %v5111 = vand.u32 %v830, 2139095040
  %v5112 = vshrl.u32 %v5111, 23
  %v5113 = vsub.s32 %v5112, 127
  %v5114 = vand.u32 2147483647, %v830
  %v5115 = vand.u32 %v5114, 8388607
  %v5116 = vor.u32 %v5115, 8388608
  %v5117 = vsub.s32 0, %v5116
  %v5118 = vadd.s32 %v5113, 1
  %vm5119 = vcmp.gt.s32.totalorder %v5118, 0
  %v5120 = vsel %vm5119, %v5118, 0
  %v5121 = vshrl.u32 %v5120, 5
  %v5122 = vand.u32 %v5120, 31
  %v5123 = vsub.s32 32, %v5122
  %v5124 = vshrl.u32 683565275, %v5123
  %v5125 = vshll.u32 683565275, %v5122
  %v5126 = vshrl.u32 2475754826, %v5123
  %v5127 = vor.u32 %v5125, %v5126
  %v5128 = vshll.u32 2475754826, %v5122
  %v5129 = vshrl.u32 2131351028, %v5123
  %v5130 = vor.u32 %v5128, %v5129
  %v5131 = vshll.u32 2131351028, %v5122
  %v5132 = vshrl.u32 2102212464, %v5123
  %v5133 = vor.u32 %v5131, %v5132
  %v5134 = vshll.u32 2102212464, %v5122
  %v5135 = vshrl.u32 920167782, %v5123
  %v5136 = vor.u32 %v5134, %v5135
  %v5137 = vshll.u32 920167782, %v5122
  %v5138 = vshrl.u32 1326507024, %v5123
  %v5139 = vor.u32 %v5137, %v5138
  %vm5140 = vcmp.lt.s32.totalorder %v5121, 1
  %vm5141 = vcmp.lt.s32.totalorder %v5121, 2
  %vm5142 = vcmp.lt.s32.totalorder %v5121, 3
  %vm5143 = vcmp.lt.s32.totalorder %v5121, 4
  %v5144 = vsel %vm5140, %v5124, %v5127
  %v5145 = vsel %vm5143, %v5133, 2102212464
  %v5146 = vsel %vm5142, %v5130, %v5145
  %v5147 = vsel %vm5141, %v5144, %v5146
  %v5148 = vsel %vm5140, %v5127, %v5130
  %v5149 = vsel %vm5143, %v5136, 920167782
  %v5150 = vsel %vm5142, %v5133, %v5149
  %v5151 = vsel %vm5141, %v5148, %v5150
  %v5152 = vsel %vm5140, %v5130, %v5133
  %v5153 = vsel %vm5143, %v5139, 1326507024
  %v5154 = vsel %vm5142, %v5136, %v5153
  %v5155 = vsel %vm5141, %v5152, %v5154
  %v5156 = vshll.u32 %v5116, 8
  %v5157 = vmul.u32.u64.compose %v5156, %v5155
  %v5158 = vextract.low.u32 %v5157
  %v5159 = vextract.high.u32 %v5157
  %v5160 = vmul.u32.u64.compose %v5156, %v5151
  %v5161 = vextract.low.u32 %v5160
  %v5162 = vextract.high.u32 %v5160
  %v5163 = vmul.u32 %v5156, %v5147
  %v5164 = vadd.s32 %v5159, %v5161
  %vm5165 = vc.u32 %v5159, %v5161
  %v5166 = vadd.s32 %v5162, 1
  %v5167 = vsel %vm5165, %v5166, %v5162
  %v5168 = vadd.s32 %v5163, %v5167
  %v5169 = vadd.s32 %v5168, 536870912
  %v5170 = vshrl.u32 %v5169, 30
  %v5171 = vshll.u32 %v5170, 30
  %v5172 = vsub.s32 %v5168, %v5171
  %vm5173 = vcmp.lt.s32.totalorder %v5172, 0
  %v5174 = vsub.s32 0, %v5172
  %v5175 = vsel %vm5173, %v5174, %v5172
  %v5176 = vclz %v5175
  %v5177 = vsub.s32 %v5176, 2
  %vm5178 = vcmp.gt.s32.totalorder 0, %v5177
  %v5179 = vsel %vm5178, 0, %v5177
  %v5180 = vsub.s32 32, %v5179
  %v5181 = vshll.u32 %v5172, %v5179
  %v5182 = vshrl.u32 %v5164, %v5180
  %v5183 = vor.u32 %v5181, %v5182
  %v5184 = vsub.s32 4294967266, %v5179
  %v5185 = vadd.s32 %v5184, 127
  %v5186 = vshll.u32 %v5185, 23
  %v5187 = vor.u32 4788187, %v5186
  %v5188 = vand.u32 2147483647, %v5187
  %v5190 = vcvt.s32.f32 %v5183
  %v5191 = vmul.f32 %v5190, %v5188
  %v5192 = vxor.u32 %v5191, 2147483648
  %v5193 = vsel %vm5110, %v5192, %v5191
  %v5194 = vsub.s32 4, %v5170
  %v5195 = vsel %vm5110, %v5194, %v5170
  %v5196 = vsel %vm5109, %v830, %v5193
  %v5197 = vsel %vm5109, 0, %v5195
  %v5198 = vcosq.f32.pop %v5196
  %v5199 = vsinq.f32.pop %v5196
  %vm5200 = vweird.f32 %v830
  %v5201 = vand.u32 %v5197, 3
  %vm5202 = vcmp.lt.s32.totalorder %v5201, 2
  %vm5203 = vcmp.eq.s32.totalorder %v5201, 0
  %v5204 = vxor.u32 %v5199, 2147483648
  %v5205 = vsel %vm5203, %v5198, %v5204
  %vm5206 = vcmp.eq.s32.totalorder %v5201, 2
  %v5207 = vxor.u32 %v5198, 2147483648
  %v5208 = vsel %vm5206, %v5207, %v5199
  %v5209 = vsel %vm5202, %v5205, %v5208
  %v5210 = vsel %vm5200, nan, %v5209
  %v5211 = vand.u32 2147483647, %v831
  %vm5212 = vcmp.le.f32.partialorder %v5211, 0.7853982
  %vm5213 = vcmp.lt.s32.totalorder %v831, 0
  %v5214 = vand.u32 %v831, 2139095040
  %v5215 = vshrl.u32 %v5214, 23
  %v5216 = vsub.s32 %v5215, 127
  %v5217 = vand.u32 2147483647, %v831
  %v5218 = vand.u32 %v5217, 8388607
  %v5219 = vor.u32 %v5218, 8388608
  %v5220 = vsub.s32 0, %v5219
  %v5221 = vadd.s32 %v5216, 1
  %vm5222 = vcmp.gt.s32.totalorder %v5221, 0
  %v5223 = vsel %vm5222, %v5221, 0
  %v5224 = vshrl.u32 %v5223, 5
  %v5225 = vand.u32 %v5223, 31
  %v5226 = vsub.s32 32, %v5225
  %v5227 = vshrl.u32 683565275, %v5226
  %v5228 = vshll.u32 683565275, %v5225
  %v5229 = vshrl.u32 2475754826, %v5226
  %v5230 = vor.u32 %v5228, %v5229
  %v5231 = vshll.u32 2475754826, %v5225
  %v5232 = vshrl.u32 2131351028, %v5226
  %v5233 = vor.u32 %v5231, %v5232
  %v5234 = vshll.u32 2131351028, %v5225
  %v5235 = vshrl.u32 2102212464, %v5226
  %v5236 = vor.u32 %v5234, %v5235
  %v5237 = vshll.u32 2102212464, %v5225
  %v5238 = vshrl.u32 920167782, %v5226
  %v5239 = vor.u32 %v5237, %v5238
  %v5240 = vshll.u32 920167782, %v5225
  %v5241 = vshrl.u32 1326507024, %v5226
  %v5242 = vor.u32 %v5240, %v5241
  %vm5243 = vcmp.lt.s32.totalorder %v5224, 1
  %vm5244 = vcmp.lt.s32.totalorder %v5224, 2
  %vm5245 = vcmp.lt.s32.totalorder %v5224, 3
  %vm5246 = vcmp.lt.s32.totalorder %v5224, 4
  %v5247 = vsel %vm5243, %v5227, %v5230
  %v5248 = vsel %vm5246, %v5236, 2102212464
  %v5249 = vsel %vm5245, %v5233, %v5248
  %v5250 = vsel %vm5244, %v5247, %v5249
  %v5251 = vsel %vm5243, %v5230, %v5233
  %v5252 = vsel %vm5246, %v5239, 920167782
  %v5253 = vsel %vm5245, %v5236, %v5252
  %v5254 = vsel %vm5244, %v5251, %v5253
  %v5255 = vsel %vm5243, %v5233, %v5236
  %v5256 = vsel %vm5246, %v5242, 1326507024
  %v5257 = vsel %vm5245, %v5239, %v5256
  %v5258 = vsel %vm5244, %v5255, %v5257
  %v5259 = vshll.u32 %v5219, 8
  %v5260 = vmul.u32.u64.compose %v5259, %v5258
  %v5261 = vextract.low.u32 %v5260
  %v5262 = vextract.high.u32 %v5260
  %v5263 = vmul.u32.u64.compose %v5259, %v5254
  %v5264 = vextract.low.u32 %v5263
  %v5265 = vextract.high.u32 %v5263
  %v5266 = vmul.u32 %v5259, %v5250
  %v5267 = vadd.s32 %v5262, %v5264
  %vm5268 = vc.u32 %v5262, %v5264
  %v5269 = vadd.s32 %v5265, 1
  %v5270 = vsel %vm5268, %v5269, %v5265
  %v5271 = vadd.s32 %v5266, %v5270
  %v5272 = vadd.s32 %v5271, 536870912
  %v5273 = vshrl.u32 %v5272, 30
  %v5274 = vshll.u32 %v5273, 30
  %v5275 = vsub.s32 %v5271, %v5274
  %vm5276 = vcmp.lt.s32.totalorder %v5275, 0
  %v5277 = vsub.s32 0, %v5275
  %v5278 = vsel %vm5276, %v5277, %v5275
  %v5279 = vclz %v5278
  %v5280 = vsub.s32 %v5279, 2
  %vm5281 = vcmp.gt.s32.totalorder 0, %v5280
  %v5282 = vsel %vm5281, 0, %v5280
  %v5283 = vsub.s32 32, %v5282
  %v5284 = vshll.u32 %v5275, %v5282
  %v5285 = vshrl.u32 %v5267, %v5283
  %v5286 = vor.u32 %v5284, %v5285
  %v5287 = vsub.s32 4294967266, %v5282
  %v5288 = vadd.s32 %v5287, 127
  %v5289 = vshll.u32 %v5288, 23
  %v5290 = vor.u32 4788187, %v5289
  %v5291 = vand.u32 2147483647, %v5290
  %v5293 = vcvt.s32.f32 %v5286
  %v5294 = vmul.f32 %v5293, %v5291
  %v5295 = vxor.u32 %v5294, 2147483648
  %v5296 = vsel %vm5213, %v5295, %v5294
  %v5297 = vsub.s32 4, %v5273
  %v5298 = vsel %vm5213, %v5297, %v5273
  %v5299 = vsel %vm5212, %v831, %v5296
  %v5300 = vsel %vm5212, 0, %v5298
  %v5301 = vcosq.f32.pop %v5299
  %v5302 = vsinq.f32.pop %v5299
  %vm5303 = vweird.f32 %v831
  %v5304 = vand.u32 %v5300, 3
  %vm5305 = vcmp.lt.s32.totalorder %v5304, 2
  %vm5306 = vcmp.eq.s32.totalorder %v5304, 0
  %v5307 = vxor.u32 %v5302, 2147483648
  %v5308 = vsel %vm5306, %v5301, %v5307
  %vm5309 = vcmp.eq.s32.totalorder %v5304, 2
  %v5310 = vxor.u32 %v5301, 2147483648
  %v5311 = vsel %vm5309, %v5310, %v5302
  %v5312 = vsel %vm5305, %v5308, %v5311
  %v5313 = vsel %vm5303, nan, %v5312
  %v5314 = vand.u32 2147483647, %v832
  %vm5315 = vcmp.le.f32.partialorder %v5314, 0.7853982
  %vm5316 = vcmp.lt.s32.totalorder %v832, 0
  %v5317 = vand.u32 %v832, 2139095040
  %v5318 = vshrl.u32 %v5317, 23
  %v5319 = vsub.s32 %v5318, 127
  %v5320 = vand.u32 2147483647, %v832
  %v5321 = vand.u32 %v5320, 8388607
  %v5322 = vor.u32 %v5321, 8388608
  %v5323 = vsub.s32 0, %v5322
  %v5324 = vadd.s32 %v5319, 1
  %vm5325 = vcmp.gt.s32.totalorder %v5324, 0
  %v5326 = vsel %vm5325, %v5324, 0
  %v5327 = vshrl.u32 %v5326, 5
  %v5328 = vand.u32 %v5326, 31
  %v5329 = vsub.s32 32, %v5328
  %v5330 = vshrl.u32 683565275, %v5329
  %v5331 = vshll.u32 683565275, %v5328
  %v5332 = vshrl.u32 2475754826, %v5329
  %v5333 = vor.u32 %v5331, %v5332
  %v5334 = vshll.u32 2475754826, %v5328
  %v5335 = vshrl.u32 2131351028, %v5329
  %v5336 = vor.u32 %v5334, %v5335
  %v5337 = vshll.u32 2131351028, %v5328
  %v5338 = vshrl.u32 2102212464, %v5329
  %v5339 = vor.u32 %v5337, %v5338
  %v5340 = vshll.u32 2102212464, %v5328
  %v5341 = vshrl.u32 920167782, %v5329
  %v5342 = vor.u32 %v5340, %v5341
  %v5343 = vshll.u32 920167782, %v5328
  %v5344 = vshrl.u32 1326507024, %v5329
  %v5345 = vor.u32 %v5343, %v5344
  %vm5346 = vcmp.lt.s32.totalorder %v5327, 1
  %vm5347 = vcmp.lt.s32.totalorder %v5327, 2
  %vm5348 = vcmp.lt.s32.totalorder %v5327, 3
  %vm5349 = vcmp.lt.s32.totalorder %v5327, 4
  %v5350 = vsel %vm5346, %v5330, %v5333
  %v5351 = vsel %vm5349, %v5339, 2102212464
  %v5352 = vsel %vm5348, %v5336, %v5351
  %v5353 = vsel %vm5347, %v5350, %v5352
  %v5354 = vsel %vm5346, %v5333, %v5336
  %v5355 = vsel %vm5349, %v5342, 920167782
  %v5356 = vsel %vm5348, %v5339, %v5355
  %v5357 = vsel %vm5347, %v5354, %v5356
  %v5358 = vsel %vm5346, %v5336, %v5339
  %v5359 = vsel %vm5349, %v5345, 1326507024
  %v5360 = vsel %vm5348, %v5342, %v5359
  %v5361 = vsel %vm5347, %v5358, %v5360
  %v5362 = vshll.u32 %v5322, 8
  %v5363 = vmul.u32.u64.compose %v5362, %v5361
  %v5364 = vextract.low.u32 %v5363
  %v5365 = vextract.high.u32 %v5363
  %v5366 = vmul.u32.u64.compose %v5362, %v5357
  %v5367 = vextract.low.u32 %v5366
  %v5368 = vextract.high.u32 %v5366
  %v5369 = vmul.u32 %v5362, %v5353
  %v5370 = vadd.s32 %v5365, %v5367
  %vm5371 = vc.u32 %v5365, %v5367
  %v5372 = vadd.s32 %v5368, 1
  %v5373 = vsel %vm5371, %v5372, %v5368
  %v5374 = vadd.s32 %v5369, %v5373
  %v5375 = vadd.s32 %v5374, 536870912
  %v5376 = vshrl.u32 %v5375, 30
  %v5377 = vshll.u32 %v5376, 30
  %v5378 = vsub.s32 %v5374, %v5377
  %vm5379 = vcmp.lt.s32.totalorder %v5378, 0
  %v5380 = vsub.s32 0, %v5378
  %v5381 = vsel %vm5379, %v5380, %v5378
  %v5382 = vclz %v5381
  %v5383 = vsub.s32 %v5382, 2
  %vm5384 = vcmp.gt.s32.totalorder 0, %v5383
  %v5385 = vsel %vm5384, 0, %v5383
  %v5386 = vsub.s32 32, %v5385
  %v5387 = vshll.u32 %v5378, %v5385
  %v5388 = vshrl.u32 %v5370, %v5386
  %v5389 = vor.u32 %v5387, %v5388
  %v5390 = vsub.s32 4294967266, %v5385
  %v5391 = vadd.s32 %v5390, 127
  %v5392 = vshll.u32 %v5391, 23
  %v5393 = vor.u32 4788187, %v5392
  %v5394 = vand.u32 2147483647, %v5393
  %v5396 = vcvt.s32.f32 %v5389
  %v5397 = vmul.f32 %v5396, %v5394
  %v5398 = vxor.u32 %v5397, 2147483648
  %v5399 = vsel %vm5316, %v5398, %v5397
  %v5400 = vsub.s32 4, %v5376
  %v5401 = vsel %vm5316, %v5400, %v5376
  %v5402 = vsel %vm5315, %v832, %v5399
  %v5403 = vsel %vm5315, 0, %v5401
  %v5404 = vcosq.f32.pop %v5402
  %v5405 = vsinq.f32.pop %v5402
  %vm5406 = vweird.f32 %v832
  %v5407 = vand.u32 %v5403, 3
  %vm5408 = vcmp.lt.s32.totalorder %v5407, 2
  %vm5409 = vcmp.eq.s32.totalorder %v5407, 0
  %v5410 = vxor.u32 %v5405, 2147483648
  %v5411 = vsel %vm5409, %v5404, %v5410
  %vm5412 = vcmp.eq.s32.totalorder %v5407, 2
  %v5413 = vxor.u32 %v5404, 2147483648
  %v5414 = vsel %vm5412, %v5413, %v5405
  %v5415 = vsel %vm5408, %v5411, %v5414
  %v5416 = vsel %vm5406, nan, %v5415
  %v5417 = vand.u32 2147483647, %v833
  %vm5418 = vcmp.le.f32.partialorder %v5417, 0.7853982
  %vm5419 = vcmp.lt.s32.totalorder %v833, 0
  %v5420 = vand.u32 %v833, 2139095040
  %v5421 = vshrl.u32 %v5420, 23
  %v5422 = vsub.s32 %v5421, 127
  %v5423 = vand.u32 2147483647, %v833
  %v5424 = vand.u32 %v5423, 8388607
  %v5425 = vor.u32 %v5424, 8388608
  %v5426 = vsub.s32 0, %v5425
  %v5427 = vadd.s32 %v5422, 1
  %vm5428 = vcmp.gt.s32.totalorder %v5427, 0
  %v5429 = vsel %vm5428, %v5427, 0
  %v5430 = vshrl.u32 %v5429, 5
  %v5431 = vand.u32 %v5429, 31
  %v5432 = vsub.s32 32, %v5431
  %v5433 = vshrl.u32 683565275, %v5432
  %v5434 = vshll.u32 683565275, %v5431
  %v5435 = vshrl.u32 2475754826, %v5432
  %v5436 = vor.u32 %v5434, %v5435
  %v5437 = vshll.u32 2475754826, %v5431
  %v5438 = vshrl.u32 2131351028, %v5432
  %v5439 = vor.u32 %v5437, %v5438
  %v5440 = vshll.u32 2131351028, %v5431
  %v5441 = vshrl.u32 2102212464, %v5432
  %v5442 = vor.u32 %v5440, %v5441
  %v5443 = vshll.u32 2102212464, %v5431
  %v5444 = vshrl.u32 920167782, %v5432
  %v5445 = vor.u32 %v5443, %v5444
  %v5446 = vshll.u32 920167782, %v5431
  %v5447 = vshrl.u32 1326507024, %v5432
  %v5448 = vor.u32 %v5446, %v5447
  %vm5449 = vcmp.lt.s32.totalorder %v5430, 1
  %vm5450 = vcmp.lt.s32.totalorder %v5430, 2
  %vm5451 = vcmp.lt.s32.totalorder %v5430, 3
  %vm5452 = vcmp.lt.s32.totalorder %v5430, 4
  %v5453 = vsel %vm5449, %v5433, %v5436
  %v5454 = vsel %vm5452, %v5442, 2102212464
  %v5455 = vsel %vm5451, %v5439, %v5454
  %v5456 = vsel %vm5450, %v5453, %v5455
  %v5457 = vsel %vm5449, %v5436, %v5439
  %v5458 = vsel %vm5452, %v5445, 920167782
  %v5459 = vsel %vm5451, %v5442, %v5458
  %v5460 = vsel %vm5450, %v5457, %v5459
  %v5461 = vsel %vm5449, %v5439, %v5442
  %v5462 = vsel %vm5452, %v5448, 1326507024
  %v5463 = vsel %vm5451, %v5445, %v5462
  %v5464 = vsel %vm5450, %v5461, %v5463
  %v5465 = vshll.u32 %v5425, 8
  %v5466 = vmul.u32.u64.compose %v5465, %v5464
  %v5467 = vextract.low.u32 %v5466
  %v5468 = vextract.high.u32 %v5466
  %v5469 = vmul.u32.u64.compose %v5465, %v5460
  %v5470 = vextract.low.u32 %v5469
  %v5471 = vextract.high.u32 %v5469
  %v5472 = vmul.u32 %v5465, %v5456
  %v5473 = vadd.s32 %v5468, %v5470
  %vm5474 = vc.u32 %v5468, %v5470
  %v5475 = vadd.s32 %v5471, 1
  %v5476 = vsel %vm5474, %v5475, %v5471
  %v5477 = vadd.s32 %v5472, %v5476
  %v5478 = vadd.s32 %v5477, 536870912
  %v5479 = vshrl.u32 %v5478, 30
  %v5480 = vshll.u32 %v5479, 30
  %v5481 = vsub.s32 %v5477, %v5480
  %vm5482 = vcmp.lt.s32.totalorder %v5481, 0
  %v5483 = vsub.s32 0, %v5481
  %v5484 = vsel %vm5482, %v5483, %v5481
  %v5485 = vclz %v5484
  %v5486 = vsub.s32 %v5485, 2
  %vm5487 = vcmp.gt.s32.totalorder 0, %v5486
  %v5488 = vsel %vm5487, 0, %v5486
  %v5489 = vsub.s32 32, %v5488
  %v5490 = vshll.u32 %v5481, %v5488
  %v5491 = vshrl.u32 %v5473, %v5489
  %v5492 = vor.u32 %v5490, %v5491
  %v5493 = vsub.s32 4294967266, %v5488
  %v5494 = vadd.s32 %v5493, 127
  %v5495 = vshll.u32 %v5494, 23
  %v5496 = vor.u32 4788187, %v5495
  %v5497 = vand.u32 2147483647, %v5496
  %v5499 = vcvt.s32.f32 %v5492
  %v5500 = vmul.f32 %v5499, %v5497
  %v5501 = vxor.u32 %v5500, 2147483648
  %v5502 = vsel %vm5419, %v5501, %v5500
  %v5503 = vsub.s32 4, %v5479
  %v5504 = vsel %vm5419, %v5503, %v5479
  %v5505 = vsel %vm5418, %v833, %v5502
  %v5506 = vsel %vm5418, 0, %v5504
  %v5507 = vcosq.f32.pop %v5505
  %v5508 = vsinq.f32.pop %v5505
  %vm5509 = vweird.f32 %v833
  %v5510 = vand.u32 %v5506, 3
  %vm5511 = vcmp.lt.s32.totalorder %v5510, 2
  %vm5512 = vcmp.eq.s32.totalorder %v5510, 0
  %v5513 = vxor.u32 %v5508, 2147483648
  %v5514 = vsel %vm5512, %v5507, %v5513
  %vm5515 = vcmp.eq.s32.totalorder %v5510, 2
  %v5516 = vxor.u32 %v5507, 2147483648
  %v5517 = vsel %vm5515, %v5516, %v5508
  %v5518 = vsel %vm5511, %v5514, %v5517
  %v5519 = vsel %vm5509, nan, %v5518
  %v5520 = vand.u32 2147483647, %v834
  %vm5521 = vcmp.le.f32.partialorder %v5520, 0.7853982
  %vm5522 = vcmp.lt.s32.totalorder %v834, 0
  %v5523 = vand.u32 %v834, 2139095040
  %v5524 = vshrl.u32 %v5523, 23
  %v5525 = vsub.s32 %v5524, 127
  %v5526 = vand.u32 2147483647, %v834
  %v5527 = vand.u32 %v5526, 8388607
  %v5528 = vor.u32 %v5527, 8388608
  %v5529 = vsub.s32 0, %v5528
  %v5530 = vadd.s32 %v5525, 1
  %vm5531 = vcmp.gt.s32.totalorder %v5530, 0
  %v5532 = vsel %vm5531, %v5530, 0
  %v5533 = vshrl.u32 %v5532, 5
  %v5534 = vand.u32 %v5532, 31
  %v5535 = vsub.s32 32, %v5534
  %v5536 = vshrl.u32 683565275, %v5535
  %v5537 = vshll.u32 683565275, %v5534
  %v5538 = vshrl.u32 2475754826, %v5535
  %v5539 = vor.u32 %v5537, %v5538
  %v5540 = vshll.u32 2475754826, %v5534
  %v5541 = vshrl.u32 2131351028, %v5535
  %v5542 = vor.u32 %v5540, %v5541
  %v5543 = vshll.u32 2131351028, %v5534
  %v5544 = vshrl.u32 2102212464, %v5535
  %v5545 = vor.u32 %v5543, %v5544
  %v5546 = vshll.u32 2102212464, %v5534
  %v5547 = vshrl.u32 920167782, %v5535
  %v5548 = vor.u32 %v5546, %v5547
  %v5549 = vshll.u32 920167782, %v5534
  %v5550 = vshrl.u32 1326507024, %v5535
  %v5551 = vor.u32 %v5549, %v5550
  %vm5552 = vcmp.lt.s32.totalorder %v5533, 1
  %vm5553 = vcmp.lt.s32.totalorder %v5533, 2
  %vm5554 = vcmp.lt.s32.totalorder %v5533, 3
  %vm5555 = vcmp.lt.s32.totalorder %v5533, 4
  %v5556 = vsel %vm5552, %v5536, %v5539
  %v5557 = vsel %vm5555, %v5545, 2102212464
  %v5558 = vsel %vm5554, %v5542, %v5557
  %v5559 = vsel %vm5553, %v5556, %v5558
  %v5560 = vsel %vm5552, %v5539, %v5542
  %v5561 = vsel %vm5555, %v5548, 920167782
  %v5562 = vsel %vm5554, %v5545, %v5561
  %v5563 = vsel %vm5553, %v5560, %v5562
  %v5564 = vsel %vm5552, %v5542, %v5545
  %v5565 = vsel %vm5555, %v5551, 1326507024
  %v5566 = vsel %vm5554, %v5548, %v5565
  %v5567 = vsel %vm5553, %v5564, %v5566
  %v5568 = vshll.u32 %v5528, 8
  %v5569 = vmul.u32.u64.compose %v5568, %v5567
  %v5570 = vextract.low.u32 %v5569
  %v5571 = vextract.high.u32 %v5569
  %v5572 = vmul.u32.u64.compose %v5568, %v5563
  %v5573 = vextract.low.u32 %v5572
  %v5574 = vextract.high.u32 %v5572
  %v5575 = vmul.u32 %v5568, %v5559
  %v5576 = vadd.s32 %v5571, %v5573
  %vm5577 = vc.u32 %v5571, %v5573
  %v5578 = vadd.s32 %v5574, 1
  %v5579 = vsel %vm5577, %v5578, %v5574
  %v5580 = vadd.s32 %v5575, %v5579
  %v5581 = vadd.s32 %v5580, 536870912
  %v5582 = vshrl.u32 %v5581, 30
  %v5583 = vshll.u32 %v5582, 30
  %v5584 = vsub.s32 %v5580, %v5583
  %vm5585 = vcmp.lt.s32.totalorder %v5584, 0
  %v5586 = vsub.s32 0, %v5584
  %v5587 = vsel %vm5585, %v5586, %v5584
  %v5588 = vclz %v5587
  %v5589 = vsub.s32 %v5588, 2
  %vm5590 = vcmp.gt.s32.totalorder 0, %v5589
  %v5591 = vsel %vm5590, 0, %v5589
  %v5592 = vsub.s32 32, %v5591
  %v5593 = vshll.u32 %v5584, %v5591
  %v5594 = vshrl.u32 %v5576, %v5592
  %v5595 = vor.u32 %v5593, %v5594
  %v5596 = vsub.s32 4294967266, %v5591
  %v5597 = vadd.s32 %v5596, 127
  %v5598 = vshll.u32 %v5597, 23
  %v5599 = vor.u32 4788187, %v5598
  %v5600 = vand.u32 2147483647, %v5599
  %v5602 = vcvt.s32.f32 %v5595
  %v5603 = vmul.f32 %v5602, %v5600
  %v5604 = vxor.u32 %v5603, 2147483648
  %v5605 = vsel %vm5522, %v5604, %v5603
  %v5606 = vsub.s32 4, %v5582
  %v5607 = vsel %vm5522, %v5606, %v5582
  %v5608 = vsel %vm5521, %v834, %v5605
  %v5609 = vsel %vm5521, 0, %v5607
  %v5610 = vcosq.f32.pop %v5608
  %v5611 = vsinq.f32.pop %v5608
  %vm5612 = vweird.f32 %v834
  %v5613 = vand.u32 %v5609, 3
  %vm5614 = vcmp.lt.s32.totalorder %v5613, 2
  %vm5615 = vcmp.eq.s32.totalorder %v5613, 0
  %v5616 = vxor.u32 %v5611, 2147483648
  %v5617 = vsel %vm5615, %v5610, %v5616
  %vm5618 = vcmp.eq.s32.totalorder %v5613, 2
  %v5619 = vxor.u32 %v5610, 2147483648
  %v5620 = vsel %vm5618, %v5619, %v5611
  %v5621 = vsel %vm5614, %v5617, %v5620
  %v5622 = vsel %vm5612, nan, %v5621
  %v5623 = vand.u32 2147483647, %v835
  %vm5624 = vcmp.le.f32.partialorder %v5623, 0.7853982
  %vm5625 = vcmp.lt.s32.totalorder %v835, 0
  %v5626 = vand.u32 %v835, 2139095040
  %v5627 = vshrl.u32 %v5626, 23
  %v5628 = vsub.s32 %v5627, 127
  %v5629 = vand.u32 2147483647, %v835
  %v5630 = vand.u32 %v5629, 8388607
  %v5631 = vor.u32 %v5630, 8388608
  %v5632 = vsub.s32 0, %v5631
  %v5633 = vadd.s32 %v5628, 1
  %vm5634 = vcmp.gt.s32.totalorder %v5633, 0
  %v5635 = vsel %vm5634, %v5633, 0
  %v5636 = vshrl.u32 %v5635, 5
  %v5637 = vand.u32 %v5635, 31
  %v5638 = vsub.s32 32, %v5637
  %v5639 = vshrl.u32 683565275, %v5638
  %v5640 = vshll.u32 683565275, %v5637
  %v5641 = vshrl.u32 2475754826, %v5638
  %v5642 = vor.u32 %v5640, %v5641
  %v5643 = vshll.u32 2475754826, %v5637
  %v5644 = vshrl.u32 2131351028, %v5638
  %v5645 = vor.u32 %v5643, %v5644
  %v5646 = vshll.u32 2131351028, %v5637
  %v5647 = vshrl.u32 2102212464, %v5638
  %v5648 = vor.u32 %v5646, %v5647
  %v5649 = vshll.u32 2102212464, %v5637
  %v5650 = vshrl.u32 920167782, %v5638
  %v5651 = vor.u32 %v5649, %v5650
  %v5652 = vshll.u32 920167782, %v5637
  %v5653 = vshrl.u32 1326507024, %v5638
  %v5654 = vor.u32 %v5652, %v5653
  %vm5655 = vcmp.lt.s32.totalorder %v5636, 1
  %vm5656 = vcmp.lt.s32.totalorder %v5636, 2
  %vm5657 = vcmp.lt.s32.totalorder %v5636, 3
  %vm5658 = vcmp.lt.s32.totalorder %v5636, 4
  %v5659 = vsel %vm5655, %v5639, %v5642
  %v5660 = vsel %vm5658, %v5648, 2102212464
  %v5661 = vsel %vm5657, %v5645, %v5660
  %v5662 = vsel %vm5656, %v5659, %v5661
  %v5663 = vsel %vm5655, %v5642, %v5645
  %v5664 = vsel %vm5658, %v5651, 920167782
  %v5665 = vsel %vm5657, %v5648, %v5664
  %v5666 = vsel %vm5656, %v5663, %v5665
  %v5667 = vsel %vm5655, %v5645, %v5648
  %v5668 = vsel %vm5658, %v5654, 1326507024
  %v5669 = vsel %vm5657, %v5651, %v5668
  %v5670 = vsel %vm5656, %v5667, %v5669
  %v5671 = vshll.u32 %v5631, 8
  %v5672 = vmul.u32.u64.compose %v5671, %v5670
  %v5673 = vextract.low.u32 %v5672
  %v5674 = vextract.high.u32 %v5672
  %v5675 = vmul.u32.u64.compose %v5671, %v5666
  %v5676 = vextract.low.u32 %v5675
  %v5677 = vextract.high.u32 %v5675
  %v5678 = vmul.u32 %v5671, %v5662
  %v5679 = vadd.s32 %v5674, %v5676
  %vm5680 = vc.u32 %v5674, %v5676
  %v5681 = vadd.s32 %v5677, 1
  %v5682 = vsel %vm5680, %v5681, %v5677
  %v5683 = vadd.s32 %v5678, %v5682
  %v5684 = vadd.s32 %v5683, 536870912
  %v5685 = vshrl.u32 %v5684, 30
  %v5686 = vshll.u32 %v5685, 30
  %v5687 = vsub.s32 %v5683, %v5686
  %vm5688 = vcmp.lt.s32.totalorder %v5687, 0
  %v5689 = vsub.s32 0, %v5687
  %v5690 = vsel %vm5688, %v5689, %v5687
  %v5691 = vclz %v5690
  %v5692 = vsub.s32 %v5691, 2
  %vm5693 = vcmp.gt.s32.totalorder 0, %v5692
  %v5694 = vsel %vm5693, 0, %v5692
  %v5695 = vsub.s32 32, %v5694
  %v5696 = vshll.u32 %v5687, %v5694
  %v5697 = vshrl.u32 %v5679, %v5695
  %v5698 = vor.u32 %v5696, %v5697
  %v5699 = vsub.s32 4294967266, %v5694
  %v5700 = vadd.s32 %v5699, 127
  %v5701 = vshll.u32 %v5700, 23
  %v5702 = vor.u32 4788187, %v5701
  %v5703 = vand.u32 2147483647, %v5702
  %v5705 = vcvt.s32.f32 %v5698
  %v5706 = vmul.f32 %v5705, %v5703
  %v5707 = vxor.u32 %v5706, 2147483648
  %v5708 = vsel %vm5625, %v5707, %v5706
  %v5709 = vsub.s32 4, %v5685
  %v5710 = vsel %vm5625, %v5709, %v5685
  %v5711 = vsel %vm5624, %v835, %v5708
  %v5712 = vsel %vm5624, 0, %v5710
  %v5713 = vcosq.f32.pop %v5711
  %v5714 = vsinq.f32.pop %v5711
  %vm5715 = vweird.f32 %v835
  %v5716 = vand.u32 %v5712, 3
  %vm5717 = vcmp.lt.s32.totalorder %v5716, 2
  %vm5718 = vcmp.eq.s32.totalorder %v5716, 0
  %v5719 = vxor.u32 %v5714, 2147483648
  %v5720 = vsel %vm5718, %v5713, %v5719
  %vm5721 = vcmp.eq.s32.totalorder %v5716, 2
  %v5722 = vxor.u32 %v5713, 2147483648
  %v5723 = vsel %vm5721, %v5722, %v5714
  %v5724 = vsel %vm5717, %v5720, %v5723
  %v5725 = vsel %vm5715, nan, %v5724
  %v5726 = vand.u32 2147483647, %v836
  %vm5727 = vcmp.le.f32.partialorder %v5726, 0.7853982
  %vm5728 = vcmp.lt.s32.totalorder %v836, 0
  %v5729 = vand.u32 %v836, 2139095040
  %v5730 = vshrl.u32 %v5729, 23
  %v5731 = vsub.s32 %v5730, 127
  %v5732 = vand.u32 2147483647, %v836
  %v5733 = vand.u32 %v5732, 8388607
  %v5734 = vor.u32 %v5733, 8388608
  %v5735 = vsub.s32 0, %v5734
  %v5736 = vadd.s32 %v5731, 1
  %vm5737 = vcmp.gt.s32.totalorder %v5736, 0
  %v5738 = vsel %vm5737, %v5736, 0
  %v5739 = vshrl.u32 %v5738, 5
  %v5740 = vand.u32 %v5738, 31
  %v5741 = vsub.s32 32, %v5740
  %v5742 = vshrl.u32 683565275, %v5741
  %v5743 = vshll.u32 683565275, %v5740
  %v5744 = vshrl.u32 2475754826, %v5741
  %v5745 = vor.u32 %v5743, %v5744
  %v5746 = vshll.u32 2475754826, %v5740
  %v5747 = vshrl.u32 2131351028, %v5741
  %v5748 = vor.u32 %v5746, %v5747
  %v5749 = vshll.u32 2131351028, %v5740
  %v5750 = vshrl.u32 2102212464, %v5741
  %v5751 = vor.u32 %v5749, %v5750
  %v5752 = vshll.u32 2102212464, %v5740
  %v5753 = vshrl.u32 920167782, %v5741
  %v5754 = vor.u32 %v5752, %v5753
  %v5755 = vshll.u32 920167782, %v5740
  %v5756 = vshrl.u32 1326507024, %v5741
  %v5757 = vor.u32 %v5755, %v5756
  %vm5758 = vcmp.lt.s32.totalorder %v5739, 1
  %vm5759 = vcmp.lt.s32.totalorder %v5739, 2
  %vm5760 = vcmp.lt.s32.totalorder %v5739, 3
  %vm5761 = vcmp.lt.s32.totalorder %v5739, 4
  %v5762 = vsel %vm5758, %v5742, %v5745
  %v5763 = vsel %vm5761, %v5751, 2102212464
  %v5764 = vsel %vm5760, %v5748, %v5763
  %v5765 = vsel %vm5759, %v5762, %v5764
  %v5766 = vsel %vm5758, %v5745, %v5748
  %v5767 = vsel %vm5761, %v5754, 920167782
  %v5768 = vsel %vm5760, %v5751, %v5767
  %v5769 = vsel %vm5759, %v5766, %v5768
  %v5770 = vsel %vm5758, %v5748, %v5751
  %v5771 = vsel %vm5761, %v5757, 1326507024
  %v5772 = vsel %vm5760, %v5754, %v5771
  %v5773 = vsel %vm5759, %v5770, %v5772
  %v5774 = vshll.u32 %v5734, 8
  %v5775 = vmul.u32.u64.compose %v5774, %v5773
  %v5776 = vextract.low.u32 %v5775
  %v5777 = vextract.high.u32 %v5775
  %v5778 = vmul.u32.u64.compose %v5774, %v5769
  %v5779 = vextract.low.u32 %v5778
  %v5780 = vextract.high.u32 %v5778
  %v5781 = vmul.u32 %v5774, %v5765
  %v5782 = vadd.s32 %v5777, %v5779
  %vm5783 = vc.u32 %v5777, %v5779
  %v5784 = vadd.s32 %v5780, 1
  %v5785 = vsel %vm5783, %v5784, %v5780
  %v5786 = vadd.s32 %v5781, %v5785
  %v5787 = vadd.s32 %v5786, 536870912
  %v5788 = vshrl.u32 %v5787, 30
  %v5789 = vshll.u32 %v5788, 30
  %v5790 = vsub.s32 %v5786, %v5789
  %vm5791 = vcmp.lt.s32.totalorder %v5790, 0
  %v5792 = vsub.s32 0, %v5790
  %v5793 = vsel %vm5791, %v5792, %v5790
  %v5794 = vclz %v5793
  %v5795 = vsub.s32 %v5794, 2
  %vm5796 = vcmp.gt.s32.totalorder 0, %v5795
  %v5797 = vsel %vm5796, 0, %v5795
  %v5798 = vsub.s32 32, %v5797
  %v5799 = vshll.u32 %v5790, %v5797
  %v5800 = vshrl.u32 %v5782, %v5798
  %v5801 = vor.u32 %v5799, %v5800
  %v5802 = vsub.s32 4294967266, %v5797
  %v5803 = vadd.s32 %v5802, 127
  %v5804 = vshll.u32 %v5803, 23
  %v5805 = vor.u32 4788187, %v5804
  %v5806 = vand.u32 2147483647, %v5805
  %v5808 = vcvt.s32.f32 %v5801
  %v5809 = vmul.f32 %v5808, %v5806
  %v5810 = vxor.u32 %v5809, 2147483648
  %v5811 = vsel %vm5728, %v5810, %v5809
  %v5812 = vsub.s32 4, %v5788
  %v5813 = vsel %vm5728, %v5812, %v5788
  %v5814 = vsel %vm5727, %v836, %v5811
  %v5815 = vsel %vm5727, 0, %v5813
  %v5816 = vcosq.f32.pop %v5814
  %v5817 = vsinq.f32.pop %v5814
  %vm5818 = vweird.f32 %v836
  %v5819 = vand.u32 %v5815, 3
  %vm5820 = vcmp.lt.s32.totalorder %v5819, 2
  %vm5821 = vcmp.eq.s32.totalorder %v5819, 0
  %v5822 = vxor.u32 %v5817, 2147483648
  %v5823 = vsel %vm5821, %v5816, %v5822
  %vm5824 = vcmp.eq.s32.totalorder %v5819, 2
  %v5825 = vxor.u32 %v5816, 2147483648
  %v5826 = vsel %vm5824, %v5825, %v5817
  %v5827 = vsel %vm5820, %v5823, %v5826
  %v5828 = vsel %vm5818, nan, %v5827
  %v5829 = vand.u32 2147483647, %v837
  %vm5830 = vcmp.le.f32.partialorder %v5829, 0.7853982
  %vm5831 = vcmp.lt.s32.totalorder %v837, 0
  %v5832 = vand.u32 %v837, 2139095040
  %v5833 = vshrl.u32 %v5832, 23
  %v5834 = vsub.s32 %v5833, 127
  %v5835 = vand.u32 2147483647, %v837
  %v5836 = vand.u32 %v5835, 8388607
  %v5837 = vor.u32 %v5836, 8388608
  %v5838 = vsub.s32 0, %v5837
  %v5839 = vadd.s32 %v5834, 1
  %vm5840 = vcmp.gt.s32.totalorder %v5839, 0
  %v5841 = vsel %vm5840, %v5839, 0
  %v5842 = vshrl.u32 %v5841, 5
  %v5843 = vand.u32 %v5841, 31
  %v5844 = vsub.s32 32, %v5843
  %v5845 = vshrl.u32 683565275, %v5844
  %v5846 = vshll.u32 683565275, %v5843
  %v5847 = vshrl.u32 2475754826, %v5844
  %v5848 = vor.u32 %v5846, %v5847
  %v5849 = vshll.u32 2475754826, %v5843
  %v5850 = vshrl.u32 2131351028, %v5844
  %v5851 = vor.u32 %v5849, %v5850
  %v5852 = vshll.u32 2131351028, %v5843
  %v5853 = vshrl.u32 2102212464, %v5844
  %v5854 = vor.u32 %v5852, %v5853
  %v5855 = vshll.u32 2102212464, %v5843
  %v5856 = vshrl.u32 920167782, %v5844
  %v5857 = vor.u32 %v5855, %v5856
  %v5858 = vshll.u32 920167782, %v5843
  %v5859 = vshrl.u32 1326507024, %v5844
  %v5860 = vor.u32 %v5858, %v5859
  %vm5861 = vcmp.lt.s32.totalorder %v5842, 1
  %vm5862 = vcmp.lt.s32.totalorder %v5842, 2
  %vm5863 = vcmp.lt.s32.totalorder %v5842, 3
  %vm5864 = vcmp.lt.s32.totalorder %v5842, 4
  %v5865 = vsel %vm5861, %v5845, %v5848
  %v5866 = vsel %vm5864, %v5854, 2102212464
  %v5867 = vsel %vm5863, %v5851, %v5866
  %v5868 = vsel %vm5862, %v5865, %v5867
  %v5869 = vsel %vm5861, %v5848, %v5851
  %v5870 = vsel %vm5864, %v5857, 920167782
  %v5871 = vsel %vm5863, %v5854, %v5870
  %v5872 = vsel %vm5862, %v5869, %v5871
  %v5873 = vsel %vm5861, %v5851, %v5854
  %v5874 = vsel %vm5864, %v5860, 1326507024
  %v5875 = vsel %vm5863, %v5857, %v5874
  %v5876 = vsel %vm5862, %v5873, %v5875
  %v5877 = vshll.u32 %v5837, 8
  %v5878 = vmul.u32.u64.compose %v5877, %v5876
  %v5879 = vextract.low.u32 %v5878
  %v5880 = vextract.high.u32 %v5878
  %v5881 = vmul.u32.u64.compose %v5877, %v5872
  %v5882 = vextract.low.u32 %v5881
  %v5883 = vextract.high.u32 %v5881
  %v5884 = vmul.u32 %v5877, %v5868
  %v5885 = vadd.s32 %v5880, %v5882
  %vm5886 = vc.u32 %v5880, %v5882
  %v5887 = vadd.s32 %v5883, 1
  %v5888 = vsel %vm5886, %v5887, %v5883
  %v5889 = vadd.s32 %v5884, %v5888
  %v5890 = vadd.s32 %v5889, 536870912
  %v5891 = vshrl.u32 %v5890, 30
  %v5892 = vshll.u32 %v5891, 30
  %v5893 = vsub.s32 %v5889, %v5892
  %vm5894 = vcmp.lt.s32.totalorder %v5893, 0
  %v5895 = vsub.s32 0, %v5893
  %v5896 = vsel %vm5894, %v5895, %v5893
  %v5897 = vclz %v5896
  %v5898 = vsub.s32 %v5897, 2
  %vm5899 = vcmp.gt.s32.totalorder 0, %v5898
  %v5900 = vsel %vm5899, 0, %v5898
  %v5901 = vsub.s32 32, %v5900
  %v5902 = vshll.u32 %v5893, %v5900
  %v5903 = vshrl.u32 %v5885, %v5901
  %v5904 = vor.u32 %v5902, %v5903
  %v5905 = vsub.s32 4294967266, %v5900
  %v5906 = vadd.s32 %v5905, 127
  %v5907 = vshll.u32 %v5906, 23
  %v5908 = vor.u32 4788187, %v5907
  %v5909 = vand.u32 2147483647, %v5908
  %v5911 = vcvt.s32.f32 %v5904
  %v5912 = vmul.f32 %v5911, %v5909
  %v5913 = vxor.u32 %v5912, 2147483648
  %v5914 = vsel %vm5831, %v5913, %v5912
  %v5915 = vsub.s32 4, %v5891
  %v5916 = vsel %vm5831, %v5915, %v5891
  %v5917 = vsel %vm5830, %v837, %v5914
  %v5918 = vsel %vm5830, 0, %v5916
  %v5919 = vcosq.f32.pop %v5917
  %v5920 = vsinq.f32.pop %v5917
  %vm5921 = vweird.f32 %v837
  %v5922 = vand.u32 %v5918, 3
  %vm5923 = vcmp.lt.s32.totalorder %v5922, 2
  %vm5924 = vcmp.eq.s32.totalorder %v5922, 0
  %v5925 = vxor.u32 %v5920, 2147483648
  %v5926 = vsel %vm5924, %v5919, %v5925
  %vm5927 = vcmp.eq.s32.totalorder %v5922, 2
  %v5928 = vxor.u32 %v5919, 2147483648
  %v5929 = vsel %vm5927, %v5928, %v5920
  %v5930 = vsel %vm5923, %v5926, %v5929
  %v5931 = vsel %vm5921, nan, %v5930
  %v5932 = vand.u32 2147483647, %v838
  %vm5933 = vcmp.le.f32.partialorder %v5932, 0.7853982
  %vm5934 = vcmp.lt.s32.totalorder %v838, 0
  %v5935 = vand.u32 %v838, 2139095040
  %v5936 = vshrl.u32 %v5935, 23
  %v5937 = vsub.s32 %v5936, 127
  %v5938 = vand.u32 2147483647, %v838
  %v5939 = vand.u32 %v5938, 8388607
  %v5940 = vor.u32 %v5939, 8388608
  %v5941 = vsub.s32 0, %v5940
  %v5942 = vadd.s32 %v5937, 1
  %vm5943 = vcmp.gt.s32.totalorder %v5942, 0
  %v5944 = vsel %vm5943, %v5942, 0
  %v5945 = vshrl.u32 %v5944, 5
  %v5946 = vand.u32 %v5944, 31
  %v5947 = vsub.s32 32, %v5946
  %v5948 = vshrl.u32 683565275, %v5947
  %v5949 = vshll.u32 683565275, %v5946
  %v5950 = vshrl.u32 2475754826, %v5947
  %v5951 = vor.u32 %v5949, %v5950
  %v5952 = vshll.u32 2475754826, %v5946
  %v5953 = vshrl.u32 2131351028, %v5947
  %v5954 = vor.u32 %v5952, %v5953
  %v5955 = vshll.u32 2131351028, %v5946
  %v5956 = vshrl.u32 2102212464, %v5947
  %v5957 = vor.u32 %v5955, %v5956
  %v5958 = vshll.u32 2102212464, %v5946
  %v5959 = vshrl.u32 920167782, %v5947
  %v5960 = vor.u32 %v5958, %v5959
  %v5961 = vshll.u32 920167782, %v5946
  %v5962 = vshrl.u32 1326507024, %v5947
  %v5963 = vor.u32 %v5961, %v5962
  %vm5964 = vcmp.lt.s32.totalorder %v5945, 1
  %vm5965 = vcmp.lt.s32.totalorder %v5945, 2
  %vm5966 = vcmp.lt.s32.totalorder %v5945, 3
  %vm5967 = vcmp.lt.s32.totalorder %v5945, 4
  %v5968 = vsel %vm5964, %v5948, %v5951
  %v5969 = vsel %vm5967, %v5957, 2102212464
  %v5970 = vsel %vm5966, %v5954, %v5969
  %v5971 = vsel %vm5965, %v5968, %v5970
  %v5972 = vsel %vm5964, %v5951, %v5954
  %v5973 = vsel %vm5967, %v5960, 920167782
  %v5974 = vsel %vm5966, %v5957, %v5973
  %v5975 = vsel %vm5965, %v5972, %v5974
  %v5976 = vsel %vm5964, %v5954, %v5957
  %v5977 = vsel %vm5967, %v5963, 1326507024
  %v5978 = vsel %vm5966, %v5960, %v5977
  %v5979 = vsel %vm5965, %v5976, %v5978
  %v5980 = vshll.u32 %v5940, 8
  %v5981 = vmul.u32.u64.compose %v5980, %v5979
  %v5982 = vextract.low.u32 %v5981
  %v5983 = vextract.high.u32 %v5981
  %v5984 = vmul.u32.u64.compose %v5980, %v5975
  %v5985 = vextract.low.u32 %v5984
  %v5986 = vextract.high.u32 %v5984
  %v5987 = vmul.u32 %v5980, %v5971
  %v5988 = vadd.s32 %v5983, %v5985
  %vm5989 = vc.u32 %v5983, %v5985
  %v5990 = vadd.s32 %v5986, 1
  %v5991 = vsel %vm5989, %v5990, %v5986
  %v5992 = vadd.s32 %v5987, %v5991
  %v5993 = vadd.s32 %v5992, 536870912
  %v5994 = vshrl.u32 %v5993, 30
  %v5995 = vshll.u32 %v5994, 30
  %v5996 = vsub.s32 %v5992, %v5995
  %vm5997 = vcmp.lt.s32.totalorder %v5996, 0
  %v5998 = vsub.s32 0, %v5996
  %v5999 = vsel %vm5997, %v5998, %v5996
  %v6000 = vclz %v5999
  %v6001 = vsub.s32 %v6000, 2
  %vm6002 = vcmp.gt.s32.totalorder 0, %v6001
  %v6003 = vsel %vm6002, 0, %v6001
  %v6004 = vsub.s32 32, %v6003
  %v6005 = vshll.u32 %v5996, %v6003
  %v6006 = vshrl.u32 %v5988, %v6004
  %v6007 = vor.u32 %v6005, %v6006
  %v6008 = vsub.s32 4294967266, %v6003
  %v6009 = vadd.s32 %v6008, 127
  %v6010 = vshll.u32 %v6009, 23
  %v6011 = vor.u32 4788187, %v6010
  %v6012 = vand.u32 2147483647, %v6011
  %v6014 = vcvt.s32.f32 %v6007
  %v6015 = vmul.f32 %v6014, %v6012
  %v6016 = vxor.u32 %v6015, 2147483648
  %v6017 = vsel %vm5934, %v6016, %v6015
  %v6018 = vsub.s32 4, %v5994
  %v6019 = vsel %vm5934, %v6018, %v5994
  %v6020 = vsel %vm5933, %v838, %v6017
  %v6021 = vsel %vm5933, 0, %v6019
  %v6022 = vcosq.f32.pop %v6020
  %v6023 = vsinq.f32.pop %v6020
  %vm6024 = vweird.f32 %v838
  %v6025 = vand.u32 %v6021, 3
  %vm6026 = vcmp.lt.s32.totalorder %v6025, 2
  %vm6027 = vcmp.eq.s32.totalorder %v6025, 0
  %v6028 = vxor.u32 %v6023, 2147483648
  %v6029 = vsel %vm6027, %v6022, %v6028
  %vm6030 = vcmp.eq.s32.totalorder %v6025, 2
  %v6031 = vxor.u32 %v6022, 2147483648
  %v6032 = vsel %vm6030, %v6031, %v6023
  %v6033 = vsel %vm6026, %v6029, %v6032
  %v6034 = vsel %vm6024, nan, %v6033
  %v6035 = vand.u32 2147483647, %v839
  %vm6036 = vcmp.le.f32.partialorder %v6035, 0.7853982
  %vm6037 = vcmp.lt.s32.totalorder %v839, 0
  %v6038 = vand.u32 %v839, 2139095040
  %v6039 = vshrl.u32 %v6038, 23
  %v6040 = vsub.s32 %v6039, 127
  %v6041 = vand.u32 2147483647, %v839
  %v6042 = vand.u32 %v6041, 8388607
  %v6043 = vor.u32 %v6042, 8388608
  %v6044 = vsub.s32 0, %v6043
  %v6045 = vadd.s32 %v6040, 1
  %vm6046 = vcmp.gt.s32.totalorder %v6045, 0
  %v6047 = vsel %vm6046, %v6045, 0
  %v6048 = vshrl.u32 %v6047, 5
  %v6049 = vand.u32 %v6047, 31
  %v6050 = vsub.s32 32, %v6049
  %v6051 = vshrl.u32 683565275, %v6050
  %v6052 = vshll.u32 683565275, %v6049
  %v6053 = vshrl.u32 2475754826, %v6050
  %v6054 = vor.u32 %v6052, %v6053
  %v6055 = vshll.u32 2475754826, %v6049
  %v6056 = vshrl.u32 2131351028, %v6050
  %v6057 = vor.u32 %v6055, %v6056
  %v6058 = vshll.u32 2131351028, %v6049
  %v6059 = vshrl.u32 2102212464, %v6050
  %v6060 = vor.u32 %v6058, %v6059
  %v6061 = vshll.u32 2102212464, %v6049
  %v6062 = vshrl.u32 920167782, %v6050
  %v6063 = vor.u32 %v6061, %v6062
  %v6064 = vshll.u32 920167782, %v6049
  %v6065 = vshrl.u32 1326507024, %v6050
  %v6066 = vor.u32 %v6064, %v6065
  %vm6067 = vcmp.lt.s32.totalorder %v6048, 1
  %vm6068 = vcmp.lt.s32.totalorder %v6048, 2
  %vm6069 = vcmp.lt.s32.totalorder %v6048, 3
  %vm6070 = vcmp.lt.s32.totalorder %v6048, 4
  %v6071 = vsel %vm6067, %v6051, %v6054
  %v6072 = vsel %vm6070, %v6060, 2102212464
  %v6073 = vsel %vm6069, %v6057, %v6072
  %v6074 = vsel %vm6068, %v6071, %v6073
  %v6075 = vsel %vm6067, %v6054, %v6057
  %v6076 = vsel %vm6070, %v6063, 920167782
  %v6077 = vsel %vm6069, %v6060, %v6076
  %v6078 = vsel %vm6068, %v6075, %v6077
  %v6079 = vsel %vm6067, %v6057, %v6060
  %v6080 = vsel %vm6070, %v6066, 1326507024
  %v6081 = vsel %vm6069, %v6063, %v6080
  %v6082 = vsel %vm6068, %v6079, %v6081
  %v6083 = vshll.u32 %v6043, 8
  %v6084 = vmul.u32.u64.compose %v6083, %v6082
  %v6085 = vextract.low.u32 %v6084
  %v6086 = vextract.high.u32 %v6084
  %v6087 = vmul.u32.u64.compose %v6083, %v6078
  %v6088 = vextract.low.u32 %v6087
  %v6089 = vextract.high.u32 %v6087
  %v6090 = vmul.u32 %v6083, %v6074
  %v6091 = vadd.s32 %v6086, %v6088
  %vm6092 = vc.u32 %v6086, %v6088
  %v6093 = vadd.s32 %v6089, 1
  %v6094 = vsel %vm6092, %v6093, %v6089
  %v6095 = vadd.s32 %v6090, %v6094
  %v6096 = vadd.s32 %v6095, 536870912
  %v6097 = vshrl.u32 %v6096, 30
  %v6098 = vshll.u32 %v6097, 30
  %v6099 = vsub.s32 %v6095, %v6098
  %vm6100 = vcmp.lt.s32.totalorder %v6099, 0
  %v6101 = vsub.s32 0, %v6099
  %v6102 = vsel %vm6100, %v6101, %v6099
  %v6103 = vclz %v6102
  %v6104 = vsub.s32 %v6103, 2
  %vm6105 = vcmp.gt.s32.totalorder 0, %v6104
  %v6106 = vsel %vm6105, 0, %v6104
  %v6107 = vsub.s32 32, %v6106
  %v6108 = vshll.u32 %v6099, %v6106
  %v6109 = vshrl.u32 %v6091, %v6107
  %v6110 = vor.u32 %v6108, %v6109
  %v6111 = vsub.s32 4294967266, %v6106
  %v6112 = vadd.s32 %v6111, 127
  %v6113 = vshll.u32 %v6112, 23
  %v6114 = vor.u32 4788187, %v6113
  %v6115 = vand.u32 2147483647, %v6114
  %v6117 = vcvt.s32.f32 %v6110
  %v6118 = vmul.f32 %v6117, %v6115
  %v6119 = vxor.u32 %v6118, 2147483648
  %v6120 = vsel %vm6037, %v6119, %v6118
  %v6121 = vsub.s32 4, %v6097
  %v6122 = vsel %vm6037, %v6121, %v6097
  %v6123 = vsel %vm6036, %v839, %v6120
  %v6124 = vsel %vm6036, 0, %v6122
  %v6125 = vcosq.f32.pop %v6123
  %v6126 = vsinq.f32.pop %v6123
  %vm6127 = vweird.f32 %v839
  %v6128 = vand.u32 %v6124, 3
  %vm6129 = vcmp.lt.s32.totalorder %v6128, 2
  %vm6130 = vcmp.eq.s32.totalorder %v6128, 0
  %v6131 = vxor.u32 %v6126, 2147483648
  %v6132 = vsel %vm6130, %v6125, %v6131
  %vm6133 = vcmp.eq.s32.totalorder %v6128, 2
  %v6134 = vxor.u32 %v6125, 2147483648
  %v6135 = vsel %vm6133, %v6134, %v6126
  %v6136 = vsel %vm6129, %v6132, %v6135
  %v6137 = vsel %vm6127, nan, %v6136
  %v6138 = vand.u32 2147483647, %v840
  %vm6139 = vcmp.le.f32.partialorder %v6138, 0.7853982
  %vm6140 = vcmp.lt.s32.totalorder %v840, 0
  %v6141 = vand.u32 %v840, 2139095040
  %v6142 = vshrl.u32 %v6141, 23
  %v6143 = vsub.s32 %v6142, 127
  %v6144 = vand.u32 2147483647, %v840
  %v6145 = vand.u32 %v6144, 8388607
  %v6146 = vor.u32 %v6145, 8388608
  %v6147 = vsub.s32 0, %v6146
  %v6148 = vadd.s32 %v6143, 1
  %vm6149 = vcmp.gt.s32.totalorder %v6148, 0
  %v6150 = vsel %vm6149, %v6148, 0
  %v6151 = vshrl.u32 %v6150, 5
  %v6152 = vand.u32 %v6150, 31
  %v6153 = vsub.s32 32, %v6152
  %v6154 = vshrl.u32 683565275, %v6153
  %v6155 = vshll.u32 683565275, %v6152
  %v6156 = vshrl.u32 2475754826, %v6153
  %v6157 = vor.u32 %v6155, %v6156
  %v6158 = vshll.u32 2475754826, %v6152
  %v6159 = vshrl.u32 2131351028, %v6153
  %v6160 = vor.u32 %v6158, %v6159
  %v6161 = vshll.u32 2131351028, %v6152
  %v6162 = vshrl.u32 2102212464, %v6153
  %v6163 = vor.u32 %v6161, %v6162
  %v6164 = vshll.u32 2102212464, %v6152
  %v6165 = vshrl.u32 920167782, %v6153
  %v6166 = vor.u32 %v6164, %v6165
  %v6167 = vshll.u32 920167782, %v6152
  %v6168 = vshrl.u32 1326507024, %v6153
  %v6169 = vor.u32 %v6167, %v6168
  %vm6170 = vcmp.lt.s32.totalorder %v6151, 1
  %vm6171 = vcmp.lt.s32.totalorder %v6151, 2
  %vm6172 = vcmp.lt.s32.totalorder %v6151, 3
  %vm6173 = vcmp.lt.s32.totalorder %v6151, 4
  %v6174 = vsel %vm6170, %v6154, %v6157
  %v6175 = vsel %vm6173, %v6163, 2102212464
  %v6176 = vsel %vm6172, %v6160, %v6175
  %v6177 = vsel %vm6171, %v6174, %v6176
  %v6178 = vsel %vm6170, %v6157, %v6160
  %v6179 = vsel %vm6173, %v6166, 920167782
  %v6180 = vsel %vm6172, %v6163, %v6179
  %v6181 = vsel %vm6171, %v6178, %v6180
  %v6182 = vsel %vm6170, %v6160, %v6163
  %v6183 = vsel %vm6173, %v6169, 1326507024
  %v6184 = vsel %vm6172, %v6166, %v6183
  %v6185 = vsel %vm6171, %v6182, %v6184
  %v6186 = vshll.u32 %v6146, 8
  %v6187 = vmul.u32.u64.compose %v6186, %v6185
  %v6188 = vextract.low.u32 %v6187
  %v6189 = vextract.high.u32 %v6187
  %v6190 = vmul.u32.u64.compose %v6186, %v6181
  %v6191 = vextract.low.u32 %v6190
  %v6192 = vextract.high.u32 %v6190
  %v6193 = vmul.u32 %v6186, %v6177
  %v6194 = vadd.s32 %v6189, %v6191
  %vm6195 = vc.u32 %v6189, %v6191
  %v6196 = vadd.s32 %v6192, 1
  %v6197 = vsel %vm6195, %v6196, %v6192
  %v6198 = vadd.s32 %v6193, %v6197
  %v6199 = vadd.s32 %v6198, 536870912
  %v6200 = vshrl.u32 %v6199, 30
  %v6201 = vshll.u32 %v6200, 30
  %v6202 = vsub.s32 %v6198, %v6201
  %vm6203 = vcmp.lt.s32.totalorder %v6202, 0
  %v6204 = vsub.s32 0, %v6202
  %v6205 = vsel %vm6203, %v6204, %v6202
  %v6206 = vclz %v6205
  %v6207 = vsub.s32 %v6206, 2
  %vm6208 = vcmp.gt.s32.totalorder 0, %v6207
  %v6209 = vsel %vm6208, 0, %v6207
  %v6210 = vsub.s32 32, %v6209
  %v6211 = vshll.u32 %v6202, %v6209
  %v6212 = vshrl.u32 %v6194, %v6210
  %v6213 = vor.u32 %v6211, %v6212
  %v6214 = vsub.s32 4294967266, %v6209
  %v6215 = vadd.s32 %v6214, 127
  %v6216 = vshll.u32 %v6215, 23
  %v6217 = vor.u32 4788187, %v6216
  %v6218 = vand.u32 2147483647, %v6217
  %v6220 = vcvt.s32.f32 %v6213
  %v6221 = vmul.f32 %v6220, %v6218
  %v6222 = vxor.u32 %v6221, 2147483648
  %v6223 = vsel %vm6140, %v6222, %v6221
  %v6224 = vsub.s32 4, %v6200
  %v6225 = vsel %vm6140, %v6224, %v6200
  %v6226 = vsel %vm6139, %v840, %v6223
  %v6227 = vsel %vm6139, 0, %v6225
  %v6228 = vcosq.f32.pop %v6226
  %v6229 = vsinq.f32.pop %v6226
  %vm6230 = vweird.f32 %v840
  %v6231 = vand.u32 %v6227, 3
  %vm6232 = vcmp.lt.s32.totalorder %v6231, 2
  %vm6233 = vcmp.eq.s32.totalorder %v6231, 0
  %v6234 = vxor.u32 %v6229, 2147483648
  %v6235 = vsel %vm6233, %v6228, %v6234
  %vm6236 = vcmp.eq.s32.totalorder %v6231, 2
  %v6237 = vxor.u32 %v6228, 2147483648
  %v6238 = vsel %vm6236, %v6237, %v6229
  %v6239 = vsel %vm6232, %v6235, %v6238
  %v6240 = vsel %vm6230, nan, %v6239
  %v6241 = vand.u32 2147483647, %v841
  %vm6242 = vcmp.le.f32.partialorder %v6241, 0.7853982
  %vm6243 = vcmp.lt.s32.totalorder %v841, 0
  %v6244 = vand.u32 %v841, 2139095040
  %v6245 = vshrl.u32 %v6244, 23
  %v6246 = vsub.s32 %v6245, 127
  %v6247 = vand.u32 2147483647, %v841
  %v6248 = vand.u32 %v6247, 8388607
  %v6249 = vor.u32 %v6248, 8388608
  %v6250 = vsub.s32 0, %v6249
  %v6251 = vadd.s32 %v6246, 1
  %vm6252 = vcmp.gt.s32.totalorder %v6251, 0
  %v6253 = vsel %vm6252, %v6251, 0
  %v6254 = vshrl.u32 %v6253, 5
  %v6255 = vand.u32 %v6253, 31
  %v6256 = vsub.s32 32, %v6255
  %v6257 = vshrl.u32 683565275, %v6256
  %v6258 = vshll.u32 683565275, %v6255
  %v6259 = vshrl.u32 2475754826, %v6256
  %v6260 = vor.u32 %v6258, %v6259
  %v6261 = vshll.u32 2475754826, %v6255
  %v6262 = vshrl.u32 2131351028, %v6256
  %v6263 = vor.u32 %v6261, %v6262
  %v6264 = vshll.u32 2131351028, %v6255
  %v6265 = vshrl.u32 2102212464, %v6256
  %v6266 = vor.u32 %v6264, %v6265
  %v6267 = vshll.u32 2102212464, %v6255
  %v6268 = vshrl.u32 920167782, %v6256
  %v6269 = vor.u32 %v6267, %v6268
  %v6270 = vshll.u32 920167782, %v6255
  %v6271 = vshrl.u32 1326507024, %v6256
  %v6272 = vor.u32 %v6270, %v6271
  %vm6273 = vcmp.lt.s32.totalorder %v6254, 1
  %vm6274 = vcmp.lt.s32.totalorder %v6254, 2
  %vm6275 = vcmp.lt.s32.totalorder %v6254, 3
  %vm6276 = vcmp.lt.s32.totalorder %v6254, 4
  %v6277 = vsel %vm6273, %v6257, %v6260
  %v6278 = vsel %vm6276, %v6266, 2102212464
  %v6279 = vsel %vm6275, %v6263, %v6278
  %v6280 = vsel %vm6274, %v6277, %v6279
  %v6281 = vsel %vm6273, %v6260, %v6263
  %v6282 = vsel %vm6276, %v6269, 920167782
  %v6283 = vsel %vm6275, %v6266, %v6282
  %v6284 = vsel %vm6274, %v6281, %v6283
  %v6285 = vsel %vm6273, %v6263, %v6266
  %v6286 = vsel %vm6276, %v6272, 1326507024
  %v6287 = vsel %vm6275, %v6269, %v6286
  %v6288 = vsel %vm6274, %v6285, %v6287
  %v6289 = vshll.u32 %v6249, 8
  %v6290 = vmul.u32.u64.compose %v6289, %v6288
  %v6291 = vextract.low.u32 %v6290
  %v6292 = vextract.high.u32 %v6290
  %v6293 = vmul.u32.u64.compose %v6289, %v6284
  %v6294 = vextract.low.u32 %v6293
  %v6295 = vextract.high.u32 %v6293
  %v6296 = vmul.u32 %v6289, %v6280
  %v6297 = vadd.s32 %v6292, %v6294
  %vm6298 = vc.u32 %v6292, %v6294
  %v6299 = vadd.s32 %v6295, 1
  %v6300 = vsel %vm6298, %v6299, %v6295
  %v6301 = vadd.s32 %v6296, %v6300
  %v6302 = vadd.s32 %v6301, 536870912
  %v6303 = vshrl.u32 %v6302, 30
  %v6304 = vshll.u32 %v6303, 30
  %v6305 = vsub.s32 %v6301, %v6304
  %vm6306 = vcmp.lt.s32.totalorder %v6305, 0
  %v6307 = vsub.s32 0, %v6305
  %v6308 = vsel %vm6306, %v6307, %v6305
  %v6309 = vclz %v6308
  %v6310 = vsub.s32 %v6309, 2
  %vm6311 = vcmp.gt.s32.totalorder 0, %v6310
  %v6312 = vsel %vm6311, 0, %v6310
  %v6313 = vsub.s32 32, %v6312
  %v6314 = vshll.u32 %v6305, %v6312
  %v6315 = vshrl.u32 %v6297, %v6313
  %v6316 = vor.u32 %v6314, %v6315
  %v6317 = vsub.s32 4294967266, %v6312
  %v6318 = vadd.s32 %v6317, 127
  %v6319 = vshll.u32 %v6318, 23
  %v6320 = vor.u32 4788187, %v6319
  %v6321 = vand.u32 2147483647, %v6320
  %v6323 = vcvt.s32.f32 %v6316
  %v6324 = vmul.f32 %v6323, %v6321
  %v6325 = vxor.u32 %v6324, 2147483648
  %v6326 = vsel %vm6243, %v6325, %v6324
  %v6327 = vsub.s32 4, %v6303
  %v6328 = vsel %vm6243, %v6327, %v6303
  %v6329 = vsel %vm6242, %v841, %v6326
  %v6330 = vsel %vm6242, 0, %v6328
  %v6331 = vcosq.f32.pop %v6329
  %v6332 = vsinq.f32.pop %v6329
  %vm6333 = vweird.f32 %v841
  %v6334 = vand.u32 %v6330, 3
  %vm6335 = vcmp.lt.s32.totalorder %v6334, 2
  %vm6336 = vcmp.eq.s32.totalorder %v6334, 0
  %v6337 = vxor.u32 %v6332, 2147483648
  %v6338 = vsel %vm6336, %v6331, %v6337
  %vm6339 = vcmp.eq.s32.totalorder %v6334, 2
  %v6340 = vxor.u32 %v6331, 2147483648
  %v6341 = vsel %vm6339, %v6340, %v6332
  %v6342 = vsel %vm6335, %v6338, %v6341
  %v6343 = vsel %vm6333, nan, %v6342
  %v6344 = vand.u32 2147483647, %v842
  %vm6345 = vcmp.le.f32.partialorder %v6344, 0.7853982
  %vm6346 = vcmp.lt.s32.totalorder %v842, 0
  %v6347 = vand.u32 %v842, 2139095040
  %v6348 = vshrl.u32 %v6347, 23
  %v6349 = vsub.s32 %v6348, 127
  %v6350 = vand.u32 2147483647, %v842
  %v6351 = vand.u32 %v6350, 8388607
  %v6352 = vor.u32 %v6351, 8388608
  %v6353 = vsub.s32 0, %v6352
  %v6354 = vadd.s32 %v6349, 1
  %vm6355 = vcmp.gt.s32.totalorder %v6354, 0
  %v6356 = vsel %vm6355, %v6354, 0
  %v6357 = vshrl.u32 %v6356, 5
  %v6358 = vand.u32 %v6356, 31
  %v6359 = vsub.s32 32, %v6358
  %v6360 = vshrl.u32 683565275, %v6359
  %v6361 = vshll.u32 683565275, %v6358
  %v6362 = vshrl.u32 2475754826, %v6359
  %v6363 = vor.u32 %v6361, %v6362
  %v6364 = vshll.u32 2475754826, %v6358
  %v6365 = vshrl.u32 2131351028, %v6359
  %v6366 = vor.u32 %v6364, %v6365
  %v6367 = vshll.u32 2131351028, %v6358
  %v6368 = vshrl.u32 2102212464, %v6359
  %v6369 = vor.u32 %v6367, %v6368
  %v6370 = vshll.u32 2102212464, %v6358
  %v6371 = vshrl.u32 920167782, %v6359
  %v6372 = vor.u32 %v6370, %v6371
  %v6373 = vshll.u32 920167782, %v6358
  %v6374 = vshrl.u32 1326507024, %v6359
  %v6375 = vor.u32 %v6373, %v6374
  %vm6376 = vcmp.lt.s32.totalorder %v6357, 1
  %vm6377 = vcmp.lt.s32.totalorder %v6357, 2
  %vm6378 = vcmp.lt.s32.totalorder %v6357, 3
  %vm6379 = vcmp.lt.s32.totalorder %v6357, 4
  %v6380 = vsel %vm6376, %v6360, %v6363
  %v6381 = vsel %vm6379, %v6369, 2102212464
  %v6382 = vsel %vm6378, %v6366, %v6381
  %v6383 = vsel %vm6377, %v6380, %v6382
  %v6384 = vsel %vm6376, %v6363, %v6366
  %v6385 = vsel %vm6379, %v6372, 920167782
  %v6386 = vsel %vm6378, %v6369, %v6385
  %v6387 = vsel %vm6377, %v6384, %v6386
  %v6388 = vsel %vm6376, %v6366, %v6369
  %v6389 = vsel %vm6379, %v6375, 1326507024
  %v6390 = vsel %vm6378, %v6372, %v6389
  %v6391 = vsel %vm6377, %v6388, %v6390
  %v6392 = vshll.u32 %v6352, 8
  %v6393 = vmul.u32.u64.compose %v6392, %v6391
  %v6394 = vextract.low.u32 %v6393
  %v6395 = vextract.high.u32 %v6393
  %v6396 = vmul.u32.u64.compose %v6392, %v6387
  %v6397 = vextract.low.u32 %v6396
  %v6398 = vextract.high.u32 %v6396
  %v6399 = vmul.u32 %v6392, %v6383
  %v6400 = vadd.s32 %v6395, %v6397
  %vm6401 = vc.u32 %v6395, %v6397
  %v6402 = vadd.s32 %v6398, 1
  %v6403 = vsel %vm6401, %v6402, %v6398
  %v6404 = vadd.s32 %v6399, %v6403
  %v6405 = vadd.s32 %v6404, 536870912
  %v6406 = vshrl.u32 %v6405, 30
  %v6407 = vshll.u32 %v6406, 30
  %v6408 = vsub.s32 %v6404, %v6407
  %vm6409 = vcmp.lt.s32.totalorder %v6408, 0
  %v6410 = vsub.s32 0, %v6408
  %v6411 = vsel %vm6409, %v6410, %v6408
  %v6412 = vclz %v6411
  %v6413 = vsub.s32 %v6412, 2
  %vm6414 = vcmp.gt.s32.totalorder 0, %v6413
  %v6415 = vsel %vm6414, 0, %v6413
  %v6416 = vsub.s32 32, %v6415
  %v6417 = vshll.u32 %v6408, %v6415
  %v6418 = vshrl.u32 %v6400, %v6416
  %v6419 = vor.u32 %v6417, %v6418
  %v6420 = vsub.s32 4294967266, %v6415
  %v6421 = vadd.s32 %v6420, 127
  %v6422 = vshll.u32 %v6421, 23
  %v6423 = vor.u32 4788187, %v6422
  %v6424 = vand.u32 2147483647, %v6423
  %v6426 = vcvt.s32.f32 %v6419
  %v6427 = vmul.f32 %v6426, %v6424
  %v6428 = vxor.u32 %v6427, 2147483648
  %v6429 = vsel %vm6346, %v6428, %v6427
  %v6430 = vsub.s32 4, %v6406
  %v6431 = vsel %vm6346, %v6430, %v6406
  %v6432 = vsel %vm6345, %v842, %v6429
  %v6433 = vsel %vm6345, 0, %v6431
  %v6434 = vcosq.f32.pop %v6432
  %v6435 = vsinq.f32.pop %v6432
  %vm6436 = vweird.f32 %v842
  %v6437 = vand.u32 %v6433, 3
  %vm6438 = vcmp.lt.s32.totalorder %v6437, 2
  %vm6439 = vcmp.eq.s32.totalorder %v6437, 0
  %v6440 = vxor.u32 %v6435, 2147483648
  %v6441 = vsel %vm6439, %v6434, %v6440
  %vm6442 = vcmp.eq.s32.totalorder %v6437, 2
  %v6443 = vxor.u32 %v6434, 2147483648
  %v6444 = vsel %vm6442, %v6443, %v6435
  %v6445 = vsel %vm6438, %v6441, %v6444
  %v6446 = vsel %vm6436, nan, %v6445
  %v6447 = vand.u32 2147483647, %v843
  %vm6448 = vcmp.le.f32.partialorder %v6447, 0.7853982
  %vm6449 = vcmp.lt.s32.totalorder %v843, 0
  %v6450 = vand.u32 %v843, 2139095040
  %v6451 = vshrl.u32 %v6450, 23
  %v6452 = vsub.s32 %v6451, 127
  %v6453 = vand.u32 2147483647, %v843
  %v6454 = vand.u32 %v6453, 8388607
  %v6455 = vor.u32 %v6454, 8388608
  %v6456 = vsub.s32 0, %v6455
  %v6457 = vadd.s32 %v6452, 1
  %vm6458 = vcmp.gt.s32.totalorder %v6457, 0
  %v6459 = vsel %vm6458, %v6457, 0
  %v6460 = vshrl.u32 %v6459, 5
  %v6461 = vand.u32 %v6459, 31
  %v6462 = vsub.s32 32, %v6461
  %v6463 = vshrl.u32 683565275, %v6462
  %v6464 = vshll.u32 683565275, %v6461
  %v6465 = vshrl.u32 2475754826, %v6462
  %v6466 = vor.u32 %v6464, %v6465
  %v6467 = vshll.u32 2475754826, %v6461
  %v6468 = vshrl.u32 2131351028, %v6462
  %v6469 = vor.u32 %v6467, %v6468
  %v6470 = vshll.u32 2131351028, %v6461
  %v6471 = vshrl.u32 2102212464, %v6462
  %v6472 = vor.u32 %v6470, %v6471
  %v6473 = vshll.u32 2102212464, %v6461
  %v6474 = vshrl.u32 920167782, %v6462
  %v6475 = vor.u32 %v6473, %v6474
  %v6476 = vshll.u32 920167782, %v6461
  %v6477 = vshrl.u32 1326507024, %v6462
  %v6478 = vor.u32 %v6476, %v6477
  %vm6479 = vcmp.lt.s32.totalorder %v6460, 1
  %vm6480 = vcmp.lt.s32.totalorder %v6460, 2
  %vm6481 = vcmp.lt.s32.totalorder %v6460, 3
  %vm6482 = vcmp.lt.s32.totalorder %v6460, 4
  %v6483 = vsel %vm6479, %v6463, %v6466
  %v6484 = vsel %vm6482, %v6472, 2102212464
  %v6485 = vsel %vm6481, %v6469, %v6484
  %v6486 = vsel %vm6480, %v6483, %v6485
  %v6487 = vsel %vm6479, %v6466, %v6469
  %v6488 = vsel %vm6482, %v6475, 920167782
  %v6489 = vsel %vm6481, %v6472, %v6488
  %v6490 = vsel %vm6480, %v6487, %v6489
  %v6491 = vsel %vm6479, %v6469, %v6472
  %v6492 = vsel %vm6482, %v6478, 1326507024
  %v6493 = vsel %vm6481, %v6475, %v6492
  %v6494 = vsel %vm6480, %v6491, %v6493
  %v6495 = vshll.u32 %v6455, 8
  %v6496 = vmul.u32.u64.compose %v6495, %v6494
  %v6497 = vextract.low.u32 %v6496
  %v6498 = vextract.high.u32 %v6496
  %v6499 = vmul.u32.u64.compose %v6495, %v6490
  %v6500 = vextract.low.u32 %v6499
  %v6501 = vextract.high.u32 %v6499
  %v6502 = vmul.u32 %v6495, %v6486
  %v6503 = vadd.s32 %v6498, %v6500
  %vm6504 = vc.u32 %v6498, %v6500
  %v6505 = vadd.s32 %v6501, 1
  %v6506 = vsel %vm6504, %v6505, %v6501
  %v6507 = vadd.s32 %v6502, %v6506
  %v6508 = vadd.s32 %v6507, 536870912
  %v6509 = vshrl.u32 %v6508, 30
  %v6510 = vshll.u32 %v6509, 30
  %v6511 = vsub.s32 %v6507, %v6510
  %vm6512 = vcmp.lt.s32.totalorder %v6511, 0
  %v6513 = vsub.s32 0, %v6511
  %v6514 = vsel %vm6512, %v6513, %v6511
  %v6515 = vclz %v6514
  %v6516 = vsub.s32 %v6515, 2
  %vm6517 = vcmp.gt.s32.totalorder 0, %v6516
  %v6518 = vsel %vm6517, 0, %v6516
  %v6519 = vsub.s32 32, %v6518
  %v6520 = vshll.u32 %v6511, %v6518
  %v6521 = vshrl.u32 %v6503, %v6519
  %v6522 = vor.u32 %v6520, %v6521
  %v6523 = vsub.s32 4294967266, %v6518
  %v6524 = vadd.s32 %v6523, 127
  %v6525 = vshll.u32 %v6524, 23
  %v6526 = vor.u32 4788187, %v6525
  %v6527 = vand.u32 2147483647, %v6526
  %v6529 = vcvt.s32.f32 %v6522
  %v6530 = vmul.f32 %v6529, %v6527
  %v6531 = vxor.u32 %v6530, 2147483648
  %v6532 = vsel %vm6449, %v6531, %v6530
  %v6533 = vsub.s32 4, %v6509
  %v6534 = vsel %vm6449, %v6533, %v6509
  %v6535 = vsel %vm6448, %v843, %v6532
  %v6536 = vsel %vm6448, 0, %v6534
  %v6537 = vcosq.f32.pop %v6535
  %v6538 = vsinq.f32.pop %v6535
  %vm6539 = vweird.f32 %v843
  %v6540 = vand.u32 %v6536, 3
  %vm6541 = vcmp.lt.s32.totalorder %v6540, 2
  %vm6542 = vcmp.eq.s32.totalorder %v6540, 0
  %v6543 = vxor.u32 %v6538, 2147483648
  %v6544 = vsel %vm6542, %v6537, %v6543
  %vm6545 = vcmp.eq.s32.totalorder %v6540, 2
  %v6546 = vxor.u32 %v6537, 2147483648
  %v6547 = vsel %vm6545, %v6546, %v6538
  %v6548 = vsel %vm6541, %v6544, %v6547
  %v6549 = vsel %vm6539, nan, %v6548
  %v6550 = vand.u32 2147483647, %v844
  %vm6551 = vcmp.le.f32.partialorder %v6550, 0.7853982
  %vm6552 = vcmp.lt.s32.totalorder %v844, 0
  %v6553 = vand.u32 %v844, 2139095040
  %v6554 = vshrl.u32 %v6553, 23
  %v6555 = vsub.s32 %v6554, 127
  %v6556 = vand.u32 2147483647, %v844
  %v6557 = vand.u32 %v6556, 8388607
  %v6558 = vor.u32 %v6557, 8388608
  %v6559 = vsub.s32 0, %v6558
  %v6560 = vadd.s32 %v6555, 1
  %vm6561 = vcmp.gt.s32.totalorder %v6560, 0
  %v6562 = vsel %vm6561, %v6560, 0
  %v6563 = vshrl.u32 %v6562, 5
  %v6564 = vand.u32 %v6562, 31
  %v6565 = vsub.s32 32, %v6564
  %v6566 = vshrl.u32 683565275, %v6565
  %v6567 = vshll.u32 683565275, %v6564
  %v6568 = vshrl.u32 2475754826, %v6565
  %v6569 = vor.u32 %v6567, %v6568
  %v6570 = vshll.u32 2475754826, %v6564
  %v6571 = vshrl.u32 2131351028, %v6565
  %v6572 = vor.u32 %v6570, %v6571
  %v6573 = vshll.u32 2131351028, %v6564
  %v6574 = vshrl.u32 2102212464, %v6565
  %v6575 = vor.u32 %v6573, %v6574
  %v6576 = vshll.u32 2102212464, %v6564
  %v6577 = vshrl.u32 920167782, %v6565
  %v6578 = vor.u32 %v6576, %v6577
  %v6579 = vshll.u32 920167782, %v6564
  %v6580 = vshrl.u32 1326507024, %v6565
  %v6581 = vor.u32 %v6579, %v6580
  %vm6582 = vcmp.lt.s32.totalorder %v6563, 1
  %vm6583 = vcmp.lt.s32.totalorder %v6563, 2
  %vm6584 = vcmp.lt.s32.totalorder %v6563, 3
  %vm6585 = vcmp.lt.s32.totalorder %v6563, 4
  %v6586 = vsel %vm6582, %v6566, %v6569
  %v6587 = vsel %vm6585, %v6575, 2102212464
  %v6588 = vsel %vm6584, %v6572, %v6587
  %v6589 = vsel %vm6583, %v6586, %v6588
  %v6590 = vsel %vm6582, %v6569, %v6572
  %v6591 = vsel %vm6585, %v6578, 920167782
  %v6592 = vsel %vm6584, %v6575, %v6591
  %v6593 = vsel %vm6583, %v6590, %v6592
  %v6594 = vsel %vm6582, %v6572, %v6575
  %v6595 = vsel %vm6585, %v6581, 1326507024
  %v6596 = vsel %vm6584, %v6578, %v6595
  %v6597 = vsel %vm6583, %v6594, %v6596
  %v6598 = vshll.u32 %v6558, 8
  %v6599 = vmul.u32.u64.compose %v6598, %v6597
  %v6600 = vextract.low.u32 %v6599
  %v6601 = vextract.high.u32 %v6599
  %v6602 = vmul.u32.u64.compose %v6598, %v6593
  %v6603 = vextract.low.u32 %v6602
  %v6604 = vextract.high.u32 %v6602
  %v6605 = vmul.u32 %v6598, %v6589
  %v6606 = vadd.s32 %v6601, %v6603
  %vm6607 = vc.u32 %v6601, %v6603
  %v6608 = vadd.s32 %v6604, 1
  %v6609 = vsel %vm6607, %v6608, %v6604
  %v6610 = vadd.s32 %v6605, %v6609
  %v6611 = vadd.s32 %v6610, 536870912
  %v6612 = vshrl.u32 %v6611, 30
  %v6613 = vshll.u32 %v6612, 30
  %v6614 = vsub.s32 %v6610, %v6613
  %vm6615 = vcmp.lt.s32.totalorder %v6614, 0
  %v6616 = vsub.s32 0, %v6614
  %v6617 = vsel %vm6615, %v6616, %v6614
  %v6618 = vclz %v6617
  %v6619 = vsub.s32 %v6618, 2
  %vm6620 = vcmp.gt.s32.totalorder 0, %v6619
  %v6621 = vsel %vm6620, 0, %v6619
  %v6622 = vsub.s32 32, %v6621
  %v6623 = vshll.u32 %v6614, %v6621
  %v6624 = vshrl.u32 %v6606, %v6622
  %v6625 = vor.u32 %v6623, %v6624
  %v6626 = vsub.s32 4294967266, %v6621
  %v6627 = vadd.s32 %v6626, 127
  %v6628 = vshll.u32 %v6627, 23
  %v6629 = vor.u32 4788187, %v6628
  %v6630 = vand.u32 2147483647, %v6629
  %v6632 = vcvt.s32.f32 %v6625
  %v6633 = vmul.f32 %v6632, %v6630
  %v6634 = vxor.u32 %v6633, 2147483648
  %v6635 = vsel %vm6552, %v6634, %v6633
  %v6636 = vsub.s32 4, %v6612
  %v6637 = vsel %vm6552, %v6636, %v6612
  %v6638 = vsel %vm6551, %v844, %v6635
  %v6639 = vsel %vm6551, 0, %v6637
  %v6640 = vcosq.f32.pop %v6638
  %v6641 = vsinq.f32.pop %v6638
  %vm6642 = vweird.f32 %v844
  %v6643 = vand.u32 %v6639, 3
  %vm6644 = vcmp.lt.s32.totalorder %v6643, 2
  %vm6645 = vcmp.eq.s32.totalorder %v6643, 0
  %v6646 = vxor.u32 %v6641, 2147483648
  %v6647 = vsel %vm6645, %v6640, %v6646
  %vm6648 = vcmp.eq.s32.totalorder %v6643, 2
  %v6649 = vxor.u32 %v6640, 2147483648
  %v6650 = vsel %vm6648, %v6649, %v6641
  %v6651 = vsel %vm6644, %v6647, %v6650
  %v6652 = vsel %vm6642, nan, %v6651
  %v6653 = vand.u32 2147483647, %v845
  %vm6654 = vcmp.le.f32.partialorder %v6653, 0.7853982
  %vm6655 = vcmp.lt.s32.totalorder %v845, 0
  %v6656 = vand.u32 %v845, 2139095040
  %v6657 = vshrl.u32 %v6656, 23
  %v6658 = vsub.s32 %v6657, 127
  %v6659 = vand.u32 2147483647, %v845
  %v6660 = vand.u32 %v6659, 8388607
  %v6661 = vor.u32 %v6660, 8388608
  %v6662 = vsub.s32 0, %v6661
  %v6663 = vadd.s32 %v6658, 1
  %vm6664 = vcmp.gt.s32.totalorder %v6663, 0
  %v6665 = vsel %vm6664, %v6663, 0
  %v6666 = vshrl.u32 %v6665, 5
  %v6667 = vand.u32 %v6665, 31
  %v6668 = vsub.s32 32, %v6667
  %v6669 = vshrl.u32 683565275, %v6668
  %v6670 = vshll.u32 683565275, %v6667
  %v6671 = vshrl.u32 2475754826, %v6668
  %v6672 = vor.u32 %v6670, %v6671
  %v6673 = vshll.u32 2475754826, %v6667
  %v6674 = vshrl.u32 2131351028, %v6668
  %v6675 = vor.u32 %v6673, %v6674
  %v6676 = vshll.u32 2131351028, %v6667
  %v6677 = vshrl.u32 2102212464, %v6668
  %v6678 = vor.u32 %v6676, %v6677
  %v6679 = vshll.u32 2102212464, %v6667
  %v6680 = vshrl.u32 920167782, %v6668
  %v6681 = vor.u32 %v6679, %v6680
  %v6682 = vshll.u32 920167782, %v6667
  %v6683 = vshrl.u32 1326507024, %v6668
  %v6684 = vor.u32 %v6682, %v6683
  %vm6685 = vcmp.lt.s32.totalorder %v6666, 1
  %vm6686 = vcmp.lt.s32.totalorder %v6666, 2
  %vm6687 = vcmp.lt.s32.totalorder %v6666, 3
  %vm6688 = vcmp.lt.s32.totalorder %v6666, 4
  %v6689 = vsel %vm6685, %v6669, %v6672
  %v6690 = vsel %vm6688, %v6678, 2102212464
  %v6691 = vsel %vm6687, %v6675, %v6690
  %v6692 = vsel %vm6686, %v6689, %v6691
  %v6693 = vsel %vm6685, %v6672, %v6675
  %v6694 = vsel %vm6688, %v6681, 920167782
  %v6695 = vsel %vm6687, %v6678, %v6694
  %v6696 = vsel %vm6686, %v6693, %v6695
  %v6697 = vsel %vm6685, %v6675, %v6678
  %v6698 = vsel %vm6688, %v6684, 1326507024
  %v6699 = vsel %vm6687, %v6681, %v6698
  %v6700 = vsel %vm6686, %v6697, %v6699
  %v6701 = vshll.u32 %v6661, 8
  %v6702 = vmul.u32.u64.compose %v6701, %v6700
  %v6703 = vextract.low.u32 %v6702
  %v6704 = vextract.high.u32 %v6702
  %v6705 = vmul.u32.u64.compose %v6701, %v6696
  %v6706 = vextract.low.u32 %v6705
  %v6707 = vextract.high.u32 %v6705
  %v6708 = vmul.u32 %v6701, %v6692
  %v6709 = vadd.s32 %v6704, %v6706
  %vm6710 = vc.u32 %v6704, %v6706
  %v6711 = vadd.s32 %v6707, 1
  %v6712 = vsel %vm6710, %v6711, %v6707
  %v6713 = vadd.s32 %v6708, %v6712
  %v6714 = vadd.s32 %v6713, 536870912
  %v6715 = vshrl.u32 %v6714, 30
  %v6716 = vshll.u32 %v6715, 30
  %v6717 = vsub.s32 %v6713, %v6716
  %vm6718 = vcmp.lt.s32.totalorder %v6717, 0
  %v6719 = vsub.s32 0, %v6717
  %v6720 = vsel %vm6718, %v6719, %v6717
  %v6721 = vclz %v6720
  %v6722 = vsub.s32 %v6721, 2
  %vm6723 = vcmp.gt.s32.totalorder 0, %v6722
  %v6724 = vsel %vm6723, 0, %v6722
  %v6725 = vsub.s32 32, %v6724
  %v6726 = vshll.u32 %v6717, %v6724
  %v6727 = vshrl.u32 %v6709, %v6725
  %v6728 = vor.u32 %v6726, %v6727
  %v6729 = vsub.s32 4294967266, %v6724
  %v6730 = vadd.s32 %v6729, 127
  %v6731 = vshll.u32 %v6730, 23
  %v6732 = vor.u32 4788187, %v6731
  %v6733 = vand.u32 2147483647, %v6732
  %v6735 = vcvt.s32.f32 %v6728
  %v6736 = vmul.f32 %v6735, %v6733
  %v6737 = vxor.u32 %v6736, 2147483648
  %v6738 = vsel %vm6655, %v6737, %v6736
  %v6739 = vsub.s32 4, %v6715
  %v6740 = vsel %vm6655, %v6739, %v6715
  %v6741 = vsel %vm6654, %v845, %v6738
  %v6742 = vsel %vm6654, 0, %v6740
  %v6743 = vcosq.f32.pop %v6741
  %v6744 = vsinq.f32.pop %v6741
  %vm6745 = vweird.f32 %v845
  %v6746 = vand.u32 %v6742, 3
  %vm6747 = vcmp.lt.s32.totalorder %v6746, 2
  %vm6748 = vcmp.eq.s32.totalorder %v6746, 0
  %v6749 = vxor.u32 %v6744, 2147483648
  %v6750 = vsel %vm6748, %v6743, %v6749
  %vm6751 = vcmp.eq.s32.totalorder %v6746, 2
  %v6752 = vxor.u32 %v6743, 2147483648
  %v6753 = vsel %vm6751, %v6752, %v6744
  %v6754 = vsel %vm6747, %v6750, %v6753
  %v6755 = vsel %vm6745, nan, %v6754
  %v6756 = vand.u32 2147483647, %v846
  %vm6757 = vcmp.le.f32.partialorder %v6756, 0.7853982
  %vm6758 = vcmp.lt.s32.totalorder %v846, 0
  %v6759 = vand.u32 %v846, 2139095040
  %v6760 = vshrl.u32 %v6759, 23
  %v6761 = vsub.s32 %v6760, 127
  %v6762 = vand.u32 2147483647, %v846
  %v6763 = vand.u32 %v6762, 8388607
  %v6764 = vor.u32 %v6763, 8388608
  %v6765 = vsub.s32 0, %v6764
  %v6766 = vadd.s32 %v6761, 1
  %vm6767 = vcmp.gt.s32.totalorder %v6766, 0
  %v6768 = vsel %vm6767, %v6766, 0
  %v6769 = vshrl.u32 %v6768, 5
  %v6770 = vand.u32 %v6768, 31
  %v6771 = vsub.s32 32, %v6770
  %v6772 = vshrl.u32 683565275, %v6771
  %v6773 = vshll.u32 683565275, %v6770
  %v6774 = vshrl.u32 2475754826, %v6771
  %v6775 = vor.u32 %v6773, %v6774
  %v6776 = vshll.u32 2475754826, %v6770
  %v6777 = vshrl.u32 2131351028, %v6771
  %v6778 = vor.u32 %v6776, %v6777
  %v6779 = vshll.u32 2131351028, %v6770
  %v6780 = vshrl.u32 2102212464, %v6771
  %v6781 = vor.u32 %v6779, %v6780
  %v6782 = vshll.u32 2102212464, %v6770
  %v6783 = vshrl.u32 920167782, %v6771
  %v6784 = vor.u32 %v6782, %v6783
  %v6785 = vshll.u32 920167782, %v6770
  %v6786 = vshrl.u32 1326507024, %v6771
  %v6787 = vor.u32 %v6785, %v6786
  %vm6788 = vcmp.lt.s32.totalorder %v6769, 1
  %vm6789 = vcmp.lt.s32.totalorder %v6769, 2
  %vm6790 = vcmp.lt.s32.totalorder %v6769, 3
  %vm6791 = vcmp.lt.s32.totalorder %v6769, 4
  %v6792 = vsel %vm6788, %v6772, %v6775
  %v6793 = vsel %vm6791, %v6781, 2102212464
  %v6794 = vsel %vm6790, %v6778, %v6793
  %v6795 = vsel %vm6789, %v6792, %v6794
  %v6796 = vsel %vm6788, %v6775, %v6778
  %v6797 = vsel %vm6791, %v6784, 920167782
  %v6798 = vsel %vm6790, %v6781, %v6797
  %v6799 = vsel %vm6789, %v6796, %v6798
  %v6800 = vsel %vm6788, %v6778, %v6781
  %v6801 = vsel %vm6791, %v6787, 1326507024
  %v6802 = vsel %vm6790, %v6784, %v6801
  %v6803 = vsel %vm6789, %v6800, %v6802
  %v6804 = vshll.u32 %v6764, 8
  %v6805 = vmul.u32.u64.compose %v6804, %v6803
  %v6806 = vextract.low.u32 %v6805
  %v6807 = vextract.high.u32 %v6805
  %v6808 = vmul.u32.u64.compose %v6804, %v6799
  %v6809 = vextract.low.u32 %v6808
  %v6810 = vextract.high.u32 %v6808
  %v6811 = vmul.u32 %v6804, %v6795
  %v6812 = vadd.s32 %v6807, %v6809
  %vm6813 = vc.u32 %v6807, %v6809
  %v6814 = vadd.s32 %v6810, 1
  %v6815 = vsel %vm6813, %v6814, %v6810
  %v6816 = vadd.s32 %v6811, %v6815
  %v6817 = vadd.s32 %v6816, 536870912
  %v6818 = vshrl.u32 %v6817, 30
  %v6819 = vshll.u32 %v6818, 30
  %v6820 = vsub.s32 %v6816, %v6819
  %vm6821 = vcmp.lt.s32.totalorder %v6820, 0
  %v6822 = vsub.s32 0, %v6820
  %v6823 = vsel %vm6821, %v6822, %v6820
  %v6824 = vclz %v6823
  %v6825 = vsub.s32 %v6824, 2
  %vm6826 = vcmp.gt.s32.totalorder 0, %v6825
  %v6827 = vsel %vm6826, 0, %v6825
  %v6828 = vsub.s32 32, %v6827
  %v6829 = vshll.u32 %v6820, %v6827
  %v6830 = vshrl.u32 %v6812, %v6828
  %v6831 = vor.u32 %v6829, %v6830
  %v6832 = vsub.s32 4294967266, %v6827
  %v6833 = vadd.s32 %v6832, 127
  %v6834 = vshll.u32 %v6833, 23
  %v6835 = vor.u32 4788187, %v6834
  %v6836 = vand.u32 2147483647, %v6835
  %v6838 = vcvt.s32.f32 %v6831
  %v6839 = vmul.f32 %v6838, %v6836
  %v6840 = vxor.u32 %v6839, 2147483648
  %v6841 = vsel %vm6758, %v6840, %v6839
  %v6842 = vsub.s32 4, %v6818
  %v6843 = vsel %vm6758, %v6842, %v6818
  %v6844 = vsel %vm6757, %v846, %v6841
  %v6845 = vsel %vm6757, 0, %v6843
  %v6846 = vcosq.f32.pop %v6844
  %v6847 = vsinq.f32.pop %v6844
  %vm6848 = vweird.f32 %v846
  %v6849 = vand.u32 %v6845, 3
  %vm6850 = vcmp.lt.s32.totalorder %v6849, 2
  %vm6851 = vcmp.eq.s32.totalorder %v6849, 0
  %v6852 = vxor.u32 %v6847, 2147483648
  %v6853 = vsel %vm6851, %v6846, %v6852
  %vm6854 = vcmp.eq.s32.totalorder %v6849, 2
  %v6855 = vxor.u32 %v6846, 2147483648
  %v6856 = vsel %vm6854, %v6855, %v6847
  %v6857 = vsel %vm6850, %v6853, %v6856
  %v6858 = vsel %vm6848, nan, %v6857
  %v6859 = vand.u32 2147483647, %v847
  %vm6860 = vcmp.le.f32.partialorder %v6859, 0.7853982
  %vm6861 = vcmp.lt.s32.totalorder %v847, 0
  %v6862 = vand.u32 %v847, 2139095040
  %v6863 = vshrl.u32 %v6862, 23
  %v6864 = vsub.s32 %v6863, 127
  %v6865 = vand.u32 2147483647, %v847
  %v6866 = vand.u32 %v6865, 8388607
  %v6867 = vor.u32 %v6866, 8388608
  %v6868 = vsub.s32 0, %v6867
  %v6869 = vadd.s32 %v6864, 1
  %vm6870 = vcmp.gt.s32.totalorder %v6869, 0
  %v6871 = vsel %vm6870, %v6869, 0
  %v6872 = vshrl.u32 %v6871, 5
  %v6873 = vand.u32 %v6871, 31
  %v6874 = vsub.s32 32, %v6873
  %v6875 = vshrl.u32 683565275, %v6874
  %v6876 = vshll.u32 683565275, %v6873
  %v6877 = vshrl.u32 2475754826, %v6874
  %v6878 = vor.u32 %v6876, %v6877
  %v6879 = vshll.u32 2475754826, %v6873
  %v6880 = vshrl.u32 2131351028, %v6874
  %v6881 = vor.u32 %v6879, %v6880
  %v6882 = vshll.u32 2131351028, %v6873
  %v6883 = vshrl.u32 2102212464, %v6874
  %v6884 = vor.u32 %v6882, %v6883
  %v6885 = vshll.u32 2102212464, %v6873
  %v6886 = vshrl.u32 920167782, %v6874
  %v6887 = vor.u32 %v6885, %v6886
  %v6888 = vshll.u32 920167782, %v6873
  %v6889 = vshrl.u32 1326507024, %v6874
  %v6890 = vor.u32 %v6888, %v6889
  %vm6891 = vcmp.lt.s32.totalorder %v6872, 1
  %vm6892 = vcmp.lt.s32.totalorder %v6872, 2
  %vm6893 = vcmp.lt.s32.totalorder %v6872, 3
  %vm6894 = vcmp.lt.s32.totalorder %v6872, 4
  %v6895 = vsel %vm6891, %v6875, %v6878
  %v6896 = vsel %vm6894, %v6884, 2102212464
  %v6897 = vsel %vm6893, %v6881, %v6896
  %v6898 = vsel %vm6892, %v6895, %v6897
  %v6899 = vsel %vm6891, %v6878, %v6881
  %v6900 = vsel %vm6894, %v6887, 920167782
  %v6901 = vsel %vm6893, %v6884, %v6900
  %v6902 = vsel %vm6892, %v6899, %v6901
  %v6903 = vsel %vm6891, %v6881, %v6884
  %v6904 = vsel %vm6894, %v6890, 1326507024
  %v6905 = vsel %vm6893, %v6887, %v6904
  %v6906 = vsel %vm6892, %v6903, %v6905
  %v6907 = vshll.u32 %v6867, 8
  %v6908 = vmul.u32.u64.compose %v6907, %v6906
  %v6909 = vextract.low.u32 %v6908
  %v6910 = vextract.high.u32 %v6908
  %v6911 = vmul.u32.u64.compose %v6907, %v6902
  %v6912 = vextract.low.u32 %v6911
  %v6913 = vextract.high.u32 %v6911
  %v6914 = vmul.u32 %v6907, %v6898
  %v6915 = vadd.s32 %v6910, %v6912
  %vm6916 = vc.u32 %v6910, %v6912
  %v6917 = vadd.s32 %v6913, 1
  %v6918 = vsel %vm6916, %v6917, %v6913
  %v6919 = vadd.s32 %v6914, %v6918
  %v6920 = vadd.s32 %v6919, 536870912
  %v6921 = vshrl.u32 %v6920, 30
  %v6922 = vshll.u32 %v6921, 30
  %v6923 = vsub.s32 %v6919, %v6922
  %vm6924 = vcmp.lt.s32.totalorder %v6923, 0
  %v6925 = vsub.s32 0, %v6923
  %v6926 = vsel %vm6924, %v6925, %v6923
  %v6927 = vclz %v6926
  %v6928 = vsub.s32 %v6927, 2
  %vm6929 = vcmp.gt.s32.totalorder 0, %v6928
  %v6930 = vsel %vm6929, 0, %v6928
  %v6931 = vsub.s32 32, %v6930
  %v6932 = vshll.u32 %v6923, %v6930
  %v6933 = vshrl.u32 %v6915, %v6931
  %v6934 = vor.u32 %v6932, %v6933
  %v6935 = vsub.s32 4294967266, %v6930
  %v6936 = vadd.s32 %v6935, 127
  %v6937 = vshll.u32 %v6936, 23
  %v6938 = vor.u32 4788187, %v6937
  %v6939 = vand.u32 2147483647, %v6938
  %v6941 = vcvt.s32.f32 %v6934
  %v6942 = vmul.f32 %v6941, %v6939
  %v6943 = vxor.u32 %v6942, 2147483648
  %v6944 = vsel %vm6861, %v6943, %v6942
  %v6945 = vsub.s32 4, %v6921
  %v6946 = vsel %vm6861, %v6945, %v6921
  %v6947 = vsel %vm6860, %v847, %v6944
  %v6948 = vsel %vm6860, 0, %v6946
  %v6949 = vcosq.f32.pop %v6947
  %v6950 = vsinq.f32.pop %v6947
  %vm6951 = vweird.f32 %v847
  %v6952 = vand.u32 %v6948, 3
  %vm6953 = vcmp.lt.s32.totalorder %v6952, 2
  %vm6954 = vcmp.eq.s32.totalorder %v6952, 0
  %v6955 = vxor.u32 %v6950, 2147483648
  %v6956 = vsel %vm6954, %v6949, %v6955
  %vm6957 = vcmp.eq.s32.totalorder %v6952, 2
  %v6958 = vxor.u32 %v6949, 2147483648
  %v6959 = vsel %vm6957, %v6958, %v6950
  %v6960 = vsel %vm6953, %v6956, %v6959
  %v6961 = vsel %vm6951, nan, %v6960
  %v6962 = vand.u32 2147483647, %v848
  %vm6963 = vcmp.le.f32.partialorder %v6962, 0.7853982
  %vm6964 = vcmp.lt.s32.totalorder %v848, 0
  %v6965 = vand.u32 %v848, 2139095040
  %v6966 = vshrl.u32 %v6965, 23
  %v6967 = vsub.s32 %v6966, 127
  %v6968 = vand.u32 2147483647, %v848
  %v6969 = vand.u32 %v6968, 8388607
  %v6970 = vor.u32 %v6969, 8388608
  %v6971 = vsub.s32 0, %v6970
  %v6972 = vadd.s32 %v6967, 1
  %vm6973 = vcmp.gt.s32.totalorder %v6972, 0
  %v6974 = vsel %vm6973, %v6972, 0
  %v6975 = vshrl.u32 %v6974, 5
  %v6976 = vand.u32 %v6974, 31
  %v6977 = vsub.s32 32, %v6976
  %v6978 = vshrl.u32 683565275, %v6977
  %v6979 = vshll.u32 683565275, %v6976
  %v6980 = vshrl.u32 2475754826, %v6977
  %v6981 = vor.u32 %v6979, %v6980
  %v6982 = vshll.u32 2475754826, %v6976
  %v6983 = vshrl.u32 2131351028, %v6977
  %v6984 = vor.u32 %v6982, %v6983
  %v6985 = vshll.u32 2131351028, %v6976
  %v6986 = vshrl.u32 2102212464, %v6977
  %v6987 = vor.u32 %v6985, %v6986
  %v6988 = vshll.u32 2102212464, %v6976
  %v6989 = vshrl.u32 920167782, %v6977
  %v6990 = vor.u32 %v6988, %v6989
  %v6991 = vshll.u32 920167782, %v6976
  %v6992 = vshrl.u32 1326507024, %v6977
  %v6993 = vor.u32 %v6991, %v6992
  %vm6994 = vcmp.lt.s32.totalorder %v6975, 1
  %vm6995 = vcmp.lt.s32.totalorder %v6975, 2
  %vm6996 = vcmp.lt.s32.totalorder %v6975, 3
  %vm6997 = vcmp.lt.s32.totalorder %v6975, 4
  %v6998 = vsel %vm6994, %v6978, %v6981
  %v6999 = vsel %vm6997, %v6987, 2102212464
  %v7000 = vsel %vm6996, %v6984, %v6999
  %v7001 = vsel %vm6995, %v6998, %v7000
  %v7002 = vsel %vm6994, %v6981, %v6984
  %v7003 = vsel %vm6997, %v6990, 920167782
  %v7004 = vsel %vm6996, %v6987, %v7003
  %v7005 = vsel %vm6995, %v7002, %v7004
  %v7006 = vsel %vm6994, %v6984, %v6987
  %v7007 = vsel %vm6997, %v6993, 1326507024
  %v7008 = vsel %vm6996, %v6990, %v7007
  %v7009 = vsel %vm6995, %v7006, %v7008
  %v7010 = vshll.u32 %v6970, 8
  %v7011 = vmul.u32.u64.compose %v7010, %v7009
  %v7012 = vextract.low.u32 %v7011
  %v7013 = vextract.high.u32 %v7011
  %v7014 = vmul.u32.u64.compose %v7010, %v7005
  %v7015 = vextract.low.u32 %v7014
  %v7016 = vextract.high.u32 %v7014
  %v7017 = vmul.u32 %v7010, %v7001
  %v7018 = vadd.s32 %v7013, %v7015
  %vm7019 = vc.u32 %v7013, %v7015
  %v7020 = vadd.s32 %v7016, 1
  %v7021 = vsel %vm7019, %v7020, %v7016
  %v7022 = vadd.s32 %v7017, %v7021
  %v7023 = vadd.s32 %v7022, 536870912
  %v7024 = vshrl.u32 %v7023, 30
  %v7025 = vshll.u32 %v7024, 30
  %v7026 = vsub.s32 %v7022, %v7025
  %vm7027 = vcmp.lt.s32.totalorder %v7026, 0
  %v7028 = vsub.s32 0, %v7026
  %v7029 = vsel %vm7027, %v7028, %v7026
  %v7030 = vclz %v7029
  %v7031 = vsub.s32 %v7030, 2
  %vm7032 = vcmp.gt.s32.totalorder 0, %v7031
  %v7033 = vsel %vm7032, 0, %v7031
  %v7034 = vsub.s32 32, %v7033
  %v7035 = vshll.u32 %v7026, %v7033
  %v7036 = vshrl.u32 %v7018, %v7034
  %v7037 = vor.u32 %v7035, %v7036
  %v7038 = vsub.s32 4294967266, %v7033
  %v7039 = vadd.s32 %v7038, 127
  %v7040 = vshll.u32 %v7039, 23
  %v7041 = vor.u32 4788187, %v7040
  %v7042 = vand.u32 2147483647, %v7041
  %v7044 = vcvt.s32.f32 %v7037
  %v7045 = vmul.f32 %v7044, %v7042
  %v7046 = vxor.u32 %v7045, 2147483648
  %v7047 = vsel %vm6964, %v7046, %v7045
  %v7048 = vsub.s32 4, %v7024
  %v7049 = vsel %vm6964, %v7048, %v7024
  %v7050 = vsel %vm6963, %v848, %v7047
  %v7051 = vsel %vm6963, 0, %v7049
  %v7052 = vcosq.f32.pop %v7050
  %v7053 = vsinq.f32.pop %v7050
  %vm7054 = vweird.f32 %v848
  %v7055 = vand.u32 %v7051, 3
  %vm7056 = vcmp.lt.s32.totalorder %v7055, 2
  %vm7057 = vcmp.eq.s32.totalorder %v7055, 0
  %v7058 = vxor.u32 %v7053, 2147483648
  %v7059 = vsel %vm7057, %v7052, %v7058
  %vm7060 = vcmp.eq.s32.totalorder %v7055, 2
  %v7061 = vxor.u32 %v7052, 2147483648
  %v7062 = vsel %vm7060, %v7061, %v7053
  %v7063 = vsel %vm7056, %v7059, %v7062
  %v7064 = vsel %vm7054, nan, %v7063
  %v7065 = vand.u32 2147483647, %v849
  %vm7066 = vcmp.le.f32.partialorder %v7065, 0.7853982
  %vm7067 = vcmp.lt.s32.totalorder %v849, 0
  %v7068 = vand.u32 %v849, 2139095040
  %v7069 = vshrl.u32 %v7068, 23
  %v7070 = vsub.s32 %v7069, 127
  %v7071 = vand.u32 2147483647, %v849
  %v7072 = vand.u32 %v7071, 8388607
  %v7073 = vor.u32 %v7072, 8388608
  %v7074 = vsub.s32 0, %v7073
  %v7075 = vadd.s32 %v7070, 1
  %vm7076 = vcmp.gt.s32.totalorder %v7075, 0
  %v7077 = vsel %vm7076, %v7075, 0
  %v7078 = vshrl.u32 %v7077, 5
  %v7079 = vand.u32 %v7077, 31
  %v7080 = vsub.s32 32, %v7079
  %v7081 = vshrl.u32 683565275, %v7080
  %v7082 = vshll.u32 683565275, %v7079
  %v7083 = vshrl.u32 2475754826, %v7080
  %v7084 = vor.u32 %v7082, %v7083
  %v7085 = vshll.u32 2475754826, %v7079
  %v7086 = vshrl.u32 2131351028, %v7080
  %v7087 = vor.u32 %v7085, %v7086
  %v7088 = vshll.u32 2131351028, %v7079
  %v7089 = vshrl.u32 2102212464, %v7080
  %v7090 = vor.u32 %v7088, %v7089
  %v7091 = vshll.u32 2102212464, %v7079
  %v7092 = vshrl.u32 920167782, %v7080
  %v7093 = vor.u32 %v7091, %v7092
  %v7094 = vshll.u32 920167782, %v7079
  %v7095 = vshrl.u32 1326507024, %v7080
  %v7096 = vor.u32 %v7094, %v7095
  %vm7097 = vcmp.lt.s32.totalorder %v7078, 1
  %vm7098 = vcmp.lt.s32.totalorder %v7078, 2
  %vm7099 = vcmp.lt.s32.totalorder %v7078, 3
  %vm7100 = vcmp.lt.s32.totalorder %v7078, 4
  %v7101 = vsel %vm7097, %v7081, %v7084
  %v7102 = vsel %vm7100, %v7090, 2102212464
  %v7103 = vsel %vm7099, %v7087, %v7102
  %v7104 = vsel %vm7098, %v7101, %v7103
  %v7105 = vsel %vm7097, %v7084, %v7087
  %v7106 = vsel %vm7100, %v7093, 920167782
  %v7107 = vsel %vm7099, %v7090, %v7106
  %v7108 = vsel %vm7098, %v7105, %v7107
  %v7109 = vsel %vm7097, %v7087, %v7090
  %v7110 = vsel %vm7100, %v7096, 1326507024
  %v7111 = vsel %vm7099, %v7093, %v7110
  %v7112 = vsel %vm7098, %v7109, %v7111
  %v7113 = vshll.u32 %v7073, 8
  %v7114 = vmul.u32.u64.compose %v7113, %v7112
  %v7115 = vextract.low.u32 %v7114
  %v7116 = vextract.high.u32 %v7114
  %v7117 = vmul.u32.u64.compose %v7113, %v7108
  %v7118 = vextract.low.u32 %v7117
  %v7119 = vextract.high.u32 %v7117
  %v7120 = vmul.u32 %v7113, %v7104
  %v7121 = vadd.s32 %v7116, %v7118
  %vm7122 = vc.u32 %v7116, %v7118
  %v7123 = vadd.s32 %v7119, 1
  %v7124 = vsel %vm7122, %v7123, %v7119
  %v7125 = vadd.s32 %v7120, %v7124
  %v7126 = vadd.s32 %v7125, 536870912
  %v7127 = vshrl.u32 %v7126, 30
  %v7128 = vshll.u32 %v7127, 30
  %v7129 = vsub.s32 %v7125, %v7128
  %vm7130 = vcmp.lt.s32.totalorder %v7129, 0
  %v7131 = vsub.s32 0, %v7129
  %v7132 = vsel %vm7130, %v7131, %v7129
  %v7133 = vclz %v7132
  %v7134 = vsub.s32 %v7133, 2
  %vm7135 = vcmp.gt.s32.totalorder 0, %v7134
  %v7136 = vsel %vm7135, 0, %v7134
  %v7137 = vsub.s32 32, %v7136
  %v7138 = vshll.u32 %v7129, %v7136
  %v7139 = vshrl.u32 %v7121, %v7137
  %v7140 = vor.u32 %v7138, %v7139
  %v7141 = vsub.s32 4294967266, %v7136
  %v7142 = vadd.s32 %v7141, 127
  %v7143 = vshll.u32 %v7142, 23
  %v7144 = vor.u32 4788187, %v7143
  %v7145 = vand.u32 2147483647, %v7144
  %v7147 = vcvt.s32.f32 %v7140
  %v7148 = vmul.f32 %v7147, %v7145
  %v7149 = vxor.u32 %v7148, 2147483648
  %v7150 = vsel %vm7067, %v7149, %v7148
  %v7151 = vsub.s32 4, %v7127
  %v7152 = vsel %vm7067, %v7151, %v7127
  %v7153 = vsel %vm7066, %v849, %v7150
  %v7154 = vsel %vm7066, 0, %v7152
  %v7155 = vcosq.f32.pop %v7153
  %v7156 = vsinq.f32.pop %v7153
  %vm7157 = vweird.f32 %v849
  %v7158 = vand.u32 %v7154, 3
  %vm7159 = vcmp.lt.s32.totalorder %v7158, 2
  %vm7160 = vcmp.eq.s32.totalorder %v7158, 0
  %v7161 = vxor.u32 %v7156, 2147483648
  %v7162 = vsel %vm7160, %v7155, %v7161
  %vm7163 = vcmp.eq.s32.totalorder %v7158, 2
  %v7164 = vxor.u32 %v7155, 2147483648
  %v7165 = vsel %vm7163, %v7164, %v7156
  %v7166 = vsel %vm7159, %v7162, %v7165
  %v7167 = vsel %vm7157, nan, %v7166
  %v7168 = vand.u32 2147483647, %v850
  %vm7169 = vcmp.le.f32.partialorder %v7168, 0.7853982
  %vm7170 = vcmp.lt.s32.totalorder %v850, 0
  %v7171 = vand.u32 %v850, 2139095040
  %v7172 = vshrl.u32 %v7171, 23
  %v7173 = vsub.s32 %v7172, 127
  %v7174 = vand.u32 2147483647, %v850
  %v7175 = vand.u32 %v7174, 8388607
  %v7176 = vor.u32 %v7175, 8388608
  %v7177 = vsub.s32 0, %v7176
  %v7178 = vadd.s32 %v7173, 1
  %vm7179 = vcmp.gt.s32.totalorder %v7178, 0
  %v7180 = vsel %vm7179, %v7178, 0
  %v7181 = vshrl.u32 %v7180, 5
  %v7182 = vand.u32 %v7180, 31
  %v7183 = vsub.s32 32, %v7182
  %v7184 = vshrl.u32 683565275, %v7183
  %v7185 = vshll.u32 683565275, %v7182
  %v7186 = vshrl.u32 2475754826, %v7183
  %v7187 = vor.u32 %v7185, %v7186
  %v7188 = vshll.u32 2475754826, %v7182
  %v7189 = vshrl.u32 2131351028, %v7183
  %v7190 = vor.u32 %v7188, %v7189
  %v7191 = vshll.u32 2131351028, %v7182
  %v7192 = vshrl.u32 2102212464, %v7183
  %v7193 = vor.u32 %v7191, %v7192
  %v7194 = vshll.u32 2102212464, %v7182
  %v7195 = vshrl.u32 920167782, %v7183
  %v7196 = vor.u32 %v7194, %v7195
  %v7197 = vshll.u32 920167782, %v7182
  %v7198 = vshrl.u32 1326507024, %v7183
  %v7199 = vor.u32 %v7197, %v7198
  %vm7200 = vcmp.lt.s32.totalorder %v7181, 1
  %vm7201 = vcmp.lt.s32.totalorder %v7181, 2
  %vm7202 = vcmp.lt.s32.totalorder %v7181, 3
  %vm7203 = vcmp.lt.s32.totalorder %v7181, 4
  %v7204 = vsel %vm7200, %v7184, %v7187
  %v7205 = vsel %vm7203, %v7193, 2102212464
  %v7206 = vsel %vm7202, %v7190, %v7205
  %v7207 = vsel %vm7201, %v7204, %v7206
  %v7208 = vsel %vm7200, %v7187, %v7190
  %v7209 = vsel %vm7203, %v7196, 920167782
  %v7210 = vsel %vm7202, %v7193, %v7209
  %v7211 = vsel %vm7201, %v7208, %v7210
  %v7212 = vsel %vm7200, %v7190, %v7193
  %v7213 = vsel %vm7203, %v7199, 1326507024
  %v7214 = vsel %vm7202, %v7196, %v7213
  %v7215 = vsel %vm7201, %v7212, %v7214
  %v7216 = vshll.u32 %v7176, 8
  %v7217 = vmul.u32.u64.compose %v7216, %v7215
  %v7218 = vextract.low.u32 %v7217
  %v7219 = vextract.high.u32 %v7217
  %v7220 = vmul.u32.u64.compose %v7216, %v7211
  %v7221 = vextract.low.u32 %v7220
  %v7222 = vextract.high.u32 %v7220
  %v7223 = vmul.u32 %v7216, %v7207
  %v7224 = vadd.s32 %v7219, %v7221
  %vm7225 = vc.u32 %v7219, %v7221
  %v7226 = vadd.s32 %v7222, 1
  %v7227 = vsel %vm7225, %v7226, %v7222
  %v7228 = vadd.s32 %v7223, %v7227
  %v7229 = vadd.s32 %v7228, 536870912
  %v7230 = vshrl.u32 %v7229, 30
  %v7231 = vshll.u32 %v7230, 30
  %v7232 = vsub.s32 %v7228, %v7231
  %vm7233 = vcmp.lt.s32.totalorder %v7232, 0
  %v7234 = vsub.s32 0, %v7232
  %v7235 = vsel %vm7233, %v7234, %v7232
  %v7236 = vclz %v7235
  %v7237 = vsub.s32 %v7236, 2
  %vm7238 = vcmp.gt.s32.totalorder 0, %v7237
  %v7239 = vsel %vm7238, 0, %v7237
  %v7240 = vsub.s32 32, %v7239
  %v7241 = vshll.u32 %v7232, %v7239
  %v7242 = vshrl.u32 %v7224, %v7240
  %v7243 = vor.u32 %v7241, %v7242
  %v7244 = vsub.s32 4294967266, %v7239
  %v7245 = vadd.s32 %v7244, 127
  %v7246 = vshll.u32 %v7245, 23
  %v7247 = vor.u32 4788187, %v7246
  %v7248 = vand.u32 2147483647, %v7247
  %v7250 = vcvt.s32.f32 %v7243
  %v7251 = vmul.f32 %v7250, %v7248
  %v7252 = vxor.u32 %v7251, 2147483648
  %v7253 = vsel %vm7170, %v7252, %v7251
  %v7254 = vsub.s32 4, %v7230
  %v7255 = vsel %vm7170, %v7254, %v7230
  %v7256 = vsel %vm7169, %v850, %v7253
  %v7257 = vsel %vm7169, 0, %v7255
  %v7258 = vcosq.f32.pop %v7256
  %v7259 = vsinq.f32.pop %v7256
  %vm7260 = vweird.f32 %v850
  %v7261 = vand.u32 %v7257, 3
  %vm7262 = vcmp.lt.s32.totalorder %v7261, 2
  %vm7263 = vcmp.eq.s32.totalorder %v7261, 0
  %v7264 = vxor.u32 %v7259, 2147483648
  %v7265 = vsel %vm7263, %v7258, %v7264
  %vm7266 = vcmp.eq.s32.totalorder %v7261, 2
  %v7267 = vxor.u32 %v7258, 2147483648
  %v7268 = vsel %vm7266, %v7267, %v7259
  %v7269 = vsel %vm7262, %v7265, %v7268
  %v7270 = vsel %vm7260, nan, %v7269
  %v7271 = vand.u32 2147483647, %v851
  %vm7272 = vcmp.le.f32.partialorder %v7271, 0.7853982
  %vm7273 = vcmp.lt.s32.totalorder %v851, 0
  %v7274 = vand.u32 %v851, 2139095040
  %v7275 = vshrl.u32 %v7274, 23
  %v7276 = vsub.s32 %v7275, 127
  %v7277 = vand.u32 2147483647, %v851
  %v7278 = vand.u32 %v7277, 8388607
  %v7279 = vor.u32 %v7278, 8388608
  %v7280 = vsub.s32 0, %v7279
  %v7281 = vadd.s32 %v7276, 1
  %vm7282 = vcmp.gt.s32.totalorder %v7281, 0
  %v7283 = vsel %vm7282, %v7281, 0
  %v7284 = vshrl.u32 %v7283, 5
  %v7285 = vand.u32 %v7283, 31
  %v7286 = vsub.s32 32, %v7285
  %v7287 = vshrl.u32 683565275, %v7286
  %v7288 = vshll.u32 683565275, %v7285
  %v7289 = vshrl.u32 2475754826, %v7286
  %v7290 = vor.u32 %v7288, %v7289
  %v7291 = vshll.u32 2475754826, %v7285
  %v7292 = vshrl.u32 2131351028, %v7286
  %v7293 = vor.u32 %v7291, %v7292
  %v7294 = vshll.u32 2131351028, %v7285
  %v7295 = vshrl.u32 2102212464, %v7286
  %v7296 = vor.u32 %v7294, %v7295
  %v7297 = vshll.u32 2102212464, %v7285
  %v7298 = vshrl.u32 920167782, %v7286
  %v7299 = vor.u32 %v7297, %v7298
  %v7300 = vshll.u32 920167782, %v7285
  %v7301 = vshrl.u32 1326507024, %v7286
  %v7302 = vor.u32 %v7300, %v7301
  %vm7303 = vcmp.lt.s32.totalorder %v7284, 1
  %vm7304 = vcmp.lt.s32.totalorder %v7284, 2
  %vm7305 = vcmp.lt.s32.totalorder %v7284, 3
  %vm7306 = vcmp.lt.s32.totalorder %v7284, 4
  %v7307 = vsel %vm7303, %v7287, %v7290
  %v7308 = vsel %vm7306, %v7296, 2102212464
  %v7309 = vsel %vm7305, %v7293, %v7308
  %v7310 = vsel %vm7304, %v7307, %v7309
  %v7311 = vsel %vm7303, %v7290, %v7293
  %v7312 = vsel %vm7306, %v7299, 920167782
  %v7313 = vsel %vm7305, %v7296, %v7312
  %v7314 = vsel %vm7304, %v7311, %v7313
  %v7315 = vsel %vm7303, %v7293, %v7296
  %v7316 = vsel %vm7306, %v7302, 1326507024
  %v7317 = vsel %vm7305, %v7299, %v7316
  %v7318 = vsel %vm7304, %v7315, %v7317
  %v7319 = vshll.u32 %v7279, 8
  %v7320 = vmul.u32.u64.compose %v7319, %v7318
  %v7321 = vextract.low.u32 %v7320
  %v7322 = vextract.high.u32 %v7320
  %v7323 = vmul.u32.u64.compose %v7319, %v7314
  %v7324 = vextract.low.u32 %v7323
  %v7325 = vextract.high.u32 %v7323
  %v7326 = vmul.u32 %v7319, %v7310
  %v7327 = vadd.s32 %v7322, %v7324
  %vm7328 = vc.u32 %v7322, %v7324
  %v7329 = vadd.s32 %v7325, 1
  %v7330 = vsel %vm7328, %v7329, %v7325
  %v7331 = vadd.s32 %v7326, %v7330
  %v7332 = vadd.s32 %v7331, 536870912
  %v7333 = vshrl.u32 %v7332, 30
  %v7334 = vshll.u32 %v7333, 30
  %v7335 = vsub.s32 %v7331, %v7334
  %vm7336 = vcmp.lt.s32.totalorder %v7335, 0
  %v7337 = vsub.s32 0, %v7335
  %v7338 = vsel %vm7336, %v7337, %v7335
  %v7339 = vclz %v7338
  %v7340 = vsub.s32 %v7339, 2
  %vm7341 = vcmp.gt.s32.totalorder 0, %v7340
  %v7342 = vsel %vm7341, 0, %v7340
  %v7343 = vsub.s32 32, %v7342
  %v7344 = vshll.u32 %v7335, %v7342
  %v7345 = vshrl.u32 %v7327, %v7343
  %v7346 = vor.u32 %v7344, %v7345
  %v7347 = vsub.s32 4294967266, %v7342
  %v7348 = vadd.s32 %v7347, 127
  %v7349 = vshll.u32 %v7348, 23
  %v7350 = vor.u32 4788187, %v7349
  %v7351 = vand.u32 2147483647, %v7350
  %v7353 = vcvt.s32.f32 %v7346
  %v7354 = vmul.f32 %v7353, %v7351
  %v7355 = vxor.u32 %v7354, 2147483648
  %v7356 = vsel %vm7273, %v7355, %v7354
  %v7357 = vsub.s32 4, %v7333
  %v7358 = vsel %vm7273, %v7357, %v7333
  %v7359 = vsel %vm7272, %v851, %v7356
  %v7360 = vsel %vm7272, 0, %v7358
  %v7361 = vcosq.f32.pop %v7359
  %v7362 = vsinq.f32.pop %v7359
  %vm7363 = vweird.f32 %v851
  %v7364 = vand.u32 %v7360, 3
  %vm7365 = vcmp.lt.s32.totalorder %v7364, 2
  %vm7366 = vcmp.eq.s32.totalorder %v7364, 0
  %v7367 = vxor.u32 %v7362, 2147483648
  %v7368 = vsel %vm7366, %v7361, %v7367
  %vm7369 = vcmp.eq.s32.totalorder %v7364, 2
  %v7370 = vxor.u32 %v7361, 2147483648
  %v7371 = vsel %vm7369, %v7370, %v7362
  %v7372 = vsel %vm7365, %v7368, %v7371
  %v7373 = vsel %vm7363, nan, %v7372
  %v7374 = vand.u32 2147483647, %v852
  %vm7375 = vcmp.le.f32.partialorder %v7374, 0.7853982
  %vm7376 = vcmp.lt.s32.totalorder %v852, 0
  %v7377 = vand.u32 %v852, 2139095040
  %v7378 = vshrl.u32 %v7377, 23
  %v7379 = vsub.s32 %v7378, 127
  %v7380 = vand.u32 2147483647, %v852
  %v7381 = vand.u32 %v7380, 8388607
  %v7382 = vor.u32 %v7381, 8388608
  %v7383 = vsub.s32 0, %v7382
  %v7384 = vadd.s32 %v7379, 1
  %vm7385 = vcmp.gt.s32.totalorder %v7384, 0
  %v7386 = vsel %vm7385, %v7384, 0
  %v7387 = vshrl.u32 %v7386, 5
  %v7388 = vand.u32 %v7386, 31
  %v7389 = vsub.s32 32, %v7388
  %v7390 = vshrl.u32 683565275, %v7389
  %v7391 = vshll.u32 683565275, %v7388
  %v7392 = vshrl.u32 2475754826, %v7389
  %v7393 = vor.u32 %v7391, %v7392
  %v7394 = vshll.u32 2475754826, %v7388
  %v7395 = vshrl.u32 2131351028, %v7389
  %v7396 = vor.u32 %v7394, %v7395
  %v7397 = vshll.u32 2131351028, %v7388
  %v7398 = vshrl.u32 2102212464, %v7389
  %v7399 = vor.u32 %v7397, %v7398
  %v7400 = vshll.u32 2102212464, %v7388
  %v7401 = vshrl.u32 920167782, %v7389
  %v7402 = vor.u32 %v7400, %v7401
  %v7403 = vshll.u32 920167782, %v7388
  %v7404 = vshrl.u32 1326507024, %v7389
  %v7405 = vor.u32 %v7403, %v7404
  %vm7406 = vcmp.lt.s32.totalorder %v7387, 1
  %vm7407 = vcmp.lt.s32.totalorder %v7387, 2
  %vm7408 = vcmp.lt.s32.totalorder %v7387, 3
  %vm7409 = vcmp.lt.s32.totalorder %v7387, 4
  %v7410 = vsel %vm7406, %v7390, %v7393
  %v7411 = vsel %vm7409, %v7399, 2102212464
  %v7412 = vsel %vm7408, %v7396, %v7411
  %v7413 = vsel %vm7407, %v7410, %v7412
  %v7414 = vsel %vm7406, %v7393, %v7396
  %v7415 = vsel %vm7409, %v7402, 920167782
  %v7416 = vsel %vm7408, %v7399, %v7415
  %v7417 = vsel %vm7407, %v7414, %v7416
  %v7418 = vsel %vm7406, %v7396, %v7399
  %v7419 = vsel %vm7409, %v7405, 1326507024
  %v7420 = vsel %vm7408, %v7402, %v7419
  %v7421 = vsel %vm7407, %v7418, %v7420
  %v7422 = vshll.u32 %v7382, 8
  %v7423 = vmul.u32.u64.compose %v7422, %v7421
  %v7424 = vextract.low.u32 %v7423
  %v7425 = vextract.high.u32 %v7423
  %v7426 = vmul.u32.u64.compose %v7422, %v7417
  %v7427 = vextract.low.u32 %v7426
  %v7428 = vextract.high.u32 %v7426
  %v7429 = vmul.u32 %v7422, %v7413
  %v7430 = vadd.s32 %v7425, %v7427
  %vm7431 = vc.u32 %v7425, %v7427
  %v7432 = vadd.s32 %v7428, 1
  %v7433 = vsel %vm7431, %v7432, %v7428
  %v7434 = vadd.s32 %v7429, %v7433
  %v7435 = vadd.s32 %v7434, 536870912
  %v7436 = vshrl.u32 %v7435, 30
  %v7437 = vshll.u32 %v7436, 30
  %v7438 = vsub.s32 %v7434, %v7437
  %vm7439 = vcmp.lt.s32.totalorder %v7438, 0
  %v7440 = vsub.s32 0, %v7438
  %v7441 = vsel %vm7439, %v7440, %v7438
  %v7442 = vclz %v7441
  %v7443 = vsub.s32 %v7442, 2
  %vm7444 = vcmp.gt.s32.totalorder 0, %v7443
  %v7445 = vsel %vm7444, 0, %v7443
  %v7446 = vsub.s32 32, %v7445
  %v7447 = vshll.u32 %v7438, %v7445
  %v7448 = vshrl.u32 %v7430, %v7446
  %v7449 = vor.u32 %v7447, %v7448
  %v7450 = vsub.s32 4294967266, %v7445
  %v7451 = vadd.s32 %v7450, 127
  %v7452 = vshll.u32 %v7451, 23
  %v7453 = vor.u32 4788187, %v7452
  %v7454 = vand.u32 2147483647, %v7453
  %v7456 = vcvt.s32.f32 %v7449
  %v7457 = vmul.f32 %v7456, %v7454
  %v7458 = vxor.u32 %v7457, 2147483648
  %v7459 = vsel %vm7376, %v7458, %v7457
  %v7460 = vsub.s32 4, %v7436
  %v7461 = vsel %vm7376, %v7460, %v7436
  %v7462 = vsel %vm7375, %v852, %v7459
  %v7463 = vsel %vm7375, 0, %v7461
  %v7464 = vcosq.f32.pop %v7462
  %v7465 = vsinq.f32.pop %v7462
  %vm7466 = vweird.f32 %v852
  %v7467 = vand.u32 %v7463, 3
  %vm7468 = vcmp.lt.s32.totalorder %v7467, 2
  %vm7469 = vcmp.eq.s32.totalorder %v7467, 0
  %v7470 = vxor.u32 %v7465, 2147483648
  %v7471 = vsel %vm7469, %v7464, %v7470
  %vm7472 = vcmp.eq.s32.totalorder %v7467, 2
  %v7473 = vxor.u32 %v7464, 2147483648
  %v7474 = vsel %vm7472, %v7473, %v7465
  %v7475 = vsel %vm7468, %v7471, %v7474
  %v7476 = vsel %vm7466, nan, %v7475
  %7509 = vrot.lane.b32.xlu0 %v4283, 4
  %v7510 = vpop.permute.xlu0 %7509
  %7511 = vrot.lane.b32.xlu0 %v4386, 4
  %v7512 = vpop.permute.xlu0 %7511
  %7513 = vrot.lane.b32.xlu0 %v4489, 4
  %v7514 = vpop.permute.xlu0 %7513
  %7515 = vrot.lane.b32.xlu0 %v4592, 4
  %v7516 = vpop.permute.xlu0 %7515
  %7517 = vrot.lane.b32.xlu0 %v4695, 4
  %v7518 = vpop.permute.xlu0 %7517
  %7519 = vrot.lane.b32.xlu0 %v4798, 4
  %v7520 = vpop.permute.xlu0 %7519
  %7521 = vrot.lane.b32.xlu0 %v4901, 4
  %v7522 = vpop.permute.xlu0 %7521
  %7523 = vrot.lane.b32.xlu0 %v5004, 4
  %v7524 = vpop.permute.xlu0 %7523
  %7525 = vrot.lane.b32.xlu0 %v5107, 4
  %v7526 = vpop.permute.xlu0 %7525
  %7527 = vrot.lane.b32.xlu0 %v5210, 4
  %v7528 = vpop.permute.xlu0 %7527
  %7529 = vrot.lane.b32.xlu0 %v5313, 4
  %v7530 = vpop.permute.xlu0 %7529
  %7531 = vrot.lane.b32.xlu0 %v5416, 4
  %v7532 = vpop.permute.xlu0 %7531
  %7533 = vrot.lane.b32.xlu0 %v5519, 4
  %v7534 = vpop.permute.xlu0 %7533
  %7535 = vrot.lane.b32.xlu0 %v5622, 4
  %v7536 = vpop.permute.xlu0 %7535
  %7537 = vrot.lane.b32.xlu0 %v5725, 4
  %v7538 = vpop.permute.xlu0 %7537
  %7539 = vrot.lane.b32.xlu0 %v5828, 4
  %v7540 = vpop.permute.xlu0 %7539
  %7541 = vrot.lane.b32.xlu0 %v5931, 4
  %v7542 = vpop.permute.xlu0 %7541
  %7543 = vrot.lane.b32.xlu0 %v6034, 4
  %v7544 = vpop.permute.xlu0 %7543
  %7545 = vrot.lane.b32.xlu0 %v6137, 4
  %v7546 = vpop.permute.xlu0 %7545
  %7547 = vrot.lane.b32.xlu0 %v6240, 4
  %v7548 = vpop.permute.xlu0 %7547
  %7549 = vrot.lane.b32.xlu0 %v6343, 4
  %v7550 = vpop.permute.xlu0 %7549
  %7551 = vrot.lane.b32.xlu0 %v6446, 4
  %v7552 = vpop.permute.xlu0 %7551
  %7553 = vrot.lane.b32.xlu0 %v6549, 4
  %v7554 = vpop.permute.xlu0 %7553
  %7555 = vrot.lane.b32.xlu0 %v6652, 4
  %v7556 = vpop.permute.xlu0 %7555
  %7557 = vrot.lane.b32.xlu0 %v6755, 4
  %v7558 = vpop.permute.xlu0 %7557
  %7559 = vrot.lane.b32.xlu0 %v6858, 4
  %v7560 = vpop.permute.xlu0 %7559
  %7561 = vrot.lane.b32.xlu0 %v6961, 4
  %v7562 = vpop.permute.xlu0 %7561
  %7563 = vrot.lane.b32.xlu0 %v7064, 4
  %v7564 = vpop.permute.xlu0 %7563
  %7565 = vrot.lane.b32.xlu0 %v7167, 4
  %v7566 = vpop.permute.xlu0 %7565
  %7567 = vrot.lane.b32.xlu0 %v7270, 4
  %v7568 = vpop.permute.xlu0 %7567
  %7569 = vrot.lane.b32.xlu0 %v7373, 4
  %v7570 = vpop.permute.xlu0 %7569
  %7571 = vrot.lane.b32.xlu0 %v7476, 4
  %v7572 = vpop.permute.xlu0 %7571
  %vm7605 = vcmask 31744
  %v7606 = vsel %vm7605, %v956, %v7510
  %v7607 = vsel %vm7605, %v1060, %v7512
  %v7608 = vsel %vm7605, %v1164, %v7514
  %v7609 = vsel %vm7605, %v1268, %v7516
  %v7610 = vsel %vm7605, %v1372, %v7518
  %v7611 = vsel %vm7605, %v1476, %v7520
  %v7612 = vsel %vm7605, %v1580, %v7522
  %v7613 = vsel %vm7605, %v1684, %v7524
  %v7614 = vsel %vm7605, %v1788, %v7526
  %v7615 = vsel %vm7605, %v1892, %v7528
  %v7616 = vsel %vm7605, %v1996, %v7530
  %v7617 = vsel %vm7605, %v2100, %v7532
  %v7618 = vsel %vm7605, %v2204, %v7534
  %v7619 = vsel %vm7605, %v2308, %v7536
  %v7620 = vsel %vm7605, %v2412, %v7538
  %v7621 = vsel %vm7605, %v2516, %v7540
  %v7622 = vsel %vm7605, %v2620, %v7542
  %v7623 = vsel %vm7605, %v2724, %v7544
  %v7624 = vsel %vm7605, %v2828, %v7546
  %v7625 = vsel %vm7605, %v2932, %v7548
  %v7626 = vsel %vm7605, %v3036, %v7550
  %v7627 = vsel %vm7605, %v3140, %v7552
  %v7628 = vsel %vm7605, %v3244, %v7554
  %v7629 = vsel %vm7605, %v3348, %v7556
  %v7630 = vsel %vm7605, %v3452, %v7558
  %v7631 = vsel %vm7605, %v3556, %v7560
  %v7632 = vsel %vm7605, %v3660, %v7562
  %v7633 = vsel %vm7605, %v3764, %v7564
  %v7634 = vsel %vm7605, %v3868, %v7566
  %v7635 = vsel %vm7605, %v3972, %v7568
  %v7636 = vsel %vm7605, %v4076, %v7570
  %v7637 = vsel %vm7605, %v4180, %v7572
  %vm7638 = vcmask 64512
  %v7639 = vsel %vm7638, %v7606, %v283
  %v7640 = vsel %vm7638, %v7607, %v286
  %v7641 = vsel %vm7638, %v7608, %v289
  %v7642 = vsel %vm7638, %v7609, %v292
  %v7643 = vsel %vm7638, %v7610, %v295
  %v7644 = vsel %vm7638, %v7611, %v298
  %v7645 = vsel %vm7638, %v7612, %v301
  %v7646 = vsel %vm7638, %v7613, %v304
  %v7647 = vsel %vm7638, %v7614, %v307
  %v7648 = vsel %vm7638, %v7615, %v310
  %v7649 = vsel %vm7638, %v7616, %v313
  %v7650 = vsel %vm7638, %v7617, %v316
  %v7651 = vsel %vm7638, %v7618, %v319
  %v7652 = vsel %vm7638, %v7619, %v322
  %v7653 = vsel %vm7638, %v7620, %v325
  %v7654 = vsel %vm7638, %v7621, %v328
  %v7655 = vsel %vm7638, %v7622, %v331
  %v7656 = vsel %vm7638, %v7623, %v334
  %v7657 = vsel %vm7638, %v7624, %v337
  %v7658 = vsel %vm7638, %v7625, %v340
  %v7659 = vsel %vm7638, %v7626, %v343
  %v7660 = vsel %vm7638, %v7627, %v346
  %v7661 = vsel %vm7638, %v7628, %v349
  %v7662 = vsel %vm7638, %v7629, %v352
  %v7663 = vsel %vm7638, %v7630, %v355
  %v7664 = vsel %vm7638, %v7631, %v358
  %v7665 = vsel %vm7638, %v7632, %v361
  %v7666 = vsel %vm7638, %v7633, %v364
  %v7667 = vsel %vm7638, %v7634, %v367
  %v7668 = vsel %vm7638, %v7635, %v370
  %v7669 = vsel %vm7638, %v7636, %v373
  %v7670 = vsel %vm7638, %v7637, %v376
  %vm7671 = vcmask 72704
  %v7672 = vsel %vm7671, %v7639, 0.0
  %v7673 = vsel %vm7671, %v7640, 0.0
  %v7674 = vsel %vm7671, %v7641, 0.0
  %v7675 = vsel %vm7671, %v7642, 0.0
  %v7676 = vsel %vm7671, %v7643, 0.0
  %v7677 = vsel %vm7671, %v7644, 0.0
  %v7678 = vsel %vm7671, %v7645, 0.0
  %v7679 = vsel %vm7671, %v7646, 0.0
  %v7680 = vsel %vm7671, %v7647, 0.0
  %v7681 = vsel %vm7671, %v7648, 0.0
  %v7682 = vsel %vm7671, %v7649, 0.0
  %v7683 = vsel %vm7671, %v7650, 0.0
  %v7684 = vsel %vm7671, %v7651, 0.0
  %v7685 = vsel %vm7671, %v7652, 0.0
  %v7686 = vsel %vm7671, %v7653, 0.0
  %v7687 = vsel %vm7671, %v7654, 0.0
  %v7688 = vsel %vm7671, %v7655, 0.0
  %v7689 = vsel %vm7671, %v7656, 0.0
  %v7690 = vsel %vm7671, %v7657, 0.0
  %v7691 = vsel %vm7671, %v7658, 0.0
  %v7692 = vsel %vm7671, %v7659, 0.0
  %v7693 = vsel %vm7671, %v7660, 0.0
  %v7694 = vsel %vm7671, %v7661, 0.0
  %v7695 = vsel %vm7671, %v7662, 0.0
  %v7696 = vsel %vm7671, %v7663, 0.0
  %v7697 = vsel %vm7671, %v7664, 0.0
  %v7698 = vsel %vm7671, %v7665, 0.0
  %v7699 = vsel %vm7671, %v7666, 0.0
  %v7700 = vsel %vm7671, %v7667, 0.0
  %v7701 = vsel %vm7671, %v7668, 0.0
  %v7702 = vsel %vm7671, %v7669, 0.0
  %v7703 = vsel %vm7671, %v7670, 0.0
  %v7704 = vpack.c.bf16 %v7673, %v7672
  %v7705 = vpack.c.bf16 %v7675, %v7674
  %v7706 = vpack.c.bf16 %v7677, %v7676
  %v7707 = vpack.c.bf16 %v7679, %v7678
  %v7708 = vpack.c.bf16 %v7681, %v7680
  %v7709 = vpack.c.bf16 %v7683, %v7682
  %v7710 = vpack.c.bf16 %v7685, %v7684
  %v7711 = vpack.c.bf16 %v7687, %v7686
  %v7712 = vpack.c.bf16 %v7689, %v7688
  %v7713 = vpack.c.bf16 %v7691, %v7690
  %v7714 = vpack.c.bf16 %v7693, %v7692
  %v7715 = vpack.c.bf16 %v7695, %v7694
  %v7716 = vpack.c.bf16 %v7697, %v7696
  %v7717 = vpack.c.bf16 %v7699, %v7698
  %v7718 = vpack.c.bf16 %v7701, %v7700
  %v7719 = vpack.c.bf16 %v7703, %v7702
  %v7720 = vld [vmem:[%s4 + $0x20] sm:$0xff]
  %v7721 = vld [vmem:[%s4 + $0x28] sm:$0xff]
  %v7724 = vunpack.c.l.b16 %v7720
  %v7725 = vunpack.c.h.b16 %v7720
  %v7726 = vunpack.c.l.b16 %v7721
  %v7727 = vunpack.c.h.b16 %v7721
  %v7728 = vpack.c.b16 %v7726, %v7724
  %v7729 = vpack.c.b16 %v7727, %v7725
  %vm7732 = vcmask 130048
  %v7734 = vsel %vm7732, %v7704, 0
  %v7737 = vsel %vm7732, %v7705, 0
  %v7740 = vsel %vm7732, %v7706, 0
  %v7743 = vsel %vm7732, %v7707, 0
  %v7746 = vsel %vm7732, %v7708, 0
  %v7749 = vsel %vm7732, %v7709, 0
  %v7752 = vsel %vm7732, %v7710, 0
  %v7755 = vsel %vm7732, %v7711, 0
  %v7758 = vsel %vm7732, %v7712, 0
  %v7761 = vsel %vm7732, %v7713, 0
  %v7764 = vsel %vm7732, %v7714, 0
  %v7767 = vsel %vm7732, %v7715, 0
  %v7770 = vsel %vm7732, %v7716, 0
  %v7773 = vsel %vm7732, %v7717, 0
  %v7776 = vsel %vm7732, %v7718, 0
  %v7779 = vsel %vm7732, %v7719, 0
  %7781 = vmatprep.subr.bf16.mxu0 %v7729
  %7782 = vmatpush1.bf16.msra.mxu0 %v7728
  %7783 = vmatprep.subr.bf16.mxu0 0
  %7784 = vmatpush1.bf16.msra.mxu0 0
  %7785 = vmatprep.subr.bf16.mxu0 0
  %7786 = vmatpush1.bf16.msra.mxu0 0
  %7787 = vmatprep.subr.bf16.mxu0 0
  %7788 = vmatpush1.bf16.msra.mxu0 0
  %7789 = vmatprep.subr.bf16.mxu0 0
  %7790 = vmatpush1.bf16.msra.mxu0 0
  %7791 = vmatprep.subr.bf16.mxu0 0
  %7792 = vmatpush1.bf16.msra.mxu0 0
  %7793 = vmatprep.subr.bf16.mxu0 0
  %7794 = vmatpush1.bf16.msra.mxu0 0
  %7795 = vmatprep.subr.bf16.mxu0 0
  %7796 = vmatpush1.bf16.msra.mxu0 0
  %7797 = vmatprep.subr.bf16.mxu0 0
  %7798 = vmatpush1.bf16.msra.mxu0 0
  %7799 = vmatprep.subr.bf16.mxu0 0
  %7800 = vmatpush1.bf16.msra.mxu0 0
  %7801 = vmatprep.subr.bf16.mxu0 0
  %7802 = vmatpush1.bf16.msra.mxu0 0
  %7803 = vmatprep.subr.bf16.mxu0 0
  %7804 = vmatpush1.bf16.msra.mxu0 0
  %7805 = vmatprep.subr.bf16.mxu0 0
  %7806 = vmatpush1.bf16.msra.mxu0 0
  %7807 = vmatprep.subr.bf16.mxu0 0
  %7808 = vmatpush1.bf16.msra.mxu0 0
  %7809 = vmatprep.subr.bf16.mxu0 0
  %7810 = vmatpush1.bf16.msra.mxu0 0
  %7811 = vmatprep.subr.bf16.mxu0 0
  %7812 = vmatpush1.bf16.msra.mxu0 0
  %7813 = vmatprep.mubr.bf16.mxu0 0
  %7814 = vmatmul.mubr.bf16.gmra.mrb[0].mxu0 %v7734
  %v7815 = vpop.f32.mrb[0].mxu0
  %v7816 = vadd.f32 0.0, %v7815
  %v7817 = vpop.f32.mrb[0].mxu0
  %v7818 = vadd.f32 0.0, %v7817
  %v7819 = vpop.f32.mrb[0].mxu0
  %v7820 = vadd.f32 0.0, %v7819
  %v7821 = vpop.f32.mrb[0].mxu0
  %v7822 = vadd.f32 0.0, %v7821
  %7823 = vmatprep.mubr.bf16.mxu0 0
  %7824 = vmatmul.mubr.bf16.gmra.mrb[0].mxu0 %v7737
  %v7825 = vpop.f32.mrb[0].mxu0
  %v7826 = vadd.f32 0.0, %v7825
  %v7827 = vpop.f32.mrb[0].mxu0
  %v7828 = vadd.f32 0.0, %v7827
  %v7829 = vpop.f32.mrb[0].mxu0
  %v7830 = vadd.f32 0.0, %v7829
  %v7831 = vpop.f32.mrb[0].mxu0
  %v7832 = vadd.f32 0.0, %v7831
  %7833 = vmatprep.mubr.bf16.mxu0 0
  %7834 = vmatmul.mubr.bf16.gmra.mrb[0].mxu0 %v7740
  %v7835 = vpop.f32.mrb[0].mxu0
  %v7836 = vadd.f32 0.0, %v7835
  %v7837 = vpop.f32.mrb[0].mxu0
  %v7838 = vadd.f32 0.0, %v7837
  %v7839 = vpop.f32.mrb[0].mxu0
  %v7840 = vadd.f32 0.0, %v7839
  %v7841 = vpop.f32.mrb[0].mxu0
  %v7842 = vadd.f32 0.0, %v7841
  %7843 = vmatprep.mubr.bf16.mxu0 0
  %7844 = vmatmul.mubr.bf16.gmra.mrb[0].mxu0 %v7743
  %v7845 = vpop.f32.mrb[0].mxu0
  %v7846 = vadd.f32 0.0, %v7845
  %v7847 = vpop.f32.mrb[0].mxu0
  %v7848 = vadd.f32 0.0, %v7847
  %v7849 = vpop.f32.mrb[0].mxu0
  %v7850 = vadd.f32 0.0, %v7849
  %v7851 = vpop.f32.mrb[0].mxu0
  %v7852 = vadd.f32 0.0, %v7851
  %7853 = vmatprep.mubr.bf16.mxu0 0
  %7854 = vmatmul.mubr.bf16.gmra.mrb[0].mxu0 %v7746
  %v7855 = vpop.f32.mrb[0].mxu0
  %v7856 = vadd.f32 0.0, %v7855
  %v7857 = vpop.f32.mrb[0].mxu0
  %v7858 = vadd.f32 0.0, %v7857
  %v7859 = vpop.f32.mrb[0].mxu0
  %v7860 = vadd.f32 0.0, %v7859
  %v7861 = vpop.f32.mrb[0].mxu0
  %v7862 = vadd.f32 0.0, %v7861
  %7863 = vmatprep.mubr.bf16.mxu0 0
  %7864 = vmatmul.mubr.bf16.gmra.mrb[0].mxu0 %v7749
  %v7865 = vpop.f32.mrb[0].mxu0
  %v7866 = vadd.f32 0.0, %v7865
  %v7867 = vpop.f32.mrb[0].mxu0
  %v7868 = vadd.f32 0.0, %v7867
  %v7869 = vpop.f32.mrb[0].mxu0
  %v7870 = vadd.f32 0.0, %v7869
  %v7871 = vpop.f32.mrb[0].mxu0
  %v7872 = vadd.f32 0.0, %v7871
  %7873 = vmatprep.mubr.bf16.mxu0 0
  %7874 = vmatmul.mubr.bf16.gmra.mrb[0].mxu0 %v7752
  %v7875 = vpop.f32.mrb[0].mxu0
  %v7876 = vadd.f32 0.0, %v7875
  %v7877 = vpop.f32.mrb[0].mxu0
  %v7878 = vadd.f32 0.0, %v7877
  %v7879 = vpop.f32.mrb[0].mxu0
  %v7880 = vadd.f32 0.0, %v7879
  %v7881 = vpop.f32.mrb[0].mxu0
  %v7882 = vadd.f32 0.0, %v7881
  %7883 = vmatprep.mubr.bf16.mxu0 0
  %7884 = vmatmul.mubr.bf16.gmra.mrb[0].mxu0 %v7755
  %v7885 = vpop.f32.mrb[0].mxu0
  %v7886 = vadd.f32 0.0, %v7885
  %v7887 = vpop.f32.mrb[0].mxu0
  %v7888 = vadd.f32 0.0, %v7887
  %v7889 = vpop.f32.mrb[0].mxu0
  %v7890 = vadd.f32 0.0, %v7889
  %v7891 = vpop.f32.mrb[0].mxu0
  %v7892 = vadd.f32 0.0, %v7891
  %7893 = vmatprep.mubr.bf16.mxu0 0
  %7894 = vmatmul.mubr.bf16.gmra.mrb[0].mxu0 %v7758
  %v7895 = vpop.f32.mrb[0].mxu0
  %v7896 = vadd.f32 0.0, %v7895
  %v7897 = vpop.f32.mrb[0].mxu0
  %v7898 = vadd.f32 0.0, %v7897
  %v7899 = vpop.f32.mrb[0].mxu0
  %v7900 = vadd.f32 0.0, %v7899
  %v7901 = vpop.f32.mrb[0].mxu0
  %v7902 = vadd.f32 0.0, %v7901
  %7903 = vmatprep.mubr.bf16.mxu0 0
  %7904 = vmatmul.mubr.bf16.gmra.mrb[0].mxu0 %v7761
  %v7905 = vpop.f32.mrb[0].mxu0
  %v7906 = vadd.f32 0.0, %v7905
  %v7907 = vpop.f32.mrb[0].mxu0
  %v7908 = vadd.f32 0.0, %v7907
  %v7909 = vpop.f32.mrb[0].mxu0
  %v7910 = vadd.f32 0.0, %v7909
  %v7911 = vpop.f32.mrb[0].mxu0
  %v7912 = vadd.f32 0.0, %v7911
  %7913 = vmatprep.mubr.bf16.mxu0 0
  %7914 = vmatmul.mubr.bf16.gmra.mrb[0].mxu0 %v7764
  %v7915 = vpop.f32.mrb[0].mxu0
  %v7916 = vadd.f32 0.0, %v7915
  %v7917 = vpop.f32.mrb[0].mxu0
  %v7918 = vadd.f32 0.0, %v7917
  %v7919 = vpop.f32.mrb[0].mxu0
  %v7920 = vadd.f32 0.0, %v7919
  %v7921 = vpop.f32.mrb[0].mxu0
  %v7922 = vadd.f32 0.0, %v7921
  %7923 = vmatprep.mubr.bf16.mxu0 0
  %7924 = vmatmul.mubr.bf16.gmra.mrb[0].mxu0 %v7767
  %v7925 = vpop.f32.mrb[0].mxu0
  %v7926 = vadd.f32 0.0, %v7925
  %v7927 = vpop.f32.mrb[0].mxu0
  %v7928 = vadd.f32 0.0, %v7927
  %v7929 = vpop.f32.mrb[0].mxu0
  %v7930 = vadd.f32 0.0, %v7929
  %v7931 = vpop.f32.mrb[0].mxu0
  %v7932 = vadd.f32 0.0, %v7931
  %7933 = vmatprep.mubr.bf16.mxu0 0
  %7934 = vmatmul.mubr.bf16.gmra.mrb[0].mxu0 %v7770
  %v7935 = vpop.f32.mrb[0].mxu0
  %v7936 = vadd.f32 0.0, %v7935
  %v7937 = vpop.f32.mrb[0].mxu0
  %v7938 = vadd.f32 0.0, %v7937
  %v7939 = vpop.f32.mrb[0].mxu0
  %v7940 = vadd.f32 0.0, %v7939
  %v7941 = vpop.f32.mrb[0].mxu0
  %v7942 = vadd.f32 0.0, %v7941
  %7943 = vmatprep.mubr.bf16.mxu0 0
  %7944 = vmatmul.mubr.bf16.gmra.mrb[0].mxu0 %v7773
  %v7945 = vpop.f32.mrb[0].mxu0
  %v7946 = vadd.f32 0.0, %v7945
  %v7947 = vpop.f32.mrb[0].mxu0
  %v7948 = vadd.f32 0.0, %v7947
  %v7949 = vpop.f32.mrb[0].mxu0
  %v7950 = vadd.f32 0.0, %v7949
  %v7951 = vpop.f32.mrb[0].mxu0
  %v7952 = vadd.f32 0.0, %v7951
  %7953 = vmatprep.mubr.bf16.mxu0 0
  %7954 = vmatmul.mubr.bf16.gmra.mrb[0].mxu0 %v7776
  %v7955 = vpop.f32.mrb[0].mxu0
  %v7956 = vadd.f32 0.0, %v7955
  %v7957 = vpop.f32.mrb[0].mxu0
  %v7958 = vadd.f32 0.0, %v7957
  %v7959 = vpop.f32.mrb[0].mxu0
  %v7960 = vadd.f32 0.0, %v7959
  %v7961 = vpop.f32.mrb[0].mxu0
  %v7962 = vadd.f32 0.0, %v7961
  %7963 = vmatprep.mubr.bf16.mxu0 0
  %7964 = vmatmul.mubr.bf16.gmra.mrb[0].mxu0 %v7779
  %v7965 = vpop.f32.mrb[0].mxu0
  %v7966 = vadd.f32 0.0, %v7965
  %v7967 = vpop.f32.mrb[0].mxu0
  %v7968 = vadd.f32 0.0, %v7967
  %v7969 = vpop.f32.mrb[0].mxu0
  %v7970 = vadd.f32 0.0, %v7969
  %v7971 = vpop.f32.mrb[0].mxu0
  %v7972 = vadd.f32 0.0, %v7971
  %7973 = vdwg.mxu0
  %v7974 = vpack.c.bf16 %v32, %v31
  %v7975 = vld [vmem:[%s4] sm:$0xff]
  %v7976 = vld [vmem:[%s4 + $0x8] sm:$0xff]
  %v7977 = vld [vmem:[%s4 + $0x10] sm:$0xff]
  %v7978 = vld [vmem:[%s4 + $0x18] sm:$0xff]
  %v7983 = vunpack.c.l.b16 %v7975
  %v7984 = vunpack.c.h.b16 %v7975
  %v7985 = vunpack.c.l.b16 %v7976
  %v7986 = vunpack.c.h.b16 %v7976
  %v7987 = vunpack.c.l.b16 %v7977
  %v7988 = vunpack.c.h.b16 %v7977
  %v7989 = vunpack.c.l.b16 %v7978
  %v7990 = vunpack.c.h.b16 %v7978
  %v7991 = vpack.c.b16 %v7985, %v7983
  %v7992 = vpack.c.b16 %v7986, %v7984
  %v7993 = vpack.c.b16 %v7989, %v7987
  %v7994 = vpack.c.b16 %v7990, %v7988
  %vm7999 = vcmask 261120
  %v8001 = vsel %vm7999, %v7974, 0
  %8003 = vmatprep.subr.bf16.mxu0 %v7992
  %8004 = vmatpush1.bf16.msra.mxu0 %v7991
  %8005 = vmatprep.subr.bf16.mxu0 %v7994
  %8006 = vmatpush1.bf16.msra.mxu0 %v7993
  %8007 = vmatprep.subr.bf16.mxu0 0
  %8008 = vmatpush1.bf16.msra.mxu0 0
  %8009 = vmatprep.subr.bf16.mxu0 0
  %8010 = vmatpush1.bf16.msra.mxu0 0
  %8011 = vmatprep.subr.bf16.mxu0 0
  %8012 = vmatpush1.bf16.msra.mxu0 0
  %8013 = vmatprep.subr.bf16.mxu0 0
  %8014 = vmatpush1.bf16.msra.mxu0 0
  %8015 = vmatprep.subr.bf16.mxu0 0
  %8016 = vmatpush1.bf16.msra.mxu0 0
  %8017 = vmatprep.subr.bf16.mxu0 0
  %8018 = vmatpush1.bf16.msra.mxu0 0
  %8019 = vmatprep.subr.bf16.mxu0 0
  %8020 = vmatpush1.bf16.msra.mxu0 0
  %8021 = vmatprep.subr.bf16.mxu0 0
  %8022 = vmatpush1.bf16.msra.mxu0 0
  %8023 = vmatprep.subr.bf16.mxu0 0
  %8024 = vmatpush1.bf16.msra.mxu0 0
  %8025 = vmatprep.subr.bf16.mxu0 0
  %8026 = vmatpush1.bf16.msra.mxu0 0
  %8027 = vmatprep.subr.bf16.mxu0 0
  %8028 = vmatpush1.bf16.msra.mxu0 0
  %8029 = vmatprep.subr.bf16.mxu0 0
  %8030 = vmatpush1.bf16.msra.mxu0 0
  %8031 = vmatprep.subr.bf16.mxu0 0
  %8032 = vmatpush1.bf16.msra.mxu0 0
  %8033 = vmatprep.subr.bf16.mxu0 0
  %8034 = vmatpush1.bf16.msra.mxu0 0
  %8035 = vmatprep.mubr.bf16.mxu0 0
  %8036 = vmatmul.mubr.bf16.gmra.mrb[0].mxu0 %v8001
  %v8037 = vpop.f32.mrb[0].mxu0
  %v8038 = vadd.f32 0.0, %v8037
  %v8039 = vpop.f32.mrb[0].mxu0
  %v8040 = vadd.f32 0.0, %v8039
  %v8041 = vpop.f32.mrb[0].mxu0
  %v8042 = vadd.f32 0.0, %v8041
  %v8043 = vpop.f32.mrb[0].mxu0
  %v8044 = vadd.f32 0.0, %v8043
  %8045 = vdwg.mxu0
  %v8050 = vcombine.low %v8038, %v8040
  %v8051 = vcombine.high %v8038, %v8040
  %v8053 = vunpack.c.l.s4 1966171168
  %v8054 = vunpack.c.0.s8 %v8053
  %v8055 = vlaneseq
  %v8056 = vshrl.u32 %v8055, 7
  %v8057 = vsub.s32 %v8054, %v8056
  %v8058 = vrot.slane %v8050, %v8057
  %v8060 = vunpack.c.l.s4 1966171168
  %v8061 = vunpack.c.0.s8 %v8060
  %v8062 = vlaneseq
  %v8063 = vshrl.u32 %v8062, 7
  %v8064 = vsub.s32 %v8061, %v8063
  %v8065 = vrot.slane %v8051, %v8064
  %v8066 = vcombine.high %v8058, %v8058
  %v8067 = vcombine.high %v8065, %v8065
  %v8069 = vunpack.c.l.s4 1966171168
  %v8070 = vunpack.c.0.s8 %v8069
  %v8071 = vlaneseq
  %v8072 = vshrl.u32 %v8071, 7
  %v8073 = vsub.s32 %v8070, %v8072
  %v8074 = vrot.slane %v8058, %v8073
  %v8076 = vunpack.c.l.s4 1966171168
  %v8077 = vunpack.c.0.s8 %v8076
  %v8078 = vlaneseq
  %v8079 = vshrl.u32 %v8078, 7
  %v8080 = vsub.s32 %v8077, %v8079
  %v8081 = vrot.slane %v8065, %v8080
  %v8083 = vunpack.c.l.s4 1966171168
  %v8084 = vunpack.c.0.s8 %v8083
  %v8085 = vlaneseq
  %v8086 = vshrl.u32 %v8085, 7
  %v8087 = vsub.s32 %v8084, %v8086
  %v8088 = vrot.slane %v8066, %v8087
  %v8090 = vunpack.c.l.s4 1966171168
  %v8091 = vunpack.c.0.s8 %v8090
  %v8092 = vlaneseq
  %v8093 = vshrl.u32 %v8092, 7
  %v8094 = vsub.s32 %v8091, %v8093
  %v8095 = vrot.slane %v8067, %v8094
  %v8096 = vcombine.high %v8074, %v8074
  %v8097 = vcombine.high %v8081, %v8081
  %v8098 = vcombine.high %v8088, %v8088
  %v8099 = vcombine.high %v8095, %v8095
  %v8100 = vcombine.low %v8042, %v8044
  %v8101 = vcombine.high %v8042, %v8044
  %v8103 = vunpack.c.l.s4 1966171168
  %v8104 = vunpack.c.0.s8 %v8103
  %v8105 = vlaneseq
  %v8106 = vshrl.u32 %v8105, 7
  %v8107 = vsub.s32 %v8104, %v8106
  %v8108 = vrot.slane %v8100, %v8107
  %v8110 = vunpack.c.l.s4 1966171168
  %v8111 = vunpack.c.0.s8 %v8110
  %v8112 = vlaneseq
  %v8113 = vshrl.u32 %v8112, 7
  %v8114 = vsub.s32 %v8111, %v8113
  %v8115 = vrot.slane %v8101, %v8114
  %v8116 = vcombine.high %v8108, %v8108
  %v8117 = vcombine.high %v8115, %v8115
  %v8119 = vunpack.c.l.s4 1966171168
  %v8120 = vunpack.c.0.s8 %v8119
  %v8121 = vlaneseq
  %v8122 = vshrl.u32 %v8121, 7
  %v8123 = vsub.s32 %v8120, %v8122
  %v8124 = vrot.slane %v8108, %v8123
  %v8126 = vunpack.c.l.s4 1966171168
  %v8127 = vunpack.c.0.s8 %v8126
  %v8128 = vlaneseq
  %v8129 = vshrl.u32 %v8128, 7
  %v8130 = vsub.s32 %v8127, %v8129
  %v8131 = vrot.slane %v8115, %v8130
  %v8133 = vunpack.c.l.s4 1966171168
  %v8134 = vunpack.c.0.s8 %v8133
  %v8135 = vlaneseq
  %v8136 = vshrl.u32 %v8135, 7
  %v8137 = vsub.s32 %v8134, %v8136
  %v8138 = vrot.slane %v8116, %v8137
  %v8140 = vunpack.c.l.s4 1966171168
  %v8141 = vunpack.c.0.s8 %v8140
  %v8142 = vlaneseq
  %v8143 = vshrl.u32 %v8142, 7
  %v8144 = vsub.s32 %v8141, %v8143
  %v8145 = vrot.slane %v8117, %v8144
  %v8146 = vcombine.high %v8124, %v8124
  %v8147 = vcombine.high %v8131, %v8131
  %v8148 = vcombine.high %v8138, %v8138
  %v8149 = vcombine.high %v8145, %v8145
  %v8150 = vlaneseq
  %v8151 = vshrl.u32 %v8150, 7
  %v8152 = vsub.s32 0, %v8151
  %v8153 = vrot.slane %v8074, %v8152
  %v8154 = vlaneseq
  %v8155 = vshrl.u32 %v8154, 7
  %v8156 = vsub.s32 1, %v8155
  %v8157 = vrot.slane %v8074, %v8156
  %v8158 = vlaneseq
  %v8159 = vshrl.u32 %v8158, 7
  %v8160 = vsub.s32 0, %v8159
  %v8161 = vrot.slane %v8088, %v8160
  %v8162 = vlaneseq
  %v8163 = vshrl.u32 %v8162, 7
  %v8164 = vsub.s32 1, %v8163
  %v8165 = vrot.slane %v8088, %v8164
  %v8166 = vlaneseq
  %v8167 = vshrl.u32 %v8166, 7
  %v8168 = vsub.s32 0, %v8167
  %v8169 = vrot.slane %v8096, %v8168
  %v8170 = vlaneseq
  %v8171 = vshrl.u32 %v8170, 7
  %v8172 = vsub.s32 1, %v8171
  %v8173 = vrot.slane %v8096, %v8172
  %v8174 = vlaneseq
  %v8175 = vshrl.u32 %v8174, 7
  %v8176 = vsub.s32 0, %v8175
  %v8177 = vrot.slane %v8098, %v8176
  %v8178 = vlaneseq
  %v8179 = vshrl.u32 %v8178, 7
  %v8180 = vsub.s32 1, %v8179
  %v8181 = vrot.slane %v8098, %v8180
  %v8182 = vlaneseq
  %v8183 = vshrl.u32 %v8182, 7
  %v8184 = vsub.s32 0, %v8183
  %v8185 = vrot.slane %v8081, %v8184
  %v8186 = vlaneseq
  %v8187 = vshrl.u32 %v8186, 7
  %v8188 = vsub.s32 1, %v8187
  %v8189 = vrot.slane %v8081, %v8188
  %v8190 = vlaneseq
  %v8191 = vshrl.u32 %v8190, 7
  %v8192 = vsub.s32 0, %v8191
  %v8193 = vrot.slane %v8095, %v8192
  %v8194 = vlaneseq
  %v8195 = vshrl.u32 %v8194, 7
  %v8196 = vsub.s32 1, %v8195
  %v8197 = vrot.slane %v8095, %v8196
  %v8198 = vlaneseq
  %v8199 = vshrl.u32 %v8198, 7
  %v8200 = vsub.s32 0, %v8199
  %v8201 = vrot.slane %v8097, %v8200
  %v8202 = vlaneseq
  %v8203 = vshrl.u32 %v8202, 7
  %v8204 = vsub.s32 1, %v8203
  %v8205 = vrot.slane %v8097, %v8204
  %v8206 = vlaneseq
  %v8207 = vshrl.u32 %v8206, 7
  %v8208 = vsub.s32 0, %v8207
  %v8209 = vrot.slane %v8099, %v8208
  %v8210 = vlaneseq
  %v8211 = vshrl.u32 %v8210, 7
  %v8212 = vsub.s32 1, %v8211
  %v8213 = vrot.slane %v8099, %v8212
  %v8214 = vlaneseq
  %v8215 = vshrl.u32 %v8214, 7
  %v8216 = vsub.s32 0, %v8215
  %v8217 = vrot.slane %v8124, %v8216
  %v8218 = vlaneseq
  %v8219 = vshrl.u32 %v8218, 7
  %v8220 = vsub.s32 1, %v8219
  %v8221 = vrot.slane %v8124, %v8220
  %v8222 = vlaneseq
  %v8223 = vshrl.u32 %v8222, 7
  %v8224 = vsub.s32 0, %v8223
  %v8225 = vrot.slane %v8138, %v8224
  %v8226 = vlaneseq
  %v8227 = vshrl.u32 %v8226, 7
  %v8228 = vsub.s32 1, %v8227
  %v8229 = vrot.slane %v8138, %v8228
  %v8230 = vlaneseq
  %v8231 = vshrl.u32 %v8230, 7
  %v8232 = vsub.s32 0, %v8231
  %v8233 = vrot.slane %v8146, %v8232
  %v8234 = vlaneseq
  %v8235 = vshrl.u32 %v8234, 7
  %v8236 = vsub.s32 1, %v8235
  %v8237 = vrot.slane %v8146, %v8236
  %v8238 = vlaneseq
  %v8239 = vshrl.u32 %v8238, 7
  %v8240 = vsub.s32 0, %v8239
  %v8241 = vrot.slane %v8148, %v8240
  %v8242 = vlaneseq
  %v8243 = vshrl.u32 %v8242, 7
  %v8244 = vsub.s32 1, %v8243
  %v8245 = vrot.slane %v8148, %v8244
  %v8246 = vlaneseq
  %v8247 = vshrl.u32 %v8246, 7
  %v8248 = vsub.s32 0, %v8247
  %v8249 = vrot.slane %v8131, %v8248
  %v8250 = vlaneseq
  %v8251 = vshrl.u32 %v8250, 7
  %v8252 = vsub.s32 1, %v8251
  %v8253 = vrot.slane %v8131, %v8252
  %v8254 = vlaneseq
  %v8255 = vshrl.u32 %v8254, 7
  %v8256 = vsub.s32 0, %v8255
  %v8257 = vrot.slane %v8145, %v8256
  %v8258 = vlaneseq
  %v8259 = vshrl.u32 %v8258, 7
  %v8260 = vsub.s32 1, %v8259
  %v8261 = vrot.slane %v8145, %v8260
  %v8262 = vlaneseq
  %v8263 = vshrl.u32 %v8262, 7
  %v8264 = vsub.s32 0, %v8263
  %v8265 = vrot.slane %v8147, %v8264
  %v8266 = vlaneseq
  %v8267 = vshrl.u32 %v8266, 7
  %v8268 = vsub.s32 1, %v8267
  %v8269 = vrot.slane %v8147, %v8268
  %v8270 = vlaneseq
  %v8271 = vshrl.u32 %v8270, 7
  %v8272 = vsub.s32 0, %v8271
  %v8273 = vrot.slane %v8149, %v8272
  %v8274 = vlaneseq
  %v8275 = vshrl.u32 %v8274, 7
  %v8276 = vsub.s32 1, %v8275
  %v8277 = vrot.slane %v8149, %v8276
  %v8310 = vadd.f32 %v7816, %v8153
  %v8311 = vadd.f32 %v7818, %v8157
  %v8312 = vadd.f32 %v7820, %v8153
  %v8313 = vadd.f32 %v7822, %v8157
  %v8314 = vadd.f32 %v7826, %v8161
  %v8315 = vadd.f32 %v7828, %v8165
  %v8316 = vadd.f32 %v7830, %v8161
  %v8317 = vadd.f32 %v7832, %v8165
  %v8318 = vadd.f32 %v7836, %v8169
  %v8319 = vadd.f32 %v7838, %v8173
  %v8320 = vadd.f32 %v7840, %v8169
  %v8321 = vadd.f32 %v7842, %v8173
  %v8322 = vadd.f32 %v7846, %v8177
  %v8323 = vadd.f32 %v7848, %v8181
  %v8324 = vadd.f32 %v7850, %v8177
  %v8325 = vadd.f32 %v7852, %v8181
  %v8326 = vadd.f32 %v7856, %v8185
  %v8327 = vadd.f32 %v7858, %v8189
  %v8328 = vadd.f32 %v7860, %v8185
  %v8329 = vadd.f32 %v7862, %v8189
  %v8330 = vadd.f32 %v7866, %v8193
  %v8331 = vadd.f32 %v7868, %v8197
  %v8332 = vadd.f32 %v7870, %v8193
  %v8333 = vadd.f32 %v7872, %v8197
  %v8334 = vadd.f32 %v7876, %v8201
  %v8335 = vadd.f32 %v7878, %v8205
  %v8336 = vadd.f32 %v7880, %v8201
  %v8337 = vadd.f32 %v7882, %v8205
  %v8338 = vadd.f32 %v7886, %v8209
  %v8339 = vadd.f32 %v7888, %v8213
  %v8340 = vadd.f32 %v7890, %v8209
  %v8341 = vadd.f32 %v7892, %v8213
  %v8342 = vadd.f32 %v7896, %v8217
  %v8343 = vadd.f32 %v7898, %v8221
  %v8344 = vadd.f32 %v7900, %v8217
  %v8345 = vadd.f32 %v7902, %v8221
  %v8346 = vadd.f32 %v7906, %v8225
  %v8347 = vadd.f32 %v7908, %v8229
  %v8348 = vadd.f32 %v7910, %v8225
  %v8349 = vadd.f32 %v7912, %v8229
  %v8350 = vadd.f32 %v7916, %v8233
  %v8351 = vadd.f32 %v7918, %v8237
  %v8352 = vadd.f32 %v7920, %v8233
  %v8353 = vadd.f32 %v7922, %v8237
  %v8354 = vadd.f32 %v7926, %v8241
  %v8355 = vadd.f32 %v7928, %v8245
  %v8356 = vadd.f32 %v7930, %v8241
  %v8357 = vadd.f32 %v7932, %v8245
  %v8358 = vadd.f32 %v7936, %v8249
  %v8359 = vadd.f32 %v7938, %v8253
  %v8360 = vadd.f32 %v7940, %v8249
  %v8361 = vadd.f32 %v7942, %v8253
  %v8362 = vadd.f32 %v7946, %v8257
  %v8363 = vadd.f32 %v7948, %v8261
  %v8364 = vadd.f32 %v7950, %v8257
  %v8365 = vadd.f32 %v7952, %v8261
  %v8366 = vadd.f32 %v7956, %v8265
  %v8367 = vadd.f32 %v7958, %v8269
  %v8368 = vadd.f32 %v7960, %v8265
  %v8369 = vadd.f32 %v7962, %v8269
  %v8370 = vadd.f32 %v7966, %v8273
  %v8371 = vadd.f32 %v7968, %v8277
  %v8372 = vadd.f32 %v7970, %v8273
  %v8373 = vadd.f32 %v7972, %v8277
  %v8374 = vld [vmem:[%s3] sm:$0xff]
  %v8375 = vld [vmem:[%s3 + $0x8] sm:$0xff]
  %v8376 = vld [vmem:[%s3 + $0x10] sm:$0xff]
  %v8377 = vld [vmem:[%s3 + $0x18] sm:$0xff]
  %v8378 = vadd.f32 %v8310, %v8374
  %v8379 = vadd.f32 %v8311, %v8375
  %v8380 = vadd.f32 %v8312, %v8376
  %v8381 = vadd.f32 %v8313, %v8377
  %v8382 = vadd.f32 %v8314, %v8374
  %v8383 = vadd.f32 %v8315, %v8375
  %v8384 = vadd.f32 %v8316, %v8376
  %v8385 = vadd.f32 %v8317, %v8377
  %v8386 = vadd.f32 %v8318, %v8374
  %v8387 = vadd.f32 %v8319, %v8375
  %v8388 = vadd.f32 %v8320, %v8376
  %v8389 = vadd.f32 %v8321, %v8377
  %v8390 = vadd.f32 %v8322, %v8374
  %v8391 = vadd.f32 %v8323, %v8375
  %v8392 = vadd.f32 %v8324, %v8376
  %v8393 = vadd.f32 %v8325, %v8377
  %v8394 = vadd.f32 %v8326, %v8374
  %v8395 = vadd.f32 %v8327, %v8375
  %v8396 = vadd.f32 %v8328, %v8376
  %v8397 = vadd.f32 %v8329, %v8377
  %v8398 = vadd.f32 %v8330, %v8374
  %v8399 = vadd.f32 %v8331, %v8375
  %v8400 = vadd.f32 %v8332, %v8376
  %v8401 = vadd.f32 %v8333, %v8377
  %v8402 = vadd.f32 %v8334, %v8374
  %v8403 = vadd.f32 %v8335, %v8375
  %v8404 = vadd.f32 %v8336, %v8376
  %v8405 = vadd.f32 %v8337, %v8377
  %v8406 = vadd.f32 %v8338, %v8374
  %v8407 = vadd.f32 %v8339, %v8375
  %v8408 = vadd.f32 %v8340, %v8376
  %v8409 = vadd.f32 %v8341, %v8377
  %v8410 = vadd.f32 %v8342, %v8374
  %v8411 = vadd.f32 %v8343, %v8375
  %v8412 = vadd.f32 %v8344, %v8376
  %v8413 = vadd.f32 %v8345, %v8377
  %v8414 = vadd.f32 %v8346, %v8374
  %v8415 = vadd.f32 %v8347, %v8375
  %v8416 = vadd.f32 %v8348, %v8376
  %v8417 = vadd.f32 %v8349, %v8377
  %v8418 = vadd.f32 %v8350, %v8374
  %v8419 = vadd.f32 %v8351, %v8375
  %v8420 = vadd.f32 %v8352, %v8376
  %v8421 = vadd.f32 %v8353, %v8377
  %v8422 = vadd.f32 %v8354, %v8374
  %v8423 = vadd.f32 %v8355, %v8375
  %v8424 = vadd.f32 %v8356, %v8376
  %v8425 = vadd.f32 %v8357, %v8377
  %v8426 = vadd.f32 %v8358, %v8374
  %v8427 = vadd.f32 %v8359, %v8375
  %v8428 = vadd.f32 %v8360, %v8376
  %v8429 = vadd.f32 %v8361, %v8377
  %v8430 = vadd.f32 %v8362, %v8374
  %v8431 = vadd.f32 %v8363, %v8375
  %v8432 = vadd.f32 %v8364, %v8376
  %v8433 = vadd.f32 %v8365, %v8377
  %v8434 = vadd.f32 %v8366, %v8374
  %v8435 = vadd.f32 %v8367, %v8375
  %v8436 = vadd.f32 %v8368, %v8376
  %v8437 = vadd.f32 %v8369, %v8377
  %v8438 = vadd.f32 %v8370, %v8374
  %v8439 = vadd.f32 %v8371, %v8375
  %v8440 = vadd.f32 %v8372, %v8376
  %v8441 = vadd.f32 %v8373, %v8377
  %v8442 = vmul.f32 %v8378, 0.5
  %v8443 = vmul.f32 %v8379, 0.5
  %v8444 = vmul.f32 %v8380, 0.5
  %v8445 = vmul.f32 %v8381, 0.5
  %v8446 = vmul.f32 %v8382, 0.5
  %v8447 = vmul.f32 %v8383, 0.5
  %v8448 = vmul.f32 %v8384, 0.5
  %v8449 = vmul.f32 %v8385, 0.5
  %v8450 = vmul.f32 %v8386, 0.5
  %v8451 = vmul.f32 %v8387, 0.5
  %v8452 = vmul.f32 %v8388, 0.5
  %v8453 = vmul.f32 %v8389, 0.5
  %v8454 = vmul.f32 %v8390, 0.5
  %v8455 = vmul.f32 %v8391, 0.5
  %v8456 = vmul.f32 %v8392, 0.5
  %v8457 = vmul.f32 %v8393, 0.5
  %v8458 = vmul.f32 %v8394, 0.5
  %v8459 = vmul.f32 %v8395, 0.5
  %v8460 = vmul.f32 %v8396, 0.5
  %v8461 = vmul.f32 %v8397, 0.5
  %v8462 = vmul.f32 %v8398, 0.5
  %v8463 = vmul.f32 %v8399, 0.5
  %v8464 = vmul.f32 %v8400, 0.5
  %v8465 = vmul.f32 %v8401, 0.5
  %v8466 = vmul.f32 %v8402, 0.5
  %v8467 = vmul.f32 %v8403, 0.5
  %v8468 = vmul.f32 %v8404, 0.5
  %v8469 = vmul.f32 %v8405, 0.5
  %v8470 = vmul.f32 %v8406, 0.5
  %v8471 = vmul.f32 %v8407, 0.5
  %v8472 = vmul.f32 %v8408, 0.5
  %v8473 = vmul.f32 %v8409, 0.5
  %v8474 = vmul.f32 %v8410, 0.5
  %v8475 = vmul.f32 %v8411, 0.5
  %v8476 = vmul.f32 %v8412, 0.5
  %v8477 = vmul.f32 %v8413, 0.5
  %v8478 = vmul.f32 %v8414, 0.5
  %v8479 = vmul.f32 %v8415, 0.5
  %v8480 = vmul.f32 %v8416, 0.5
  %v8481 = vmul.f32 %v8417, 0.5
  %v8482 = vmul.f32 %v8418, 0.5
  %v8483 = vmul.f32 %v8419, 0.5
  %v8484 = vmul.f32 %v8420, 0.5
  %v8485 = vmul.f32 %v8421, 0.5
  %v8486 = vmul.f32 %v8422, 0.5
  %v8487 = vmul.f32 %v8423, 0.5
  %v8488 = vmul.f32 %v8424, 0.5
  %v8489 = vmul.f32 %v8425, 0.5
  %v8490 = vmul.f32 %v8426, 0.5
  %v8491 = vmul.f32 %v8427, 0.5
  %v8492 = vmul.f32 %v8428, 0.5
  %v8493 = vmul.f32 %v8429, 0.5
  %v8494 = vmul.f32 %v8430, 0.5
  %v8495 = vmul.f32 %v8431, 0.5
  %v8496 = vmul.f32 %v8432, 0.5
  %v8497 = vmul.f32 %v8433, 0.5
  %v8498 = vmul.f32 %v8434, 0.5
  %v8499 = vmul.f32 %v8435, 0.5
  %v8500 = vmul.f32 %v8436, 0.5
  %v8501 = vmul.f32 %v8437, 0.5
  %v8502 = vmul.f32 %v8438, 0.5
  %v8503 = vmul.f32 %v8439, 0.5
  %v8504 = vmul.f32 %v8440, 0.5
  %v8505 = vmul.f32 %v8441, 0.5
  %v8506 = vtanh.pop %v8442
  %v8507 = vtanh.pop %v8443
  %v8508 = vtanh.pop %v8444
  %v8509 = vtanh.pop %v8445
  %v8510 = vtanh.pop %v8446
  %v8511 = vtanh.pop %v8447
  %v8512 = vtanh.pop %v8448
  %v8513 = vtanh.pop %v8449
  %v8514 = vtanh.pop %v8450
  %v8515 = vtanh.pop %v8451
  %v8516 = vtanh.pop %v8452
  %v8517 = vtanh.pop %v8453
  %v8518 = vtanh.pop %v8454
  %v8519 = vtanh.pop %v8455
  %v8520 = vtanh.pop %v8456
  %v8521 = vtanh.pop %v8457
  %v8522 = vtanh.pop %v8458
  %v8523 = vtanh.pop %v8459
  %v8524 = vtanh.pop %v8460
  %v8525 = vtanh.pop %v8461
  %v8526 = vtanh.pop %v8462
  %v8527 = vtanh.pop %v8463
  %v8528 = vtanh.pop %v8464
  %v8529 = vtanh.pop %v8465
  %v8530 = vtanh.pop %v8466
  %v8531 = vtanh.pop %v8467
  %v8532 = vtanh.pop %v8468
  %v8533 = vtanh.pop %v8469
  %v8534 = vtanh.pop %v8470
  %v8535 = vtanh.pop %v8471
  %v8536 = vtanh.pop %v8472
  %v8537 = vtanh.pop %v8473
  %v8538 = vtanh.pop %v8474
  %v8539 = vtanh.pop %v8475
  %v8540 = vtanh.pop %v8476
  %v8541 = vtanh.pop %v8477
  %v8542 = vtanh.pop %v8478
  %v8543 = vtanh.pop %v8479
  %v8544 = vtanh.pop %v8480
  %v8545 = vtanh.pop %v8481
  %v8546 = vtanh.pop %v8482
  %v8547 = vtanh.pop %v8483
  %v8548 = vtanh.pop %v8484
  %v8549 = vtanh.pop %v8485
  %v8550 = vtanh.pop %v8486
  %v8551 = vtanh.pop %v8487
  %v8552 = vtanh.pop %v8488
  %v8553 = vtanh.pop %v8489
  %v8554 = vtanh.pop %v8490
  %v8555 = vtanh.pop %v8491
  %v8556 = vtanh.pop %v8492
  %v8557 = vtanh.pop %v8493
  %v8558 = vtanh.pop %v8494
  %v8559 = vtanh.pop %v8495
  %v8560 = vtanh.pop %v8496
  %v8561 = vtanh.pop %v8497
  %v8562 = vtanh.pop %v8498
  %v8563 = vtanh.pop %v8499
  %v8564 = vtanh.pop %v8500
  %v8565 = vtanh.pop %v8501
  %v8566 = vtanh.pop %v8502
  %v8567 = vtanh.pop %v8503
  %v8568 = vtanh.pop %v8504
  %v8569 = vtanh.pop %v8505
  %v8570 = vmul.f32 %v8506, 0.5
  %v8571 = vmul.f32 %v8507, 0.5
  %v8572 = vmul.f32 %v8508, 0.5
  %v8573 = vmul.f32 %v8509, 0.5
  %v8574 = vmul.f32 %v8510, 0.5
  %v8575 = vmul.f32 %v8511, 0.5
  %v8576 = vmul.f32 %v8512, 0.5
  %v8577 = vmul.f32 %v8513, 0.5
  %v8578 = vmul.f32 %v8514, 0.5
  %v8579 = vmul.f32 %v8515, 0.5
  %v8580 = vmul.f32 %v8516, 0.5
  %v8581 = vmul.f32 %v8517, 0.5
  %v8582 = vmul.f32 %v8518, 0.5
  %v8583 = vmul.f32 %v8519, 0.5
  %v8584 = vmul.f32 %v8520, 0.5
  %v8585 = vmul.f32 %v8521, 0.5
  %v8586 = vmul.f32 %v8522, 0.5
  %v8587 = vmul.f32 %v8523, 0.5
  %v8588 = vmul.f32 %v8524, 0.5
  %v8589 = vmul.f32 %v8525, 0.5
  %v8590 = vmul.f32 %v8526, 0.5
  %v8591 = vmul.f32 %v8527, 0.5
  %v8592 = vmul.f32 %v8528, 0.5
  %v8593 = vmul.f32 %v8529, 0.5
  %v8594 = vmul.f32 %v8530, 0.5
  %v8595 = vmul.f32 %v8531, 0.5
  %v8596 = vmul.f32 %v8532, 0.5
  %v8597 = vmul.f32 %v8533, 0.5
  %v8598 = vmul.f32 %v8534, 0.5
  %v8599 = vmul.f32 %v8535, 0.5
  %v8600 = vmul.f32 %v8536, 0.5
  %v8601 = vmul.f32 %v8537, 0.5
  %v8602 = vmul.f32 %v8538, 0.5
  %v8603 = vmul.f32 %v8539, 0.5
  %v8604 = vmul.f32 %v8540, 0.5
  %v8605 = vmul.f32 %v8541, 0.5
  %v8606 = vmul.f32 %v8542, 0.5
  %v8607 = vmul.f32 %v8543, 0.5
  %v8608 = vmul.f32 %v8544, 0.5
  %v8609 = vmul.f32 %v8545, 0.5
  %v8610 = vmul.f32 %v8546, 0.5
  %v8611 = vmul.f32 %v8547, 0.5
  %v8612 = vmul.f32 %v8548, 0.5
  %v8613 = vmul.f32 %v8549, 0.5
  %v8614 = vmul.f32 %v8550, 0.5
  %v8615 = vmul.f32 %v8551, 0.5
  %v8616 = vmul.f32 %v8552, 0.5
  %v8617 = vmul.f32 %v8553, 0.5
  %v8618 = vmul.f32 %v8554, 0.5
  %v8619 = vmul.f32 %v8555, 0.5
  %v8620 = vmul.f32 %v8556, 0.5
  %v8621 = vmul.f32 %v8557, 0.5
  %v8622 = vmul.f32 %v8558, 0.5
  %v8623 = vmul.f32 %v8559, 0.5
  %v8624 = vmul.f32 %v8560, 0.5
  %v8625 = vmul.f32 %v8561, 0.5
  %v8626 = vmul.f32 %v8562, 0.5
  %v8627 = vmul.f32 %v8563, 0.5
  %v8628 = vmul.f32 %v8564, 0.5
  %v8629 = vmul.f32 %v8565, 0.5
  %v8630 = vmul.f32 %v8566, 0.5
  %v8631 = vmul.f32 %v8567, 0.5
  %v8632 = vmul.f32 %v8568, 0.5
  %v8633 = vmul.f32 %v8569, 0.5
  %v8634 = vadd.f32 %v8570, 0.5
  %v8635 = vadd.f32 %v8571, 0.5
  %v8636 = vadd.f32 %v8572, 0.5
  %v8637 = vadd.f32 %v8573, 0.5
  %v8638 = vadd.f32 %v8574, 0.5
  %v8639 = vadd.f32 %v8575, 0.5
  %v8640 = vadd.f32 %v8576, 0.5
  %v8641 = vadd.f32 %v8577, 0.5
  %v8642 = vadd.f32 %v8578, 0.5
  %v8643 = vadd.f32 %v8579, 0.5
  %v8644 = vadd.f32 %v8580, 0.5
  %v8645 = vadd.f32 %v8581, 0.5
  %v8646 = vadd.f32 %v8582, 0.5
  %v8647 = vadd.f32 %v8583, 0.5
  %v8648 = vadd.f32 %v8584, 0.5
  %v8649 = vadd.f32 %v8585, 0.5
  %v8650 = vadd.f32 %v8586, 0.5
  %v8651 = vadd.f32 %v8587, 0.5
  %v8652 = vadd.f32 %v8588, 0.5
  %v8653 = vadd.f32 %v8589, 0.5
  %v8654 = vadd.f32 %v8590, 0.5
  %v8655 = vadd.f32 %v8591, 0.5
  %v8656 = vadd.f32 %v8592, 0.5
  %v8657 = vadd.f32 %v8593, 0.5
  %v8658 = vadd.f32 %v8594, 0.5
  %v8659 = vadd.f32 %v8595, 0.5
  %v8660 = vadd.f32 %v8596, 0.5
  %v8661 = vadd.f32 %v8597, 0.5
  %v8662 = vadd.f32 %v8598, 0.5
  %v8663 = vadd.f32 %v8599, 0.5
  %v8664 = vadd.f32 %v8600, 0.5
  %v8665 = vadd.f32 %v8601, 0.5
  %v8666 = vadd.f32 %v8602, 0.5
  %v8667 = vadd.f32 %v8603, 0.5
  %v8668 = vadd.f32 %v8604, 0.5
  %v8669 = vadd.f32 %v8605, 0.5
  %v8670 = vadd.f32 %v8606, 0.5
  %v8671 = vadd.f32 %v8607, 0.5
  %v8672 = vadd.f32 %v8608, 0.5
  %v8673 = vadd.f32 %v8609, 0.5
  %v8674 = vadd.f32 %v8610, 0.5
  %v8675 = vadd.f32 %v8611, 0.5
  %v8676 = vadd.f32 %v8612, 0.5
  %v8677 = vadd.f32 %v8613, 0.5
  %v8678 = vadd.f32 %v8614, 0.5
  %v8679 = vadd.f32 %v8615, 0.5
  %v8680 = vadd.f32 %v8616, 0.5
  %v8681 = vadd.f32 %v8617, 0.5
  %v8682 = vadd.f32 %v8618, 0.5
  %v8683 = vadd.f32 %v8619, 0.5
  %v8684 = vadd.f32 %v8620, 0.5
  %v8685 = vadd.f32 %v8621, 0.5
  %v8686 = vadd.f32 %v8622, 0.5
  %v8687 = vadd.f32 %v8623, 0.5
  %v8688 = vadd.f32 %v8624, 0.5
  %v8689 = vadd.f32 %v8625, 0.5
  %v8690 = vadd.f32 %v8626, 0.5
  %v8691 = vadd.f32 %v8627, 0.5
  %v8692 = vadd.f32 %v8628, 0.5
  %v8693 = vadd.f32 %v8629, 0.5
  %v8694 = vadd.f32 %v8630, 0.5
  %v8695 = vadd.f32 %v8631, 0.5
  %v8696 = vadd.f32 %v8632, 0.5
  %v8697 = vadd.f32 %v8633, 0.5
  %v8698 = vmul.f32 %v8378, %v8634
  %v8699 = vmul.f32 %v8379, %v8635
  %v8700 = vmul.f32 %v8380, %v8636
  %v8701 = vmul.f32 %v8381, %v8637
  %v8702 = vmul.f32 %v8382, %v8638
  %v8703 = vmul.f32 %v8383, %v8639
  %v8704 = vmul.f32 %v8384, %v8640
  %v8705 = vmul.f32 %v8385, %v8641
  %v8706 = vmul.f32 %v8386, %v8642
  %v8707 = vmul.f32 %v8387, %v8643
  %v8708 = vmul.f32 %v8388, %v8644
  %v8709 = vmul.f32 %v8389, %v8645
  %v8710 = vmul.f32 %v8390, %v8646
  %v8711 = vmul.f32 %v8391, %v8647
  %v8712 = vmul.f32 %v8392, %v8648
  %v8713 = vmul.f32 %v8393, %v8649
  %v8714 = vmul.f32 %v8394, %v8650
  %v8715 = vmul.f32 %v8395, %v8651
  %v8716 = vmul.f32 %v8396, %v8652
  %v8717 = vmul.f32 %v8397, %v8653
  %v8718 = vmul.f32 %v8398, %v8654
  %v8719 = vmul.f32 %v8399, %v8655
  %v8720 = vmul.f32 %v8400, %v8656
  %v8721 = vmul.f32 %v8401, %v8657
  %v8722 = vmul.f32 %v8402, %v8658
  %v8723 = vmul.f32 %v8403, %v8659
  %v8724 = vmul.f32 %v8404, %v8660
  %v8725 = vmul.f32 %v8405, %v8661
  %v8726 = vmul.f32 %v8406, %v8662
  %v8727 = vmul.f32 %v8407, %v8663
  %v8728 = vmul.f32 %v8408, %v8664
  %v8729 = vmul.f32 %v8409, %v8665
  %v8730 = vmul.f32 %v8410, %v8666
  %v8731 = vmul.f32 %v8411, %v8667
  %v8732 = vmul.f32 %v8412, %v8668
  %v8733 = vmul.f32 %v8413, %v8669
  %v8734 = vmul.f32 %v8414, %v8670
  %v8735 = vmul.f32 %v8415, %v8671
  %v8736 = vmul.f32 %v8416, %v8672
  %v8737 = vmul.f32 %v8417, %v8673
  %v8738 = vmul.f32 %v8418, %v8674
  %v8739 = vmul.f32 %v8419, %v8675
  %v8740 = vmul.f32 %v8420, %v8676
  %v8741 = vmul.f32 %v8421, %v8677
  %v8742 = vmul.f32 %v8422, %v8678
  %v8743 = vmul.f32 %v8423, %v8679
  %v8744 = vmul.f32 %v8424, %v8680
  %v8745 = vmul.f32 %v8425, %v8681
  %v8746 = vmul.f32 %v8426, %v8682
  %v8747 = vmul.f32 %v8427, %v8683
  %v8748 = vmul.f32 %v8428, %v8684
  %v8749 = vmul.f32 %v8429, %v8685
  %v8750 = vmul.f32 %v8430, %v8686
  %v8751 = vmul.f32 %v8431, %v8687
  %v8752 = vmul.f32 %v8432, %v8688
  %v8753 = vmul.f32 %v8433, %v8689
  %v8754 = vmul.f32 %v8434, %v8690
  %v8755 = vmul.f32 %v8435, %v8691
  %v8756 = vmul.f32 %v8436, %v8692
  %v8757 = vmul.f32 %v8437, %v8693
  %v8758 = vmul.f32 %v8438, %v8694
  %v8759 = vmul.f32 %v8439, %v8695
  %v8760 = vmul.f32 %v8440, %v8696
  %v8761 = vmul.f32 %v8441, %v8697
  %v8762 = vpack.c.bf16 %v8700, %v8698
  %v8763 = vpack.c.bf16 %v8701, %v8699
  %v8764 = vpack.c.bf16 %v8704, %v8702
  %v8765 = vpack.c.bf16 %v8705, %v8703
  %v8766 = vpack.c.bf16 %v8708, %v8706
  %v8767 = vpack.c.bf16 %v8709, %v8707
  %v8768 = vpack.c.bf16 %v8712, %v8710
  %v8769 = vpack.c.bf16 %v8713, %v8711
  %v8770 = vpack.c.bf16 %v8716, %v8714
  %v8771 = vpack.c.bf16 %v8717, %v8715
  %v8772 = vpack.c.bf16 %v8720, %v8718
  %v8773 = vpack.c.bf16 %v8721, %v8719
  %v8774 = vpack.c.bf16 %v8724, %v8722
  %v8775 = vpack.c.bf16 %v8725, %v8723
  %v8776 = vpack.c.bf16 %v8728, %v8726
  %v8777 = vpack.c.bf16 %v8729, %v8727
  %v8778 = vpack.c.bf16 %v8732, %v8730
  %v8779 = vpack.c.bf16 %v8733, %v8731
  %v8780 = vpack.c.bf16 %v8736, %v8734
  %v8781 = vpack.c.bf16 %v8737, %v8735
  %v8782 = vpack.c.bf16 %v8740, %v8738
  %v8783 = vpack.c.bf16 %v8741, %v8739
  %v8784 = vpack.c.bf16 %v8744, %v8742
  %v8785 = vpack.c.bf16 %v8745, %v8743
  %v8786 = vpack.c.bf16 %v8748, %v8746
  %v8787 = vpack.c.bf16 %v8749, %v8747
  %v8788 = vpack.c.bf16 %v8752, %v8750
  %v8789 = vpack.c.bf16 %v8753, %v8751
  %v8790 = vpack.c.bf16 %v8756, %v8754
  %v8791 = vpack.c.bf16 %v8757, %v8755
  %v8792 = vpack.c.bf16 %v8760, %v8758
  %v8793 = vpack.c.bf16 %v8761, %v8759
  %v8794 = vld [vmem:[%s4 + $0x30] sm:$0xf]
  %v8795 = vld [vmem:[%s4 + $0x38] sm:$0xf]
  %v8796 = vld [vmem:[%s4 + $0x40] sm:$0xf]
  %v8797 = vld [vmem:[%s4 + $0x48] sm:$0xf]
  %v8798 = vld [vmem:[%s4 + $0x50] sm:$0xf]
  %v8799 = vld [vmem:[%s4 + $0x58] sm:$0xf]
  %v8800 = vld [vmem:[%s4 + $0x60] sm:$0xf]
  %v8801 = vld [vmem:[%s4 + $0x68] sm:$0xf]
  %v8802 = vld [vmem:[%s4 + $0x70] sm:$0xf]
  %v8803 = vld [vmem:[%s4 + $0x78] sm:$0xf]
  %v8804 = vld [vmem:[%s4 + $0x80] sm:$0xf]
  %v8805 = vld [vmem:[%s4 + $0x88] sm:$0xf]
  %v8806 = vld [vmem:[%s4 + $0x90] sm:$0xf]
  %v8807 = vld [vmem:[%s4 + $0x98] sm:$0xf]
  %v8808 = vld [vmem:[%s4 + $0xa0] sm:$0xf]
  %v8809 = vld [vmem:[%s4 + $0xa8] sm:$0xf]
  %v8810 = vld [vmem:[%s4 + $0xb0] sm:$0xf]
  %v8811 = vld [vmem:[%s4 + $0xb8] sm:$0xf]
  %v8812 = vld [vmem:[%s4 + $0xc0] sm:$0xf]
  %v8813 = vld [vmem:[%s4 + $0xc8] sm:$0xf]
  %v8814 = vld [vmem:[%s4 + $0xd0] sm:$0xf]
  %v8815 = vld [vmem:[%s4 + $0xd8] sm:$0xf]
  %v8816 = vld [vmem:[%s4 + $0xe0] sm:$0xf]
  %v8817 = vld [vmem:[%s4 + $0xe8] sm:$0xf]
  %v8818 = vld [vmem:[%s4 + $0xf0] sm:$0xf]
  %v8819 = vld [vmem:[%s4 + $0xf8] sm:$0xf]
  %v8820 = vld [vmem:[%s4 + $0x100] sm:$0xf]
  %v8821 = vld [vmem:[%s4 + $0x108] sm:$0xf]
  %v8822 = vld [vmem:[%s4 + $0x110] sm:$0xf]
  %v8823 = vld [vmem:[%s4 + $0x118] sm:$0xf]
  %v8824 = vld [vmem:[%s4 + $0x120] sm:$0xf]
  %v8825 = vld [vmem:[%s4 + $0x128] sm:$0xf]
  %v8826 = vld [vmem:[%s5] ss:$0 sm:$0xff]
  %v8859 = vunpack.c.l.b16 %v8794
  %v8860 = vunpack.c.l.b16 %v8795
  %v8861 = vunpack.c.l.b16 %v8796
  %v8862 = vunpack.c.l.b16 %v8797
  %v8863 = vunpack.c.l.b16 %v8798
  %v8864 = vunpack.c.l.b16 %v8799
  %v8865 = vunpack.c.l.b16 %v8800
  %v8866 = vunpack.c.l.b16 %v8801
  %v8867 = vunpack.c.l.b16 %v8802
  %v8868 = vunpack.c.l.b16 %v8803
  %v8869 = vunpack.c.l.b16 %v8804
  %v8870 = vunpack.c.l.b16 %v8805
  %v8871 = vunpack.c.l.b16 %v8806
  %v8872 = vunpack.c.l.b16 %v8807
  %v8873 = vunpack.c.l.b16 %v8808
  %v8874 = vunpack.c.l.b16 %v8809
  %v8875 = vunpack.c.l.b16 %v8810
  %v8876 = vunpack.c.l.b16 %v8811
  %v8877 = vunpack.c.l.b16 %v8812
  %v8878 = vunpack.c.l.b16 %v8813
  %v8879 = vunpack.c.l.b16 %v8814
  %v8880 = vunpack.c.l.b16 %v8815
  %v8881 = vunpack.c.l.b16 %v8816
  %v8882 = vunpack.c.l.b16 %v8817
  %v8883 = vunpack.c.l.b16 %v8818
  %v8884 = vunpack.c.l.b16 %v8819
  %v8885 = vunpack.c.l.b16 %v8820
  %v8886 = vunpack.c.l.b16 %v8821
  %v8887 = vunpack.c.l.b16 %v8822
  %v8888 = vunpack.c.l.b16 %v8823
  %v8889 = vunpack.c.l.b16 %v8824
  %v8890 = vunpack.c.l.b16 %v8825
  %v8891 = vpack.c.b16 %v8860, %v8859
  %v8892 = vpack.c.b16 %v8862, %v8861
  %v8893 = vpack.c.b16 %v8864, %v8863
  %v8894 = vpack.c.b16 %v8866, %v8865
  %v8895 = vpack.c.b16 %v8868, %v8867
  %v8896 = vpack.c.b16 %v8870, %v8869
  %v8897 = vpack.c.b16 %v8872, %v8871
  %v8898 = vpack.c.b16 %v8874, %v8873
  %v8899 = vpack.c.b16 %v8876, %v8875
  %v8900 = vpack.c.b16 %v8878, %v8877
  %v8901 = vpack.c.b16 %v8880, %v8879
  %v8902 = vpack.c.b16 %v8882, %v8881
  %v8903 = vpack.c.b16 %v8884, %v8883
  %v8904 = vpack.c.b16 %v8886, %v8885
  %v8905 = vpack.c.b16 %v8888, %v8887
  %v8906 = vpack.c.b16 %v8890, %v8889
  %8923 = vmatprep.subr.bf16.mxu0 0
  %8924 = vmatpush1.bf16.msra.mxu0 %v8891
  %8925 = vmatprep.subr.bf16.mxu0 0
  %8926 = vmatpush1.bf16.msra.mxu0 %v8892
  %8927 = vmatprep.subr.bf16.mxu0 0
  %8928 = vmatpush1.bf16.msra.mxu0 %v8893
  %8929 = vmatprep.subr.bf16.mxu0 0
  %8930 = vmatpush1.bf16.msra.mxu0 %v8894
  %8931 = vmatprep.subr.bf16.mxu0 0
  %8932 = vmatpush1.bf16.msra.mxu0 %v8895
  %8933 = vmatprep.subr.bf16.mxu0 0
  %8934 = vmatpush1.bf16.msra.mxu0 %v8896
  %8935 = vmatprep.subr.bf16.mxu0 0
  %8936 = vmatpush1.bf16.msra.mxu0 %v8897
  %8937 = vmatprep.subr.bf16.mxu0 0
  %8938 = vmatpush1.bf16.msra.mxu0 %v8898
  %8939 = vmatprep.subr.bf16.mxu0 0
  %8940 = vmatpush1.bf16.msra.mxu0 %v8899
  %8941 = vmatprep.subr.bf16.mxu0 0
  %8942 = vmatpush1.bf16.msra.mxu0 %v8900
  %8943 = vmatprep.subr.bf16.mxu0 0
  %8944 = vmatpush1.bf16.msra.mxu0 %v8901
  %8945 = vmatprep.subr.bf16.mxu0 0
  %8946 = vmatpush1.bf16.msra.mxu0 %v8902
  %8947 = vmatprep.subr.bf16.mxu0 0
  %8948 = vmatpush1.bf16.msra.mxu0 %v8903
  %8949 = vmatprep.subr.bf16.mxu0 0
  %8950 = vmatpush1.bf16.msra.mxu0 %v8904
  %8951 = vmatprep.subr.bf16.mxu0 0
  %8952 = vmatpush1.bf16.msra.mxu0 %v8905
  %8953 = vmatprep.subr.bf16.mxu0 0
  %8954 = vmatpush1.bf16.msra.mxu0 %v8906
  %8955 = vmatprep.mubr.bf16.mxu0 %v8763
  %8956 = vmatmul.mubr.bf16.gmra.mrb[0].mxu0 %v8762
  %v8957 = vpop.f32.mrb[0].mxu0
  %v8958 = vadd.f32 %v8826, %v8957
  %v8959 = vpop.f32.mrb[0].mxu0
  %v8960 = vpop.f32.mrb[0].mxu0
  %v8961 = vadd.f32 %v8826, %v8960
  %v8962 = vpop.f32.mrb[0].mxu0
  %8963 = vmatprep.mubr.bf16.mxu0 %v8765
  %8964 = vmatmul.mubr.bf16.gmra.mrb[0].mxu0 %v8764
  %v8965 = vpop.f32.mrb[0].mxu0
  %v8966 = vadd.f32 %v8826, %v8965
  %v8967 = vpop.f32.mrb[0].mxu0
  %v8968 = vpop.f32.mrb[0].mxu0
  %v8969 = vadd.f32 %v8826, %v8968
  %v8970 = vpop.f32.mrb[0].mxu0
  %8971 = vmatprep.mubr.bf16.mxu0 %v8767
  %8972 = vmatmul.mubr.bf16.gmra.mrb[0].mxu0 %v8766
  %v8973 = vpop.f32.mrb[0].mxu0
  %v8974 = vadd.f32 %v8826, %v8973
  %v8975 = vpop.f32.mrb[0].mxu0
  %v8976 = vpop.f32.mrb[0].mxu0
  %v8977 = vadd.f32 %v8826, %v8976
  %v8978 = vpop.f32.mrb[0].mxu0
  %8979 = vmatprep.mubr.bf16.mxu0 %v8769
  %8980 = vmatmul.mubr.bf16.gmra.mrb[0].mxu0 %v8768
  %v8981 = vpop.f32.mrb[0].mxu0
  %v8982 = vadd.f32 %v8826, %v8981
  %v8983 = vpop.f32.mrb[0].mxu0
  %v8984 = vpop.f32.mrb[0].mxu0
  %v8985 = vadd.f32 %v8826, %v8984
  %v8986 = vpop.f32.mrb[0].mxu0
  %8987 = vmatprep.mubr.bf16.mxu0 %v8771
  %8988 = vmatmul.mubr.bf16.gmra.mrb[0].mxu0 %v8770
  %v8989 = vpop.f32.mrb[0].mxu0
  %v8990 = vadd.f32 %v8826, %v8989
  %v8991 = vpop.f32.mrb[0].mxu0
  %v8992 = vpop.f32.mrb[0].mxu0
  %v8993 = vadd.f32 %v8826, %v8992
  %v8994 = vpop.f32.mrb[0].mxu0
  %8995 = vmatprep.mubr.bf16.mxu0 %v8773
  %8996 = vmatmul.mubr.bf16.gmra.mrb[0].mxu0 %v8772
  %v8997 = vpop.f32.mrb[0].mxu0
  %v8998 = vadd.f32 %v8826, %v8997
  %v8999 = vpop.f32.mrb[0].mxu0
  %v9000 = vpop.f32.mrb[0].mxu0
  %v9001 = vadd.f32 %v8826, %v9000
  %v9002 = vpop.f32.mrb[0].mxu0
  %9003 = vmatprep.mubr.bf16.mxu0 %v8775
  %9004 = vmatmul.mubr.bf16.gmra.mrb[0].mxu0 %v8774
  %v9005 = vpop.f32.mrb[0].mxu0
  %v9006 = vadd.f32 %v8826, %v9005
  %v9007 = vpop.f32.mrb[0].mxu0
  %v9008 = vpop.f32.mrb[0].mxu0
  %v9009 = vadd.f32 %v8826, %v9008
  %v9010 = vpop.f32.mrb[0].mxu0
  %9011 = vmatprep.mubr.bf16.mxu0 %v8777
  %9012 = vmatmul.mubr.bf16.gmra.mrb[0].mxu0 %v8776
  %v9013 = vpop.f32.mrb[0].mxu0
  %v9014 = vadd.f32 %v8826, %v9013
  %v9015 = vpop.f32.mrb[0].mxu0
  %v9016 = vpop.f32.mrb[0].mxu0
  %v9017 = vadd.f32 %v8826, %v9016
  %v9018 = vpop.f32.mrb[0].mxu0
  %9019 = vmatprep.mubr.bf16.mxu0 %v8779
  %9020 = vmatmul.mubr.bf16.gmra.mrb[0].mxu0 %v8778
  %v9021 = vpop.f32.mrb[0].mxu0
  %v9022 = vadd.f32 %v8826, %v9021
  %v9023 = vpop.f32.mrb[0].mxu0
  %v9024 = vpop.f32.mrb[0].mxu0
  %v9025 = vadd.f32 %v8826, %v9024
  %v9026 = vpop.f32.mrb[0].mxu0
  %9027 = vmatprep.mubr.bf16.mxu0 %v8781
  %9028 = vmatmul.mubr.bf16.gmra.mrb[0].mxu0 %v8780
  %v9029 = vpop.f32.mrb[0].mxu0
  %v9030 = vadd.f32 %v8826, %v9029
  %v9031 = vpop.f32.mrb[0].mxu0
  %v9032 = vpop.f32.mrb[0].mxu0
  %v9033 = vadd.f32 %v8826, %v9032
  %v9034 = vpop.f32.mrb[0].mxu0
  %9035 = vmatprep.mubr.bf16.mxu0 %v8783
  %9036 = vmatmul.mubr.bf16.gmra.mrb[0].mxu0 %v8782
  %v9037 = vpop.f32.mrb[0].mxu0
  %v9038 = vadd.f32 %v8826, %v9037
  %v9039 = vpop.f32.mrb[0].mxu0
  %v9040 = vpop.f32.mrb[0].mxu0
  %v9041 = vadd.f32 %v8826, %v9040
  %v9042 = vpop.f32.mrb[0].mxu0
  %9043 = vmatprep.mubr.bf16.mxu0 %v8785
  %9044 = vmatmul.mubr.bf16.gmra.mrb[0].mxu0 %v8784
  %v9045 = vpop.f32.mrb[0].mxu0
  %v9046 = vadd.f32 %v8826, %v9045
  %v9047 = vpop.f32.mrb[0].mxu0
  %v9048 = vpop.f32.mrb[0].mxu0
  %v9049 = vadd.f32 %v8826, %v9048
  %v9050 = vpop.f32.mrb[0].mxu0
  %9051 = vmatprep.mubr.bf16.mxu0 %v8787
  %9052 = vmatmul.mubr.bf16.gmra.mrb[0].mxu0 %v8786
  %v9053 = vpop.f32.mrb[0].mxu0
  %v9054 = vadd.f32 %v8826, %v9053
  %v9055 = vpop.f32.mrb[0].mxu0
  %v9056 = vpop.f32.mrb[0].mxu0
  %v9057 = vadd.f32 %v8826, %v9056
  %v9058 = vpop.f32.mrb[0].mxu0
  %9059 = vmatprep.mubr.bf16.mxu0 %v8789
  %9060 = vmatmul.mubr.bf16.gmra.mrb[0].mxu0 %v8788
  %v9061 = vpop.f32.mrb[0].mxu0
  %v9062 = vadd.f32 %v8826, %v9061
  %v9063 = vpop.f32.mrb[0].mxu0
  %v9064 = vpop.f32.mrb[0].mxu0
  %v9065 = vadd.f32 %v8826, %v9064
  %v9066 = vpop.f32.mrb[0].mxu0
  %9067 = vmatprep.mubr.bf16.mxu0 %v8791
  %9068 = vmatmul.mubr.bf16.gmra.mrb[0].mxu0 %v8790
  %v9069 = vpop.f32.mrb[0].mxu0
  %v9070 = vadd.f32 %v8826, %v9069
  %v9071 = vpop.f32.mrb[0].mxu0
  %v9072 = vpop.f32.mrb[0].mxu0
  %v9073 = vadd.f32 %v8826, %v9072
  %v9074 = vpop.f32.mrb[0].mxu0
  %9075 = vmatprep.mubr.bf16.mxu0 %v8793
  %9076 = vmatmul.mubr.bf16.gmra.mrb[0].mxu0 %v8792
  %v9077 = vpop.f32.mrb[0].mxu0
  %v9078 = vadd.f32 %v8826, %v9077
  %v9079 = vpop.f32.mrb[0].mxu0
  %v9080 = vpop.f32.mrb[0].mxu0
  %v9081 = vadd.f32 %v8826, %v9080
  %v9082 = vpop.f32.mrb[0].mxu0
  %9083 = vdwg.mxu0
  %v9084 = vmul.f32 %v8958, 0.5
  %v9085 = vmul.f32 %v8961, 0.5
  %v9086 = vmul.f32 %v8966, 0.5
  %v9087 = vmul.f32 %v8969, 0.5
  %v9088 = vmul.f32 %v8974, 0.5
  %v9089 = vmul.f32 %v8977, 0.5
  %v9090 = vmul.f32 %v8982, 0.5
  %v9091 = vmul.f32 %v8985, 0.5
  %v9092 = vmul.f32 %v8990, 0.5
  %v9093 = vmul.f32 %v8993, 0.5
  %v9094 = vmul.f32 %v8998, 0.5
  %v9095 = vmul.f32 %v9001, 0.5
  %v9096 = vmul.f32 %v9006, 0.5
  %v9097 = vmul.f32 %v9009, 0.5
  %v9098 = vmul.f32 %v9014, 0.5
  %v9099 = vmul.f32 %v9017, 0.5
  %v9100 = vmul.f32 %v9022, 0.5
  %v9101 = vmul.f32 %v9025, 0.5
  %v9102 = vmul.f32 %v9030, 0.5
  %v9103 = vmul.f32 %v9033, 0.5
  %v9104 = vmul.f32 %v9038, 0.5
  %v9105 = vmul.f32 %v9041, 0.5
  %v9106 = vmul.f32 %v9046, 0.5
  %v9107 = vmul.f32 %v9049, 0.5
  %v9108 = vmul.f32 %v9054, 0.5
  %v9109 = vmul.f32 %v9057, 0.5
  %v9110 = vmul.f32 %v9062, 0.5
  %v9111 = vmul.f32 %v9065, 0.5
  %v9112 = vmul.f32 %v9070, 0.5
  %v9113 = vmul.f32 %v9073, 0.5
  %v9114 = vmul.f32 %v9078, 0.5
  %v9115 = vmul.f32 %v9081, 0.5
  %v9116 = vtanh.pop %v9084
  %v9117 = vtanh.pop %v9085
  %v9118 = vtanh.pop %v9086
  %v9119 = vtanh.pop %v9087
  %v9120 = vtanh.pop %v9088
  %v9121 = vtanh.pop %v9089
  %v9122 = vtanh.pop %v9090
  %v9123 = vtanh.pop %v9091
  %v9124 = vtanh.pop %v9092
  %v9125 = vtanh.pop %v9093
  %v9126 = vtanh.pop %v9094
  %v9127 = vtanh.pop %v9095
  %v9128 = vtanh.pop %v9096
  %v9129 = vtanh.pop %v9097
  %v9130 = vtanh.pop %v9098
  %v9131 = vtanh.pop %v9099
  %v9132 = vtanh.pop %v9100
  %v9133 = vtanh.pop %v9101
  %v9134 = vtanh.pop %v9102
  %v9135 = vtanh.pop %v9103
  %v9136 = vtanh.pop %v9104
  %v9137 = vtanh.pop %v9105
  %v9138 = vtanh.pop %v9106
  %v9139 = vtanh.pop %v9107
  %v9140 = vtanh.pop %v9108
  %v9141 = vtanh.pop %v9109
  %v9142 = vtanh.pop %v9110
  %v9143 = vtanh.pop %v9111
  %v9144 = vtanh.pop %v9112
  %v9145 = vtanh.pop %v9113
  %v9146 = vtanh.pop %v9114
  %v9147 = vtanh.pop %v9115
  %v9148 = vmul.f32 %v9116, 0.5
  %v9149 = vmul.f32 %v9117, 0.5
  %v9150 = vmul.f32 %v9118, 0.5
  %v9151 = vmul.f32 %v9119, 0.5
  %v9152 = vmul.f32 %v9120, 0.5
  %v9153 = vmul.f32 %v9121, 0.5
  %v9154 = vmul.f32 %v9122, 0.5
  %v9155 = vmul.f32 %v9123, 0.5
  %v9156 = vmul.f32 %v9124, 0.5
  %v9157 = vmul.f32 %v9125, 0.5
  %v9158 = vmul.f32 %v9126, 0.5
  %v9159 = vmul.f32 %v9127, 0.5
  %v9160 = vmul.f32 %v9128, 0.5
  %v9161 = vmul.f32 %v9129, 0.5
  %v9162 = vmul.f32 %v9130, 0.5
  %v9163 = vmul.f32 %v9131, 0.5
  %v9164 = vmul.f32 %v9132, 0.5
  %v9165 = vmul.f32 %v9133, 0.5
  %v9166 = vmul.f32 %v9134, 0.5
  %v9167 = vmul.f32 %v9135, 0.5
  %v9168 = vmul.f32 %v9136, 0.5
  %v9169 = vmul.f32 %v9137, 0.5
  %v9170 = vmul.f32 %v9138, 0.5
  %v9171 = vmul.f32 %v9139, 0.5
  %v9172 = vmul.f32 %v9140, 0.5
  %v9173 = vmul.f32 %v9141, 0.5
  %v9174 = vmul.f32 %v9142, 0.5
  %v9175 = vmul.f32 %v9143, 0.5
  %v9176 = vmul.f32 %v9144, 0.5
  %v9177 = vmul.f32 %v9145, 0.5
  %v9178 = vmul.f32 %v9146, 0.5
  %v9179 = vmul.f32 %v9147, 0.5
  %v9180 = vadd.f32 %v9148, 0.5
  %v9181 = vadd.f32 %v9149, 0.5
  %v9182 = vadd.f32 %v9150, 0.5
  %v9183 = vadd.f32 %v9151, 0.5
  %v9184 = vadd.f32 %v9152, 0.5
  %v9185 = vadd.f32 %v9153, 0.5
  %v9186 = vadd.f32 %v9154, 0.5
  %v9187 = vadd.f32 %v9155, 0.5
  %v9188 = vadd.f32 %v9156, 0.5
  %v9189 = vadd.f32 %v9157, 0.5
  %v9190 = vadd.f32 %v9158, 0.5
  %v9191 = vadd.f32 %v9159, 0.5
  %v9192 = vadd.f32 %v9160, 0.5
  %v9193 = vadd.f32 %v9161, 0.5
  %v9194 = vadd.f32 %v9162, 0.5
  %v9195 = vadd.f32 %v9163, 0.5
  %v9196 = vadd.f32 %v9164, 0.5
  %v9197 = vadd.f32 %v9165, 0.5
  %v9198 = vadd.f32 %v9166, 0.5
  %v9199 = vadd.f32 %v9167, 0.5
  %v9200 = vadd.f32 %v9168, 0.5
  %v9201 = vadd.f32 %v9169, 0.5
  %v9202 = vadd.f32 %v9170, 0.5
  %v9203 = vadd.f32 %v9171, 0.5
  %v9204 = vadd.f32 %v9172, 0.5
  %v9205 = vadd.f32 %v9173, 0.5
  %v9206 = vadd.f32 %v9174, 0.5
  %v9207 = vadd.f32 %v9175, 0.5
  %v9208 = vadd.f32 %v9176, 0.5
  %v9209 = vadd.f32 %v9177, 0.5
  %v9210 = vadd.f32 %v9178, 0.5
  %v9211 = vadd.f32 %v9179, 0.5
  %v9212 = vmul.f32 %v8958, %v9180
  %v9213 = vmul.f32 %v8961, %v9181
  %v9214 = vmul.f32 %v8966, %v9182
  %v9215 = vmul.f32 %v8969, %v9183
  %v9216 = vmul.f32 %v8974, %v9184
  %v9217 = vmul.f32 %v8977, %v9185
  %v9218 = vmul.f32 %v8982, %v9186
  %v9219 = vmul.f32 %v8985, %v9187
  %v9220 = vmul.f32 %v8990, %v9188
  %v9221 = vmul.f32 %v8993, %v9189
  %v9222 = vmul.f32 %v8998, %v9190
  %v9223 = vmul.f32 %v9001, %v9191
  %v9224 = vmul.f32 %v9006, %v9192
  %v9225 = vmul.f32 %v9009, %v9193
  %v9226 = vmul.f32 %v9014, %v9194
  %v9227 = vmul.f32 %v9017, %v9195
  %v9228 = vmul.f32 %v9022, %v9196
  %v9229 = vmul.f32 %v9025, %v9197
  %v9230 = vmul.f32 %v9030, %v9198
  %v9231 = vmul.f32 %v9033, %v9199
  %v9232 = vmul.f32 %v9038, %v9200
  %v9233 = vmul.f32 %v9041, %v9201
  %v9234 = vmul.f32 %v9046, %v9202
  %v9235 = vmul.f32 %v9049, %v9203
  %v9236 = vmul.f32 %v9054, %v9204
  %v9237 = vmul.f32 %v9057, %v9205
  %v9238 = vmul.f32 %v9062, %v9206
  %v9239 = vmul.f32 %v9065, %v9207
  %v9240 = vmul.f32 %v9070, %v9208
  %v9241 = vmul.f32 %v9073, %v9209
  %v9242 = vmul.f32 %v9078, %v9210
  %v9243 = vmul.f32 %v9081, %v9211
  %v9244 = vpack.c.bf16 %v9213, %v9212
  %v9245 = vpack.c.bf16 %v9215, %v9214
  %v9246 = vpack.c.bf16 %v9217, %v9216
  %v9247 = vpack.c.bf16 %v9219, %v9218
  %v9248 = vpack.c.bf16 %v9221, %v9220
  %v9249 = vpack.c.bf16 %v9223, %v9222
  %v9250 = vpack.c.bf16 %v9225, %v9224
  %v9251 = vpack.c.bf16 %v9227, %v9226
  %v9252 = vpack.c.bf16 %v9229, %v9228
  %v9253 = vpack.c.bf16 %v9231, %v9230
  %v9254 = vpack.c.bf16 %v9233, %v9232
  %v9255 = vpack.c.bf16 %v9235, %v9234
  %v9256 = vpack.c.bf16 %v9237, %v9236
  %v9257 = vpack.c.bf16 %v9239, %v9238
  %v9258 = vpack.c.bf16 %v9241, %v9240
  %v9259 = vpack.c.bf16 %v9243, %v9242
  %v9260 = vld [vmem:[%s4 + $0x130] sm:$0xf]
  %v9261 = vld [vmem:[%s4 + $0x138] sm:$0xf]
  %v9262 = vld [vmem:[%s4 + $0x140] sm:$0xf]
  %v9263 = vld [vmem:[%s4 + $0x148] sm:$0xf]
  %v9264 = vld [vmem:[%s5 + $0x1] ss:$0 sm:$0xff]
  %v9269 = vunpack.c.l.b16 %v9260
  %v9270 = vunpack.c.l.b16 %v9261
  %v9271 = vunpack.c.l.b16 %v9262
  %v9272 = vunpack.c.l.b16 %v9263
  %v9273 = vpack.c.b16 %v9270, %v9269
  %v9274 = vpack.c.b16 %v9272, %v9271
  %v9278 = vsel %vm7999, %v9244, 0
  %v9281 = vsel %vm7999, %v9245, 0
  %v9284 = vsel %vm7999, %v9246, 0
  %v9287 = vsel %vm7999, %v9247, 0
  %v9290 = vsel %vm7999, %v9248, 0
  %v9293 = vsel %vm7999, %v9249, 0
  %v9296 = vsel %vm7999, %v9250, 0
  %v9299 = vsel %vm7999, %v9251, 0
  %v9302 = vsel %vm7999, %v9252, 0
  %v9305 = vsel %vm7999, %v9253, 0
  %v9308 = vsel %vm7999, %v9254, 0
  %v9311 = vsel %vm7999, %v9255, 0
  %v9314 = vsel %vm7999, %v9256, 0
  %v9317 = vsel %vm7999, %v9257, 0
  %v9320 = vsel %vm7999, %v9258, 0
  %v9323 = vsel %vm7999, %v9259, 0
  %9325 = vmatprep.subr.bf16.mxu0 0
  %9326 = vmatpush1.bf16.msra.mxu0 %v9273
  %9327 = vmatprep.subr.bf16.mxu0 0
  %9328 = vmatpush1.bf16.msra.mxu0 %v9274
  %9329 = vmatprep.subr.bf16.mxu0 0
  %9330 = vmatpush1.bf16.msra.mxu0 0
  %9331 = vmatprep.subr.bf16.mxu0 0
  %9332 = vmatpush1.bf16.msra.mxu0 0
  %9333 = vmatprep.subr.bf16.mxu0 0
  %9334 = vmatpush1.bf16.msra.mxu0 0
  %9335 = vmatprep.subr.bf16.mxu0 0
  %9336 = vmatpush1.bf16.msra.mxu0 0
  %9337 = vmatprep.subr.bf16.mxu0 0
  %9338 = vmatpush1.bf16.msra.mxu0 0
  %9339 = vmatprep.subr.bf16.mxu0 0
  %9340 = vmatpush1.bf16.msra.mxu0 0
  %9341 = vmatprep.subr.bf16.mxu0 0
  %9342 = vmatpush1.bf16.msra.mxu0 0
  %9343 = vmatprep.subr.bf16.mxu0 0
  %9344 = vmatpush1.bf16.msra.mxu0 0
  %9345 = vmatprep.subr.bf16.mxu0 0
  %9346 = vmatpush1.bf16.msra.mxu0 0
  %9347 = vmatprep.subr.bf16.mxu0 0
  %9348 = vmatpush1.bf16.msra.mxu0 0
  %9349 = vmatprep.subr.bf16.mxu0 0
  %9350 = vmatpush1.bf16.msra.mxu0 0
  %9351 = vmatprep.subr.bf16.mxu0 0
  %9352 = vmatpush1.bf16.msra.mxu0 0
  %9353 = vmatprep.subr.bf16.mxu0 0
  %9354 = vmatpush1.bf16.msra.mxu0 0
  %9355 = vmatprep.subr.bf16.mxu0 0
  %9356 = vmatpush1.bf16.msra.mxu0 0
  %9357 = vmatprep.mubr.bf16.mxu0 0
  %9358 = vmatmul.mubr.bf16.gmra.mrb[0].mxu0 %v9278
  %v9359 = vpop.f32.mrb[0].mxu0
  %v9360 = vadd.f32 %v9264, %v9359
  %v9361 = vpop.f32.mrb[0].mxu0
  %v9362 = vpop.f32.mrb[0].mxu0
  %v9363 = vadd.f32 %v9264, %v9362
  %v9364 = vpop.f32.mrb[0].mxu0
  %9365 = vmatprep.mubr.bf16.mxu0 0
  %9366 = vmatmul.mubr.bf16.gmra.mrb[0].mxu0 %v9281
  %v9367 = vpop.f32.mrb[0].mxu0
  %v9368 = vadd.f32 %v9264, %v9367
  %v9369 = vpop.f32.mrb[0].mxu0
  %v9370 = vpop.f32.mrb[0].mxu0
  %v9371 = vadd.f32 %v9264, %v9370
  %v9372 = vpop.f32.mrb[0].mxu0
  %9373 = vmatprep.mubr.bf16.mxu0 0
  %9374 = vmatmul.mubr.bf16.gmra.mrb[0].mxu0 %v9284
  %v9375 = vpop.f32.mrb[0].mxu0
  %v9376 = vadd.f32 %v9264, %v9375
  %v9377 = vpop.f32.mrb[0].mxu0
  %v9378 = vpop.f32.mrb[0].mxu0
  %v9379 = vadd.f32 %v9264, %v9378
  %v9380 = vpop.f32.mrb[0].mxu0
  %9381 = vmatprep.mubr.bf16.mxu0 0
  %9382 = vmatmul.mubr.bf16.gmra.mrb[0].mxu0 %v9287
  %v9383 = vpop.f32.mrb[0].mxu0
  %v9384 = vadd.f32 %v9264, %v9383
  %v9385 = vpop.f32.mrb[0].mxu0
  %v9386 = vpop.f32.mrb[0].mxu0
  %v9387 = vadd.f32 %v9264, %v9386
  %v9388 = vpop.f32.mrb[0].mxu0
  %9389 = vmatprep.mubr.bf16.mxu0 0
  %9390 = vmatmul.mubr.bf16.gmra.mrb[0].mxu0 %v9290
  %v9391 = vpop.f32.mrb[0].mxu0
  %v9392 = vadd.f32 %v9264, %v9391
  %v9393 = vpop.f32.mrb[0].mxu0
  %v9394 = vpop.f32.mrb[0].mxu0
  %v9395 = vadd.f32 %v9264, %v9394
  %v9396 = vpop.f32.mrb[0].mxu0
  %9397 = vmatprep.mubr.bf16.mxu0 0
  %9398 = vmatmul.mubr.bf16.gmra.mrb[0].mxu0 %v9293
  %v9399 = vpop.f32.mrb[0].mxu0
  %v9400 = vadd.f32 %v9264, %v9399
  %v9401 = vpop.f32.mrb[0].mxu0
  %v9402 = vpop.f32.mrb[0].mxu0
  %v9403 = vadd.f32 %v9264, %v9402
  %v9404 = vpop.f32.mrb[0].mxu0
  %9405 = vmatprep.mubr.bf16.mxu0 0
  %9406 = vmatmul.mubr.bf16.gmra.mrb[0].mxu0 %v9296
  %v9407 = vpop.f32.mrb[0].mxu0
  %v9408 = vadd.f32 %v9264, %v9407
  %v9409 = vpop.f32.mrb[0].mxu0
  %v9410 = vpop.f32.mrb[0].mxu0
  %v9411 = vadd.f32 %v9264, %v9410
  %v9412 = vpop.f32.mrb[0].mxu0
  %9413 = vmatprep.mubr.bf16.mxu0 0
  %9414 = vmatmul.mubr.bf16.gmra.mrb[0].mxu0 %v9299
  %v9415 = vpop.f32.mrb[0].mxu0
  %v9416 = vadd.f32 %v9264, %v9415
  %v9417 = vpop.f32.mrb[0].mxu0
  %v9418 = vpop.f32.mrb[0].mxu0
  %v9419 = vadd.f32 %v9264, %v9418
  %v9420 = vpop.f32.mrb[0].mxu0
  %9421 = vmatprep.mubr.bf16.mxu0 0
  %9422 = vmatmul.mubr.bf16.gmra.mrb[0].mxu0 %v9302
  %v9423 = vpop.f32.mrb[0].mxu0
  %v9424 = vadd.f32 %v9264, %v9423
  %v9425 = vpop.f32.mrb[0].mxu0
  %v9426 = vpop.f32.mrb[0].mxu0
  %v9427 = vadd.f32 %v9264, %v9426
  %v9428 = vpop.f32.mrb[0].mxu0
  %9429 = vmatprep.mubr.bf16.mxu0 0
  %9430 = vmatmul.mubr.bf16.gmra.mrb[0].mxu0 %v9305
  %v9431 = vpop.f32.mrb[0].mxu0
  %v9432 = vadd.f32 %v9264, %v9431
  %v9433 = vpop.f32.mrb[0].mxu0
  %v9434 = vpop.f32.mrb[0].mxu0
  %v9435 = vadd.f32 %v9264, %v9434
  %v9436 = vpop.f32.mrb[0].mxu0
  %9437 = vmatprep.mubr.bf16.mxu0 0
  %9438 = vmatmul.mubr.bf16.gmra.mrb[0].mxu0 %v9308
  %v9439 = vpop.f32.mrb[0].mxu0
  %v9440 = vadd.f32 %v9264, %v9439
  %v9441 = vpop.f32.mrb[0].mxu0
  %v9442 = vpop.f32.mrb[0].mxu0
  %v9443 = vadd.f32 %v9264, %v9442
  %v9444 = vpop.f32.mrb[0].mxu0
  %9445 = vmatprep.mubr.bf16.mxu0 0
  %9446 = vmatmul.mubr.bf16.gmra.mrb[0].mxu0 %v9311
  %v9447 = vpop.f32.mrb[0].mxu0
  %v9448 = vadd.f32 %v9264, %v9447
  %v9449 = vpop.f32.mrb[0].mxu0
  %v9450 = vpop.f32.mrb[0].mxu0
  %v9451 = vadd.f32 %v9264, %v9450
  %v9452 = vpop.f32.mrb[0].mxu0
  %9453 = vmatprep.mubr.bf16.mxu0 0
  %9454 = vmatmul.mubr.bf16.gmra.mrb[0].mxu0 %v9314
  %v9455 = vpop.f32.mrb[0].mxu0
  %v9456 = vadd.f32 %v9264, %v9455
  %v9457 = vpop.f32.mrb[0].mxu0
  %v9458 = vpop.f32.mrb[0].mxu0
  %v9459 = vadd.f32 %v9264, %v9458
  %v9460 = vpop.f32.mrb[0].mxu0
  %9461 = vmatprep.mubr.bf16.mxu0 0
  %9462 = vmatmul.mubr.bf16.gmra.mrb[0].mxu0 %v9317
  %v9463 = vpop.f32.mrb[0].mxu0
  %v9464 = vadd.f32 %v9264, %v9463
  %v9465 = vpop.f32.mrb[0].mxu0
  %v9466 = vpop.f32.mrb[0].mxu0
  %v9467 = vadd.f32 %v9264, %v9466
  %v9468 = vpop.f32.mrb[0].mxu0
  %9469 = vmatprep.mubr.bf16.mxu0 0
  %9470 = vmatmul.mubr.bf16.gmra.mrb[0].mxu0 %v9320
  %v9471 = vpop.f32.mrb[0].mxu0
  %v9472 = vadd.f32 %v9264, %v9471
  %v9473 = vpop.f32.mrb[0].mxu0
  %v9474 = vpop.f32.mrb[0].mxu0
  %v9475 = vadd.f32 %v9264, %v9474
  %v9476 = vpop.f32.mrb[0].mxu0
  %9477 = vmatprep.mubr.bf16.mxu0 0
  %9478 = vmatmul.mubr.bf16.gmra.mrb[0].mxu0 %v9323
  %v9479 = vpop.f32.mrb[0].mxu0
  %v9480 = vadd.f32 %v9264, %v9479
  %v9481 = vpop.f32.mrb[0].mxu0
  %v9482 = vpop.f32.mrb[0].mxu0
  %v9483 = vadd.f32 %v9264, %v9482
  %v9484 = vpop.f32.mrb[0].mxu0
  %9485 = vdwg.mxu0
  %v9486 = vmul.f32 %v9360, 0.5
  %v9487 = vmul.f32 %v9363, 0.5
  %v9488 = vmul.f32 %v9368, 0.5
  %v9489 = vmul.f32 %v9371, 0.5
  %v9490 = vmul.f32 %v9376, 0.5
  %v9491 = vmul.f32 %v9379, 0.5
  %v9492 = vmul.f32 %v9384, 0.5
  %v9493 = vmul.f32 %v9387, 0.5
  %v9494 = vmul.f32 %v9392, 0.5
  %v9495 = vmul.f32 %v9395, 0.5
  %v9496 = vmul.f32 %v9400, 0.5
  %v9497 = vmul.f32 %v9403, 0.5
  %v9498 = vmul.f32 %v9408, 0.5
  %v9499 = vmul.f32 %v9411, 0.5
  %v9500 = vmul.f32 %v9416, 0.5
  %v9501 = vmul.f32 %v9419, 0.5
  %v9502 = vmul.f32 %v9424, 0.5
  %v9503 = vmul.f32 %v9427, 0.5
  %v9504 = vmul.f32 %v9432, 0.5
  %v9505 = vmul.f32 %v9435, 0.5
  %v9506 = vmul.f32 %v9440, 0.5
  %v9507 = vmul.f32 %v9443, 0.5
  %v9508 = vmul.f32 %v9448, 0.5
  %v9509 = vmul.f32 %v9451, 0.5
  %v9510 = vmul.f32 %v9456, 0.5
  %v9511 = vmul.f32 %v9459, 0.5
  %v9512 = vmul.f32 %v9464, 0.5
  %v9513 = vmul.f32 %v9467, 0.5
  %v9514 = vmul.f32 %v9472, 0.5
  %v9515 = vmul.f32 %v9475, 0.5
  %v9516 = vmul.f32 %v9480, 0.5
  %v9517 = vmul.f32 %v9483, 0.5
  %v9518 = vtanh.pop %v9486
  %v9519 = vtanh.pop %v9487
  %v9520 = vtanh.pop %v9488
  %v9521 = vtanh.pop %v9489
  %v9522 = vtanh.pop %v9490
  %v9523 = vtanh.pop %v9491
  %v9524 = vtanh.pop %v9492
  %v9525 = vtanh.pop %v9493
  %v9526 = vtanh.pop %v9494
  %v9527 = vtanh.pop %v9495
  %v9528 = vtanh.pop %v9496
  %v9529 = vtanh.pop %v9497
  %v9530 = vtanh.pop %v9498
  %v9531 = vtanh.pop %v9499
  %v9532 = vtanh.pop %v9500
  %v9533 = vtanh.pop %v9501
  %v9534 = vtanh.pop %v9502
  %v9535 = vtanh.pop %v9503
  %v9536 = vtanh.pop %v9504
  %v9537 = vtanh.pop %v9505
  %v9538 = vtanh.pop %v9506
  %v9539 = vtanh.pop %v9507
  %v9540 = vtanh.pop %v9508
  %v9541 = vtanh.pop %v9509
  %v9542 = vtanh.pop %v9510
  %v9543 = vtanh.pop %v9511
  %v9544 = vtanh.pop %v9512
  %v9545 = vtanh.pop %v9513
  %v9546 = vtanh.pop %v9514
  %v9547 = vtanh.pop %v9515
  %v9548 = vtanh.pop %v9516
  %v9549 = vtanh.pop %v9517
  %v9550 = vmul.f32 %v9518, 0.5
  %v9551 = vmul.f32 %v9519, 0.5
  %v9552 = vmul.f32 %v9520, 0.5
  %v9553 = vmul.f32 %v9521, 0.5
  %v9554 = vmul.f32 %v9522, 0.5
  %v9555 = vmul.f32 %v9523, 0.5
  %v9556 = vmul.f32 %v9524, 0.5
  %v9557 = vmul.f32 %v9525, 0.5
  %v9558 = vmul.f32 %v9526, 0.5
  %v9559 = vmul.f32 %v9527, 0.5
  %v9560 = vmul.f32 %v9528, 0.5
  %v9561 = vmul.f32 %v9529, 0.5
  %v9562 = vmul.f32 %v9530, 0.5
  %v9563 = vmul.f32 %v9531, 0.5
  %v9564 = vmul.f32 %v9532, 0.5
  %v9565 = vmul.f32 %v9533, 0.5
  %v9566 = vmul.f32 %v9534, 0.5
  %v9567 = vmul.f32 %v9535, 0.5
  %v9568 = vmul.f32 %v9536, 0.5
  %v9569 = vmul.f32 %v9537, 0.5
  %v9570 = vmul.f32 %v9538, 0.5
  %v9571 = vmul.f32 %v9539, 0.5
  %v9572 = vmul.f32 %v9540, 0.5
  %v9573 = vmul.f32 %v9541, 0.5
  %v9574 = vmul.f32 %v9542, 0.5
  %v9575 = vmul.f32 %v9543, 0.5
  %v9576 = vmul.f32 %v9544, 0.5
  %v9577 = vmul.f32 %v9545, 0.5
  %v9578 = vmul.f32 %v9546, 0.5
  %v9579 = vmul.f32 %v9547, 0.5
  %v9580 = vmul.f32 %v9548, 0.5
  %v9581 = vmul.f32 %v9549, 0.5
  %v9582 = vadd.f32 %v9550, 0.5
  %v9583 = vadd.f32 %v9551, 0.5
  %v9584 = vadd.f32 %v9552, 0.5
  %v9585 = vadd.f32 %v9553, 0.5
  %v9586 = vadd.f32 %v9554, 0.5
  %v9587 = vadd.f32 %v9555, 0.5
  %v9588 = vadd.f32 %v9556, 0.5
  %v9589 = vadd.f32 %v9557, 0.5
  %v9590 = vadd.f32 %v9558, 0.5
  %v9591 = vadd.f32 %v9559, 0.5
  %v9592 = vadd.f32 %v9560, 0.5
  %v9593 = vadd.f32 %v9561, 0.5
  %v9594 = vadd.f32 %v9562, 0.5
  %v9595 = vadd.f32 %v9563, 0.5
  %v9596 = vadd.f32 %v9564, 0.5
  %v9597 = vadd.f32 %v9565, 0.5
  %v9598 = vadd.f32 %v9566, 0.5
  %v9599 = vadd.f32 %v9567, 0.5
  %v9600 = vadd.f32 %v9568, 0.5
  %v9601 = vadd.f32 %v9569, 0.5
  %v9602 = vadd.f32 %v9570, 0.5
  %v9603 = vadd.f32 %v9571, 0.5
  %v9604 = vadd.f32 %v9572, 0.5
  %v9605 = vadd.f32 %v9573, 0.5
  %v9606 = vadd.f32 %v9574, 0.5
  %v9607 = vadd.f32 %v9575, 0.5
  %v9608 = vadd.f32 %v9576, 0.5
  %v9609 = vadd.f32 %v9577, 0.5
  %v9610 = vadd.f32 %v9578, 0.5
  %v9611 = vadd.f32 %v9579, 0.5
  %v9612 = vadd.f32 %v9580, 0.5
  %v9613 = vadd.f32 %v9581, 0.5
  %v9614 = vmul.f32 %v9360, %v9582
  %v9615 = vmul.f32 %v9363, %v9583
  %v9616 = vmul.f32 %v9368, %v9584
  %v9617 = vmul.f32 %v9371, %v9585
  %v9618 = vmul.f32 %v9376, %v9586
  %v9619 = vmul.f32 %v9379, %v9587
  %v9620 = vmul.f32 %v9384, %v9588
  %v9621 = vmul.f32 %v9387, %v9589
  %v9622 = vmul.f32 %v9392, %v9590
  %v9623 = vmul.f32 %v9395, %v9591
  %v9624 = vmul.f32 %v9400, %v9592
  %v9625 = vmul.f32 %v9403, %v9593
  %v9626 = vmul.f32 %v9408, %v9594
  %v9627 = vmul.f32 %v9411, %v9595
  %v9628 = vmul.f32 %v9416, %v9596
  %v9629 = vmul.f32 %v9419, %v9597
  %v9630 = vmul.f32 %v9424, %v9598
  %v9631 = vmul.f32 %v9427, %v9599
  %v9632 = vmul.f32 %v9432, %v9600
  %v9633 = vmul.f32 %v9435, %v9601
  %v9634 = vmul.f32 %v9440, %v9602
  %v9635 = vmul.f32 %v9443, %v9603
  %v9636 = vmul.f32 %v9448, %v9604
  %v9637 = vmul.f32 %v9451, %v9605
  %v9638 = vmul.f32 %v9456, %v9606
  %v9639 = vmul.f32 %v9459, %v9607
  %v9640 = vmul.f32 %v9464, %v9608
  %v9641 = vmul.f32 %v9467, %v9609
  %v9642 = vmul.f32 %v9472, %v9610
  %v9643 = vmul.f32 %v9475, %v9611
  %v9644 = vmul.f32 %v9480, %v9612
  %v9645 = vmul.f32 %v9483, %v9613
  %v9646 = vld [vmem:[%s5 + $0x2] ss:$0 sm:$0xff]
  %v9647 = vld [vmem:[%s5 + $0x3] ss:$0 sm:$0xff]
  %v9648 = vmul.f32 %v9614, %v9646
  %v9649 = vmul.f32 %v9615, %v9646
  %v9650 = vmul.f32 %v9616, %v9646
  %v9651 = vmul.f32 %v9617, %v9646
  %v9652 = vmul.f32 %v9618, %v9646
  %v9653 = vmul.f32 %v9619, %v9646
  %v9654 = vmul.f32 %v9620, %v9646
  %v9655 = vmul.f32 %v9621, %v9646
  %v9656 = vmul.f32 %v9622, %v9646
  %v9657 = vmul.f32 %v9623, %v9646
  %v9658 = vmul.f32 %v9624, %v9646
  %v9659 = vmul.f32 %v9625, %v9646
  %v9660 = vmul.f32 %v9626, %v9646
  %v9661 = vmul.f32 %v9627, %v9646
  %v9662 = vmul.f32 %v9628, %v9646
  %v9663 = vmul.f32 %v9629, %v9646
  %v9664 = vmul.f32 %v9630, %v9646
  %v9665 = vmul.f32 %v9631, %v9646
  %v9666 = vmul.f32 %v9632, %v9646
  %v9667 = vmul.f32 %v9633, %v9646
  %v9668 = vmul.f32 %v9634, %v9646
  %v9669 = vmul.f32 %v9635, %v9646
  %v9670 = vmul.f32 %v9636, %v9646
  %v9671 = vmul.f32 %v9637, %v9646
  %v9672 = vmul.f32 %v9638, %v9646
  %v9673 = vmul.f32 %v9639, %v9646
  %v9674 = vmul.f32 %v9640, %v9646
  %v9675 = vmul.f32 %v9641, %v9646
  %v9676 = vmul.f32 %v9642, %v9646
  %v9677 = vmul.f32 %v9643, %v9646
  %v9678 = vmul.f32 %v9644, %v9646
  %v9679 = vmul.f32 %v9645, %v9646
  %9680 = vadd.xlane.f32.xlu0 %v9648
  %v9681 = vpop.xlane.xlu0 %9680
  %9682 = vadd.xlane.f32.xlu0 %v9649
  %v9683 = vpop.xlane.xlu0 %9682
  %9684 = vadd.xlane.f32.xlu0 %v9650
  %v9685 = vpop.xlane.xlu0 %9684
  %9686 = vadd.xlane.f32.xlu0 %v9651
  %v9687 = vpop.xlane.xlu0 %9686
  %9688 = vadd.xlane.f32.xlu0 %v9652
  %v9689 = vpop.xlane.xlu0 %9688
  %9690 = vadd.xlane.f32.xlu0 %v9653
  %v9691 = vpop.xlane.xlu0 %9690
  %9692 = vadd.xlane.f32.xlu0 %v9654
  %v9693 = vpop.xlane.xlu0 %9692
  %9694 = vadd.xlane.f32.xlu0 %v9655
  %v9695 = vpop.xlane.xlu0 %9694
  %9696 = vadd.xlane.f32.xlu0 %v9656
  %v9697 = vpop.xlane.xlu0 %9696
  %9698 = vadd.xlane.f32.xlu0 %v9657
  %v9699 = vpop.xlane.xlu0 %9698
  %9700 = vadd.xlane.f32.xlu0 %v9658
  %v9701 = vpop.xlane.xlu0 %9700
  %9702 = vadd.xlane.f32.xlu0 %v9659
  %v9703 = vpop.xlane.xlu0 %9702
  %9704 = vadd.xlane.f32.xlu0 %v9660
  %v9705 = vpop.xlane.xlu0 %9704
  %9706 = vadd.xlane.f32.xlu0 %v9661
  %v9707 = vpop.xlane.xlu0 %9706
  %9708 = vadd.xlane.f32.xlu0 %v9662
  %v9709 = vpop.xlane.xlu0 %9708
  %9710 = vadd.xlane.f32.xlu0 %v9663
  %v9711 = vpop.xlane.xlu0 %9710
  %9712 = vadd.xlane.f32.xlu0 %v9664
  %v9713 = vpop.xlane.xlu0 %9712
  %9714 = vadd.xlane.f32.xlu0 %v9665
  %v9715 = vpop.xlane.xlu0 %9714
  %9716 = vadd.xlane.f32.xlu0 %v9666
  %v9717 = vpop.xlane.xlu0 %9716
  %9718 = vadd.xlane.f32.xlu0 %v9667
  %v9719 = vpop.xlane.xlu0 %9718
  %9720 = vadd.xlane.f32.xlu0 %v9668
  %v9721 = vpop.xlane.xlu0 %9720
  %9722 = vadd.xlane.f32.xlu0 %v9669
  %v9723 = vpop.xlane.xlu0 %9722
  %9724 = vadd.xlane.f32.xlu0 %v9670
  %v9725 = vpop.xlane.xlu0 %9724
  %9726 = vadd.xlane.f32.xlu0 %v9671
  %v9727 = vpop.xlane.xlu0 %9726
  %9728 = vadd.xlane.f32.xlu0 %v9672
  %v9729 = vpop.xlane.xlu0 %9728
  %9730 = vadd.xlane.f32.xlu0 %v9673
  %v9731 = vpop.xlane.xlu0 %9730
  %9732 = vadd.xlane.f32.xlu0 %v9674
  %v9733 = vpop.xlane.xlu0 %9732
  %9734 = vadd.xlane.f32.xlu0 %v9675
  %v9735 = vpop.xlane.xlu0 %9734
  %9736 = vadd.xlane.f32.xlu0 %v9676
  %v9737 = vpop.xlane.xlu0 %9736
  %9738 = vadd.xlane.f32.xlu0 %v9677
  %v9739 = vpop.xlane.xlu0 %9738
  %9740 = vadd.xlane.f32.xlu0 %v9678
  %v9741 = vpop.xlane.xlu0 %9740
  %9742 = vadd.xlane.f32.xlu0 %v9679
  %v9743 = vpop.xlane.xlu0 %9742
  %v9744 = vadd.f32 %v9681, %v9647
  %v9745 = vadd.f32 %v9683, %v9647
  %v9746 = vadd.f32 %v9685, %v9647
  %v9747 = vadd.f32 %v9687, %v9647
  %v9748 = vadd.f32 %v9689, %v9647
  %v9749 = vadd.f32 %v9691, %v9647
  %v9750 = vadd.f32 %v9693, %v9647
  %v9751 = vadd.f32 %v9695, %v9647
  %v9752 = vadd.f32 %v9697, %v9647
  %v9753 = vadd.f32 %v9699, %v9647
  %v9754 = vadd.f32 %v9701, %v9647
  %v9755 = vadd.f32 %v9703, %v9647
  %v9756 = vadd.f32 %v9705, %v9647
  %v9757 = vadd.f32 %v9707, %v9647
  %v9758 = vadd.f32 %v9709, %v9647
  %v9759 = vadd.f32 %v9711, %v9647
  %v9760 = vadd.f32 %v9713, %v9647
  %v9761 = vadd.f32 %v9715, %v9647
  %v9762 = vadd.f32 %v9717, %v9647
  %v9763 = vadd.f32 %v9719, %v9647
  %v9764 = vadd.f32 %v9721, %v9647
  %v9765 = vadd.f32 %v9723, %v9647
  %v9766 = vadd.f32 %v9725, %v9647
  %v9767 = vadd.f32 %v9727, %v9647
  %v9768 = vadd.f32 %v9729, %v9647
  %v9769 = vadd.f32 %v9731, %v9647
  %v9770 = vadd.f32 %v9733, %v9647
  %v9771 = vadd.f32 %v9735, %v9647
  %v9772 = vadd.f32 %v9737, %v9647
  %v9773 = vadd.f32 %v9739, %v9647
  %v9774 = vadd.f32 %v9741, %v9647
  %v9775 = vadd.f32 %v9743, %v9647
  %v9776 = vmul.f32 %v627, %v9212
  %v9777 = vmul.f32 %v628, %v9213
  %v9778 = vmul.f32 %v629, %v9214
  %v9779 = vmul.f32 %v630, %v9215
  %v9780 = vmul.f32 %v631, %v9216
  %v9781 = vmul.f32 %v632, %v9217
  %v9782 = vmul.f32 %v633, %v9218
  %v9783 = vmul.f32 %v634, %v9219
  %v9784 = vmul.f32 %v635, %v9220
  %v9785 = vmul.f32 %v636, %v9221
  %v9786 = vmul.f32 %v637, %v9222
  %v9787 = vmul.f32 %v638, %v9223
  %v9788 = vmul.f32 %v639, %v9224
  %v9789 = vmul.f32 %v640, %v9225
  %v9790 = vmul.f32 %v641, %v9226
  %v9791 = vmul.f32 %v642, %v9227
  %v9792 = vmul.f32 %v643, %v9228
  %v9793 = vmul.f32 %v644, %v9229
  %v9794 = vmul.f32 %v645, %v9230
  %v9795 = vmul.f32 %v646, %v9231
  %v9796 = vmul.f32 %v647, %v9232
  %v9797 = vmul.f32 %v648, %v9233
  %v9798 = vmul.f32 %v649, %v9234
  %v9799 = vmul.f32 %v650, %v9235
  %v9800 = vmul.f32 %v651, %v9236
  %v9801 = vmul.f32 %v652, %v9237
  %v9802 = vmul.f32 %v653, %v9238
  %v9803 = vmul.f32 %v654, %v9239
  %v9804 = vmul.f32 %v655, %v9240
  %v9805 = vmul.f32 %v656, %v9241
  %v9806 = vmul.f32 %v657, %v9242
  %v9807 = vmul.f32 %v658, %v9243
  %v9808 = vsel %vm7999, %v9776, 0.0
  %v9809 = vsel %vm7999, %v9777, 0.0
  %v9810 = vadd.f32 %v9808, %v9809
  %v9811 = vrot.slane %v9810, 4
  %v9812 = vadd.f32 %v9810, %v9811
  %v9813 = vrot.slane %v9812, 2
  %v9814 = vadd.f32 %v9812, %v9813
  %v9815 = vrot.slane %v9814, 1
  %v9816 = vadd.f32 %v9814, %v9815
  %v9817 = vsel %vm7999, %v9778, 0.0
  %v9818 = vsel %vm7999, %v9779, 0.0
  %v9819 = vadd.f32 %v9817, %v9818
  %v9820 = vrot.slane %v9819, 4
  %v9821 = vadd.f32 %v9819, %v9820
  %v9822 = vrot.slane %v9821, 2
  %v9823 = vadd.f32 %v9821, %v9822
  %v9824 = vrot.slane %v9823, 1
  %v9825 = vadd.f32 %v9823, %v9824
  %v9826 = vsel %vm7999, %v9780, 0.0
  %v9827 = vsel %vm7999, %v9781, 0.0
  %v9828 = vadd.f32 %v9826, %v9827
  %v9829 = vrot.slane %v9828, 4
  %v9830 = vadd.f32 %v9828, %v9829
  %v9831 = vrot.slane %v9830, 2
  %v9832 = vadd.f32 %v9830, %v9831
  %v9833 = vrot.slane %v9832, 1
  %v9834 = vadd.f32 %v9832, %v9833
  %v9835 = vsel %vm7999, %v9782, 0.0
  %v9836 = vsel %vm7999, %v9783, 0.0
  %v9837 = vadd.f32 %v9835, %v9836
  %v9838 = vrot.slane %v9837, 4
  %v9839 = vadd.f32 %v9837, %v9838
  %v9840 = vrot.slane %v9839, 2
  %v9841 = vadd.f32 %v9839, %v9840
  %v9842 = vrot.slane %v9841, 1
  %v9843 = vadd.f32 %v9841, %v9842
  %v9844 = vsel %vm7999, %v9784, 0.0
  %v9845 = vsel %vm7999, %v9785, 0.0
  %v9846 = vadd.f32 %v9844, %v9845
  %v9847 = vrot.slane %v9846, 4
  %v9848 = vadd.f32 %v9846, %v9847
  %v9849 = vrot.slane %v9848, 2
  %v9850 = vadd.f32 %v9848, %v9849
  %v9851 = vrot.slane %v9850, 1
  %v9852 = vadd.f32 %v9850, %v9851
  %v9853 = vsel %vm7999, %v9786, 0.0
  %v9854 = vsel %vm7999, %v9787, 0.0
  %v9855 = vadd.f32 %v9853, %v9854
  %v9856 = vrot.slane %v9855, 4
  %v9857 = vadd.f32 %v9855, %v9856
  %v9858 = vrot.slane %v9857, 2
  %v9859 = vadd.f32 %v9857, %v9858
  %v9860 = vrot.slane %v9859, 1
  %v9861 = vadd.f32 %v9859, %v9860
  %v9862 = vsel %vm7999, %v9788, 0.0
  %v9863 = vsel %vm7999, %v9789, 0.0
  %v9864 = vadd.f32 %v9862, %v9863
  %v9865 = vrot.slane %v9864, 4
  %v9866 = vadd.f32 %v9864, %v9865
  %v9867 = vrot.slane %v9866, 2
  %v9868 = vadd.f32 %v9866, %v9867
  %v9869 = vrot.slane %v9868, 1
  %v9870 = vadd.f32 %v9868, %v9869
  %v9871 = vsel %vm7999, %v9790, 0.0
  %v9872 = vsel %vm7999, %v9791, 0.0
  %v9873 = vadd.f32 %v9871, %v9872
  %v9874 = vrot.slane %v9873, 4
  %v9875 = vadd.f32 %v9873, %v9874
  %v9876 = vrot.slane %v9875, 2
  %v9877 = vadd.f32 %v9875, %v9876
  %v9878 = vrot.slane %v9877, 1
  %v9879 = vadd.f32 %v9877, %v9878
  %v9880 = vsel %vm7999, %v9792, 0.0
  %v9881 = vsel %vm7999, %v9793, 0.0
  %v9882 = vadd.f32 %v9880, %v9881
  %v9883 = vrot.slane %v9882, 4
  %v9884 = vadd.f32 %v9882, %v9883
  %v9885 = vrot.slane %v9884, 2
  %v9886 = vadd.f32 %v9884, %v9885
  %v9887 = vrot.slane %v9886, 1
  %v9888 = vadd.f32 %v9886, %v9887
  %v9889 = vsel %vm7999, %v9794, 0.0
  %v9890 = vsel %vm7999, %v9795, 0.0
  %v9891 = vadd.f32 %v9889, %v9890
  %v9892 = vrot.slane %v9891, 4
  %v9893 = vadd.f32 %v9891, %v9892
  %v9894 = vrot.slane %v9893, 2
  %v9895 = vadd.f32 %v9893, %v9894
  %v9896 = vrot.slane %v9895, 1
  %v9897 = vadd.f32 %v9895, %v9896
  %v9898 = vsel %vm7999, %v9796, 0.0
  %v9899 = vsel %vm7999, %v9797, 0.0
  %v9900 = vadd.f32 %v9898, %v9899
  %v9901 = vrot.slane %v9900, 4
  %v9902 = vadd.f32 %v9900, %v9901
  %v9903 = vrot.slane %v9902, 2
  %v9904 = vadd.f32 %v9902, %v9903
  %v9905 = vrot.slane %v9904, 1
  %v9906 = vadd.f32 %v9904, %v9905
  %v9907 = vsel %vm7999, %v9798, 0.0
  %v9908 = vsel %vm7999, %v9799, 0.0
  %v9909 = vadd.f32 %v9907, %v9908
  %v9910 = vrot.slane %v9909, 4
  %v9911 = vadd.f32 %v9909, %v9910
  %v9912 = vrot.slane %v9911, 2
  %v9913 = vadd.f32 %v9911, %v9912
  %v9914 = vrot.slane %v9913, 1
  %v9915 = vadd.f32 %v9913, %v9914
  %v9916 = vsel %vm7999, %v9800, 0.0
  %v9917 = vsel %vm7999, %v9801, 0.0
  %v9918 = vadd.f32 %v9916, %v9917
  %v9919 = vrot.slane %v9918, 4
  %v9920 = vadd.f32 %v9918, %v9919
  %v9921 = vrot.slane %v9920, 2
  %v9922 = vadd.f32 %v9920, %v9921
  %v9923 = vrot.slane %v9922, 1
  %v9924 = vadd.f32 %v9922, %v9923
  %v9925 = vsel %vm7999, %v9802, 0.0
  %v9926 = vsel %vm7999, %v9803, 0.0
  %v9927 = vadd.f32 %v9925, %v9926
  %v9928 = vrot.slane %v9927, 4
  %v9929 = vadd.f32 %v9927, %v9928
  %v9930 = vrot.slane %v9929, 2
  %v9931 = vadd.f32 %v9929, %v9930
  %v9932 = vrot.slane %v9931, 1
  %v9933 = vadd.f32 %v9931, %v9932
  %v9934 = vsel %vm7999, %v9804, 0.0
  %v9935 = vsel %vm7999, %v9805, 0.0
  %v9936 = vadd.f32 %v9934, %v9935
  %v9937 = vrot.slane %v9936, 4
  %v9938 = vadd.f32 %v9936, %v9937
  %v9939 = vrot.slane %v9938, 2
  %v9940 = vadd.f32 %v9938, %v9939
  %v9941 = vrot.slane %v9940, 1
  %v9942 = vadd.f32 %v9940, %v9941
  %v9943 = vsel %vm7999, %v9806, 0.0
  %v9944 = vsel %vm7999, %v9807, 0.0
  %v9945 = vadd.f32 %v9943, %v9944
  %v9946 = vrot.slane %v9945, 4
  %v9947 = vadd.f32 %v9945, %v9946
  %v9948 = vrot.slane %v9947, 2
  %v9949 = vadd.f32 %v9947, %v9948
  %v9950 = vrot.slane %v9949, 1
  %v9951 = vadd.f32 %v9949, %v9950
  %v9952 = vrsqrt.pop %v283
  %v9953 = vrsqrt.pop %v286
  %v9954 = vrsqrt.pop %v289
  %v9955 = vrsqrt.pop %v292
  %v9956 = vrsqrt.pop %v295
  %v9957 = vrsqrt.pop %v298
  %v9958 = vrsqrt.pop %v301
  %v9959 = vrsqrt.pop %v304
  %v9960 = vrsqrt.pop %v307
  %v9961 = vrsqrt.pop %v310
  %v9962 = vrsqrt.pop %v313
  %v9963 = vrsqrt.pop %v316
  %v9964 = vrsqrt.pop %v319
  %v9965 = vrsqrt.pop %v322
  %v9966 = vrsqrt.pop %v325
  %v9967 = vrsqrt.pop %v328
  %v9968 = vrsqrt.pop %v331
  %v9969 = vrsqrt.pop %v334
  %v9970 = vrsqrt.pop %v337
  %v9971 = vrsqrt.pop %v340
  %v9972 = vrsqrt.pop %v343
  %v9973 = vrsqrt.pop %v346
  %v9974 = vrsqrt.pop %v349
  %v9975 = vrsqrt.pop %v352
  %v9976 = vrsqrt.pop %v355
  %v9977 = vrsqrt.pop %v358
  %v9978 = vrsqrt.pop %v361
  %v9979 = vrsqrt.pop %v364
  %v9980 = vrsqrt.pop %v367
  %v9981 = vrsqrt.pop %v370
  %v9982 = vrsqrt.pop %v373
  %v9983 = vrsqrt.pop %v376
  %v9984 = vmin.f32 %v9952, 1e+08
  %v9985 = vmin.f32 %v9953, 1e+08
  %v9986 = vmin.f32 %v9954, 1e+08
  %v9987 = vmin.f32 %v9955, 1e+08
  %v9988 = vmin.f32 %v9956, 1e+08
  %v9989 = vmin.f32 %v9957, 1e+08
  %v9990 = vmin.f32 %v9958, 1e+08
  %v9991 = vmin.f32 %v9959, 1e+08
  %v9992 = vmin.f32 %v9960, 1e+08
  %v9993 = vmin.f32 %v9961, 1e+08
  %v9994 = vmin.f32 %v9962, 1e+08
  %v9995 = vmin.f32 %v9963, 1e+08
  %v9996 = vmin.f32 %v9964, 1e+08
  %v9997 = vmin.f32 %v9965, 1e+08
  %v9998 = vmin.f32 %v9966, 1e+08
  %v9999 = vmin.f32 %v9967, 1e+08
  %v10000 = vmin.f32 %v9968, 1e+08
  %v10001 = vmin.f32 %v9969, 1e+08
  %v10002 = vmin.f32 %v9970, 1e+08
  %v10003 = vmin.f32 %v9971, 1e+08
  %v10004 = vmin.f32 %v9972, 1e+08
  %v10005 = vmin.f32 %v9973, 1e+08
  %v10006 = vmin.f32 %v9974, 1e+08
  %v10007 = vmin.f32 %v9975, 1e+08
  %v10008 = vmin.f32 %v9976, 1e+08
  %v10009 = vmin.f32 %v9977, 1e+08
  %v10010 = vmin.f32 %v9978, 1e+08
  %v10011 = vmin.f32 %v9979, 1e+08
  %v10012 = vmin.f32 %v9980, 1e+08
  %v10013 = vmin.f32 %v9981, 1e+08
  %v10014 = vmin.f32 %v9982, 1e+08
  %v10015 = vmin.f32 %v9983, 1e+08
  %v10016 = vmul.f32 %v627, %v9744
  %v10017 = vmul.f32 %v628, %v9745
  %v10018 = vmul.f32 %v629, %v9746
  %v10019 = vmul.f32 %v630, %v9747
  %v10020 = vmul.f32 %v631, %v9748
  %v10021 = vmul.f32 %v632, %v9749
  %v10022 = vmul.f32 %v633, %v9750
  %v10023 = vmul.f32 %v634, %v9751
  %v10024 = vmul.f32 %v635, %v9752
  %v10025 = vmul.f32 %v636, %v9753
  %v10026 = vmul.f32 %v637, %v9754
  %v10027 = vmul.f32 %v638, %v9755
  %v10028 = vmul.f32 %v639, %v9756
  %v10029 = vmul.f32 %v640, %v9757
  %v10030 = vmul.f32 %v641, %v9758
  %v10031 = vmul.f32 %v642, %v9759
  %v10032 = vmul.f32 %v643, %v9760
  %v10033 = vmul.f32 %v644, %v9761
  %v10034 = vmul.f32 %v645, %v9762
  %v10035 = vmul.f32 %v646, %v9763
  %v10036 = vmul.f32 %v647, %v9764
  %v10037 = vmul.f32 %v648, %v9765
  %v10038 = vmul.f32 %v649, %v9766
  %v10039 = vmul.f32 %v650, %v9767
  %v10040 = vmul.f32 %v651, %v9768
  %v10041 = vmul.f32 %v652, %v9769
  %v10042 = vmul.f32 %v653, %v9770
  %v10043 = vmul.f32 %v654, %v9771
  %v10044 = vmul.f32 %v655, %v9772
  %v10045 = vmul.f32 %v656, %v9773
  %v10046 = vmul.f32 %v657, %v9774
  %v10047 = vmul.f32 %v658, %v9775
  %v10048 = vmul.f32 %v10016, %v9984
  %v10049 = vmul.f32 %v10017, %v9985
  %v10050 = vmul.f32 %v10018, %v9986
  %v10051 = vmul.f32 %v10019, %v9987
  %v10052 = vmul.f32 %v10020, %v9988
  %v10053 = vmul.f32 %v10021, %v9989
  %v10054 = vmul.f32 %v10022, %v9990
  %v10055 = vmul.f32 %v10023, %v9991
  %v10056 = vmul.f32 %v10024, %v9992
  %v10057 = vmul.f32 %v10025, %v9993
  %v10058 = vmul.f32 %v10026, %v9994
  %v10059 = vmul.f32 %v10027, %v9995
  %v10060 = vmul.f32 %v10028, %v9996
  %v10061 = vmul.f32 %v10029, %v9997
  %v10062 = vmul.f32 %v10030, %v9998
  %v10063 = vmul.f32 %v10031, %v9999
  %v10064 = vmul.f32 %v10032, %v10000
  %v10065 = vmul.f32 %v10033, %v10001
  %v10066 = vmul.f32 %v10034, %v10002
  %v10067 = vmul.f32 %v10035, %v10003
  %v10068 = vmul.f32 %v10036, %v10004
  %v10069 = vmul.f32 %v10037, %v10005
  %v10070 = vmul.f32 %v10038, %v10006
  %v10071 = vmul.f32 %v10039, %v10007
  %v10072 = vmul.f32 %v10040, %v10008
  %v10073 = vmul.f32 %v10041, %v10009
  %v10074 = vmul.f32 %v10042, %v10010
  %v10075 = vmul.f32 %v10043, %v10011
  %v10076 = vmul.f32 %v10044, %v10012
  %v10077 = vmul.f32 %v10045, %v10013
  %v10078 = vmul.f32 %v10046, %v10014
  %v10079 = vmul.f32 %v10047, %v10015
  %10081 = vset.pattern.permute.xlu0 0
  %10082 = vperm.xlu0 %10081, %v10048
  %v10083 = vpop.permute.xlu0 %10082
  %10086 = vset.pattern.permute.xlu0 0
  %10087 = vperm.xlu0 %10086, %v10049
  %v10088 = vpop.permute.xlu0 %10087
  %10091 = vset.pattern.permute.xlu0 0
  %10092 = vperm.xlu0 %10091, %v10050
  %v10093 = vpop.permute.xlu0 %10092
  %10096 = vset.pattern.permute.xlu0 0
  %10097 = vperm.xlu0 %10096, %v10051
  %v10098 = vpop.permute.xlu0 %10097
  %10101 = vset.pattern.permute.xlu0 0
  %10102 = vperm.xlu0 %10101, %v10052
  %v10103 = vpop.permute.xlu0 %10102
  %10106 = vset.pattern.permute.xlu0 0
  %10107 = vperm.xlu0 %10106, %v10053
  %v10108 = vpop.permute.xlu0 %10107
  %10111 = vset.pattern.permute.xlu0 0
  %10112 = vperm.xlu0 %10111, %v10054
  %v10113 = vpop.permute.xlu0 %10112
  %10116 = vset.pattern.permute.xlu0 0
  %10117 = vperm.xlu0 %10116, %v10055
  %v10118 = vpop.permute.xlu0 %10117
  %10121 = vset.pattern.permute.xlu0 0
  %10122 = vperm.xlu0 %10121, %v10056
  %v10123 = vpop.permute.xlu0 %10122
  %10126 = vset.pattern.permute.xlu0 0
  %10127 = vperm.xlu0 %10126, %v10057
  %v10128 = vpop.permute.xlu0 %10127
  %10131 = vset.pattern.permute.xlu0 0
  %10132 = vperm.xlu0 %10131, %v10058
  %v10133 = vpop.permute.xlu0 %10132
  %10136 = vset.pattern.permute.xlu0 0
  %10137 = vperm.xlu0 %10136, %v10059
  %v10138 = vpop.permute.xlu0 %10137
  %10141 = vset.pattern.permute.xlu0 0
  %10142 = vperm.xlu0 %10141, %v10060
  %v10143 = vpop.permute.xlu0 %10142
  %10146 = vset.pattern.permute.xlu0 0
  %10147 = vperm.xlu0 %10146, %v10061
  %v10148 = vpop.permute.xlu0 %10147
  %10151 = vset.pattern.permute.xlu0 0
  %10152 = vperm.xlu0 %10151, %v10062
  %v10153 = vpop.permute.xlu0 %10152
  %10156 = vset.pattern.permute.xlu0 0
  %10157 = vperm.xlu0 %10156, %v10063
  %v10158 = vpop.permute.xlu0 %10157
  %10161 = vset.pattern.permute.xlu0 0
  %10162 = vperm.xlu0 %10161, %v10064
  %v10163 = vpop.permute.xlu0 %10162
  %10166 = vset.pattern.permute.xlu0 0
  %10167 = vperm.xlu0 %10166, %v10065
  %v10168 = vpop.permute.xlu0 %10167
  %10171 = vset.pattern.permute.xlu0 0
  %10172 = vperm.xlu0 %10171, %v10066
  %v10173 = vpop.permute.xlu0 %10172
  %10176 = vset.pattern.permute.xlu0 0
  %10177 = vperm.xlu0 %10176, %v10067
  %v10178 = vpop.permute.xlu0 %10177
  %10181 = vset.pattern.permute.xlu0 0
  %10182 = vperm.xlu0 %10181, %v10068
  %v10183 = vpop.permute.xlu0 %10182
  %10186 = vset.pattern.permute.xlu0 0
  %10187 = vperm.xlu0 %10186, %v10069
  %v10188 = vpop.permute.xlu0 %10187
  %10191 = vset.pattern.permute.xlu0 0
  %10192 = vperm.xlu0 %10191, %v10070
  %v10193 = vpop.permute.xlu0 %10192
  %10196 = vset.pattern.permute.xlu0 0
  %10197 = vperm.xlu0 %10196, %v10071
  %v10198 = vpop.permute.xlu0 %10197
  %10201 = vset.pattern.permute.xlu0 0
  %10202 = vperm.xlu0 %10201, %v10072
  %v10203 = vpop.permute.xlu0 %10202
  %10206 = vset.pattern.permute.xlu0 0
  %10207 = vperm.xlu0 %10206, %v10073
  %v10208 = vpop.permute.xlu0 %10207
  %10211 = vset.pattern.permute.xlu0 0
  %10212 = vperm.xlu0 %10211, %v10074
  %v10213 = vpop.permute.xlu0 %10212
  %10216 = vset.pattern.permute.xlu0 0
  %10217 = vperm.xlu0 %10216, %v10075
  %v10218 = vpop.permute.xlu0 %10217
  %10221 = vset.pattern.permute.xlu0 0
  %10222 = vperm.xlu0 %10221, %v10076
  %v10223 = vpop.permute.xlu0 %10222
  %10226 = vset.pattern.permute.xlu0 0
  %10227 = vperm.xlu0 %10226, %v10077
  %v10228 = vpop.permute.xlu0 %10227
  %10231 = vset.pattern.permute.xlu0 0
  %10232 = vperm.xlu0 %10231, %v10078
  %v10233 = vpop.permute.xlu0 %10232
  %10236 = vset.pattern.permute.xlu0 0
  %10237 = vperm.xlu0 %10236, %v10079
  %v10238 = vpop.permute.xlu0 %10237
  %v10240 = vmul.f32 %v10083, %v216
  %v10241 = vmul.f32 %v10088, %v217
  %v10242 = vmul.f32 %v10093, %v218
  %v10243 = vmul.f32 %v10098, %v219
  %v10244 = vmul.f32 %v10103, %v220
  %v10245 = vmul.f32 %v10108, %v221
  %v10246 = vmul.f32 %v10113, %v222
  %v10247 = vmul.f32 %v10118, %v223
  %v10248 = vmul.f32 %v10123, %v224
  %v10249 = vmul.f32 %v10128, %v225
  %v10250 = vmul.f32 %v10133, %v226
  %v10251 = vmul.f32 %v10138, %v227
  %v10252 = vmul.f32 %v10143, %v228
  %v10253 = vmul.f32 %v10148, %v229
  %v10254 = vmul.f32 %v10153, %v230
  %v10255 = vmul.f32 %v10158, %v231
  %v10256 = vmul.f32 %v10163, %v232
  %v10257 = vmul.f32 %v10168, %v233
  %v10258 = vmul.f32 %v10173, %v234
  %v10259 = vmul.f32 %v10178, %v235
  %v10260 = vmul.f32 %v10183, %v236
  %v10261 = vmul.f32 %v10188, %v237
  %v10262 = vmul.f32 %v10193, %v238
  %v10263 = vmul.f32 %v10198, %v239
  %v10264 = vmul.f32 %v10203, %v240
  %v10265 = vmul.f32 %v10208, %v241
  %v10266 = vmul.f32 %v10213, %v242
  %v10267 = vmul.f32 %v10218, %v243
  %v10268 = vmul.f32 %v10223, %v244
  %v10269 = vmul.f32 %v10228, %v245
  %v10270 = vmul.f32 %v10233, %v246
  %v10271 = vmul.f32 %v10238, %v247
  %v10272 = vsel %vm280, %v10240, 0.0
  %v10273 = vsel %vm280, %v10241, 0.0
  %v10274 = vadd.f32 %v10272, %v10273
  %v10275 = vrot.slane %v10274, 4
  %v10276 = vadd.f32 %v10274, %v10275
  %v10277 = vrot.slane %v10276, 2
  %v10278 = vadd.f32 %v10276, %v10277
  %v10279 = vrot.slane %v10278, 1
  %v10280 = vadd.f32 %v10278, %v10279
  %v10281 = vsel %vm280, %v10242, 0.0
  %v10282 = vsel %vm280, %v10243, 0.0
  %v10283 = vadd.f32 %v10281, %v10282
  %v10284 = vrot.slane %v10283, 4
  %v10285 = vadd.f32 %v10283, %v10284
  %v10286 = vrot.slane %v10285, 2
  %v10287 = vadd.f32 %v10285, %v10286
  %v10288 = vrot.slane %v10287, 1
  %v10289 = vadd.f32 %v10287, %v10288
  %v10290 = vsel %vm280, %v10244, 0.0
  %v10291 = vsel %vm280, %v10245, 0.0
  %v10292 = vadd.f32 %v10290, %v10291
  %v10293 = vrot.slane %v10292, 4
  %v10294 = vadd.f32 %v10292, %v10293
  %v10295 = vrot.slane %v10294, 2
  %v10296 = vadd.f32 %v10294, %v10295
  %v10297 = vrot.slane %v10296, 1
  %v10298 = vadd.f32 %v10296, %v10297
  %v10299 = vsel %vm280, %v10246, 0.0
  %v10300 = vsel %vm280, %v10247, 0.0
  %v10301 = vadd.f32 %v10299, %v10300
  %v10302 = vrot.slane %v10301, 4
  %v10303 = vadd.f32 %v10301, %v10302
  %v10304 = vrot.slane %v10303, 2
  %v10305 = vadd.f32 %v10303, %v10304
  %v10306 = vrot.slane %v10305, 1
  %v10307 = vadd.f32 %v10305, %v10306
  %v10308 = vsel %vm280, %v10248, 0.0
  %v10309 = vsel %vm280, %v10249, 0.0
  %v10310 = vadd.f32 %v10308, %v10309
  %v10311 = vrot.slane %v10310, 4
  %v10312 = vadd.f32 %v10310, %v10311
  %v10313 = vrot.slane %v10312, 2
  %v10314 = vadd.f32 %v10312, %v10313
  %v10315 = vrot.slane %v10314, 1
  %v10316 = vadd.f32 %v10314, %v10315
  %v10317 = vsel %vm280, %v10250, 0.0
  %v10318 = vsel %vm280, %v10251, 0.0
  %v10319 = vadd.f32 %v10317, %v10318
  %v10320 = vrot.slane %v10319, 4
  %v10321 = vadd.f32 %v10319, %v10320
  %v10322 = vrot.slane %v10321, 2
  %v10323 = vadd.f32 %v10321, %v10322
  %v10324 = vrot.slane %v10323, 1
  %v10325 = vadd.f32 %v10323, %v10324
  %v10326 = vsel %vm280, %v10252, 0.0
  %v10327 = vsel %vm280, %v10253, 0.0
  %v10328 = vadd.f32 %v10326, %v10327
  %v10329 = vrot.slane %v10328, 4
  %v10330 = vadd.f32 %v10328, %v10329
  %v10331 = vrot.slane %v10330, 2
  %v10332 = vadd.f32 %v10330, %v10331
  %v10333 = vrot.slane %v10332, 1
  %v10334 = vadd.f32 %v10332, %v10333
  %v10335 = vsel %vm280, %v10254, 0.0
  %v10336 = vsel %vm280, %v10255, 0.0
  %v10337 = vadd.f32 %v10335, %v10336
  %v10338 = vrot.slane %v10337, 4
  %v10339 = vadd.f32 %v10337, %v10338
  %v10340 = vrot.slane %v10339, 2
  %v10341 = vadd.f32 %v10339, %v10340
  %v10342 = vrot.slane %v10341, 1
  %v10343 = vadd.f32 %v10341, %v10342
  %v10344 = vsel %vm280, %v10256, 0.0
  %v10345 = vsel %vm280, %v10257, 0.0
  %v10346 = vadd.f32 %v10344, %v10345
  %v10347 = vrot.slane %v10346, 4
  %v10348 = vadd.f32 %v10346, %v10347
  %v10349 = vrot.slane %v10348, 2
  %v10350 = vadd.f32 %v10348, %v10349
  %v10351 = vrot.slane %v10350, 1
  %v10352 = vadd.f32 %v10350, %v10351
  %v10353 = vsel %vm280, %v10258, 0.0
  %v10354 = vsel %vm280, %v10259, 0.0
  %v10355 = vadd.f32 %v10353, %v10354
  %v10356 = vrot.slane %v10355, 4
  %v10357 = vadd.f32 %v10355, %v10356
  %v10358 = vrot.slane %v10357, 2
  %v10359 = vadd.f32 %v10357, %v10358
  %v10360 = vrot.slane %v10359, 1
  %v10361 = vadd.f32 %v10359, %v10360
  %v10362 = vsel %vm280, %v10260, 0.0
  %v10363 = vsel %vm280, %v10261, 0.0
  %v10364 = vadd.f32 %v10362, %v10363
  %v10365 = vrot.slane %v10364, 4
  %v10366 = vadd.f32 %v10364, %v10365
  %v10367 = vrot.slane %v10366, 2
  %v10368 = vadd.f32 %v10366, %v10367
  %v10369 = vrot.slane %v10368, 1
  %v10370 = vadd.f32 %v10368, %v10369
  %v10371 = vsel %vm280, %v10262, 0.0
  %v10372 = vsel %vm280, %v10263, 0.0
  %v10373 = vadd.f32 %v10371, %v10372
  %v10374 = vrot.slane %v10373, 4
  %v10375 = vadd.f32 %v10373, %v10374
  %v10376 = vrot.slane %v10375, 2
  %v10377 = vadd.f32 %v10375, %v10376
  %v10378 = vrot.slane %v10377, 1
  %v10379 = vadd.f32 %v10377, %v10378
  %v10380 = vsel %vm280, %v10264, 0.0
  %v10381 = vsel %vm280, %v10265, 0.0
  %v10382 = vadd.f32 %v10380, %v10381
  %v10383 = vrot.slane %v10382, 4
  %v10384 = vadd.f32 %v10382, %v10383
  %v10385 = vrot.slane %v10384, 2
  %v10386 = vadd.f32 %v10384, %v10385
  %v10387 = vrot.slane %v10386, 1
  %v10388 = vadd.f32 %v10386, %v10387
  %v10389 = vsel %vm280, %v10266, 0.0
  %v10390 = vsel %vm280, %v10267, 0.0
  %v10391 = vadd.f32 %v10389, %v10390
  %v10392 = vrot.slane %v10391, 4
  %v10393 = vadd.f32 %v10391, %v10392
  %v10394 = vrot.slane %v10393, 2
  %v10395 = vadd.f32 %v10393, %v10394
  %v10396 = vrot.slane %v10395, 1
  %v10397 = vadd.f32 %v10395, %v10396
  %v10398 = vsel %vm280, %v10268, 0.0
  %v10399 = vsel %vm280, %v10269, 0.0
  %v10400 = vadd.f32 %v10398, %v10399
  %v10401 = vrot.slane %v10400, 4
  %v10402 = vadd.f32 %v10400, %v10401
  %v10403 = vrot.slane %v10402, 2
  %v10404 = vadd.f32 %v10402, %v10403
  %v10405 = vrot.slane %v10404, 1
  %v10406 = vadd.f32 %v10404, %v10405
  %v10407 = vsel %vm280, %v10270, 0.0
  %v10408 = vsel %vm280, %v10271, 0.0
  %v10409 = vadd.f32 %v10407, %v10408
  %v10410 = vrot.slane %v10409, 4
  %v10411 = vadd.f32 %v10409, %v10410
  %v10412 = vrot.slane %v10411, 2
  %v10413 = vadd.f32 %v10411, %v10412
  %v10414 = vrot.slane %v10413, 1
  %v10415 = vadd.f32 %v10413, %v10414
  %vm10432 = vcmask 1041409
  %v10433 = vsel %vm10432, %v10289, %v10280
  %vm10434 = vcmask 1042434
  %v10435 = vsel %vm10434, %v10298, %v10433
  %vm10436 = vcmask 1043459
  %v10437 = vsel %vm10436, %v10307, %v10435
  %vm10438 = vcmask 1044484
  %v10439 = vsel %vm10438, %v10316, %v10437
  %vm10440 = vcmask 1045509
  %v10441 = vsel %vm10440, %v10325, %v10439
  %vm10442 = vcmask 1046534
  %v10443 = vsel %vm10442, %v10334, %v10441
  %vm10444 = vcmask 1047559
  %v10445 = vsel %vm10444, %v10343, %v10443
  %v10446 = vsel %vm10432, %v10361, %v10352
  %v10447 = vsel %vm10434, %v10370, %v10446
  %v10448 = vsel %vm10436, %v10379, %v10447
  %v10449 = vsel %vm10438, %v10388, %v10448
  %v10450 = vsel %vm10440, %v10397, %v10449
  %v10451 = vsel %vm10442, %v10406, %v10450
  %v10452 = vsel %vm10444, %v10415, %v10451
  %v10455 = vadd.f32 %v28, %v10445
  %v10456 = vadd.f32 %v29, %v10452
  %v10457 = vpack.c.bf16 %v35, %v34
  %v10458 = vld [vmem:[%s4 + $0x150] sm:$0xf]
  %v10459 = vld [vmem:[%s4 + $0x158] sm:$0xf]
  %v10460 = vld [vmem:[%s4 + $0x160] sm:$0xf]
  %v10461 = vld [vmem:[%s4 + $0x168] sm:$0xf]
  %v10462 = vpack.c.bf16 %v9816, %v9816
  %v10463 = vpack.c.bf16 %v9825, %v9825
  %v10464 = vpack.c.bf16 %v9834, %v9834
  %v10465 = vpack.c.bf16 %v9843, %v9843
  %v10466 = vpack.c.bf16 %v9852, %v9852
  %v10467 = vpack.c.bf16 %v9861, %v9861
  %v10468 = vpack.c.bf16 %v9870, %v9870
  %v10469 = vpack.c.bf16 %v9879, %v9879
  %v10470 = vpack.c.bf16 %v9888, %v9888
  %v10471 = vpack.c.bf16 %v9897, %v9897
  %v10472 = vpack.c.bf16 %v9906, %v9906
  %v10473 = vpack.c.bf16 %v9915, %v9915
  %v10474 = vpack.c.bf16 %v9924, %v9924
  %v10475 = vpack.c.bf16 %v9933, %v9933
  %v10476 = vpack.c.bf16 %v9942, %v9942
  %v10477 = vpack.c.bf16 %v9951, %v9951
  %v10478 = vld [vmem:[%s4 + $0x170] sm:$0xf]
  %v10479 = vld [vmem:[%s4 + $0x178] sm:$0xf]
  %v10480 = vld [vmem:[%s4 + $0x180] sm:$0xf]
  %v10481 = vld [vmem:[%s4 + $0x188] sm:$0xf]
  %v10498 = vunpack.c.l.b16 %v10462
  %v10499 = vunpack.c.l.b16 %v10463
  %v10500 = vunpack.c.l.b16 %v10464
  %v10501 = vunpack.c.l.b16 %v10465
  %v10502 = vunpack.c.l.b16 %v10466
  %v10503 = vunpack.c.l.b16 %v10467
  %v10504 = vunpack.c.l.b16 %v10468
  %v10505 = vunpack.c.l.b16 %v10469
  %v10506 = vunpack.c.l.b16 %v10470
  %v10507 = vunpack.c.l.b16 %v10471
  %v10508 = vunpack.c.l.b16 %v10472
  %v10509 = vunpack.c.l.b16 %v10473
  %v10510 = vunpack.c.l.b16 %v10474
  %v10511 = vunpack.c.l.b16 %v10475
  %v10512 = vunpack.c.l.b16 %v10476
  %v10513 = vunpack.c.l.b16 %v10477
  %v10514 = vsel %vm10432, %v10499, %v10498
  %v10515 = vsel %vm10434, %v10500, %v10514
  %v10516 = vsel %vm10436, %v10501, %v10515
  %v10517 = vsel %vm10438, %v10502, %v10516
  %v10518 = vsel %vm10440, %v10503, %v10517
  %v10519 = vsel %vm10442, %v10504, %v10518
  %v10520 = vsel %vm10444, %v10505, %v10519
  %v10521 = vsel %vm10432, %v10507, %v10506
  %v10522 = vsel %vm10434, %v10508, %v10521
  %v10523 = vsel %vm10436, %v10509, %v10522
  %v10524 = vsel %vm10438, %v10510, %v10523
  %v10525 = vsel %vm10440, %v10511, %v10524
  %v10526 = vsel %vm10442, %v10512, %v10525
  %v10527 = vsel %vm10444, %v10513, %v10526
  %v10528 = vpack.c.b16 %v10527, %v10520
  %v10533 = vunpack.c.l.b16 %v10478
  %v10534 = vunpack.c.l.b16 %v10479
  %v10535 = vunpack.c.l.b16 %v10480
  %v10536 = vunpack.c.l.b16 %v10481
  %v10537 = vpack.c.b16 %v10534, %v10533
  %v10538 = vpack.c.b16 %v10536, %v10535
  %v10542 = vsel %vm7999, %v10528, 0
  %10544 = vmatprep.subr.bf16.mxu0 0
  %10545 = vmatpush1.bf16.msra.mxu0 %v10537
  %10546 = vmatprep.subr.bf16.mxu0 0
  %10547 = vmatpush1.bf16.msra.mxu0 %v10538
  %10548 = vmatprep.subr.bf16.mxu0 0
  %10549 = vmatpush1.bf16.msra.mxu0 0
  %10550 = vmatprep.subr.bf16.mxu0 0
  %10551 = vmatpush1.bf16.msra.mxu0 0
  %10552 = vmatprep.subr.bf16.mxu0 0
  %10553 = vmatpush1.bf16.msra.mxu0 0
  %10554 = vmatprep.subr.bf16.mxu0 0
  %10555 = vmatpush1.bf16.msra.mxu0 0
  %10556 = vmatprep.subr.bf16.mxu0 0
  %10557 = vmatpush1.bf16.msra.mxu0 0
  %10558 = vmatprep.subr.bf16.mxu0 0
  %10559 = vmatpush1.bf16.msra.mxu0 0
  %10560 = vmatprep.subr.bf16.mxu0 0
  %10561 = vmatpush1.bf16.msra.mxu0 0
  %10562 = vmatprep.subr.bf16.mxu0 0
  %10563 = vmatpush1.bf16.msra.mxu0 0
  %10564 = vmatprep.subr.bf16.mxu0 0
  %10565 = vmatpush1.bf16.msra.mxu0 0
  %10566 = vmatprep.subr.bf16.mxu0 0
  %10567 = vmatpush1.bf16.msra.mxu0 0
  %10568 = vmatprep.subr.bf16.mxu0 0
  %10569 = vmatpush1.bf16.msra.mxu0 0
  %10570 = vmatprep.subr.bf16.mxu0 0
  %10571 = vmatpush1.bf16.msra.mxu0 0
  %10572 = vmatprep.subr.bf16.mxu0 0
  %10573 = vmatpush1.bf16.msra.mxu0 0
  %10574 = vmatprep.subr.bf16.mxu0 0
  %10575 = vmatpush1.bf16.msra.mxu0 0
  %10576 = vmatprep.mubr.bf16.mxu0 0
  %10577 = vmatmul.mubr.bf16.gmra.mrb[0].mxu0 %v10542
  %v10578 = vpop.f32.mrb[0].mxu0
  %v10579 = vadd.f32 0.0, %v10578
  %v10580 = vpop.f32.mrb[0].mxu0
  %v10581 = vpop.f32.mrb[0].mxu0
  %v10582 = vadd.f32 0.0, %v10581
  %v10583 = vpop.f32.mrb[0].mxu0
  %10584 = vdwg.mxu0
  %v10589 = vunpack.c.l.b16 %v10458
  %v10590 = vunpack.c.l.b16 %v10459
  %v10591 = vunpack.c.l.b16 %v10460
  %v10592 = vunpack.c.l.b16 %v10461
  %v10593 = vpack.c.b16 %v10590, %v10589
  %v10594 = vpack.c.b16 %v10592, %v10591
  %v10598 = vsel %vm7999, %v10457, 0
  %10600 = vmatprep.subr.bf16.mxu0 0
  %10601 = vmatpush1.bf16.msra.mxu0 %v10593
  %10602 = vmatprep.subr.bf16.mxu0 0
  %10603 = vmatpush1.bf16.msra.mxu0 %v10594
  %10604 = vmatprep.subr.bf16.mxu0 0
  %10605 = vmatpush1.bf16.msra.mxu0 0
  %10606 = vmatprep.subr.bf16.mxu0 0
  %10607 = vmatpush1.bf16.msra.mxu0 0
  %10608 = vmatprep.subr.bf16.mxu0 0
  %10609 = vmatpush1.bf16.msra.mxu0 0
  %10610 = vmatprep.subr.bf16.mxu0 0
  %10611 = vmatpush1.bf16.msra.mxu0 0
  %10612 = vmatprep.subr.bf16.mxu0 0
  %10613 = vmatpush1.bf16.msra.mxu0 0
  %10614 = vmatprep.subr.bf16.mxu0 0
  %10615 = vmatpush1.bf16.msra.mxu0 0
  %10616 = vmatprep.subr.bf16.mxu0 0
  %10617 = vmatpush1.bf16.msra.mxu0 0
  %10618 = vmatprep.subr.bf16.mxu0 0
  %10619 = vmatpush1.bf16.msra.mxu0 0
  %10620 = vmatprep.subr.bf16.mxu0 0
  %10621 = vmatpush1.bf16.msra.mxu0 0
  %10622 = vmatprep.subr.bf16.mxu0 0
  %10623 = vmatpush1.bf16.msra.mxu0 0
  %10624 = vmatprep.subr.bf16.mxu0 0
  %10625 = vmatpush1.bf16.msra.mxu0 0
  %10626 = vmatprep.subr.bf16.mxu0 0
  %10627 = vmatpush1.bf16.msra.mxu0 0
  %10628 = vmatprep.subr.bf16.mxu0 0
  %10629 = vmatpush1.bf16.msra.mxu0 0
  %10630 = vmatprep.subr.bf16.mxu0 0
  %10631 = vmatpush1.bf16.msra.mxu0 0
  %10632 = vmatprep.mubr.bf16.mxu0 0
  %10633 = vmatmul.mubr.bf16.gmra.mrb[0].mxu0 %v10598
  %v10634 = vpop.f32.mrb[0].mxu0
  %v10635 = vadd.f32 %v10579, %v10634
  %v10636 = vpop.f32.mrb[0].mxu0
  %v10637 = vpop.f32.mrb[0].mxu0
  %v10638 = vadd.f32 %v10582, %v10637
  %v10639 = vpop.f32.mrb[0].mxu0
  %10640 = vdwg.mxu0
  %v10641 = vld [vmem:[%s5 + $0x4] ss:$0 sm:$0xff]
  %v10642 = vadd.f32 %v10635, %v10641
  %v10643 = vadd.f32 %v10638, %v10641
  %v10644 = vmul.f32 %v10642, 0.5
  %v10645 = vmul.f32 %v10643, 0.5
  %v10646 = vtanh.pop %v10644
  %v10647 = vtanh.pop %v10645
  %v10648 = vmul.f32 %v10646, 0.5
  %v10649 = vmul.f32 %v10647, 0.5
  %v10650 = vadd.f32 %v10648, 0.5
  %v10651 = vadd.f32 %v10649, 0.5
  %v10652 = vmul.f32 %v10642, %v10650
  %v10653 = vmul.f32 %v10643, %v10651
  %v10654 = vpack.c.bf16 %v10653, %v10652
  %v10655 = vld [vmem:[%s4 + $0x190] sm:$0xf]
  %v10656 = vld [vmem:[%s4 + $0x198] sm:$0xf]
  %v10657 = vld [vmem:[%s4 + $0x1a0] sm:$0xf]
  %v10658 = vld [vmem:[%s4 + $0x1a8] sm:$0xf]
  %v10659 = vld [vmem:[%s4 + $0x1b0] sm:$0xf]
  %v10660 = vld [vmem:[%s4 + $0x1b8] sm:$0xf]
  %v10661 = vld [vmem:[%s4 + $0x1c0] sm:$0xf]
  %v10662 = vld [vmem:[%s4 + $0x1c8] sm:$0xf]
  %v10663 = vld [vmem:[%s5 + $0x5] ss:$0 sm:$0xff]
  %v10672 = vunpack.c.l.b16 %v10655
  %v10673 = vunpack.c.l.b16 %v10656
  %v10674 = vunpack.c.l.b16 %v10657
  %v10675 = vunpack.c.l.b16 %v10658
  %v10676 = vunpack.c.l.b16 %v10659
  %v10677 = vunpack.c.l.b16 %v10660
  %v10678 = vunpack.c.l.b16 %v10661
  %v10679 = vunpack.c.l.b16 %v10662
  %v10680 = vpack.c.b16 %v10673, %v10672
  %v10681 = vpack.c.b16 %v10675, %v10674
  %v10682 = vpack.c.b16 %v10677, %v10676
  %v10683 = vpack.c.b16 %v10679, %v10678
  %vm10688 = vcmask 523264
  %v10690 = vsel %vm10688, %v10654, 0
  %10692 = vmatprep.subr.bf16.mxu0 0
  %10693 = vmatpush1.bf16.msra.mxu0 %v10680
  %10694 = vmatprep.subr.bf16.mxu0 0
  %10695 = vmatpush1.bf16.msra.mxu0 %v10681
  %10696 = vmatprep.subr.bf16.mxu0 0
  %10697 = vmatpush1.bf16.msra.mxu0 %v10682
  %10698 = vmatprep.subr.bf16.mxu0 0
  %10699 = vmatpush1.bf16.msra.mxu0 %v10683
  %10700 = vmatprep.subr.bf16.mxu0 0
  %10701 = vmatpush1.bf16.msra.mxu0 0
  %10702 = vmatprep.subr.bf16.mxu0 0
  %10703 = vmatpush1.bf16.msra.mxu0 0
  %10704 = vmatprep.subr.bf16.mxu0 0
  %10705 = vmatpush1.bf16.msra.mxu0 0
  %10706 = vmatprep.subr.bf16.mxu0 0
  %10707 = vmatpush1.bf16.msra.mxu0 0
  %10708 = vmatprep.subr.bf16.mxu0 0
  %10709 = vmatpush1.bf16.msra.mxu0 0
  %10710 = vmatprep.subr.bf16.mxu0 0
  %10711 = vmatpush1.bf16.msra.mxu0 0
  %10712 = vmatprep.subr.bf16.mxu0 0
  %10713 = vmatpush1.bf16.msra.mxu0 0
  %10714 = vmatprep.subr.bf16.mxu0 0
  %10715 = vmatpush1.bf16.msra.mxu0 0
  %10716 = vmatprep.subr.bf16.mxu0 0
  %10717 = vmatpush1.bf16.msra.mxu0 0
  %10718 = vmatprep.subr.bf16.mxu0 0
  %10719 = vmatpush1.bf16.msra.mxu0 0
  %10720 = vmatprep.subr.bf16.mxu0 0
  %10721 = vmatpush1.bf16.msra.mxu0 0
  %10722 = vmatprep.subr.bf16.mxu0 0
  %10723 = vmatpush1.bf16.msra.mxu0 0
  %10724 = vmatprep.mubr.bf16.mxu0 0
  %10725 = vmatmul.mubr.bf16.gmra.mrb[0].mxu0 %v10690
  %v10726 = vpop.f32.mrb[0].mxu0
  %v10727 = vadd.f32 %v10663, %v10726
  %v10728 = vpop.f32.mrb[0].mxu0
  %v10729 = vpop.f32.mrb[0].mxu0
  %v10730 = vadd.f32 %v10663, %v10729
  %v10731 = vpop.f32.mrb[0].mxu0
  %10732 = vdwg.mxu0
  %v10733 = vadd.f32 %v31, %v10727
  %v10734 = vadd.f32 %v32, %v10730
  %10737 = vrot.lane.b32.xlu0 %v10733, 3
  %v10738 = vpop.permute.xlu0 %10737
  %10739 = vrot.lane.b32.xlu0 %v10734, 3
  %v10740 = vpop.permute.xlu0 %10739
  %v10743 = vsel %vm280, %v10455, %v10738
  %v10744 = vsel %vm280, %v10456, %v10740
  %vm10745 = vcmask 285696
  %v10746 = vsel %vm10745, %v10743, 0.0
  %v10747 = vsel %vm10745, %v10744, 0.0
  %10748 = vst [vmem:[%s6] sm:$0xff] %v10746
  %10749 = vst [vmem:[%s6 + $0x8] sm:$0xff] %v10747
  // Predicated region
  $region26: #{egnn_forward.2} parent=0 // pred_check
    _
  $region27: #{egnn_forward.2} parent=0 // pred_check_branch
    %10751 = sbr.rel (0) target = $region29
  $region28: #{egnn_forward.2} parent=0 // pred_region
    _
  $region29: #{egnn_forward.2} parent=0 // pred_fallthru
    _
  // Predicated region
  $region30: #{egnn_forward.2} parent=0 // pred_check
    _
  $region31: #{egnn_forward.2} parent=0 // pred_check_branch
    %10753 = sbr.rel (0) target = $region33
  $region32: #{egnn_forward.2} parent=0 // pred_region
    _
  $region33: #{egnn_forward.2} parent=0 // pred_fallthru
    _

</llo_original>
